<compile_context>
chip_gen: v5e
topology: v5e:2x2
jax: 0.10.0
libtpu: 0.0.40
codegen_flags: <defaults>
</compile_context>

<pallas_src>
import functools

import numpy as np

import jax
import jax.numpy as jnp
from jax.experimental import pallas as pl
from jax.experimental.pallas import tpu as pltpu


# ---------------------------------------------------------------------------
# Fused kernel: nb images per grid step.
#   x_ref    : (nb*S, 9*cin)   pre-im2col'd conv1 input (bf16)
#   mask_ref : (nb*S, 1)       1.0 on real HxW pixels of the flat padded slab
#   pad_ref  : (nb*S + 2G, 32) flat padded activations (bf16 scratch)
#   col_ref  : (nb*S, 288)     im2col columns (bf16 scratch)
#   o_ref    : (nb, 1, A)      q-values
# ---------------------------------------------------------------------------
def _qnet_kernel(x_ref, mask_ref, w1_ref, b1_ref, w2_ref, b2_ref, w3_ref, b3_ref,
                 wl_ref, bl_ref, wh1_ref, bh1_ref, wh2_ref, bh2_ref,
                 o_ref, pad_ref, col_ref, *, H, W, A, nb, S, G):
    Wp = W + 2
    L = nb * S                         # rows in the centers slab (all nb images)
    mxu = pad_ref.dtype                # bf16 (MXU input dtype)

    valid = mask_ref[...] > 0.5        # (L, 1) bool: real HxW pixel?

    def finish(y, relu):
        # bias already added; junk rows (halo / inter-image padding / garbage-fed)
        # are forced to exactly 0 so they behave as conv zero-padding downstream.
        if relu:
            y = jnp.maximum(y, 0.0)
        return jnp.where(valid, y, 0.0)

    # ---- conv1: input arrives pre-im2col'd -> one wide-K MXU matmul ----
    y = jnp.dot(x_ref[...], w1_ref[...],
                preferred_element_type=jnp.float32) + b1_ref[...]
    y = finish(y, relu=True)                                     # (L, 16) f32
    pad_ref[pl.ds(G, L), 0:w1_ref.shape[1]] = y.astype(mxu)

    # ---- conv2 / conv3: flat sublane-offset tap views -> im2col -> one matmul ----
    def conv3x3(w_ref, b_ref):
        k9, _ = w_ref.shape
        cin = k9 // 9
        for t in range(9):
            dy, dx = divmod(t, 3)
            off = G + (dy - 1) * Wp + (dx - 1)                   # static row offset
            col_ref[:, t * cin:(t + 1) * cin] = pad_ref[pl.ds(off, L), 0:cin]
        return jnp.dot(col_ref[:, 0:k9], w_ref[...],
                       preferred_element_type=jnp.float32) + b_ref[...]

    y = finish(conv3x3(w2_ref, b2_ref), relu=True)               # (L, 32)
    pad_ref[pl.ds(G, L), 0:w2_ref.shape[1]] = y.astype(mxu)

    y = conv3x3(w3_ref, b3_ref)                                  # (L, 64), no relu

    # ---- global spatial max per image, then ReLU ----
    y = jnp.where(valid, y, -jnp.inf)
    feats = [jnp.max(y[i * S:(i + 1) * S], axis=0, keepdims=True) for i in range(nb)]
    feat = jnp.maximum(jnp.concatenate(feats, axis=0), 0.0)      # (nb, 64)

    # ---- fused dueling head (real-M matmuls over the nb images) ----
    def dense(v, w_ref, b_ref, relu):
        z = jnp.dot(v.astype(mxu), w_ref[...],
                    preferred_element_type=jnp.float32) + b_ref[...]
        return jnp.maximum(z, 0.0) if relu else z

    h = dense(feat, wl_ref, bl_ref, relu=True)                   # (nb, 128)
    h = dense(h, wh1_ref, bh1_ref, relu=True)                    # (nb, 256) = [adv_hid|val_hid]
    o2 = dense(h, wh2_ref, bh2_ref, relu=False)                  # (nb, A+1)  = [adv|val]

    adv = o2[:, 0:A]
    val = o2[:, A:A + 1]
    qv = val + adv - jnp.mean(adv, axis=1, keepdims=True)        # dueling combine
    o_ref[...] = qv.reshape(nb, 1, A).astype(o_ref.dtype)


def _pick_nb(batch, max_nb):
    divs = [d for d in range(1, min(batch, max_nb) + 1) if batch % d == 0]
    multi = [d for d in divs if batch // d >= 2]      # keep >=2 grid steps for megacore
    return max(multi) if multi else max(divs)


# ---------------------------------------------------------------------------
# Wrapper: layout plumbing (NCHW->flat padded slab, conv1 im2col) + pallas_call.
# ---------------------------------------------------------------------------
def qnet_forward(params, x, action_count, max_images_per_step=8):
    B, d, c, H, W = x.shape
    cin = d * c
    A = action_count
    Hp, Wp = H + 2, W + 2
    Sp = Hp * Wp
    S = ((Sp + 7) // 8) * 8                 # per-image row stride (sublane aligned)
    G = ((Wp + 1 + 7) // 8) * 8             # guard rows so tap views stay in bounds
    nb = _pick_nb(B, max_images_per_step)
    L = nb * S
    mxu_dtype = params["w1"].dtype
    c_pad = max(params["w1"].shape[1], params["w2"].shape[1])    # 32

    # ---- conv1 im2col + flat padded-slab layout, done once in XLA ----
    x_nhwc = jnp.transpose(x.reshape(B, cin, H, W), (0, 2, 3, 1))        # (B,H,W,cin)
    xp = jnp.pad(x_nhwc, ((0, 0), (1, 1), (1, 1), (0, 0)))
    taps = [xp[:, dy:dy + H, dx:dx + W, :] for dy in range(3) for dx in range(3)]
    cols = jnp.concatenate(taps, axis=-1)                                # (B,H,W,9cin)
    slab = jnp.zeros((B, Hp, Wp, 9 * cin), cols.dtype)
    slab = slab.at[:, 1:H + 1, 1:W + 1, :].set(cols)
    slab = slab.reshape(B, Sp, 9 * cin)
    if S > Sp:
        slab = jnp.pad(slab, ((0, 0), (0, S - Sp), (0, 0)))
    x_cols = slab.reshape(B * S, 9 * cin).astype(mxu_dtype)              # (B*S, 9cin)

    # interior-pixel mask over one grid-step's slab rows (trace-time constant)
    q = np.arange(S)
    rr, cc = q // Wp, q % Wp
    m = ((rr >= 1) & (rr <= H) & (cc >= 1) & (cc <= W)).astype(np.float32)
    mask = jnp.asarray(np.tile(m, nb)[:, None])                          # (L, 1)

    kern = functools.partial(_qnet_kernel, H=H, W=W, A=A, nb=nb, S=S, G=G)

    w_names = ("w1", "b1", "w2", "b2", "w3", "b3",
               "w_lin", "b_lin", "w_h1", "b_h1", "w_h2", "b_h2")
    w_args = tuple(params[n] for n in w_names)

    def resident(a):
        # whole array, same block index every grid step -> fetched once, stays in VMEM
        zeros = (0,) * a.ndim
        return pl.BlockSpec(a.shape, lambda b, z=zeros: z)

    out = pl.pallas_call(
        kern,
        out_shape=jax.ShapeDtypeStruct((B, 1, A), jnp.float32),
        grid_spec=pltpu.PrefetchScalarGridSpec(
            num_scalar_prefetch=0,
            grid=(B // nb,),                                   # nb images per step
            in_specs=[pl.BlockSpec((L, 9 * cin), lambda b: (b, 0)),
                      resident(mask)]
                     + [resident(a) for a in w_args],
            out_specs=pl.BlockSpec((nb, 1, A), lambda b: (b, 0, 0)),
            scratch_shapes=[
                pltpu.VMEM((L + 2 * G, c_pad), mxu_dtype),     # flat padded activations
                pltpu.VMEM((L, 9 * c_pad), mxu_dtype),         # im2col columns
            ],
        ),
        compiler_params=pltpu.CompilerParams(
            dimension_semantics=("parallel",)),                # both TCs on v7x
    )(x_cols, mask, *w_args)
    return out.reshape(B, A)


# ---------------------------------------------------------------------------
# Parameters (orthogonal init in torch layout, re-packed for the fused kernel).
# ---------------------------------------------------------------------------
def make_params(key, in_channels, action_count, compute_dtype=jnp.bfloat16):
    ortho = jax.nn.initializers.orthogonal()
    keys = jax.random.split(key, 8)
    A = action_count

    def conv_w(k, cin, cout):
        # torch: orthogonal_ on (cout, cin*3*3) of an (O, I, KH, KW) conv weight
        w = ortho(k, (cout, cin * 9), jnp.float32).reshape(cout, cin, 3, 3)
        # -> im2col layout (9*cin, cout), row index = (ky*3+kx)*cin + ci
        return jnp.transpose(w, (2, 3, 1, 0)).reshape(9 * cin, cout)

    def lin_w(k, fin, fout):
        # torch nn.Linear weight is (fout, fin); kernel computes x @ W so store (fin, fout)
        return ortho(k, (fout, fin), jnp.float32).T

    w_a1 = lin_w(keys[4], 128, 128)
    w_a2 = lin_w(keys[5], 128, A)
    w_v1 = lin_w(keys[6], 128, 128)
    w_v2 = lin_w(keys[7], 128, 1)

    # fused dueling head:
    #   h1 = relu(x @ [w_a1 | w_v1])                       (128, 256)
    #   [adv | val] = h1 @ blockdiag(w_a2, w_v2)           (256, A+1)
    w_h1 = jnp.concatenate([w_a1, w_v1], axis=1)
    w_h2 = jnp.zeros((256, A + 1), jnp.float32)
    w_h2 = w_h2.at[:128, :A].set(w_a2).at[128:, A:].set(w_v2)

    cd = compute_dtype
    return {
        "w1": conv_w(keys[0], in_channels, 16).astype(cd), "b1": jnp.zeros((1, 16), jnp.float32),
        "w2": conv_w(keys[1], 16, 32).astype(cd),          "b2": jnp.zeros((1, 32), jnp.float32),
        "w3": conv_w(keys[2], 32, 64).astype(cd),          "b3": jnp.zeros((1, 64), jnp.float32),
        "w_lin": lin_w(keys[3], 64, 128).astype(cd),       "b_lin": jnp.zeros((1, 128), jnp.float32),
        "w_h1": w_h1.astype(cd),                           "b_h1": jnp.zeros((1, 256), jnp.float32),
        "w_h2": w_h2.astype(cd),                           "b_h2": jnp.zeros((1, A + 1), jnp.float32),
    }


# ---------------------------------------------------------------------------
# Pure-JAX reference (same bf16-at-the-matmul rounding) for a correctness check.
# ---------------------------------------------------------------------------
def qnet_reference(params, x, action_count):
    B, d, c, H, W = x.shape
    cin = d * c
    A = action_count
    cd = params["w1"].dtype
    hid = params["w_lin"].shape[1]
    a = jnp.transpose(x.reshape(B, cin, H, W), (0, 2, 3, 1))

    def conv(a, w2d, b, relu):
        ci = w2d.shape[0] // 9
        w = w2d.reshape(3, 3, ci, -1)
        y = jax.lax.conv_general_dilated(
            a.astype(cd), w, window_strides=(1, 1), padding=((1, 1), (1, 1)),
            dimension_numbers=("NHWC", "HWIO", "NHWC"),
            preferred_element_type=jnp.float32) + b.reshape(1, 1, 1, -1)
        return jnp.maximum(y, 0.0) if relu else y

    def dense(v, w, b, relu):
        y = jnp.dot(v.astype(cd), w, preferred_element_type=jnp.float32) + b
        return jnp.maximum(y, 0.0) if relu else y

    a = conv(a, params["w1"], params["b1"], True)
    a = conv(a, params["w2"], params["b2"], True)
    a = conv(a, params["w3"], params["b3"], False)
    f = jnp.maximum(jnp.max(a, axis=(1, 2)), 0.0)                 # (B, 64)
    h0 = dense(f, params["w_lin"], params["b_lin"], True)

    wh1, bh1 = params["w_h1"], params["b_h1"]
    wh2, bh2 = params["w_h2"], params["b_h2"]
    a_h = dense(h0, wh1[:, :hid], bh1[:, :hid], True)
    v_h = dense(h0, wh1[:, hid:], bh1[:, hid:], True)
    adv = dense(a_h, wh2[:hid, :A], bh2[:, :A], False)
    val = dense(v_h, wh2[hid:, A:], bh2[:, A:], False)
    return val + adv - jnp.mean(adv, axis=1, keepdims=True)


if __name__ == "__main__":
    key = jax.random.PRNGKey(0)
    k_param, k_obs = jax.random.split(key)

    # small shapes consistent with the module: obs_shape = (d=1, c=4, w=16, h=16)
    B, d, c, H, W = 2, 1, 4, 16, 16
    action_count = 5

    params = make_params(k_param, in_channels=d * c, action_count=action_count)
    obs = jax.random.normal(k_obs, (B, d, c, H, W), dtype=jnp.float32)

    fwd = jax.jit(functools.partial(qnet_forward, action_count=action_count))
    q = jax.block_until_ready(fwd(params, obs))

    ref = jax.jit(functools.partial(qnet_reference, action_count=action_count))
    q_ref = jax.block_until_ready(ref(params, obs))

    assert q.shape == (B, action_count)
    assert bool(jnp.all(jnp.isfinite(q)))
    assert bool(jnp.allclose(q, q_ref, atol=5e-2, rtol=5e-2)), (q, q_ref)
    print("KERNEL_OK")
</pallas_src>

<mosaic_0001>
module attributes {stable_mosaic.version = 11 : i64} {
  func.func @_qnet_kernel(%arg0: i32, %arg1: memref<328x36xbf16, #tpu.memory_space<vmem>>, %arg2: memref<328x1xf32, #tpu.memory_space<vmem>>, %arg3: memref<36x16xbf16, #tpu.memory_space<vmem>>, %arg4: memref<1x16xf32, #tpu.memory_space<vmem>>, %arg5: memref<144x32xbf16, #tpu.memory_space<vmem>>, %arg6: memref<1x32xf32, #tpu.memory_space<vmem>>, %arg7: memref<288x64xbf16, #tpu.memory_space<vmem>>, %arg8: memref<1x64xf32, #tpu.memory_space<vmem>>, %arg9: memref<64x128xbf16, #tpu.memory_space<vmem>>, %arg10: memref<1x128xf32, #tpu.memory_space<vmem>>, %arg11: memref<128x256xbf16, #tpu.memory_space<vmem>>, %arg12: memref<1x256xf32, #tpu.memory_space<vmem>>, %arg13: memref<256x6xbf16, #tpu.memory_space<vmem>>, %arg14: memref<1x6xf32, #tpu.memory_space<vmem>>, %arg15: memref<1x1x5xf32, #tpu.memory_space<vmem>>, %arg16: memref<376x32xbf16, #tpu.memory_space<vmem>>, %arg17: memref<328x288xbf16, #tpu.memory_space<vmem>>) attributes {dimension_semantics = [#tpu.dimension_semantics<parallel>], iteration_bounds = array<i64: 2>, scalar_prefetch = 0 : i64, scratch_operands = 2 : i64, tpu.core_type = #tpu.core_type<tc>, window_params = [{transform_indices = @transform_0, window_bounds = array<i64: 328, 36>}, {pipeline_mode = #tpu.pipeline_mode<synchronous>, transform_indices = @transform_1, window_bounds = array<i64: 328, 1>}, {pipeline_mode = #tpu.pipeline_mode<synchronous>, transform_indices = @transform_2, window_bounds = array<i64: 36, 16>}, {pipeline_mode = #tpu.pipeline_mode<synchronous>, transform_indices = @transform_3, window_bounds = array<i64: 1, 16>}, {pipeline_mode = #tpu.pipeline_mode<synchronous>, transform_indices = @transform_4, window_bounds = array<i64: 144, 32>}, {pipeline_mode = #tpu.pipeline_mode<synchronous>, transform_indices = @transform_5, window_bounds = array<i64: 1, 32>}, {pipeline_mode = #tpu.pipeline_mode<synchronous>, transform_indices = @transform_6, window_bounds = array<i64: 288, 64>}, {pipeline_mode = #tpu.pipeline_mode<synchronous>, transform_indices = @transform_7, window_bounds = array<i64: 1, 64>}, {pipeline_mode = #tpu.pipeline_mode<synchronous>, transform_indices = @transform_8, window_bounds = array<i64: 64, 128>}, {pipeline_mode = #tpu.pipeline_mode<synchronous>, transform_indices = @transform_9, window_bounds = array<i64: 1, 128>}, {pipeline_mode = #tpu.pipeline_mode<synchronous>, transform_indices = @transform_10, window_bounds = array<i64: 128, 256>}, {pipeline_mode = #tpu.pipeline_mode<synchronous>, transform_indices = @transform_11, window_bounds = array<i64: 1, 256>}, {pipeline_mode = #tpu.pipeline_mode<synchronous>, transform_indices = @transform_12, window_bounds = array<i64: 256, 6>}, {pipeline_mode = #tpu.pipeline_mode<synchronous>, transform_indices = @transform_13, window_bounds = array<i64: 1, 6>}, {transform_indices = @transform_14, window_bounds = array<i64: 1, 1, 5>}]} {
    %c0 = arith.constant 0 : index
    %c0_0 = arith.constant 0 : index
    %0 = vector.load %arg2[%c0, %c0_0] : memref<328x1xf32, #tpu.memory_space<vmem>>, vector<328x1xf32>
    %cst = arith.constant 5.000000e-01 : f32
    %1 = vector.broadcast %cst : f32 to vector<328x1xf32>
    %2 = arith.cmpf ogt, %0, %1 : vector<328x1xf32>
    %c0_1 = arith.constant 0 : index
    %c0_2 = arith.constant 0 : index
    %3 = vector.load %arg1[%c0_1, %c0_2] : memref<328x36xbf16, #tpu.memory_space<vmem>>, vector<328x36xbf16>
    %c0_3 = arith.constant 0 : index
    %c0_4 = arith.constant 0 : index
    %4 = vector.load %arg3[%c0_3, %c0_4] : memref<36x16xbf16, #tpu.memory_space<vmem>>, vector<36x16xbf16>
    %cst_5 = arith.constant dense<0.000000e+00> : vector<328x16xf32>
    %5 = tpu.matmul %3, %4, %cst_5 {dimension_numbers = #tpu.dot_dimension_numbers<[1], [0], [0], [1], [0, 0, 1, 1], [], []>} : vector<328x36xbf16>, vector<36x16xbf16>, vector<328x16xf32> -> vector<328x16xf32>
    %c0_6 = arith.constant 0 : index
    %c0_7 = arith.constant 0 : index
    %6 = vector.load %arg4[%c0_6, %c0_7] : memref<1x16xf32, #tpu.memory_space<vmem>>, vector<1x16xf32>
    %7 = vector.broadcast %6 : vector<1x16xf32> to vector<328x16xf32>
    %8 = arith.addf %5, %7 : vector<328x16xf32>
    %cst_8 = arith.constant 0.000000e+00 : f32
    %9 = vector.broadcast %cst_8 : f32 to vector<328x16xf32>
    %10 = arith.maximumf %8, %9 : vector<328x16xf32>
    %cst_9 = arith.constant 0.000000e+00 : f32
    %11 = vector.shape_cast %2 : vector<328x1xi1> to vector<328x1xi1>
    %12 = vector.broadcast %11 : vector<328x1xi1> to vector<328x16xi1>
    %13 = vector.broadcast %cst_9 : f32 to vector<328x16xf32>
    %14 = arith.select %12, %10, %13 : vector<328x16xi1>, vector<328x16xf32>
    %15 = arith.truncf %14 : vector<328x16xf32> to vector<328x16xbf16>
    %c24 = arith.constant 24 : index
    %c0_10 = arith.constant 0 : index
    %16 = vector.load %arg16[%c24, %c0_10] : memref<376x32xbf16, #tpu.memory_space<vmem>>, vector<328x16xbf16>
    tpu.vector_store %arg16[%c24, %c0_10], %15 {strides = array<i32>} : memref<376x32xbf16, #tpu.memory_space<vmem>>, vector<328x16xbf16>,
    %c5 = arith.constant 5 : index
    %c0_11 = arith.constant 0 : index
    %17 = vector.load %arg16[%c5, %c0_11] : memref<376x32xbf16, #tpu.memory_space<vmem>>, vector<328x16xbf16>
    %c0_12 = arith.constant 0 : index
    %c0_13 = arith.constant 0 : index
    %18 = vector.load %arg17[%c0_12, %c0_13] : memref<328x288xbf16, #tpu.memory_space<vmem>>, vector<328x16xbf16>
    tpu.vector_store %arg17[%c0_12, %c0_13], %17 {strides = array<i32>} : memref<328x288xbf16, #tpu.memory_space<vmem>>, vector<328x16xbf16>,
    %c6 = arith.constant 6 : index
    %c0_14 = arith.constant 0 : index
    %19 = vector.load %arg16[%c6, %c0_14] : memref<376x32xbf16, #tpu.memory_space<vmem>>, vector<328x16xbf16>
    %c0_15 = arith.constant 0 : index
    %c16 = arith.constant 16 : index
    %20 = vector.load %arg17[%c0_15, %c16] : memref<328x288xbf16, #tpu.memory_space<vmem>>, vector<328x16xbf16>
    tpu.vector_store %arg17[%c0_15, %c16], %19 {strides = array<i32>} : memref<328x288xbf16, #tpu.memory_space<vmem>>, vector<328x16xbf16>,
    %c7 = arith.constant 7 : index
    %c0_16 = arith.constant 0 : index
    %21 = vector.load %arg16[%c7, %c0_16] : memref<376x32xbf16, #tpu.memory_space<vmem>>, vector<328x16xbf16>
    %c0_17 = arith.constant 0 : index
    %c32 = arith.constant 32 : index
    %22 = vector.load %arg17[%c0_17, %c32] : memref<328x288xbf16, #tpu.memory_space<vmem>>, vector<328x16xbf16>
    tpu.vector_store %arg17[%c0_17, %c32], %21 {strides = array<i32>} : memref<328x288xbf16, #tpu.memory_space<vmem>>, vector<328x16xbf16>,
    %c23 = arith.constant 23 : index
    %c0_18 = arith.constant 0 : index
    %23 = vector.load %arg16[%c23, %c0_18] : memref<376x32xbf16, #tpu.memory_space<vmem>>, vector<328x16xbf16>
    %c0_19 = arith.constant 0 : index
    %c48 = arith.constant 48 : index
    %24 = vector.load %arg17[%c0_19, %c48] : memref<328x288xbf16, #tpu.memory_space<vmem>>, vector<328x16xbf16>
    tpu.vector_store %arg17[%c0_19, %c48], %23 {strides = array<i32>} : memref<328x288xbf16, #tpu.memory_space<vmem>>, vector<328x16xbf16>,
    %c24_20 = arith.constant 24 : index
    %c0_21 = arith.constant 0 : index
    %25 = vector.load %arg16[%c24_20, %c0_21] : memref<376x32xbf16, #tpu.memory_space<vmem>>, vector<328x16xbf16>
    %c0_22 = arith.constant 0 : index
    %c64 = arith.constant 64 : index
    %26 = vector.load %arg17[%c0_22, %c64] : memref<328x288xbf16, #tpu.memory_space<vmem>>, vector<328x16xbf16>
    tpu.vector_store %arg17[%c0_22, %c64], %25 {strides = array<i32>} : memref<328x288xbf16, #tpu.memory_space<vmem>>, vector<328x16xbf16>,
    %c25 = arith.constant 25 : index
    %c0_23 = arith.constant 0 : index
    %27 = vector.load %arg16[%c25, %c0_23] : memref<376x32xbf16, #tpu.memory_space<vmem>>, vector<328x16xbf16>
    %c0_24 = arith.constant 0 : index
    %c80 = arith.constant 80 : index
    %28 = vector.load %arg17[%c0_24, %c80] : memref<328x288xbf16, #tpu.memory_space<vmem>>, vector<328x16xbf16>
    tpu.vector_store %arg17[%c0_24, %c80], %27 {strides = array<i32>} : memref<328x288xbf16, #tpu.memory_space<vmem>>, vector<328x16xbf16>,
    %c41 = arith.constant 41 : index
    %c0_25 = arith.constant 0 : index
    %29 = vector.load %arg16[%c41, %c0_25] : memref<376x32xbf16, #tpu.memory_space<vmem>>, vector<328x16xbf16>
    %c0_26 = arith.constant 0 : index
    %c96 = arith.constant 96 : index
    %30 = vector.load %arg17[%c0_26, %c96] : memref<328x288xbf16, #tpu.memory_space<vmem>>, vector<328x16xbf16>
    tpu.vector_store %arg17[%c0_26, %c96], %29 {strides = array<i32>} : memref<328x288xbf16, #tpu.memory_space<vmem>>, vector<328x16xbf16>,
    %c42 = arith.constant 42 : index
    %c0_27 = arith.constant 0 : index
    %31 = vector.load %arg16[%c42, %c0_27] : memref<376x32xbf16, #tpu.memory_space<vmem>>, vector<328x16xbf16>
    %c0_28 = arith.constant 0 : index
    %c112 = arith.constant 112 : index
    %32 = vector.load %arg17[%c0_28, %c112] : memref<328x288xbf16, #tpu.memory_space<vmem>>, vector<328x16xbf16>
    tpu.vector_store %arg17[%c0_28, %c112], %31 {strides = array<i32>} : memref<328x288xbf16, #tpu.memory_space<vmem>>, vector<328x16xbf16>,
    %c43 = arith.constant 43 : index
    %c0_29 = arith.constant 0 : index
    %33 = vector.load %arg16[%c43, %c0_29] : memref<376x32xbf16, #tpu.memory_space<vmem>>, vector<328x16xbf16>
    %c0_30 = arith.constant 0 : index
    %c128 = arith.constant 128 : index
    %34 = vector.load %arg17[%c0_30, %c128] : memref<328x288xbf16, #tpu.memory_space<vmem>>, vector<328x16xbf16>
    tpu.vector_store %arg17[%c0_30, %c128], %33 {strides = array<i32>} : memref<328x288xbf16, #tpu.memory_space<vmem>>, vector<328x16xbf16>,
    %c0_31 = arith.constant 0 : index
    %c0_32 = arith.constant 0 : index
    %35 = vector.load %arg17[%c0_31, %c0_32] : memref<328x288xbf16, #tpu.memory_space<vmem>>, vector<328x144xbf16>
    %c0_33 = arith.constant 0 : index
    %c0_34 = arith.constant 0 : index
    %36 = vector.load %arg5[%c0_33, %c0_34] : memref<144x32xbf16, #tpu.memory_space<vmem>>, vector<144x32xbf16>
    %cst_35 = arith.constant dense<0.000000e+00> : vector<328x32xf32>
    %37 = tpu.matmul %35, %36, %cst_35 {dimension_numbers = #tpu.dot_dimension_numbers<[1], [0], [0], [1], [0, 0, 1, 1], [], []>} : vector<328x144xbf16>, vector<144x32xbf16>, vector<328x32xf32> -> vector<328x32xf32>
    %c0_36 = arith.constant 0 : index
    %c0_37 = arith.constant 0 : index
    %38 = vector.load %arg6[%c0_36, %c0_37] : memref<1x32xf32, #tpu.memory_space<vmem>>, vector<1x32xf32>
    %39 = vector.broadcast %38 : vector<1x32xf32> to vector<328x32xf32>
    %40 = arith.addf %37, %39 : vector<328x32xf32>
    %cst_38 = arith.constant 0.000000e+00 : f32
    %41 = vector.broadcast %cst_38 : f32 to vector<328x32xf32>
    %42 = arith.maximumf %40, %41 : vector<328x32xf32>
    %cst_39 = arith.constant 0.000000e+00 : f32
    %43 = vector.shape_cast %2 : vector<328x1xi1> to vector<328x1xi1>
    %44 = vector.broadcast %43 : vector<328x1xi1> to vector<328x32xi1>
    %45 = vector.broadcast %cst_39 : f32 to vector<328x32xf32>
    %46 = arith.select %44, %42, %45 : vector<328x32xi1>, vector<328x32xf32>
    %47 = arith.truncf %46 : vector<328x32xf32> to vector<328x32xbf16>
    %c24_40 = arith.constant 24 : index
    %c0_41 = arith.constant 0 : index
    %48 = vector.load %arg16[%c24_40, %c0_41] : memref<376x32xbf16, #tpu.memory_space<vmem>>, vector<328x32xbf16>
    tpu.vector_store %arg16[%c24_40, %c0_41], %47 {strides = array<i32>} : memref<376x32xbf16, #tpu.memory_space<vmem>>, vector<328x32xbf16>,
    %c5_42 = arith.constant 5 : index
    %c0_43 = arith.constant 0 : index
    %49 = vector.load %arg16[%c5_42, %c0_43] : memref<376x32xbf16, #tpu.memory_space<vmem>>, vector<328x32xbf16>
    %c0_44 = arith.constant 0 : index
    %c0_45 = arith.constant 0 : index
    %50 = vector.load %arg17[%c0_44, %c0_45] : memref<328x288xbf16, #tpu.memory_space<vmem>>, vector<328x32xbf16>
    tpu.vector_store %arg17[%c0_44, %c0_45], %49 {strides = array<i32>} : memref<328x288xbf16, #tpu.memory_space<vmem>>, vector<328x32xbf16>,
    %c6_46 = arith.constant 6 : index
    %c0_47 = arith.constant 0 : index
    %51 = vector.load %arg16[%c6_46, %c0_47] : memref<376x32xbf16, #tpu.memory_space<vmem>>, vector<328x32xbf16>
    %c0_48 = arith.constant 0 : index
    %c32_49 = arith.constant 32 : index
    %52 = vector.load %arg17[%c0_48, %c32_49] : memref<328x288xbf16, #tpu.memory_space<vmem>>, vector<328x32xbf16>
    tpu.vector_store %arg17[%c0_48, %c32_49], %51 {strides = array<i32>} : memref<328x288xbf16, #tpu.memory_space<vmem>>, vector<328x32xbf16>,
    %c7_50 = arith.constant 7 : index
    %c0_51 = arith.constant 0 : index
    %53 = vector.load %arg16[%c7_50, %c0_51] : memref<376x32xbf16, #tpu.memory_space<vmem>>, vector<328x32xbf16>
    %c0_52 = arith.constant 0 : index
    %c64_53 = arith.constant 64 : index
    %54 = vector.load %arg17[%c0_52, %c64_53] : memref<328x288xbf16, #tpu.memory_space<vmem>>, vector<328x32xbf16>
    tpu.vector_store %arg17[%c0_52, %c64_53], %53 {strides = array<i32>} : memref<328x288xbf16, #tpu.memory_space<vmem>>, vector<328x32xbf16>,
    %c23_54 = arith.constant 23 : index
    %c0_55 = arith.constant 0 : index
    %55 = vector.load %arg16[%c23_54, %c0_55] : memref<376x32xbf16, #tpu.memory_space<vmem>>, vector<328x32xbf16>
    %c0_56 = arith.constant 0 : index
    %c96_57 = arith.constant 96 : index
    %56 = vector.load %arg17[%c0_56, %c96_57] : memref<328x288xbf16, #tpu.memory_space<vmem>>, vector<328x32xbf16>
    tpu.vector_store %arg17[%c0_56, %c96_57], %55 {strides = array<i32>} : memref<328x288xbf16, #tpu.memory_space<vmem>>, vector<328x32xbf16>,
    %c24_58 = arith.constant 24 : index
    %c0_59 = arith.constant 0 : index
    %57 = vector.load %arg16[%c24_58, %c0_59] : memref<376x32xbf16, #tpu.memory_space<vmem>>, vector<328x32xbf16>
    %c0_60 = arith.constant 0 : index
    %c128_61 = arith.constant 128 : index
    %58 = vector.load %arg17[%c0_60, %c128_61] : memref<328x288xbf16, #tpu.memory_space<vmem>>, vector<328x32xbf16>
    tpu.vector_store %arg17[%c0_60, %c128_61], %57 {strides = array<i32>} : memref<328x288xbf16, #tpu.memory_space<vmem>>, vector<328x32xbf16>,
    %c25_62 = arith.constant 25 : index
    %c0_63 = arith.constant 0 : index
    %59 = vector.load %arg16[%c25_62, %c0_63] : memref<376x32xbf16, #tpu.memory_space<vmem>>, vector<328x32xbf16>
    %c0_64 = arith.constant 0 : index
    %c160 = arith.constant 160 : index
    %60 = vector.load %arg17[%c0_64, %c160] : memref<328x288xbf16, #tpu.memory_space<vmem>>, vector<328x32xbf16>
    tpu.vector_store %arg17[%c0_64, %c160], %59 {strides = array<i32>} : memref<328x288xbf16, #tpu.memory_space<vmem>>, vector<328x32xbf16>,
    %c41_65 = arith.constant 41 : index
    %c0_66 = arith.constant 0 : index
    %61 = vector.load %arg16[%c41_65, %c0_66] : memref<376x32xbf16, #tpu.memory_space<vmem>>, vector<328x32xbf16>
    %c0_67 = arith.constant 0 : index
    %c192 = arith.constant 192 : index
    %62 = vector.load %arg17[%c0_67, %c192] : memref<328x288xbf16, #tpu.memory_space<vmem>>, vector<328x32xbf16>
    tpu.vector_store %arg17[%c0_67, %c192], %61 {strides = array<i32>} : memref<328x288xbf16, #tpu.memory_space<vmem>>, vector<328x32xbf16>,
    %c42_68 = arith.constant 42 : index
    %c0_69 = arith.constant 0 : index
    %63 = vector.load %arg16[%c42_68, %c0_69] : memref<376x32xbf16, #tpu.memory_space<vmem>>, vector<328x32xbf16>
    %c0_70 = arith.constant 0 : index
    %c224 = arith.constant 224 : index
    %64 = vector.load %arg17[%c0_70, %c224] : memref<328x288xbf16, #tpu.memory_space<vmem>>, vector<328x32xbf16>
    tpu.vector_store %arg17[%c0_70, %c224], %63 {strides = array<i32>} : memref<328x288xbf16, #tpu.memory_space<vmem>>, vector<328x32xbf16>,
    %c43_71 = arith.constant 43 : index
    %c0_72 = arith.constant 0 : index
    %65 = vector.load %arg16[%c43_71, %c0_72] : memref<376x32xbf16, #tpu.memory_space<vmem>>, vector<328x32xbf16>
    %c0_73 = arith.constant 0 : index
    %c256 = arith.constant 256 : index
    %66 = vector.load %arg17[%c0_73, %c256] : memref<328x288xbf16, #tpu.memory_space<vmem>>, vector<328x32xbf16>
    tpu.vector_store %arg17[%c0_73, %c256], %65 {strides = array<i32>} : memref<328x288xbf16, #tpu.memory_space<vmem>>, vector<328x32xbf16>,
    %c0_74 = arith.constant 0 : index
    %c0_75 = arith.constant 0 : index
    %67 = vector.load %arg17[%c0_74, %c0_75] : memref<328x288xbf16, #tpu.memory_space<vmem>>, vector<328x288xbf16>
    %c0_76 = arith.constant 0 : index
    %c0_77 = arith.constant 0 : index
    %68 = vector.load %arg7[%c0_76, %c0_77] : memref<288x64xbf16, #tpu.memory_space<vmem>>, vector<288x64xbf16>
    %cst_78 = arith.constant dense<0.000000e+00> : vector<328x64xf32>
    %69 = tpu.matmul %67, %68, %cst_78 {dimension_numbers = #tpu.dot_dimension_numbers<[1], [0], [0], [1], [0, 0, 1, 1], [], []>} : vector<328x288xbf16>, vector<288x64xbf16>, vector<328x64xf32> -> vector<328x64xf32>
    %c0_79 = arith.constant 0 : index
    %c0_80 = arith.constant 0 : index
    %70 = vector.load %arg8[%c0_79, %c0_80] : memref<1x64xf32, #tpu.memory_space<vmem>>, vector<1x64xf32>
    %71 = vector.broadcast %70 : vector<1x64xf32> to vector<328x64xf32>
    %72 = arith.addf %69, %71 : vector<328x64xf32>
    %cst_81 = arith.constant 0xFF800000 : f32
    %73 = vector.shape_cast %2 : vector<328x1xi1> to vector<328x1xi1>
    %74 = vector.broadcast %73 : vector<328x1xi1> to vector<328x64xi1>
    %75 = vector.broadcast %cst_81 : f32 to vector<328x64xf32>
    %76 = arith.select %74, %72, %75 : vector<328x64xi1>, vector<328x64xf32>
    %cst_82 = arith.constant dense<0xFF800000> : vector<64xf32>
    %77 = vector.multi_reduction <maximumf>, %76, %cst_82 [0] : vector<328x64xf32> to vector<64xf32>
    %78 = vector.shape_cast %77 : vector<64xf32> to vector<1x64xf32>
    %cst_83 = arith.constant 0.000000e+00 : f32
    %79 = vector.broadcast %cst_83 : f32 to vector<1x64xf32>
    %80 = arith.maximumf %78, %79 : vector<1x64xf32>
    %81 = arith.truncf %80 : vector<1x64xf32> to vector<1x64xbf16>
    %c0_84 = arith.constant 0 : index
    %c0_85 = arith.constant 0 : index
    %82 = vector.load %arg9[%c0_84, %c0_85] : memref<64x128xbf16, #tpu.memory_space<vmem>>, vector<64x128xbf16>
    %cst_86 = arith.constant dense<0.000000e+00> : vector<1x128xf32>
    %83 = tpu.matmul %81, %82, %cst_86 {dimension_numbers = #tpu.dot_dimension_numbers<[1], [0], [0], [1], [0, 0, 1, 1], [], []>} : vector<1x64xbf16>, vector<64x128xbf16>, vector<1x128xf32> -> vector<1x128xf32>
    %c0_87 = arith.constant 0 : index
    %c0_88 = arith.constant 0 : index
    %84 = vector.load %arg10[%c0_87, %c0_88] : memref<1x128xf32, #tpu.memory_space<vmem>>, vector<1x128xf32>
    %85 = arith.addf %83, %84 : vector<1x128xf32>
    %cst_89 = arith.constant 0.000000e+00 : f32
    %86 = vector.broadcast %cst_89 : f32 to vector<1x128xf32>
    %87 = arith.maximumf %85, %86 : vector<1x128xf32>
    %88 = arith.truncf %87 : vector<1x128xf32> to vector<1x128xbf16>
    %c0_90 = arith.constant 0 : index
    %c0_91 = arith.constant 0 : index
    %89 = vector.load %arg11[%c0_90, %c0_91] : memref<128x256xbf16, #tpu.memory_space<vmem>>, vector<128x256xbf16>
    %cst_92 = arith.constant dense<0.000000e+00> : vector<1x256xf32>
    %90 = tpu.matmul %88, %89, %cst_92 {dimension_numbers = #tpu.dot_dimension_numbers<[1], [0], [0], [1], [0, 0, 1, 1], [], []>} : vector<1x128xbf16>, vector<128x256xbf16>, vector<1x256xf32> -> vector<1x256xf32>
    %c0_93 = arith.constant 0 : index
    %c0_94 = arith.constant 0 : index
    %91 = vector.load %arg12[%c0_93, %c0_94] : memref<1x256xf32, #tpu.memory_space<vmem>>, vector<1x256xf32>
    %92 = arith.addf %90, %91 : vector<1x256xf32>
    %cst_95 = arith.constant 0.000000e+00 : f32
    %93 = vector.broadcast %cst_95 : f32 to vector<1x256xf32>
    %94 = arith.maximumf %92, %93 : vector<1x256xf32>
    %95 = arith.truncf %94 : vector<1x256xf32> to vector<1x256xbf16>
    %c0_96 = arith.constant 0 : index
    %c0_97 = arith.constant 0 : index
    %96 = vector.load %arg13[%c0_96, %c0_97] : memref<256x6xbf16, #tpu.memory_space<vmem>>, vector<256x6xbf16>
    %cst_98 = arith.constant dense<0.000000e+00> : vector<1x6xf32>
    %97 = tpu.matmul %95, %96, %cst_98 {dimension_numbers = #tpu.dot_dimension_numbers<[1], [0], [0], [1], [0, 0, 1, 1], [], []>} : vector<1x256xbf16>, vector<256x6xbf16>, vector<1x6xf32> -> vector<1x6xf32>
    %c0_99 = arith.constant 0 : index
    %c0_100 = arith.constant 0 : index
    %98 = vector.load %arg14[%c0_99, %c0_100] : memref<1x6xf32, #tpu.memory_space<vmem>>, vector<1x6xf32>
    %99 = arith.addf %97, %98 : vector<1x6xf32>
    %100 = vector.extract_strided_slice %99 {offsets = [0, 0], sizes = [1, 5], strides = [1, 1]} : vector<1x6xf32> to vector<1x5xf32>
    %101 = vector.extract_strided_slice %99 {offsets = [0, 5], sizes = [1, 1], strides = [1, 1]} : vector<1x6xf32> to vector<1x1xf32>
    %102 = vector.broadcast %101 : vector<1x1xf32> to vector<1x5xf32>
    %103 = arith.addf %102, %100 : vector<1x5xf32>
    %cst_101 = arith.constant dense<0.000000e+00> : vector<1xf32>
    %104 = vector.multi_reduction <add>, %100, %cst_101 [1] : vector<1x5xf32> to vector<1xf32>
    %105 = vector.shape_cast %104 : vector<1xf32> to vector<1x1xf32>
    %cst_102 = arith.constant 5.000000e+00 : f32
    %106 = vector.broadcast %cst_102 : f32 to vector<1x1xf32>
    %107 = arith.divf %105, %106 : vector<1x1xf32>
    %108 = vector.broadcast %107 : vector<1x1xf32> to vector<1x5xf32>
    %109 = arith.subf %103, %108 : vector<1x5xf32>
    %110 = vector.shape_cast %109 : vector<1x5xf32> to vector<1x1x5xf32>
    %c0_103 = arith.constant 0 : index
    %c0_104 = arith.constant 0 : index
    %c0_105 = arith.constant 0 : index
    %111 = vector.load %arg15[%c0_103, %c0_104, %c0_105] : memref<1x1x5xf32, #tpu.memory_space<vmem>>, vector<1x1x5xf32>
    tpu.vector_store %arg15[%c0_103, %c0_104, %c0_105], %110 {strides = array<i32>} : memref<1x1x5xf32, #tpu.memory_space<vmem>>, vector<1x1x5xf32>,
    return
  }
  func.func @transform_0(%arg0: i32) -> (i32, i32) {
    %c0_i32 = arith.constant 0 : i32
    %c0_i32_0 = arith.constant 0 : i32
    return %arg0, %c0_i32 : i32, i32
  }
  func.func @transform_1(%arg0: i32) -> (i32, i32) {
    %c0_i32 = arith.constant 0 : i32
    %c0_i32_0 = arith.constant 0 : i32
    %c0_i32_1 = arith.constant 0 : i32
    return %c0_i32, %c0_i32_0 : i32, i32
  }
  func.func @transform_2(%arg0: i32) -> (i32, i32) {
    %c0_i32 = arith.constant 0 : i32
    %c0_i32_0 = arith.constant 0 : i32
    %c0_i32_1 = arith.constant 0 : i32
    return %c0_i32, %c0_i32_0 : i32, i32
  }
  func.func @transform_3(%arg0: i32) -> (i32, i32) {
    %c0_i32 = arith.constant 0 : i32
    %c0_i32_0 = arith.constant 0 : i32
    %c0_i32_1 = arith.constant 0 : i32
    return %c0_i32, %c0_i32_0 : i32, i32
  }
  func.func @transform_4(%arg0: i32) -> (i32, i32) {
    %c0_i32 = arith.constant 0 : i32
    %c0_i32_0 = arith.constant 0 : i32
    %c0_i32_1 = arith.constant 0 : i32
    return %c0_i32, %c0_i32_0 : i32, i32
  }
  func.func @transform_5(%arg0: i32) -> (i32, i32) {
    %c0_i32 = arith.constant 0 : i32
    %c0_i32_0 = arith.constant 0 : i32
    %c0_i32_1 = arith.constant 0 : i32
    return %c0_i32, %c0_i32_0 : i32, i32
  }
  func.func @transform_6(%arg0: i32) -> (i32, i32) {
    %c0_i32 = arith.constant 0 : i32
    %c0_i32_0 = arith.constant 0 : i32
    %c0_i32_1 = arith.constant 0 : i32
    return %c0_i32, %c0_i32_0 : i32, i32
  }
  func.func @transform_7(%arg0: i32) -> (i32, i32) {
    %c0_i32 = arith.constant 0 : i32
    %c0_i32_0 = arith.constant 0 : i32
    %c0_i32_1 = arith.constant 0 : i32
    return %c0_i32, %c0_i32_0 : i32, i32
  }
  func.func @transform_8(%arg0: i32) -> (i32, i32) {
    %c0_i32 = arith.constant 0 : i32
    %c0_i32_0 = arith.constant 0 : i32
    %c0_i32_1 = arith.constant 0 : i32
    return %c0_i32, %c0_i32_0 : i32, i32
  }
  func.func @transform_9(%arg0: i32) -> (i32, i32) {
    %c0_i32 = arith.constant 0 : i32
    %c0_i32_0 = arith.constant 0 : i32
    %c0_i32_1 = arith.constant 0 : i32
    return %c0_i32, %c0_i32_0 : i32, i32
  }
  func.func @transform_10(%arg0: i32) -> (i32, i32) {
    %c0_i32 = arith.constant 0 : i32
    %c0_i32_0 = arith.constant 0 : i32
    %c0_i32_1 = arith.constant 0 : i32
    return %c0_i32, %c0_i32_0 : i32, i32
  }
  func.func @transform_11(%arg0: i32) -> (i32, i32) {
    %c0_i32 = arith.constant 0 : i32
    %c0_i32_0 = arith.constant 0 : i32
    %c0_i32_1 = arith.constant 0 : i32
    return %c0_i32, %c0_i32_0 : i32, i32
  }
  func.func @transform_12(%arg0: i32) -> (i32, i32) {
    %c0_i32 = arith.constant 0 : i32
    %c0_i32_0 = arith.constant 0 : i32
    %c0_i32_1 = arith.constant 0 : i32
    return %c0_i32, %c0_i32_0 : i32, i32
  }
  func.func @transform_13(%arg0: i32) -> (i32, i32) {
    %c0_i32 = arith.constant 0 : i32
    %c0_i32_0 = arith.constant 0 : i32
    %c0_i32_1 = arith.constant 0 : i32
    return %c0_i32, %c0_i32_0 : i32, i32
  }
  func.func @transform_14(%arg0: i32) -> (i32, i32, i32) {
    %c0_i32 = arith.constant 0 : i32
    %c0_i32_0 = arith.constant 0 : i32
    %c0_i32_1 = arith.constant 0 : i32
    return %arg0, %c0_i32, %c0_i32_0 : i32, i32, i32
  }
}

</mosaic_0001>

<llo_original>
// kernel: qnet_forward.1
$region0: #{qnet_forward.1}
  #allocation0 [shape = 'u32[]', space=smem, size = 0x4, offset = 0x4, fixed_abs, tag = 'smem constant byte address 0x4 - core index']
  #allocation1 [shape = 'u32[72,128]{1,0:T(1,128)}', space=vmem, size = 0x9000, scoped, tag = 'internal scratch']
  #allocation2 [shape = 'bf16[376,32]{1,0:T(8,128)(2,1)}', space=vmem, size = 0x17800, scoped, tag = 'scratch operand']
  #allocation3 [shape = 'bf16[328,288]{1,0:T(8,128)(2,1)}', space=vmem, size = 0x3d800, scoped, tag = 'scratch operand']
  %s0 = inlined_call_operand.vmem [shape: bf16[656,36], index: 0, kind: input, shape index: {}]
  %s1 = inlined_call_operand.vmem [shape: f32[328,1], index: 1, kind: input, shape index: {}]
  %s2 = inlined_call_operand.vmem [shape: bf16[36,16], index: 2, kind: input, shape index: {}]
  %s3 = inlined_call_operand.vmem [shape: f32[1,16], index: 3, kind: input, shape index: {}]
  %s4 = inlined_call_operand.vmem [shape: bf16[144,32], index: 4, kind: input, shape index: {}]
  %s5 = inlined_call_operand.vmem [shape: f32[1,32], index: 5, kind: input, shape index: {}]
  %s6 = inlined_call_operand.vmem [shape: bf16[288,64], index: 6, kind: input, shape index: {}]
  %s7 = inlined_call_operand.vmem [shape: f32[1,64], index: 7, kind: input, shape index: {}]
  %s8 = inlined_call_operand.vmem [shape: bf16[64,128], index: 8, kind: input, shape index: {}]
  %s9 = inlined_call_operand.vmem [shape: f32[1,128], index: 9, kind: input, shape index: {}]
  %s10 = inlined_call_operand.vmem [shape: bf16[128,256], index: 10, kind: input, shape index: {}]
  %s11 = inlined_call_operand.vmem [shape: f32[1,256], index: 11, kind: input, shape index: {}]
  %s12 = inlined_call_operand.vmem [shape: bf16[256,6], index: 12, kind: input, shape index: {}]
  %s13 = inlined_call_operand.vmem [shape: f32[1,6], index: 13, kind: input, shape index: {}]
  %s14 = inlined_call_operand.hbm [shape: f32[2,1,5], index: 14, kind: output, shape index: {}]
  %s15 = sld [smem:[#allocation0]]
  $region89: #{qnet_forward.1} parent=0
    _
  %s17 = ssub.s32 1, %s15
  %s18 = scalar_select 0, %s17, %s15
  $region1: #{qnet_forward.1} parent=0
    #allocation4 [shape = 'u8[1024]{0}', space=vmem, size = 0x400, scoped, tag = 'output window, operand 0']
    #allocation5 [shape = 's32[2]{0}', space=sflag, size = 0x8, scoped, tag = 'scoped memory for qnet_forward.1']
    %19 = vsyncpa [#allocation5], 0
    %s20 = scalar_lea.sflag [#allocation5], 1
    %21 = vsyncpa %s20, 0
    loop: start=0, step=1, limit=4
    $region2: #{qnet_forward.1} parent=1 // loop_pre_header
      _
    $region3: #{qnet_forward.1} parent=1 // loop_header
      %s23 = sphi 0, %s27
      %p24 = scmp.ge.s32.totalorder %s23, 4
      %s33 = sphi 0, %s35
      %s36 = sphi 0, %s33
      %s37 = sphi 0, %s36
      %s53 = sphi 0, %s37
      %s57 = sphi 0, %s57
      %s59 = sphi 0, %s57
      %s60 = sphi 0, %s59
      %s74 = sphi 0, %s60
      %s78 = sphi 0, %s78
      %s80 = sphi 0, %s78
      %s81 = sphi 0, %s80
      %s95 = sphi 0, %s81
      %s99 = sphi 0, %s99
      %s101 = sphi 0, %s99
      %s102 = sphi 0, %s101
      %s116 = sphi 0, %s102
      %s120 = sphi 0, %s120
      %s122 = sphi 0, %s120
      %s123 = sphi 0, %s122
      %s137 = sphi 0, %s123
      %s141 = sphi 0, %s141
      %s143 = sphi 0, %s141
      %s144 = sphi 0, %s143
      %s158 = sphi 0, %s144
      %s162 = sphi 0, %s162
      %s164 = sphi 0, %s162
      %s165 = sphi 0, %s164
      %s179 = sphi 0, %s165
      %s183 = sphi 0, %s183
      %s185 = sphi 0, %s183
      %s186 = sphi 0, %s185
      %s200 = sphi 0, %s186
      %s204 = sphi 0, %s204
      %s206 = sphi 0, %s204
      %s207 = sphi 0, %s206
      %s221 = sphi 0, %s207
      %s225 = sphi 0, %s225
      %s227 = sphi 0, %s225
      %s228 = sphi 0, %s227
      %s242 = sphi 0, %s228
      %s246 = sphi 0, %s246
      %s248 = sphi 0, %s246
      %s249 = sphi 0, %s248
      %s263 = sphi 0, %s249
      %s267 = sphi 0, %s267
      %s269 = sphi 0, %s267
      %s270 = sphi 0, %s269
      %s284 = sphi 0, %s270
      %s288 = sphi 0, %s288
      %s290 = sphi 0, %s288
      %s291 = sphi 0, %s290
      %s305 = sphi 0, %s291
      %s309 = sphi 0, %s309
      %s311 = sphi 0, %s309
      %s312 = sphi 0, %s311
      %s326 = sphi 0, %s312
      %s332 = sphi 0, %s334
      %s335 = sphi 0, %s332
      %s336 = sphi 0, %s335
      %s352 = sphi 0, %s336
    $region4: #{qnet_forward.1} parent=1 // loop_header_branch
      %26 = sbr.rel (%p24) target = $region8
    $region5: #{qnet_forward.1} parent=1 // loop_body
      %s28 = ssub.s32 %s23, 1
      %s29 = ssub.s32 %s23, 2
      %s30 = sadd.s32 %s23, 1
      %s31 = ssub.s32 %s23, %s30
      %p32 = scmp.eq.s32.totalorder %s31, 0
      %s34 = sadd.s32 %s33, 1
      %s35 = scalar_select %p32, %s33, %s34
      %p38 = pneg %p32
      %p39 = scmp.eq.s32.totalorder %s23, 1
      %p40 = por %p38, %p39
      %p41 = scmp.ne.s32.totalorder %s33, %s36
      %p42 = scmp.eq.s32.totalorder %s23, 0
      %p43 = por %p41, %p42
      %p44 = scmp.ne.s32.totalorder %s33, %s36
      %p45 = scmp.eq.s32.totalorder %s28, 1
      %p46 = por %p44, %p45
      %p47 = scmp.ne.s32.totalorder %s36, %s37
      %p48 = scmp.eq.s32.totalorder %s28, 0
      %p49 = por %p47, %p48
      %p50 = scmp.ne.s32.totalorder %s36, %s37
      %p51 = scmp.eq.s32.totalorder %s29, 1
      %p52 = por %p50, %p51
      %p54 = scmp.ne.s32.totalorder %s37, %s53
      %p55 = scmp.eq.s32.totalorder %s29, 0
      %p56 = por %p54, %p55
      %s58 = sadd.s32 %s57, 1
      %p61 = scmp.eq.s32.totalorder %s23, 1
      %p62 = scmp.ne.s32.totalorder %s57, %s59
      %p63 = scmp.eq.s32.totalorder %s23, 0
      %p64 = por %p62, %p63
      %p65 = scmp.ne.s32.totalorder %s57, %s59
      %p66 = scmp.eq.s32.totalorder %s28, 1
      %p67 = por %p65, %p66
      %p68 = scmp.ne.s32.totalorder %s59, %s60
      %p69 = scmp.eq.s32.totalorder %s28, 0
      %p70 = por %p68, %p69
      %p71 = scmp.ne.s32.totalorder %s59, %s60
      %p72 = scmp.eq.s32.totalorder %s29, 1
      %p73 = por %p71, %p72
      %p75 = scmp.ne.s32.totalorder %s60, %s74
      %p76 = scmp.eq.s32.totalorder %s29, 0
      %p77 = por %p75, %p76
      %s79 = sadd.s32 %s78, 1
      %p82 = scmp.eq.s32.totalorder %s23, 1
      %p83 = scmp.ne.s32.totalorder %s78, %s80
      %p84 = scmp.eq.s32.totalorder %s23, 0
      %p85 = por %p83, %p84
      %p86 = scmp.ne.s32.totalorder %s78, %s80
      %p87 = scmp.eq.s32.totalorder %s28, 1
      %p88 = por %p86, %p87
      %p89 = scmp.ne.s32.totalorder %s80, %s81
      %p90 = scmp.eq.s32.totalorder %s28, 0
      %p91 = por %p89, %p90
      %p92 = scmp.ne.s32.totalorder %s80, %s81
      %p93 = scmp.eq.s32.totalorder %s29, 1
      %p94 = por %p92, %p93
      %p96 = scmp.ne.s32.totalorder %s81, %s95
      %p97 = scmp.eq.s32.totalorder %s29, 0
      %p98 = por %p96, %p97
      %s100 = sadd.s32 %s99, 1
      %p103 = scmp.eq.s32.totalorder %s23, 1
      %p104 = scmp.ne.s32.totalorder %s99, %s101
      %p105 = scmp.eq.s32.totalorder %s23, 0
      %p106 = por %p104, %p105
      %p107 = scmp.ne.s32.totalorder %s99, %s101
      %p108 = scmp.eq.s32.totalorder %s28, 1
      %p109 = por %p107, %p108
      %p110 = scmp.ne.s32.totalorder %s101, %s102
      %p111 = scmp.eq.s32.totalorder %s28, 0
      %p112 = por %p110, %p111
      %p113 = scmp.ne.s32.totalorder %s101, %s102
      %p114 = scmp.eq.s32.totalorder %s29, 1
      %p115 = por %p113, %p114
      %p117 = scmp.ne.s32.totalorder %s102, %s116
      %p118 = scmp.eq.s32.totalorder %s29, 0
      %p119 = por %p117, %p118
      %s121 = sadd.s32 %s120, 1
      %p124 = scmp.eq.s32.totalorder %s23, 1
      %p125 = scmp.ne.s32.totalorder %s120, %s122
      %p126 = scmp.eq.s32.totalorder %s23, 0
      %p127 = por %p125, %p126
      %p128 = scmp.ne.s32.totalorder %s120, %s122
      %p129 = scmp.eq.s32.totalorder %s28, 1
      %p130 = por %p128, %p129
      %p131 = scmp.ne.s32.totalorder %s122, %s123
      %p132 = scmp.eq.s32.totalorder %s28, 0
      %p133 = por %p131, %p132
      %p134 = scmp.ne.s32.totalorder %s122, %s123
      %p135 = scmp.eq.s32.totalorder %s29, 1
      %p136 = por %p134, %p135
      %p138 = scmp.ne.s32.totalorder %s123, %s137
      %p139 = scmp.eq.s32.totalorder %s29, 0
      %p140 = por %p138, %p139
      %s142 = sadd.s32 %s141, 1
      %p145 = scmp.eq.s32.totalorder %s23, 1
      %p146 = scmp.ne.s32.totalorder %s141, %s143
      %p147 = scmp.eq.s32.totalorder %s23, 0
      %p148 = por %p146, %p147
      %p149 = scmp.ne.s32.totalorder %s141, %s143
      %p150 = scmp.eq.s32.totalorder %s28, 1
      %p151 = por %p149, %p150
      %p152 = scmp.ne.s32.totalorder %s143, %s144
      %p153 = scmp.eq.s32.totalorder %s28, 0
      %p154 = por %p152, %p153
      %p155 = scmp.ne.s32.totalorder %s143, %s144
      %p156 = scmp.eq.s32.totalorder %s29, 1
      %p157 = por %p155, %p156
      %p159 = scmp.ne.s32.totalorder %s144, %s158
      %p160 = scmp.eq.s32.totalorder %s29, 0
      %p161 = por %p159, %p160
      %s163 = sadd.s32 %s162, 1
      %p166 = scmp.eq.s32.totalorder %s23, 1
      %p167 = scmp.ne.s32.totalorder %s162, %s164
      %p168 = scmp.eq.s32.totalorder %s23, 0
      %p169 = por %p167, %p168
      %p170 = scmp.ne.s32.totalorder %s162, %s164
      %p171 = scmp.eq.s32.totalorder %s28, 1
      %p172 = por %p170, %p171
      %p173 = scmp.ne.s32.totalorder %s164, %s165
      %p174 = scmp.eq.s32.totalorder %s28, 0
      %p175 = por %p173, %p174
      %p176 = scmp.ne.s32.totalorder %s164, %s165
      %p177 = scmp.eq.s32.totalorder %s29, 1
      %p178 = por %p176, %p177
      %p180 = scmp.ne.s32.totalorder %s165, %s179
      %p181 = scmp.eq.s32.totalorder %s29, 0
      %p182 = por %p180, %p181
      %s184 = sadd.s32 %s183, 1
      %p187 = scmp.eq.s32.totalorder %s23, 1
      %p188 = scmp.ne.s32.totalorder %s183, %s185
      %p189 = scmp.eq.s32.totalorder %s23, 0
      %p190 = por %p188, %p189
      %p191 = scmp.ne.s32.totalorder %s183, %s185
      %p192 = scmp.eq.s32.totalorder %s28, 1
      %p193 = por %p191, %p192
      %p194 = scmp.ne.s32.totalorder %s185, %s186
      %p195 = scmp.eq.s32.totalorder %s28, 0
      %p196 = por %p194, %p195
      %p197 = scmp.ne.s32.totalorder %s185, %s186
      %p198 = scmp.eq.s32.totalorder %s29, 1
      %p199 = por %p197, %p198
      %p201 = scmp.ne.s32.totalorder %s186, %s200
      %p202 = scmp.eq.s32.totalorder %s29, 0
      %p203 = por %p201, %p202
      %s205 = sadd.s32 %s204, 1
      %p208 = scmp.eq.s32.totalorder %s23, 1
      %p209 = scmp.ne.s32.totalorder %s204, %s206
      %p210 = scmp.eq.s32.totalorder %s23, 0
      %p211 = por %p209, %p210
      %p212 = scmp.ne.s32.totalorder %s204, %s206
      %p213 = scmp.eq.s32.totalorder %s28, 1
      %p214 = por %p212, %p213
      %p215 = scmp.ne.s32.totalorder %s206, %s207
      %p216 = scmp.eq.s32.totalorder %s28, 0
      %p217 = por %p215, %p216
      %p218 = scmp.ne.s32.totalorder %s206, %s207
      %p219 = scmp.eq.s32.totalorder %s29, 1
      %p220 = por %p218, %p219
      %p222 = scmp.ne.s32.totalorder %s207, %s221
      %p223 = scmp.eq.s32.totalorder %s29, 0
      %p224 = por %p222, %p223
      %s226 = sadd.s32 %s225, 1
      %p229 = scmp.eq.s32.totalorder %s23, 1
      %p230 = scmp.ne.s32.totalorder %s225, %s227
      %p231 = scmp.eq.s32.totalorder %s23, 0
      %p232 = por %p230, %p231
      %p233 = scmp.ne.s32.totalorder %s225, %s227
      %p234 = scmp.eq.s32.totalorder %s28, 1
      %p235 = por %p233, %p234
      %p236 = scmp.ne.s32.totalorder %s227, %s228
      %p237 = scmp.eq.s32.totalorder %s28, 0
      %p238 = por %p236, %p237
      %p239 = scmp.ne.s32.totalorder %s227, %s228
      %p240 = scmp.eq.s32.totalorder %s29, 1
      %p241 = por %p239, %p240
      %p243 = scmp.ne.s32.totalorder %s228, %s242
      %p244 = scmp.eq.s32.totalorder %s29, 0
      %p245 = por %p243, %p244
      %s247 = sadd.s32 %s246, 1
      %p250 = scmp.eq.s32.totalorder %s23, 1
      %p251 = scmp.ne.s32.totalorder %s246, %s248
      %p252 = scmp.eq.s32.totalorder %s23, 0
      %p253 = por %p251, %p252
      %p254 = scmp.ne.s32.totalorder %s246, %s248
      %p255 = scmp.eq.s32.totalorder %s28, 1
      %p256 = por %p254, %p255
      %p257 = scmp.ne.s32.totalorder %s248, %s249
      %p258 = scmp.eq.s32.totalorder %s28, 0
      %p259 = por %p257, %p258
      %p260 = scmp.ne.s32.totalorder %s248, %s249
      %p261 = scmp.eq.s32.totalorder %s29, 1
      %p262 = por %p260, %p261
      %p264 = scmp.ne.s32.totalorder %s249, %s263
      %p265 = scmp.eq.s32.totalorder %s29, 0
      %p266 = por %p264, %p265
      %s268 = sadd.s32 %s267, 1
      %p271 = scmp.eq.s32.totalorder %s23, 1
      %p272 = scmp.ne.s32.totalorder %s267, %s269
      %p273 = scmp.eq.s32.totalorder %s23, 0
      %p274 = por %p272, %p273
      %p275 = scmp.ne.s32.totalorder %s267, %s269
      %p276 = scmp.eq.s32.totalorder %s28, 1
      %p277 = por %p275, %p276
      %p278 = scmp.ne.s32.totalorder %s269, %s270
      %p279 = scmp.eq.s32.totalorder %s28, 0
      %p280 = por %p278, %p279
      %p281 = scmp.ne.s32.totalorder %s269, %s270
      %p282 = scmp.eq.s32.totalorder %s29, 1
      %p283 = por %p281, %p282
      %p285 = scmp.ne.s32.totalorder %s270, %s284
      %p286 = scmp.eq.s32.totalorder %s29, 0
      %p287 = por %p285, %p286
      %s289 = sadd.s32 %s288, 1
      %p292 = scmp.eq.s32.totalorder %s23, 1
      %p293 = scmp.ne.s32.totalorder %s288, %s290
      %p294 = scmp.eq.s32.totalorder %s23, 0
      %p295 = por %p293, %p294
      %p296 = scmp.ne.s32.totalorder %s288, %s290
      %p297 = scmp.eq.s32.totalorder %s28, 1
      %p298 = por %p296, %p297
      %p299 = scmp.ne.s32.totalorder %s290, %s291
      %p300 = scmp.eq.s32.totalorder %s28, 0
      %p301 = por %p299, %p300
      %p302 = scmp.ne.s32.totalorder %s290, %s291
      %p303 = scmp.eq.s32.totalorder %s29, 1
      %p304 = por %p302, %p303
      %p306 = scmp.ne.s32.totalorder %s291, %s305
      %p307 = scmp.eq.s32.totalorder %s29, 0
      %p308 = por %p306, %p307
      %s310 = sadd.s32 %s309, 1
      %p313 = scmp.eq.s32.totalorder %s23, 1
      %p314 = scmp.ne.s32.totalorder %s309, %s311
      %p315 = scmp.eq.s32.totalorder %s23, 0
      %p316 = por %p314, %p315
      %p317 = scmp.ne.s32.totalorder %s309, %s311
      %p318 = scmp.eq.s32.totalorder %s28, 1
      %p319 = por %p317, %p318
      %p320 = scmp.ne.s32.totalorder %s311, %s312
      %p321 = scmp.eq.s32.totalorder %s28, 0
      %p322 = por %p320, %p321
      %p323 = scmp.ne.s32.totalorder %s311, %s312
      %p324 = scmp.eq.s32.totalorder %s29, 1
      %p325 = por %p323, %p324
      %p327 = scmp.ne.s32.totalorder %s312, %s326
      %p328 = scmp.eq.s32.totalorder %s29, 0
      %p329 = por %p327, %p328
      %s330 = ssub.s32 %s23, %s30
      %p331 = scmp.eq.s32.totalorder %s330, 0
      %s333 = sadd.s32 %s332, 1
      %s334 = scalar_select %p331, %s332, %s333
      %p337 = pneg %p331
      %p338 = scmp.eq.s32.totalorder %s23, 1
      %p339 = por %p337, %p338
      %p340 = scmp.ne.s32.totalorder %s332, %s335
      %p341 = scmp.eq.s32.totalorder %s23, 0
      %p342 = por %p340, %p341
      %p343 = scmp.ne.s32.totalorder %s332, %s335
      %p344 = scmp.eq.s32.totalorder %s28, 1
      %p345 = por %p343, %p344
      %p346 = scmp.ne.s32.totalorder %s335, %s336
      %p347 = scmp.eq.s32.totalorder %s28, 0
      %p348 = por %p346, %p347
      %p349 = scmp.ne.s32.totalorder %s335, %s336
      %p350 = scmp.eq.s32.totalorder %s29, 1
      %p351 = por %p349, %p350
      %p353 = scmp.ne.s32.totalorder %s336, %s352
      %p354 = scmp.eq.s32.totalorder %s29, 0
      %p355 = por %p353, %p354
      %p356 = scmp.le.s32.totalorder 1, %s23
      %p357 = scmp.lt.s32.totalorder %s23, 3
      %p358 = pnand %p356, %p357
      %p359 = pneg %p358
      // Predicated region
      $region9: #{qnet_forward.1} parent=5 // pred_check
        _
      $region10: #{qnet_forward.1} parent=5 // pred_check_branch
        %361 = sbr.rel (%p358) target = $region12
      $region11: #{qnet_forward.1} parent=5 // pred_region
        %s362 = ssub.s32 %s23, 1
        // Predicated region
        $region13: #{qnet_forward.1} parent=11 // pred_check
          %p363 = pneg %p70
        $region14: #{qnet_forward.1} parent=11 // pred_check_branch
          %365 = sbr.rel (%p363) target = $region16
        $region15: #{qnet_forward.1} parent=11 // pred_region
          _
        $region16: #{qnet_forward.1} parent=11 // pred_fallthru
          _
        // Predicated region
        $region17: #{qnet_forward.1} parent=11 // pred_check
          %p366 = pneg %p91
        $region18: #{qnet_forward.1} parent=11 // pred_check_branch
          %368 = sbr.rel (%p366) target = $region20
        $region19: #{qnet_forward.1} parent=11 // pred_region
          _
        $region20: #{qnet_forward.1} parent=11 // pred_fallthru
          _
        // Predicated region
        $region21: #{qnet_forward.1} parent=11 // pred_check
          %p369 = pneg %p112
        $region22: #{qnet_forward.1} parent=11 // pred_check_branch
          %371 = sbr.rel (%p369) target = $region24
        $region23: #{qnet_forward.1} parent=11 // pred_region
          _
        $region24: #{qnet_forward.1} parent=11 // pred_fallthru
          _
        // Predicated region
        $region25: #{qnet_forward.1} parent=11 // pred_check
          %p372 = pneg %p133
        $region26: #{qnet_forward.1} parent=11 // pred_check_branch
          %374 = sbr.rel (%p372) target = $region28
        $region27: #{qnet_forward.1} parent=11 // pred_region
          _
        $region28: #{qnet_forward.1} parent=11 // pred_fallthru
          _
        // Predicated region
        $region29: #{qnet_forward.1} parent=11 // pred_check
          %p375 = pneg %p154
        $region30: #{qnet_forward.1} parent=11 // pred_check_branch
          %377 = sbr.rel (%p375) target = $region32
        $region31: #{qnet_forward.1} parent=11 // pred_region
          _
        $region32: #{qnet_forward.1} parent=11 // pred_fallthru
          _
        // Predicated region
        $region33: #{qnet_forward.1} parent=11 // pred_check
          %p378 = pneg %p175
        $region34: #{qnet_forward.1} parent=11 // pred_check_branch
          %380 = sbr.rel (%p378) target = $region36
        $region35: #{qnet_forward.1} parent=11 // pred_region
          _
        $region36: #{qnet_forward.1} parent=11 // pred_fallthru
          _
        // Predicated region
        $region37: #{qnet_forward.1} parent=11 // pred_check
          %p381 = pneg %p196
        $region38: #{qnet_forward.1} parent=11 // pred_check_branch
          %383 = sbr.rel (%p381) target = $region40
        $region39: #{qnet_forward.1} parent=11 // pred_region
          _
        $region40: #{qnet_forward.1} parent=11 // pred_fallthru
          _
        // Predicated region
        $region41: #{qnet_forward.1} parent=11 // pred_check
          %p384 = pneg %p217
        $region42: #{qnet_forward.1} parent=11 // pred_check_branch
          %386 = sbr.rel (%p384) target = $region44
        $region43: #{qnet_forward.1} parent=11 // pred_region
          _
        $region44: #{qnet_forward.1} parent=11 // pred_fallthru
          _
        // Predicated region
        $region45: #{qnet_forward.1} parent=11 // pred_check
          %p387 = pneg %p238
        $region46: #{qnet_forward.1} parent=11 // pred_check_branch
          %389 = sbr.rel (%p387) target = $region48
        $region47: #{qnet_forward.1} parent=11 // pred_region
          _
        $region48: #{qnet_forward.1} parent=11 // pred_fallthru
          _
        // Predicated region
        $region49: #{qnet_forward.1} parent=11 // pred_check
          %p390 = pneg %p259
        $region50: #{qnet_forward.1} parent=11 // pred_check_branch
          %392 = sbr.rel (%p390) target = $region52
        $region51: #{qnet_forward.1} parent=11 // pred_region
          _
        $region52: #{qnet_forward.1} parent=11 // pred_fallthru
          _
        // Predicated region
        $region53: #{qnet_forward.1} parent=11 // pred_check
          %p393 = pneg %p280
        $region54: #{qnet_forward.1} parent=11 // pred_check_branch
          %395 = sbr.rel (%p393) target = $region56
        $region55: #{qnet_forward.1} parent=11 // pred_region
          _
        $region56: #{qnet_forward.1} parent=11 // pred_fallthru
          _
        // Predicated region
        $region57: #{qnet_forward.1} parent=11 // pred_check
          %p396 = pneg %p301
        $region58: #{qnet_forward.1} parent=11 // pred_check_branch
          %398 = sbr.rel (%p396) target = $region60
        $region59: #{qnet_forward.1} parent=11 // pred_region
          _
        $region60: #{qnet_forward.1} parent=11 // pred_fallthru
          _
        // Predicated region
        $region61: #{qnet_forward.1} parent=11 // pred_check
          %p399 = pneg %p322
        $region62: #{qnet_forward.1} parent=11 // pred_check_branch
          %401 = sbr.rel (%p399) target = $region64
        $region63: #{qnet_forward.1} parent=11 // pred_region
          _
        $region64: #{qnet_forward.1} parent=11 // pred_fallthru
          _
      $region12: #{qnet_forward.1} parent=5 // pred_fallthru
        _
      %p402 = scmp.lt.s32.totalorder %s23, 2
      // Predicated region
      $region65: #{qnet_forward.1} parent=5 // pred_check
        %p403 = pneg %p402
      $region66: #{qnet_forward.1} parent=5 // pred_check_branch
        %405 = sbr.rel (%p403) target = $region68
      $region67: #{qnet_forward.1} parent=5 // pred_region
        // Predicated region
        $region69: #{qnet_forward.1} parent=67 // pred_check
          %p406 = pneg %p43
        $region70: #{qnet_forward.1} parent=67 // pred_check_branch
          %408 = sbr.rel (%p406) target = $region72
        $region71: #{qnet_forward.1} parent=67 // pred_region
          %s409 = smul.u32 41, %s23
          %p410 = scmp.lt.s32.totalorder %s409, 81
          %s411 = scalar_select %p410, %s409, 81
          %s412 = smul.addr %s411, 4
          %s413 = scalar_lea.vmem %s0, %s412
          %s414 = smul.u32 41, %s23
        $region72: #{qnet_forward.1} parent=67 // pred_fallthru
          _
      $region68: #{qnet_forward.1} parent=5 // pred_fallthru
        _
      %p415 = scmp.le.s32.totalorder 1, %s23
      %p416 = scmp.lt.s32.totalorder %s23, 3
      %p417 = pnand %p415, %p416
      %p418 = pneg %p417
      // Predicated region
      $region73: #{qnet_forward.1} parent=5 // pred_check
        _
      $region74: #{qnet_forward.1} parent=5 // pred_check_branch
        %420 = sbr.rel (%p417) target = $region76
      $region75: #{qnet_forward.1} parent=5 // pred_region
        %s421 = ssub.s32 %s23, 1
        %s422 = smul.u32 41, %s28
        %p423 = scmp.lt.s32.totalorder %s422, 81
        %s424 = scalar_select %p423, %s422, 81
        %s425 = smul.addr %s424, 4
        %s426 = scalar_lea.vmem %s0, %s425
        %p427 = pneg %p49
        %p428 = pneg %p46
        %p429 = pneg %p70
        %p430 = pneg %p67
        %p431 = pneg %p91
        %p432 = pneg %p88
        %p433 = pneg %p112
        %p434 = pneg %p109
        %p435 = pneg %p133
        %p436 = pneg %p130
        %p437 = pneg %p154
        %p438 = pneg %p151
        %p439 = pneg %p175
        %p440 = pneg %p172
        %p441 = pneg %p196
        %p442 = pneg %p193
        %p443 = pneg %p217
        %p444 = pneg %p214
        %p445 = pneg %p238
        %p446 = pneg %p235
        %p447 = pneg %p259
        %p448 = pneg %p256
        %p449 = pneg %p280
        %p450 = pneg %p277
        %p451 = pneg %p301
        %p452 = pneg %p298
        %p453 = pneg %p322
        %p454 = pneg %p319
        %p455 = pneg %p348
        %p456 = pneg %p345
        %s457 = sand.u32 %s335, 1
        %s458 = scalar_lea.sflag [#allocation5], %s457
        %s459 = sand.u32 %s335, 1
        %s460 = scalar_lea.vmem [#allocation4], %s459
        %s461 = smul.u32 41, %s28
        %p462 = scmp.lt.s32.totalorder %s461, 81
        %s463 = scalar_select %p462, %s461, 81
        %s464 = smul.addr %s463, 4
        %s465 = scalar_lea.vmem %s0, %s464
        %s466 = smul.u32 41, %s28
        %v468 = vld [vmem:[%s1] sm:$0xff]
        %v469 = vld [vmem:[%s1 + $0x8] sm:$0xff]
        %v470 = vld [vmem:[%s1 + $0x10] sm:$0xff]
        %v471 = vld [vmem:[%s1 + $0x18] sm:$0xff]
        %v472 = vld [vmem:[%s1 + $0x20] sm:$0xff]
        %v473 = vld [vmem:[%s1 + $0x28] sm:$0xff]
        %v474 = vld [vmem:[%s1 + $0x30] sm:$0xff]
        %v475 = vld [vmem:[%s1 + $0x38] sm:$0xff]
        %v476 = vld [vmem:[%s1 + $0x40] sm:$0xff]
        %v477 = vld [vmem:[%s1 + $0x48] sm:$0xff]
        %v478 = vld [vmem:[%s1 + $0x50] sm:$0xff]
        %v479 = vld [vmem:[%s1 + $0x58] sm:$0xff]
        %v480 = vld [vmem:[%s1 + $0x60] sm:$0xff]
        %v481 = vld [vmem:[%s1 + $0x68] sm:$0xff]
        %v482 = vld [vmem:[%s1 + $0x70] sm:$0xff]
        %v483 = vld [vmem:[%s1 + $0x78] sm:$0xff]
        %v484 = vld [vmem:[%s1 + $0x80] sm:$0xff]
        %v485 = vld [vmem:[%s1 + $0x88] sm:$0xff]
        %v486 = vld [vmem:[%s1 + $0x90] sm:$0xff]
        %v487 = vld [vmem:[%s1 + $0x98] sm:$0xff]
        %v488 = vld [vmem:[%s1 + $0xa0] sm:$0xff]
        %v489 = vld [vmem:[%s1 + $0xa8] sm:$0xff]
        %v490 = vld [vmem:[%s1 + $0xb0] sm:$0xff]
        %v491 = vld [vmem:[%s1 + $0xb8] sm:$0xff]
        %v492 = vld [vmem:[%s1 + $0xc0] sm:$0xff]
        %v493 = vld [vmem:[%s1 + $0xc8] sm:$0xff]
        %v494 = vld [vmem:[%s1 + $0xd0] sm:$0xff]
        %v495 = vld [vmem:[%s1 + $0xd8] sm:$0xff]
        %v496 = vld [vmem:[%s1 + $0xe0] sm:$0xff]
        %v497 = vld [vmem:[%s1 + $0xe8] sm:$0xff]
        %v498 = vld [vmem:[%s1 + $0xf0] sm:$0xff]
        %v499 = vld [vmem:[%s1 + $0xf8] sm:$0xff]
        %v500 = vld [vmem:[%s1 + $0x100] sm:$0xff]
        %v501 = vld [vmem:[%s1 + $0x108] sm:$0xff]
        %v502 = vld [vmem:[%s1 + $0x110] sm:$0xff]
        %v503 = vld [vmem:[%s1 + $0x118] sm:$0xff]
        %v504 = vld [vmem:[%s1 + $0x120] sm:$0xff]
        %v505 = vld [vmem:[%s1 + $0x128] sm:$0xff]
        %v506 = vld [vmem:[%s1 + $0x130] sm:$0xff]
        %v507 = vld [vmem:[%s1 + $0x138] sm:$0xff]
        %v508 = vld [vmem:[%s1 + $0x140] sm:$0xff]
        %vm509 = vcmp.gt.f32.partialorder %v468, 0.5
        %vm510 = vcmp.gt.f32.partialorder %v469, 0.5
        %vm511 = vcmp.gt.f32.partialorder %v470, 0.5
        %vm512 = vcmp.gt.f32.partialorder %v471, 0.5
        %vm513 = vcmp.gt.f32.partialorder %v472, 0.5
        %vm514 = vcmp.gt.f32.partialorder %v473, 0.5
        %vm515 = vcmp.gt.f32.partialorder %v474, 0.5
        %vm516 = vcmp.gt.f32.partialorder %v475, 0.5
        %vm517 = vcmp.gt.f32.partialorder %v476, 0.5
        %vm518 = vcmp.gt.f32.partialorder %v477, 0.5
        %vm519 = vcmp.gt.f32.partialorder %v478, 0.5
        %vm520 = vcmp.gt.f32.partialorder %v479, 0.5
        %vm521 = vcmp.gt.f32.partialorder %v480, 0.5
        %vm522 = vcmp.gt.f32.partialorder %v481, 0.5
        %vm523 = vcmp.gt.f32.partialorder %v482, 0.5
        %vm524 = vcmp.gt.f32.partialorder %v483, 0.5
        %vm525 = vcmp.gt.f32.partialorder %v484, 0.5
        %vm526 = vcmp.gt.f32.partialorder %v485, 0.5
        %vm527 = vcmp.gt.f32.partialorder %v486, 0.5
        %vm528 = vcmp.gt.f32.partialorder %v487, 0.5
        %vm529 = vcmp.gt.f32.partialorder %v488, 0.5
        %vm530 = vcmp.gt.f32.partialorder %v489, 0.5
        %vm531 = vcmp.gt.f32.partialorder %v490, 0.5
        %vm532 = vcmp.gt.f32.partialorder %v491, 0.5
        %vm533 = vcmp.gt.f32.partialorder %v492, 0.5
        %vm534 = vcmp.gt.f32.partialorder %v493, 0.5
        %vm535 = vcmp.gt.f32.partialorder %v494, 0.5
        %vm536 = vcmp.gt.f32.partialorder %v495, 0.5
        %vm537 = vcmp.gt.f32.partialorder %v496, 0.5
        %vm538 = vcmp.gt.f32.partialorder %v497, 0.5
        %vm539 = vcmp.gt.f32.partialorder %v498, 0.5
        %vm540 = vcmp.gt.f32.partialorder %v499, 0.5
        %vm541 = vcmp.gt.f32.partialorder %v500, 0.5
        %vm542 = vcmp.gt.f32.partialorder %v501, 0.5
        %vm543 = vcmp.gt.f32.partialorder %v502, 0.5
        %vm544 = vcmp.gt.f32.partialorder %v503, 0.5
        %vm545 = vcmp.gt.f32.partialorder %v504, 0.5
        %vm546 = vcmp.gt.f32.partialorder %v505, 0.5
        %vm547 = vcmp.gt.f32.partialorder %v506, 0.5
        %vm548 = vcmp.gt.f32.partialorder %v507, 0.5
        %vm549 = vcmp.gt.f32.partialorder %v508, 0.5
        %v550 = vld [vmem:[%s465] sm:$0xf]
        %v551 = vld [vmem:[%s465 + $0x4] sm:$0xf]
        %v552 = vld [vmem:[%s465 + $0x8] sm:$0xf]
        %v553 = vld [vmem:[%s465 + $0xc] sm:$0xf]
        %v554 = vld [vmem:[%s465 + $0x10] sm:$0xf]
        %v555 = vld [vmem:[%s465 + $0x14] sm:$0xf]
        %v556 = vld [vmem:[%s465 + $0x18] sm:$0xf]
        %v557 = vld [vmem:[%s465 + $0x1c] sm:$0xf]
        %v558 = vld [vmem:[%s465 + $0x20] sm:$0xf]
        %v559 = vld [vmem:[%s465 + $0x24] sm:$0xf]
        %v560 = vld [vmem:[%s465 + $0x28] sm:$0xf]
        %v561 = vld [vmem:[%s465 + $0x2c] sm:$0xf]
        %v562 = vld [vmem:[%s465 + $0x30] sm:$0xf]
        %v563 = vld [vmem:[%s465 + $0x34] sm:$0xf]
        %v564 = vld [vmem:[%s465 + $0x38] sm:$0xf]
        %v565 = vld [vmem:[%s465 + $0x3c] sm:$0xf]
        %v566 = vld [vmem:[%s465 + $0x40] sm:$0xf]
        %v567 = vld [vmem:[%s465 + $0x44] sm:$0xf]
        %v568 = vld [vmem:[%s465 + $0x48] sm:$0xf]
        %v569 = vld [vmem:[%s465 + $0x4c] sm:$0xf]
        %v570 = vld [vmem:[%s465 + $0x50] sm:$0xf]
        %v571 = vld [vmem:[%s465 + $0x54] sm:$0xf]
        %v572 = vld [vmem:[%s465 + $0x58] sm:$0xf]
        %v573 = vld [vmem:[%s465 + $0x5c] sm:$0xf]
        %v574 = vld [vmem:[%s465 + $0x60] sm:$0xf]
        %v575 = vld [vmem:[%s465 + $0x64] sm:$0xf]
        %v576 = vld [vmem:[%s465 + $0x68] sm:$0xf]
        %v577 = vld [vmem:[%s465 + $0x6c] sm:$0xf]
        %v578 = vld [vmem:[%s465 + $0x70] sm:$0xf]
        %v579 = vld [vmem:[%s465 + $0x74] sm:$0xf]
        %v580 = vld [vmem:[%s465 + $0x78] sm:$0xf]
        %v581 = vld [vmem:[%s465 + $0x7c] sm:$0xf]
        %v582 = vld [vmem:[%s465 + $0x80] sm:$0xf]
        %v583 = vld [vmem:[%s465 + $0x84] sm:$0xf]
        %v584 = vld [vmem:[%s465 + $0x88] sm:$0xf]
        %v585 = vld [vmem:[%s465 + $0x8c] sm:$0xf]
        %v586 = vld [vmem:[%s465 + $0x90] sm:$0xf]
        %v587 = vld [vmem:[%s465 + $0x94] sm:$0xf]
        %v588 = vld [vmem:[%s465 + $0x98] sm:$0xf]
        %v589 = vld [vmem:[%s465 + $0x9c] sm:$0xf]
        %v590 = vld [vmem:[%s465 + $0xa0] sm:$0xf]
        %v591 = vld [vmem:[%s2] sm:$0xf]
        %v592 = vld [vmem:[%s2 + $0x4] sm:$0xf]
        %v593 = vld [vmem:[%s2 + $0x8] sm:$0xf]
        %v594 = vld [vmem:[%s2 + $0xc] sm:$0xf]
        %v595 = vld [vmem:[%s2 + $0x10] sm:$0x3]
        %v596 = vld [vmem:[%s3] sm:$0x1]
        %v598 = vperm.slane %v596, 0
        %v641 = vunpack.c.l.b16 %v550
        %v642 = vunpack.c.l.b16 %v551
        %v643 = vunpack.c.l.b16 %v552
        %v644 = vunpack.c.l.b16 %v553
        %v645 = vunpack.c.l.b16 %v554
        %v646 = vunpack.c.l.b16 %v555
        %v647 = vunpack.c.l.b16 %v556
        %v648 = vunpack.c.l.b16 %v557
        %v649 = vunpack.c.l.b16 %v558
        %v650 = vunpack.c.l.b16 %v559
        %v651 = vunpack.c.l.b16 %v560
        %v652 = vunpack.c.l.b16 %v561
        %v653 = vunpack.c.l.b16 %v562
        %v654 = vunpack.c.l.b16 %v563
        %v655 = vunpack.c.l.b16 %v564
        %v656 = vunpack.c.l.b16 %v565
        %v657 = vunpack.c.l.b16 %v566
        %v658 = vunpack.c.l.b16 %v567
        %v659 = vunpack.c.l.b16 %v568
        %v660 = vunpack.c.l.b16 %v569
        %v661 = vunpack.c.l.b16 %v570
        %v662 = vunpack.c.l.b16 %v571
        %v663 = vunpack.c.l.b16 %v572
        %v664 = vunpack.c.l.b16 %v573
        %v665 = vunpack.c.l.b16 %v574
        %v666 = vunpack.c.l.b16 %v575
        %v667 = vunpack.c.l.b16 %v576
        %v668 = vunpack.c.l.b16 %v577
        %v669 = vunpack.c.l.b16 %v578
        %v670 = vunpack.c.l.b16 %v579
        %v671 = vunpack.c.l.b16 %v580
        %v672 = vunpack.c.l.b16 %v581
        %v673 = vunpack.c.l.b16 %v582
        %v674 = vunpack.c.l.b16 %v583
        %v675 = vunpack.c.l.b16 %v584
        %v676 = vunpack.c.l.b16 %v585
        %v677 = vunpack.c.l.b16 %v586
        %v678 = vunpack.c.l.b16 %v587
        %v679 = vunpack.c.l.b16 %v588
        %v680 = vunpack.c.l.b16 %v589
        %v681 = vunpack.c.l.b16 %v590
        %v682 = vpack.c.b16 %v642, %v641
        %v683 = vpack.c.b16 %v644, %v643
        %v684 = vpack.c.b16 %v646, %v645
        %v685 = vpack.c.b16 %v648, %v647
        %v686 = vpack.c.b16 %v650, %v649
        %v687 = vpack.c.b16 %v652, %v651
        %v688 = vpack.c.b16 %v654, %v653
        %v689 = vpack.c.b16 %v656, %v655
        %v690 = vpack.c.b16 %v658, %v657
        %v691 = vpack.c.b16 %v660, %v659
        %v692 = vpack.c.b16 %v662, %v661
        %v693 = vpack.c.b16 %v664, %v663
        %v694 = vpack.c.b16 %v666, %v665
        %v695 = vpack.c.b16 %v668, %v667
        %v696 = vpack.c.b16 %v670, %v669
        %v697 = vpack.c.b16 %v672, %v671
        %v698 = vpack.c.b16 %v674, %v673
        %v699 = vpack.c.b16 %v676, %v675
        %v700 = vpack.c.b16 %v678, %v677
        %v701 = vpack.c.b16 %v680, %v679
        %v702 = vpack.c.b16 %v681, %v681
        %v708 = vunpack.c.l.b16 %v591
        %v709 = vunpack.c.l.b16 %v592
        %v710 = vunpack.c.l.b16 %v593
        %v711 = vunpack.c.l.b16 %v594
        %v712 = vunpack.c.l.b16 %v595
        %v713 = vpack.c.b16 %v709, %v708
        %v714 = vpack.c.b16 %v711, %v710
        %v715 = vpack.c.b16 %v712, %v712
        %vm718 = vcmask 293888
        %v720 = vsel %vm718, %v682, 0
        %v723 = vsel %vm718, %v683, 0
        %v726 = vsel %vm718, %v684, 0
        %v729 = vsel %vm718, %v685, 0
        %v732 = vsel %vm718, %v686, 0
        %v735 = vsel %vm718, %v687, 0
        %v738 = vsel %vm718, %v688, 0
        %v741 = vsel %vm718, %v689, 0
        %v744 = vsel %vm718, %v690, 0
        %v747 = vsel %vm718, %v691, 0
        %v750 = vsel %vm718, %v692, 0
        %v753 = vsel %vm718, %v693, 0
        %v756 = vsel %vm718, %v694, 0
        %v759 = vsel %vm718, %v695, 0
        %v762 = vsel %vm718, %v696, 0
        %v765 = vsel %vm718, %v697, 0
        %v768 = vsel %vm718, %v698, 0
        %v771 = vsel %vm718, %v699, 0
        %v774 = vsel %vm718, %v700, 0
        %v777 = vsel %vm718, %v701, 0
        %v780 = vsel %vm718, %v702, 0
        %vm782 = vcmask 1041408
        %v784 = vsel %vm782, %v715, 0
        %786 = vmatpush.bf16.msra.mxu0 0
        %787 = vmatpush.bf16.msra.mxu0 0
        %788 = vmatpush.bf16.msra.mxu0 0
        %789 = vmatpush.bf16.msra.mxu0 0
        %790 = vmatpush.bf16.msra.mxu0 0
        %791 = vmatpush.bf16.msra.mxu0 %v784
        %792 = vmatpush.bf16.msra.mxu0 %v714
        %793 = vmatpush.bf16.msra.mxu0 %v713
        %794 = vmatmul.bf16.gmra.mxu0 %v720
        %v795 = vpop.f32.mrf.mxu0
        %v796 = vadd.f32 %v598, %v795
        %v797 = vpop.f32.mrf.mxu0
        %v798 = vadd.f32 %v598, %v797
        %799 = vmatmul.bf16.gmra.mxu0 %v723
        %v800 = vpop.f32.mrf.mxu0
        %v801 = vadd.f32 %v598, %v800
        %v802 = vpop.f32.mrf.mxu0
        %v803 = vadd.f32 %v598, %v802
        %804 = vmatmul.bf16.gmra.mxu0 %v726
        %v805 = vpop.f32.mrf.mxu0
        %v806 = vadd.f32 %v598, %v805
        %v807 = vpop.f32.mrf.mxu0
        %v808 = vadd.f32 %v598, %v807
        %809 = vmatmul.bf16.gmra.mxu0 %v729
        %v810 = vpop.f32.mrf.mxu0
        %v811 = vadd.f32 %v598, %v810
        %v812 = vpop.f32.mrf.mxu0
        %v813 = vadd.f32 %v598, %v812
        %814 = vmatmul.bf16.gmra.mxu0 %v732
        %v815 = vpop.f32.mrf.mxu0
        %v816 = vadd.f32 %v598, %v815
        %v817 = vpop.f32.mrf.mxu0
        %v818 = vadd.f32 %v598, %v817
        %819 = vmatmul.bf16.gmra.mxu0 %v735
        %v820 = vpop.f32.mrf.mxu0
        %v821 = vadd.f32 %v598, %v820
        %v822 = vpop.f32.mrf.mxu0
        %v823 = vadd.f32 %v598, %v822
        %824 = vmatmul.bf16.gmra.mxu0 %v738
        %v825 = vpop.f32.mrf.mxu0
        %v826 = vadd.f32 %v598, %v825
        %v827 = vpop.f32.mrf.mxu0
        %v828 = vadd.f32 %v598, %v827
        %829 = vmatmul.bf16.gmra.mxu0 %v741
        %v830 = vpop.f32.mrf.mxu0
        %v831 = vadd.f32 %v598, %v830
        %v832 = vpop.f32.mrf.mxu0
        %v833 = vadd.f32 %v598, %v832
        %834 = vmatmul.bf16.gmra.mxu0 %v744
        %v835 = vpop.f32.mrf.mxu0
        %v836 = vadd.f32 %v598, %v835
        %v837 = vpop.f32.mrf.mxu0
        %v838 = vadd.f32 %v598, %v837
        %839 = vmatmul.bf16.gmra.mxu0 %v747
        %v840 = vpop.f32.mrf.mxu0
        %v841 = vadd.f32 %v598, %v840
        %v842 = vpop.f32.mrf.mxu0
        %v843 = vadd.f32 %v598, %v842
        %844 = vmatmul.bf16.gmra.mxu0 %v750
        %v845 = vpop.f32.mrf.mxu0
        %v846 = vadd.f32 %v598, %v845
        %v847 = vpop.f32.mrf.mxu0
        %v848 = vadd.f32 %v598, %v847
        %849 = vmatmul.bf16.gmra.mxu0 %v753
        %v850 = vpop.f32.mrf.mxu0
        %v851 = vadd.f32 %v598, %v850
        %v852 = vpop.f32.mrf.mxu0
        %v853 = vadd.f32 %v598, %v852
        %854 = vmatmul.bf16.gmra.mxu0 %v756
        %v855 = vpop.f32.mrf.mxu0
        %v856 = vadd.f32 %v598, %v855
        %v857 = vpop.f32.mrf.mxu0
        %v858 = vadd.f32 %v598, %v857
        %859 = vmatmul.bf16.gmra.mxu0 %v759
        %v860 = vpop.f32.mrf.mxu0
        %v861 = vadd.f32 %v598, %v860
        %v862 = vpop.f32.mrf.mxu0
        %v863 = vadd.f32 %v598, %v862
        %864 = vmatmul.bf16.gmra.mxu0 %v762
        %v865 = vpop.f32.mrf.mxu0
        %v866 = vadd.f32 %v598, %v865
        %v867 = vpop.f32.mrf.mxu0
        %v868 = vadd.f32 %v598, %v867
        %869 = vmatmul.bf16.gmra.mxu0 %v765
        %v870 = vpop.f32.mrf.mxu0
        %v871 = vadd.f32 %v598, %v870
        %v872 = vpop.f32.mrf.mxu0
        %v873 = vadd.f32 %v598, %v872
        %874 = vmatmul.bf16.gmra.mxu0 %v768
        %v875 = vpop.f32.mrf.mxu0
        %v876 = vadd.f32 %v598, %v875
        %v877 = vpop.f32.mrf.mxu0
        %v878 = vadd.f32 %v598, %v877
        %879 = vmatmul.bf16.gmra.mxu0 %v771
        %v880 = vpop.f32.mrf.mxu0
        %v881 = vadd.f32 %v598, %v880
        %v882 = vpop.f32.mrf.mxu0
        %v883 = vadd.f32 %v598, %v882
        %884 = vmatmul.bf16.gmra.mxu0 %v774
        %v885 = vpop.f32.mrf.mxu0
        %v886 = vadd.f32 %v598, %v885
        %v887 = vpop.f32.mrf.mxu0
        %v888 = vadd.f32 %v598, %v887
        %889 = vmatmul.bf16.gmra.mxu0 %v777
        %v890 = vpop.f32.mrf.mxu0
        %v891 = vadd.f32 %v598, %v890
        %v892 = vpop.f32.mrf.mxu0
        %v893 = vadd.f32 %v598, %v892
        %894 = vmatmul.bf16.gmra.mxu0 %v780
        %v895 = vpop.f32.mrf.mxu0
        %v896 = vadd.f32 %v598, %v895
        %v897 = vpop.f32.mrf.mxu0
        %898 = vdwg.mxu0
        %v899 = vmax.f32 %v796, 0.0
        %v900 = vmax.f32 %v798, 0.0
        %v901 = vmax.f32 %v801, 0.0
        %v902 = vmax.f32 %v803, 0.0
        %v903 = vmax.f32 %v806, 0.0
        %v904 = vmax.f32 %v808, 0.0
        %v905 = vmax.f32 %v811, 0.0
        %v906 = vmax.f32 %v813, 0.0
        %v907 = vmax.f32 %v816, 0.0
        %v908 = vmax.f32 %v818, 0.0
        %v909 = vmax.f32 %v821, 0.0
        %v910 = vmax.f32 %v823, 0.0
        %v911 = vmax.f32 %v826, 0.0
        %v912 = vmax.f32 %v828, 0.0
        %v913 = vmax.f32 %v831, 0.0
        %v914 = vmax.f32 %v833, 0.0
        %v915 = vmax.f32 %v836, 0.0
        %v916 = vmax.f32 %v838, 0.0
        %v917 = vmax.f32 %v841, 0.0
        %v918 = vmax.f32 %v843, 0.0
        %v919 = vmax.f32 %v846, 0.0
        %v920 = vmax.f32 %v848, 0.0
        %v921 = vmax.f32 %v851, 0.0
        %v922 = vmax.f32 %v853, 0.0
        %v923 = vmax.f32 %v856, 0.0
        %v924 = vmax.f32 %v858, 0.0
        %v925 = vmax.f32 %v861, 0.0
        %v926 = vmax.f32 %v863, 0.0
        %v927 = vmax.f32 %v866, 0.0
        %v928 = vmax.f32 %v868, 0.0
        %v929 = vmax.f32 %v871, 0.0
        %v930 = vmax.f32 %v873, 0.0
        %v931 = vmax.f32 %v876, 0.0
        %v932 = vmax.f32 %v878, 0.0
        %v933 = vmax.f32 %v881, 0.0
        %v934 = vmax.f32 %v883, 0.0
        %v935 = vmax.f32 %v886, 0.0
        %v936 = vmax.f32 %v888, 0.0
        %v937 = vmax.f32 %v891, 0.0
        %v938 = vmax.f32 %v893, 0.0
        %v939 = vmax.f32 %v896, 0.0
        %v940 = vsel %vm509, 1, 0
        %v941 = vsel %vm510, 1, 0
        %v942 = vsel %vm511, 1, 0
        %v943 = vsel %vm512, 1, 0
        %v944 = vsel %vm513, 1, 0
        %v945 = vsel %vm514, 1, 0
        %v946 = vsel %vm515, 1, 0
        %v947 = vsel %vm516, 1, 0
        %v948 = vsel %vm517, 1, 0
        %v949 = vsel %vm518, 1, 0
        %v950 = vsel %vm519, 1, 0
        %v951 = vsel %vm520, 1, 0
        %v952 = vsel %vm521, 1, 0
        %v953 = vsel %vm522, 1, 0
        %v954 = vsel %vm523, 1, 0
        %v955 = vsel %vm524, 1, 0
        %v956 = vsel %vm525, 1, 0
        %v957 = vsel %vm526, 1, 0
        %v958 = vsel %vm527, 1, 0
        %v959 = vsel %vm528, 1, 0
        %v960 = vsel %vm529, 1, 0
        %v961 = vsel %vm530, 1, 0
        %v962 = vsel %vm531, 1, 0
        %v963 = vsel %vm532, 1, 0
        %v964 = vsel %vm533, 1, 0
        %v965 = vsel %vm534, 1, 0
        %v966 = vsel %vm535, 1, 0
        %v967 = vsel %vm536, 1, 0
        %v968 = vsel %vm537, 1, 0
        %v969 = vsel %vm538, 1, 0
        %v970 = vsel %vm539, 1, 0
        %v971 = vsel %vm540, 1, 0
        %v972 = vsel %vm541, 1, 0
        %v973 = vsel %vm542, 1, 0
        %v974 = vsel %vm543, 1, 0
        %v975 = vsel %vm544, 1, 0
        %v976 = vsel %vm545, 1, 0
        %v977 = vsel %vm546, 1, 0
        %v978 = vsel %vm547, 1, 0
        %v979 = vsel %vm548, 1, 0
        %v980 = vsel %vm549, 1, 0
        %981 = vset.pattern.permute.xlu0 0
        %982 = vperm.xlu0 %981, %v940
        %v983 = vpop.permute.xlu0 %982
        %984 = vset.pattern.permute.xlu0 0
        %985 = vperm.xlu0 %984, %v941
        %v986 = vpop.permute.xlu0 %985
        %987 = vset.pattern.permute.xlu0 0
        %988 = vperm.xlu0 %987, %v942
        %v989 = vpop.permute.xlu0 %988
        %990 = vset.pattern.permute.xlu0 0
        %991 = vperm.xlu0 %990, %v943
        %v992 = vpop.permute.xlu0 %991
        %993 = vset.pattern.permute.xlu0 0
        %994 = vperm.xlu0 %993, %v944
        %v995 = vpop.permute.xlu0 %994
        %996 = vset.pattern.permute.xlu0 0
        %997 = vperm.xlu0 %996, %v945
        %v998 = vpop.permute.xlu0 %997
        %999 = vset.pattern.permute.xlu0 0
        %1000 = vperm.xlu0 %999, %v946
        %v1001 = vpop.permute.xlu0 %1000
        %1002 = vset.pattern.permute.xlu0 0
        %1003 = vperm.xlu0 %1002, %v947
        %v1004 = vpop.permute.xlu0 %1003
        %1005 = vset.pattern.permute.xlu0 0
        %1006 = vperm.xlu0 %1005, %v948
        %v1007 = vpop.permute.xlu0 %1006
        %1008 = vset.pattern.permute.xlu0 0
        %1009 = vperm.xlu0 %1008, %v949
        %v1010 = vpop.permute.xlu0 %1009
        %1011 = vset.pattern.permute.xlu0 0
        %1012 = vperm.xlu0 %1011, %v950
        %v1013 = vpop.permute.xlu0 %1012
        %1014 = vset.pattern.permute.xlu0 0
        %1015 = vperm.xlu0 %1014, %v951
        %v1016 = vpop.permute.xlu0 %1015
        %1017 = vset.pattern.permute.xlu0 0
        %1018 = vperm.xlu0 %1017, %v952
        %v1019 = vpop.permute.xlu0 %1018
        %1020 = vset.pattern.permute.xlu0 0
        %1021 = vperm.xlu0 %1020, %v953
        %v1022 = vpop.permute.xlu0 %1021
        %1023 = vset.pattern.permute.xlu0 0
        %1024 = vperm.xlu0 %1023, %v954
        %v1025 = vpop.permute.xlu0 %1024
        %1026 = vset.pattern.permute.xlu0 0
        %1027 = vperm.xlu0 %1026, %v955
        %v1028 = vpop.permute.xlu0 %1027
        %1029 = vset.pattern.permute.xlu0 0
        %1030 = vperm.xlu0 %1029, %v956
        %v1031 = vpop.permute.xlu0 %1030
        %1032 = vset.pattern.permute.xlu0 0
        %1033 = vperm.xlu0 %1032, %v957
        %v1034 = vpop.permute.xlu0 %1033
        %1035 = vset.pattern.permute.xlu0 0
        %1036 = vperm.xlu0 %1035, %v958
        %v1037 = vpop.permute.xlu0 %1036
        %1038 = vset.pattern.permute.xlu0 0
        %1039 = vperm.xlu0 %1038, %v959
        %v1040 = vpop.permute.xlu0 %1039
        %1041 = vset.pattern.permute.xlu0 0
        %1042 = vperm.xlu0 %1041, %v960
        %v1043 = vpop.permute.xlu0 %1042
        %1044 = vset.pattern.permute.xlu0 0
        %1045 = vperm.xlu0 %1044, %v961
        %v1046 = vpop.permute.xlu0 %1045
        %1047 = vset.pattern.permute.xlu0 0
        %1048 = vperm.xlu0 %1047, %v962
        %v1049 = vpop.permute.xlu0 %1048
        %1050 = vset.pattern.permute.xlu0 0
        %1051 = vperm.xlu0 %1050, %v963
        %v1052 = vpop.permute.xlu0 %1051
        %1053 = vset.pattern.permute.xlu0 0
        %1054 = vperm.xlu0 %1053, %v964
        %v1055 = vpop.permute.xlu0 %1054
        %1056 = vset.pattern.permute.xlu0 0
        %1057 = vperm.xlu0 %1056, %v965
        %v1058 = vpop.permute.xlu0 %1057
        %1059 = vset.pattern.permute.xlu0 0
        %1060 = vperm.xlu0 %1059, %v966
        %v1061 = vpop.permute.xlu0 %1060
        %1062 = vset.pattern.permute.xlu0 0
        %1063 = vperm.xlu0 %1062, %v967
        %v1064 = vpop.permute.xlu0 %1063
        %1065 = vset.pattern.permute.xlu0 0
        %1066 = vperm.xlu0 %1065, %v968
        %v1067 = vpop.permute.xlu0 %1066
        %1068 = vset.pattern.permute.xlu0 0
        %1069 = vperm.xlu0 %1068, %v969
        %v1070 = vpop.permute.xlu0 %1069
        %1071 = vset.pattern.permute.xlu0 0
        %1072 = vperm.xlu0 %1071, %v970
        %v1073 = vpop.permute.xlu0 %1072
        %1074 = vset.pattern.permute.xlu0 0
        %1075 = vperm.xlu0 %1074, %v971
        %v1076 = vpop.permute.xlu0 %1075
        %1077 = vset.pattern.permute.xlu0 0
        %1078 = vperm.xlu0 %1077, %v972
        %v1079 = vpop.permute.xlu0 %1078
        %1080 = vset.pattern.permute.xlu0 0
        %1081 = vperm.xlu0 %1080, %v973
        %v1082 = vpop.permute.xlu0 %1081
        %1083 = vset.pattern.permute.xlu0 0
        %1084 = vperm.xlu0 %1083, %v974
        %v1085 = vpop.permute.xlu0 %1084
        %1086 = vset.pattern.permute.xlu0 0
        %1087 = vperm.xlu0 %1086, %v975
        %v1088 = vpop.permute.xlu0 %1087
        %1089 = vset.pattern.permute.xlu0 0
        %1090 = vperm.xlu0 %1089, %v976
        %v1091 = vpop.permute.xlu0 %1090
        %1092 = vset.pattern.permute.xlu0 0
        %1093 = vperm.xlu0 %1092, %v977
        %v1094 = vpop.permute.xlu0 %1093
        %1095 = vset.pattern.permute.xlu0 0
        %1096 = vperm.xlu0 %1095, %v978
        %v1097 = vpop.permute.xlu0 %1096
        %1098 = vset.pattern.permute.xlu0 0
        %1099 = vperm.xlu0 %1098, %v979
        %v1100 = vpop.permute.xlu0 %1099
        %1101 = vset.pattern.permute.xlu0 0
        %1102 = vperm.xlu0 %1101, %v980
        %v1103 = vpop.permute.xlu0 %1102
        %vm1104 = vcmp.eq.s32.totalorder %v983, 1
        %vm1105 = vcmp.eq.s32.totalorder %v986, 1
        %vm1106 = vcmp.eq.s32.totalorder %v989, 1
        %vm1107 = vcmp.eq.s32.totalorder %v992, 1
        %vm1108 = vcmp.eq.s32.totalorder %v995, 1
        %vm1109 = vcmp.eq.s32.totalorder %v998, 1
        %vm1110 = vcmp.eq.s32.totalorder %v1001, 1
        %vm1111 = vcmp.eq.s32.totalorder %v1004, 1
        %vm1112 = vcmp.eq.s32.totalorder %v1007, 1
        %vm1113 = vcmp.eq.s32.totalorder %v1010, 1
        %vm1114 = vcmp.eq.s32.totalorder %v1013, 1
        %vm1115 = vcmp.eq.s32.totalorder %v1016, 1
        %vm1116 = vcmp.eq.s32.totalorder %v1019, 1
        %vm1117 = vcmp.eq.s32.totalorder %v1022, 1
        %vm1118 = vcmp.eq.s32.totalorder %v1025, 1
        %vm1119 = vcmp.eq.s32.totalorder %v1028, 1
        %vm1120 = vcmp.eq.s32.totalorder %v1031, 1
        %vm1121 = vcmp.eq.s32.totalorder %v1034, 1
        %vm1122 = vcmp.eq.s32.totalorder %v1037, 1
        %vm1123 = vcmp.eq.s32.totalorder %v1040, 1
        %vm1124 = vcmp.eq.s32.totalorder %v1043, 1
        %vm1125 = vcmp.eq.s32.totalorder %v1046, 1
        %vm1126 = vcmp.eq.s32.totalorder %v1049, 1
        %vm1127 = vcmp.eq.s32.totalorder %v1052, 1
        %vm1128 = vcmp.eq.s32.totalorder %v1055, 1
        %vm1129 = vcmp.eq.s32.totalorder %v1058, 1
        %vm1130 = vcmp.eq.s32.totalorder %v1061, 1
        %vm1131 = vcmp.eq.s32.totalorder %v1064, 1
        %vm1132 = vcmp.eq.s32.totalorder %v1067, 1
        %vm1133 = vcmp.eq.s32.totalorder %v1070, 1
        %vm1134 = vcmp.eq.s32.totalorder %v1073, 1
        %vm1135 = vcmp.eq.s32.totalorder %v1076, 1
        %vm1136 = vcmp.eq.s32.totalorder %v1079, 1
        %vm1137 = vcmp.eq.s32.totalorder %v1082, 1
        %vm1138 = vcmp.eq.s32.totalorder %v1085, 1
        %vm1139 = vcmp.eq.s32.totalorder %v1088, 1
        %vm1140 = vcmp.eq.s32.totalorder %v1091, 1
        %vm1141 = vcmp.eq.s32.totalorder %v1094, 1
        %vm1142 = vcmp.eq.s32.totalorder %v1097, 1
        %vm1143 = vcmp.eq.s32.totalorder %v1100, 1
        %vm1144 = vcmp.eq.s32.totalorder %v1103, 1
        %v1145 = vsel %vm1104, %v899, 0.0
        %v1146 = vsel %vm1105, %v900, 0.0
        %v1147 = vsel %vm1106, %v901, 0.0
        %v1148 = vsel %vm1107, %v902, 0.0
        %v1149 = vsel %vm1108, %v903, 0.0
        %v1150 = vsel %vm1109, %v904, 0.0
        %v1151 = vsel %vm1110, %v905, 0.0
        %v1152 = vsel %vm1111, %v906, 0.0
        %v1153 = vsel %vm1112, %v907, 0.0
        %v1154 = vsel %vm1113, %v908, 0.0
        %v1155 = vsel %vm1114, %v909, 0.0
        %v1156 = vsel %vm1115, %v910, 0.0
        %v1157 = vsel %vm1116, %v911, 0.0
        %v1158 = vsel %vm1117, %v912, 0.0
        %v1159 = vsel %vm1118, %v913, 0.0
        %v1160 = vsel %vm1119, %v914, 0.0
        %v1161 = vsel %vm1120, %v915, 0.0
        %v1162 = vsel %vm1121, %v916, 0.0
        %v1163 = vsel %vm1122, %v917, 0.0
        %v1164 = vsel %vm1123, %v918, 0.0
        %v1165 = vsel %vm1124, %v919, 0.0
        %v1166 = vsel %vm1125, %v920, 0.0
        %v1167 = vsel %vm1126, %v921, 0.0
        %v1168 = vsel %vm1127, %v922, 0.0
        %v1169 = vsel %vm1128, %v923, 0.0
        %v1170 = vsel %vm1129, %v924, 0.0
        %v1171 = vsel %vm1130, %v925, 0.0
        %v1172 = vsel %vm1131, %v926, 0.0
        %v1173 = vsel %vm1132, %v927, 0.0
        %v1174 = vsel %vm1133, %v928, 0.0
        %v1175 = vsel %vm1134, %v929, 0.0
        %v1176 = vsel %vm1135, %v930, 0.0
        %v1177 = vsel %vm1136, %v931, 0.0
        %v1178 = vsel %vm1137, %v932, 0.0
        %v1179 = vsel %vm1138, %v933, 0.0
        %v1180 = vsel %vm1139, %v934, 0.0
        %v1181 = vsel %vm1140, %v935, 0.0
        %v1182 = vsel %vm1141, %v936, 0.0
        %v1183 = vsel %vm1142, %v937, 0.0
        %v1184 = vsel %vm1143, %v938, 0.0
        %v1185 = vsel %vm1144, %v939, 0.0
        %v1186 = vpack.c.bf16 %v1145, %v1145
        %v1187 = vpack.c.bf16 %v1146, %v1146
        %v1188 = vpack.c.bf16 %v1147, %v1147
        %v1189 = vpack.c.bf16 %v1148, %v1148
        %v1190 = vpack.c.bf16 %v1149, %v1149
        %v1191 = vpack.c.bf16 %v1150, %v1150
        %v1192 = vpack.c.bf16 %v1151, %v1151
        %v1193 = vpack.c.bf16 %v1152, %v1152
        %v1194 = vpack.c.bf16 %v1153, %v1153
        %v1195 = vpack.c.bf16 %v1154, %v1154
        %v1196 = vpack.c.bf16 %v1155, %v1155
        %v1197 = vpack.c.bf16 %v1156, %v1156
        %v1198 = vpack.c.bf16 %v1157, %v1157
        %v1199 = vpack.c.bf16 %v1158, %v1158
        %v1200 = vpack.c.bf16 %v1159, %v1159
        %v1201 = vpack.c.bf16 %v1160, %v1160
        %v1202 = vpack.c.bf16 %v1161, %v1161
        %v1203 = vpack.c.bf16 %v1162, %v1162
        %v1204 = vpack.c.bf16 %v1163, %v1163
        %v1205 = vpack.c.bf16 %v1164, %v1164
        %v1206 = vpack.c.bf16 %v1165, %v1165
        %v1207 = vpack.c.bf16 %v1166, %v1166
        %v1208 = vpack.c.bf16 %v1167, %v1167
        %v1209 = vpack.c.bf16 %v1168, %v1168
        %v1210 = vpack.c.bf16 %v1169, %v1169
        %v1211 = vpack.c.bf16 %v1170, %v1170
        %v1212 = vpack.c.bf16 %v1171, %v1171
        %v1213 = vpack.c.bf16 %v1172, %v1172
        %v1214 = vpack.c.bf16 %v1173, %v1173
        %v1215 = vpack.c.bf16 %v1174, %v1174
        %v1216 = vpack.c.bf16 %v1175, %v1175
        %v1217 = vpack.c.bf16 %v1176, %v1176
        %v1218 = vpack.c.bf16 %v1177, %v1177
        %v1219 = vpack.c.bf16 %v1178, %v1178
        %v1220 = vpack.c.bf16 %v1179, %v1179
        %v1221 = vpack.c.bf16 %v1180, %v1180
        %v1222 = vpack.c.bf16 %v1181, %v1181
        %v1223 = vpack.c.bf16 %v1182, %v1182
        %v1224 = vpack.c.bf16 %v1183, %v1183
        %v1225 = vpack.c.bf16 %v1184, %v1184
        %v1226 = vpack.c.bf16 %v1185, %v1185
        %vm1227 = vcmask 125952
        %1228 = vst.msk [vmem:[#allocation2 + $0xc] sm:$0xf] %vm1227, %v1186
        %1229 = vst.msk [vmem:[#allocation2 + $0x10] sm:$0xf] %vm1227, %v1187
        %1230 = vst.msk [vmem:[#allocation2 + $0x14] sm:$0xf] %vm1227, %v1188
        %1231 = vst.msk [vmem:[#allocation2 + $0x18] sm:$0xf] %vm1227, %v1189
        %1232 = vst.msk [vmem:[#allocation2 + $0x1c] sm:$0xf] %vm1227, %v1190
        %1233 = vst.msk [vmem:[#allocation2 + $0x20] sm:$0xf] %vm1227, %v1191
        %1234 = vst.msk [vmem:[#allocation2 + $0x24] sm:$0xf] %vm1227, %v1192
        %1235 = vst.msk [vmem:[#allocation2 + $0x28] sm:$0xf] %vm1227, %v1193
        %1236 = vst.msk [vmem:[#allocation2 + $0x2c] sm:$0xf] %vm1227, %v1194
        %1237 = vst.msk [vmem:[#allocation2 + $0x30] sm:$0xf] %vm1227, %v1195
        %1238 = vst.msk [vmem:[#allocation2 + $0x34] sm:$0xf] %vm1227, %v1196
        %1239 = vst.msk [vmem:[#allocation2 + $0x38] sm:$0xf] %vm1227, %v1197
        %1240 = vst.msk [vmem:[#allocation2 + $0x3c] sm:$0xf] %vm1227, %v1198
        %1241 = vst.msk [vmem:[#allocation2 + $0x40] sm:$0xf] %vm1227, %v1199
        %1242 = vst.msk [vmem:[#allocation2 + $0x44] sm:$0xf] %vm1227, %v1200
        %1243 = vst.msk [vmem:[#allocation2 + $0x48] sm:$0xf] %vm1227, %v1201
        %1244 = vst.msk [vmem:[#allocation2 + $0x4c] sm:$0xf] %vm1227, %v1202
        %1245 = vst.msk [vmem:[#allocation2 + $0x50] sm:$0xf] %vm1227, %v1203
        %1246 = vst.msk [vmem:[#allocation2 + $0x54] sm:$0xf] %vm1227, %v1204
        %1247 = vst.msk [vmem:[#allocation2 + $0x58] sm:$0xf] %vm1227, %v1205
        %1248 = vst.msk [vmem:[#allocation2 + $0x5c] sm:$0xf] %vm1227, %v1206
        %1249 = vst.msk [vmem:[#allocation2 + $0x60] sm:$0xf] %vm1227, %v1207
        %1250 = vst.msk [vmem:[#allocation2 + $0x64] sm:$0xf] %vm1227, %v1208
        %1251 = vst.msk [vmem:[#allocation2 + $0x68] sm:$0xf] %vm1227, %v1209
        %1252 = vst.msk [vmem:[#allocation2 + $0x6c] sm:$0xf] %vm1227, %v1210
        %1253 = vst.msk [vmem:[#allocation2 + $0x70] sm:$0xf] %vm1227, %v1211
        %1254 = vst.msk [vmem:[#allocation2 + $0x74] sm:$0xf] %vm1227, %v1212
        %1255 = vst.msk [vmem:[#allocation2 + $0x78] sm:$0xf] %vm1227, %v1213
        %1256 = vst.msk [vmem:[#allocation2 + $0x7c] sm:$0xf] %vm1227, %v1214
        %1257 = vst.msk [vmem:[#allocation2 + $0x80] sm:$0xf] %vm1227, %v1215
        %1258 = vst.msk [vmem:[#allocation2 + $0x84] sm:$0xf] %vm1227, %v1216
        %1259 = vst.msk [vmem:[#allocation2 + $0x88] sm:$0xf] %vm1227, %v1217
        %1260 = vst.msk [vmem:[#allocation2 + $0x8c] sm:$0xf] %vm1227, %v1218
        %1261 = vst.msk [vmem:[#allocation2 + $0x90] sm:$0xf] %vm1227, %v1219
        %1262 = vst.msk [vmem:[#allocation2 + $0x94] sm:$0xf] %vm1227, %v1220
        %1263 = vst.msk [vmem:[#allocation2 + $0x98] sm:$0xf] %vm1227, %v1221
        %1264 = vst.msk [vmem:[#allocation2 + $0x9c] sm:$0xf] %vm1227, %v1222
        %1265 = vst.msk [vmem:[#allocation2 + $0xa0] sm:$0xf] %vm1227, %v1223
        %1266 = vst.msk [vmem:[#allocation2 + $0xa4] sm:$0xf] %vm1227, %v1224
        %1267 = vst.msk [vmem:[#allocation2 + $0xa8] sm:$0xf] %vm1227, %v1225
        %1268 = vst.msk [vmem:[#allocation2 + $0xac] sm:$0xf] %vm1227, %v1226
        %v1269 = vld [vmem:[#allocation2] sm:$0xc]
        %v1270 = vld [vmem:[#allocation2 + $0x4] sm:$0xf]
        %v1271 = vld [vmem:[#allocation2 + $0x8] sm:$0xf]
        %v1272 = vld [vmem:[#allocation2 + $0xc] sm:$0xf]
        %v1273 = vld [vmem:[#allocation2 + $0x10] sm:$0xf]
        %v1274 = vld [vmem:[#allocation2 + $0x14] sm:$0xf]
        %v1275 = vld [vmem:[#allocation2 + $0x18] sm:$0xf]
        %v1276 = vld [vmem:[#allocation2 + $0x1c] sm:$0xf]
        %v1277 = vld [vmem:[#allocation2 + $0x20] sm:$0xf]
        %v1278 = vld [vmem:[#allocation2 + $0x24] sm:$0xf]
        %v1279 = vld [vmem:[#allocation2 + $0x28] sm:$0xf]
        %v1280 = vld [vmem:[#allocation2 + $0x2c] sm:$0xf]
        %v1281 = vld [vmem:[#allocation2 + $0x30] sm:$0xf]
        %v1282 = vld [vmem:[#allocation2 + $0x34] sm:$0xf]
        %v1283 = vld [vmem:[#allocation2 + $0x38] sm:$0xf]
        %v1284 = vld [vmem:[#allocation2 + $0x3c] sm:$0xf]
        %v1285 = vld [vmem:[#allocation2 + $0x40] sm:$0xf]
        %v1286 = vld [vmem:[#allocation2 + $0x44] sm:$0xf]
        %v1287 = vld [vmem:[#allocation2 + $0x48] sm:$0xf]
        %v1288 = vld [vmem:[#allocation2 + $0x4c] sm:$0xf]
        %v1289 = vld [vmem:[#allocation2 + $0x50] sm:$0xf]
        %v1290 = vld [vmem:[#allocation2 + $0x54] sm:$0xf]
        %v1291 = vld [vmem:[#allocation2 + $0x58] sm:$0xf]
        %v1292 = vld [vmem:[#allocation2 + $0x5c] sm:$0xf]
        %v1293 = vld [vmem:[#allocation2 + $0x60] sm:$0xf]
        %v1294 = vld [vmem:[#allocation2 + $0x64] sm:$0xf]
        %v1295 = vld [vmem:[#allocation2 + $0x68] sm:$0xf]
        %v1296 = vld [vmem:[#allocation2 + $0x6c] sm:$0xf]
        %v1297 = vld [vmem:[#allocation2 + $0x70] sm:$0xf]
        %v1298 = vld [vmem:[#allocation2 + $0x74] sm:$0xf]
        %v1299 = vld [vmem:[#allocation2 + $0x78] sm:$0xf]
        %v1300 = vld [vmem:[#allocation2 + $0x7c] sm:$0xf]
        %v1301 = vld [vmem:[#allocation2 + $0x80] sm:$0xf]
        %v1302 = vld [vmem:[#allocation2 + $0x84] sm:$0xf]
        %v1303 = vld [vmem:[#allocation2 + $0x88] sm:$0xf]
        %v1304 = vld [vmem:[#allocation2 + $0x8c] sm:$0xf]
        %v1305 = vld [vmem:[#allocation2 + $0x90] sm:$0xf]
        %v1306 = vld [vmem:[#allocation2 + $0x94] sm:$0xf]
        %v1307 = vld [vmem:[#allocation2 + $0x98] sm:$0xf]
        %v1308 = vld [vmem:[#allocation2 + $0x9c] sm:$0xf]
        %v1309 = vld [vmem:[#allocation2 + $0xa0] sm:$0xf]
        %v1310 = vld [vmem:[#allocation2 + $0xa4] sm:$0x7]
        %vm1311 = vsmask.f32 1280
        %vm1312 = vsmask.f32 5392
        %vm1313 = vmor %vm1311, %vm1312
        %v1315 = vshrl.u32 %v1269, 16
        %v1317 = vrot.slane %v1315, 6
        %v1318 = vshll.u32 %v1269, 16
        %v1320 = vrot.slane %v1318, 7
        %v1321 = vor.u32 %v1317, %v1320
        %v1322 = vrot.slane %v1321, 4
        %v1324 = vshrl.u32 %v1270, 16
        %v1326 = vrot.slane %v1324, 6
        %v1327 = vshll.u32 %v1270, 16
        %v1329 = vrot.slane %v1327, 7
        %v1330 = vor.u32 %v1326, %v1329
        %v1331 = vsel %vm1313, %v1322, %v1330
        %v1332 = vrot.slane %v1330, 4
        %v1334 = vshrl.u32 %v1271, 16
        %v1336 = vrot.slane %v1334, 6
        %v1337 = vshll.u32 %v1271, 16
        %v1339 = vrot.slane %v1337, 7
        %v1340 = vor.u32 %v1336, %v1339
        %v1341 = vsel %vm1313, %v1332, %v1340
        %v1342 = vrot.slane %v1340, 4
        %v1344 = vshrl.u32 %v1272, 16
        %v1346 = vrot.slane %v1344, 6
        %v1347 = vshll.u32 %v1272, 16
        %v1349 = vrot.slane %v1347, 7
        %v1350 = vor.u32 %v1346, %v1349
        %v1351 = vsel %vm1313, %v1342, %v1350
        %v1352 = vrot.slane %v1350, 4
        %v1354 = vshrl.u32 %v1273, 16
        %v1356 = vrot.slane %v1354, 6
        %v1357 = vshll.u32 %v1273, 16
        %v1359 = vrot.slane %v1357, 7
        %v1360 = vor.u32 %v1356, %v1359
        %v1361 = vsel %vm1313, %v1352, %v1360
        %v1362 = vrot.slane %v1360, 4
        %v1364 = vshrl.u32 %v1274, 16
        %v1366 = vrot.slane %v1364, 6
        %v1367 = vshll.u32 %v1274, 16
        %v1369 = vrot.slane %v1367, 7
        %v1370 = vor.u32 %v1366, %v1369
        %v1371 = vsel %vm1313, %v1362, %v1370
        %v1372 = vrot.slane %v1370, 4
        %v1374 = vshrl.u32 %v1275, 16
        %v1376 = vrot.slane %v1374, 6
        %v1377 = vshll.u32 %v1275, 16
        %v1379 = vrot.slane %v1377, 7
        %v1380 = vor.u32 %v1376, %v1379
        %v1381 = vsel %vm1313, %v1372, %v1380
        %v1382 = vrot.slane %v1380, 4
        %v1384 = vshrl.u32 %v1276, 16
        %v1386 = vrot.slane %v1384, 6
        %v1387 = vshll.u32 %v1276, 16
        %v1389 = vrot.slane %v1387, 7
        %v1390 = vor.u32 %v1386, %v1389
        %v1391 = vsel %vm1313, %v1382, %v1390
        %v1392 = vrot.slane %v1390, 4
        %v1394 = vshrl.u32 %v1277, 16
        %v1396 = vrot.slane %v1394, 6
        %v1397 = vshll.u32 %v1277, 16
        %v1399 = vrot.slane %v1397, 7
        %v1400 = vor.u32 %v1396, %v1399
        %v1401 = vsel %vm1313, %v1392, %v1400
        %v1402 = vrot.slane %v1400, 4
        %v1404 = vshrl.u32 %v1278, 16
        %v1406 = vrot.slane %v1404, 6
        %v1407 = vshll.u32 %v1278, 16
        %v1409 = vrot.slane %v1407, 7
        %v1410 = vor.u32 %v1406, %v1409
        %v1411 = vsel %vm1313, %v1402, %v1410
        %v1412 = vrot.slane %v1410, 4
        %v1414 = vshrl.u32 %v1279, 16
        %v1416 = vrot.slane %v1414, 6
        %v1417 = vshll.u32 %v1279, 16
        %v1419 = vrot.slane %v1417, 7
        %v1420 = vor.u32 %v1416, %v1419
        %v1421 = vsel %vm1313, %v1412, %v1420
        %v1422 = vrot.slane %v1420, 4
        %v1424 = vshrl.u32 %v1280, 16
        %v1426 = vrot.slane %v1424, 6
        %v1427 = vshll.u32 %v1280, 16
        %v1429 = vrot.slane %v1427, 7
        %v1430 = vor.u32 %v1426, %v1429
        %v1431 = vsel %vm1313, %v1422, %v1430
        %v1432 = vrot.slane %v1430, 4
        %v1434 = vshrl.u32 %v1281, 16
        %v1436 = vrot.slane %v1434, 6
        %v1437 = vshll.u32 %v1281, 16
        %v1439 = vrot.slane %v1437, 7
        %v1440 = vor.u32 %v1436, %v1439
        %v1441 = vsel %vm1313, %v1432, %v1440
        %v1442 = vrot.slane %v1440, 4
        %v1444 = vshrl.u32 %v1282, 16
        %v1446 = vrot.slane %v1444, 6
        %v1447 = vshll.u32 %v1282, 16
        %v1449 = vrot.slane %v1447, 7
        %v1450 = vor.u32 %v1446, %v1449
        %v1451 = vsel %vm1313, %v1442, %v1450
        %v1452 = vrot.slane %v1450, 4
        %v1454 = vshrl.u32 %v1283, 16
        %v1456 = vrot.slane %v1454, 6
        %v1457 = vshll.u32 %v1283, 16
        %v1459 = vrot.slane %v1457, 7
        %v1460 = vor.u32 %v1456, %v1459
        %v1461 = vsel %vm1313, %v1452, %v1460
        %v1462 = vrot.slane %v1460, 4
        %v1464 = vshrl.u32 %v1284, 16
        %v1466 = vrot.slane %v1464, 6
        %v1467 = vshll.u32 %v1284, 16
        %v1469 = vrot.slane %v1467, 7
        %v1470 = vor.u32 %v1466, %v1469
        %v1471 = vsel %vm1313, %v1462, %v1470
        %v1472 = vrot.slane %v1470, 4
        %v1474 = vshrl.u32 %v1285, 16
        %v1476 = vrot.slane %v1474, 6
        %v1477 = vshll.u32 %v1285, 16
        %v1479 = vrot.slane %v1477, 7
        %v1480 = vor.u32 %v1476, %v1479
        %v1481 = vsel %vm1313, %v1472, %v1480
        %v1482 = vrot.slane %v1480, 4
        %v1484 = vshrl.u32 %v1286, 16
        %v1486 = vrot.slane %v1484, 6
        %v1487 = vshll.u32 %v1286, 16
        %v1489 = vrot.slane %v1487, 7
        %v1490 = vor.u32 %v1486, %v1489
        %v1491 = vsel %vm1313, %v1482, %v1490
        %v1492 = vrot.slane %v1490, 4
        %v1494 = vshrl.u32 %v1287, 16
        %v1496 = vrot.slane %v1494, 6
        %v1497 = vshll.u32 %v1287, 16
        %v1499 = vrot.slane %v1497, 7
        %v1500 = vor.u32 %v1496, %v1499
        %v1501 = vsel %vm1313, %v1492, %v1500
        %v1502 = vrot.slane %v1500, 4
        %v1504 = vshrl.u32 %v1288, 16
        %v1506 = vrot.slane %v1504, 6
        %v1507 = vshll.u32 %v1288, 16
        %v1509 = vrot.slane %v1507, 7
        %v1510 = vor.u32 %v1506, %v1509
        %v1511 = vsel %vm1313, %v1502, %v1510
        %v1512 = vrot.slane %v1510, 4
        %v1514 = vshrl.u32 %v1289, 16
        %v1516 = vrot.slane %v1514, 6
        %v1517 = vshll.u32 %v1289, 16
        %v1519 = vrot.slane %v1517, 7
        %v1520 = vor.u32 %v1516, %v1519
        %v1521 = vsel %vm1313, %v1512, %v1520
        %v1522 = vrot.slane %v1520, 4
        %v1524 = vshrl.u32 %v1290, 16
        %v1526 = vrot.slane %v1524, 6
        %v1527 = vshll.u32 %v1290, 16
        %v1529 = vrot.slane %v1527, 7
        %v1530 = vor.u32 %v1526, %v1529
        %v1531 = vsel %vm1313, %v1522, %v1530
        %v1532 = vrot.slane %v1530, 4
        %v1534 = vshrl.u32 %v1291, 16
        %v1536 = vrot.slane %v1534, 6
        %v1537 = vshll.u32 %v1291, 16
        %v1539 = vrot.slane %v1537, 7
        %v1540 = vor.u32 %v1536, %v1539
        %v1541 = vsel %vm1313, %v1532, %v1540
        %v1542 = vrot.slane %v1540, 4
        %v1544 = vshrl.u32 %v1292, 16
        %v1546 = vrot.slane %v1544, 6
        %v1547 = vshll.u32 %v1292, 16
        %v1549 = vrot.slane %v1547, 7
        %v1550 = vor.u32 %v1546, %v1549
        %v1551 = vsel %vm1313, %v1542, %v1550
        %v1552 = vrot.slane %v1550, 4
        %v1554 = vshrl.u32 %v1293, 16
        %v1556 = vrot.slane %v1554, 6
        %v1557 = vshll.u32 %v1293, 16
        %v1559 = vrot.slane %v1557, 7
        %v1560 = vor.u32 %v1556, %v1559
        %v1561 = vsel %vm1313, %v1552, %v1560
        %v1562 = vrot.slane %v1560, 4
        %v1564 = vshrl.u32 %v1294, 16
        %v1566 = vrot.slane %v1564, 6
        %v1567 = vshll.u32 %v1294, 16
        %v1569 = vrot.slane %v1567, 7
        %v1570 = vor.u32 %v1566, %v1569
        %v1571 = vsel %vm1313, %v1562, %v1570
        %v1572 = vrot.slane %v1570, 4
        %v1574 = vshrl.u32 %v1295, 16
        %v1576 = vrot.slane %v1574, 6
        %v1577 = vshll.u32 %v1295, 16
        %v1579 = vrot.slane %v1577, 7
        %v1580 = vor.u32 %v1576, %v1579
        %v1581 = vsel %vm1313, %v1572, %v1580
        %v1582 = vrot.slane %v1580, 4
        %v1584 = vshrl.u32 %v1296, 16
        %v1586 = vrot.slane %v1584, 6
        %v1587 = vshll.u32 %v1296, 16
        %v1589 = vrot.slane %v1587, 7
        %v1590 = vor.u32 %v1586, %v1589
        %v1591 = vsel %vm1313, %v1582, %v1590
        %v1592 = vrot.slane %v1590, 4
        %v1594 = vshrl.u32 %v1297, 16
        %v1596 = vrot.slane %v1594, 6
        %v1597 = vshll.u32 %v1297, 16
        %v1599 = vrot.slane %v1597, 7
        %v1600 = vor.u32 %v1596, %v1599
        %v1601 = vsel %vm1313, %v1592, %v1600
        %v1602 = vrot.slane %v1600, 4
        %v1604 = vshrl.u32 %v1298, 16
        %v1606 = vrot.slane %v1604, 6
        %v1607 = vshll.u32 %v1298, 16
        %v1609 = vrot.slane %v1607, 7
        %v1610 = vor.u32 %v1606, %v1609
        %v1611 = vsel %vm1313, %v1602, %v1610
        %v1612 = vrot.slane %v1610, 4
        %v1614 = vshrl.u32 %v1299, 16
        %v1616 = vrot.slane %v1614, 6
        %v1617 = vshll.u32 %v1299, 16
        %v1619 = vrot.slane %v1617, 7
        %v1620 = vor.u32 %v1616, %v1619
        %v1621 = vsel %vm1313, %v1612, %v1620
        %v1622 = vrot.slane %v1620, 4
        %v1624 = vshrl.u32 %v1300, 16
        %v1626 = vrot.slane %v1624, 6
        %v1627 = vshll.u32 %v1300, 16
        %v1629 = vrot.slane %v1627, 7
        %v1630 = vor.u32 %v1626, %v1629
        %v1631 = vsel %vm1313, %v1622, %v1630
        %v1632 = vrot.slane %v1630, 4
        %v1634 = vshrl.u32 %v1301, 16
        %v1636 = vrot.slane %v1634, 6
        %v1637 = vshll.u32 %v1301, 16
        %v1639 = vrot.slane %v1637, 7
        %v1640 = vor.u32 %v1636, %v1639
        %v1641 = vsel %vm1313, %v1632, %v1640
        %v1642 = vrot.slane %v1640, 4
        %v1644 = vshrl.u32 %v1302, 16
        %v1646 = vrot.slane %v1644, 6
        %v1647 = vshll.u32 %v1302, 16
        %v1649 = vrot.slane %v1647, 7
        %v1650 = vor.u32 %v1646, %v1649
        %v1651 = vsel %vm1313, %v1642, %v1650
        %v1652 = vrot.slane %v1650, 4
        %v1654 = vshrl.u32 %v1303, 16
        %v1656 = vrot.slane %v1654, 6
        %v1657 = vshll.u32 %v1303, 16
        %v1659 = vrot.slane %v1657, 7
        %v1660 = vor.u32 %v1656, %v1659
        %v1661 = vsel %vm1313, %v1652, %v1660
        %v1662 = vrot.slane %v1660, 4
        %v1664 = vshrl.u32 %v1304, 16
        %v1666 = vrot.slane %v1664, 6
        %v1667 = vshll.u32 %v1304, 16
        %v1669 = vrot.slane %v1667, 7
        %v1670 = vor.u32 %v1666, %v1669
        %v1671 = vsel %vm1313, %v1662, %v1670
        %v1672 = vrot.slane %v1670, 4
        %v1674 = vshrl.u32 %v1305, 16
        %v1676 = vrot.slane %v1674, 6
        %v1677 = vshll.u32 %v1305, 16
        %v1679 = vrot.slane %v1677, 7
        %v1680 = vor.u32 %v1676, %v1679
        %v1681 = vsel %vm1313, %v1672, %v1680
        %v1682 = vrot.slane %v1680, 4
        %v1684 = vshrl.u32 %v1306, 16
        %v1686 = vrot.slane %v1684, 6
        %v1687 = vshll.u32 %v1306, 16
        %v1689 = vrot.slane %v1687, 7
        %v1690 = vor.u32 %v1686, %v1689
        %v1691 = vsel %vm1313, %v1682, %v1690
        %v1692 = vrot.slane %v1690, 4
        %v1694 = vshrl.u32 %v1307, 16
        %v1696 = vrot.slane %v1694, 6
        %v1697 = vshll.u32 %v1307, 16
        %v1699 = vrot.slane %v1697, 7
        %v1700 = vor.u32 %v1696, %v1699
        %v1701 = vsel %vm1313, %v1692, %v1700
        %v1702 = vrot.slane %v1700, 4
        %v1704 = vshrl.u32 %v1308, 16
        %v1706 = vrot.slane %v1704, 6
        %v1707 = vshll.u32 %v1308, 16
        %v1709 = vrot.slane %v1707, 7
        %v1710 = vor.u32 %v1706, %v1709
        %v1711 = vsel %vm1313, %v1702, %v1710
        %v1712 = vrot.slane %v1710, 4
        %v1714 = vshrl.u32 %v1309, 16
        %v1716 = vrot.slane %v1714, 6
        %v1717 = vshll.u32 %v1309, 16
        %v1719 = vrot.slane %v1717, 7
        %v1720 = vor.u32 %v1716, %v1719
        %v1721 = vsel %vm1313, %v1712, %v1720
        %v1722 = vrot.slane %v1720, 4
        %v1724 = vshrl.u32 %v1310, 16
        %v1726 = vrot.slane %v1724, 6
        %v1727 = vshll.u32 %v1310, 16
        %v1729 = vrot.slane %v1727, 7
        %v1730 = vor.u32 %v1726, %v1729
        %v1731 = vsel %vm1313, %v1722, %v1730
        %1773 = vst.msk [vmem:[#allocation3] sm:$0xf] %vm1227, %v1331
        %1774 = vst.msk [vmem:[#allocation3 + $0xc] sm:$0xf] %vm1227, %v1341
        %1775 = vst.msk [vmem:[#allocation3 + $0x18] sm:$0xf] %vm1227, %v1351
        %1776 = vst.msk [vmem:[#allocation3 + $0x24] sm:$0xf] %vm1227, %v1361
        %1777 = vst.msk [vmem:[#allocation3 + $0x30] sm:$0xf] %vm1227, %v1371
        %1778 = vst.msk [vmem:[#allocation3 + $0x3c] sm:$0xf] %vm1227, %v1381
        %1779 = vst.msk [vmem:[#allocation3 + $0x48] sm:$0xf] %vm1227, %v1391
        %1780 = vst.msk [vmem:[#allocation3 + $0x54] sm:$0xf] %vm1227, %v1401
        %1781 = vst.msk [vmem:[#allocation3 + $0x60] sm:$0xf] %vm1227, %v1411
        %1782 = vst.msk [vmem:[#allocation3 + $0x6c] sm:$0xf] %vm1227, %v1421
        %1783 = vst.msk [vmem:[#allocation3 + $0x78] sm:$0xf] %vm1227, %v1431
        %1784 = vst.msk [vmem:[#allocation3 + $0x84] sm:$0xf] %vm1227, %v1441
        %1785 = vst.msk [vmem:[#allocation3 + $0x90] sm:$0xf] %vm1227, %v1451
        %1786 = vst.msk [vmem:[#allocation3 + $0x9c] sm:$0xf] %vm1227, %v1461
        %1787 = vst.msk [vmem:[#allocation3 + $0xa8] sm:$0xf] %vm1227, %v1471
        %1788 = vst.msk [vmem:[#allocation3 + $0xb4] sm:$0xf] %vm1227, %v1481
        %1789 = vst.msk [vmem:[#allocation3 + $0xc0] sm:$0xf] %vm1227, %v1491
        %1790 = vst.msk [vmem:[#allocation3 + $0xcc] sm:$0xf] %vm1227, %v1501
        %1791 = vst.msk [vmem:[#allocation3 + $0xd8] sm:$0xf] %vm1227, %v1511
        %1792 = vst.msk [vmem:[#allocation3 + $0xe4] sm:$0xf] %vm1227, %v1521
        %1793 = vst.msk [vmem:[#allocation3 + $0xf0] sm:$0xf] %vm1227, %v1531
        %1794 = vst.msk [vmem:[#allocation3 + $0xfc] sm:$0xf] %vm1227, %v1541
        %1795 = vst.msk [vmem:[#allocation3 + $0x108] sm:$0xf] %vm1227, %v1551
        %1796 = vst.msk [vmem:[#allocation3 + $0x114] sm:$0xf] %vm1227, %v1561
        %1797 = vst.msk [vmem:[#allocation3 + $0x120] sm:$0xf] %vm1227, %v1571
        %1798 = vst.msk [vmem:[#allocation3 + $0x12c] sm:$0xf] %vm1227, %v1581
        %1799 = vst.msk [vmem:[#allocation3 + $0x138] sm:$0xf] %vm1227, %v1591
        %1800 = vst.msk [vmem:[#allocation3 + $0x144] sm:$0xf] %vm1227, %v1601
        %1801 = vst.msk [vmem:[#allocation3 + $0x150] sm:$0xf] %vm1227, %v1611
        %1802 = vst.msk [vmem:[#allocation3 + $0x15c] sm:$0xf] %vm1227, %v1621
        %1803 = vst.msk [vmem:[#allocation3 + $0x168] sm:$0xf] %vm1227, %v1631
        %1804 = vst.msk [vmem:[#allocation3 + $0x174] sm:$0xf] %vm1227, %v1641
        %1805 = vst.msk [vmem:[#allocation3 + $0x180] sm:$0xf] %vm1227, %v1651
        %1806 = vst.msk [vmem:[#allocation3 + $0x18c] sm:$0xf] %vm1227, %v1661
        %1807 = vst.msk [vmem:[#allocation3 + $0x198] sm:$0xf] %vm1227, %v1671
        %1808 = vst.msk [vmem:[#allocation3 + $0x1a4] sm:$0xf] %vm1227, %v1681
        %1809 = vst.msk [vmem:[#allocation3 + $0x1b0] sm:$0xf] %vm1227, %v1691
        %1810 = vst.msk [vmem:[#allocation3 + $0x1bc] sm:$0xf] %vm1227, %v1701
        %1811 = vst.msk [vmem:[#allocation3 + $0x1c8] sm:$0xf] %vm1227, %v1711
        %1812 = vst.msk [vmem:[#allocation3 + $0x1d4] sm:$0xf] %vm1227, %v1721
        %1813 = vst.msk [vmem:[#allocation3 + $0x1e0] sm:$0xf] %vm1227, %v1731
        %v1814 = vld [vmem:[#allocation2] sm:$0x8]
        %v1815 = vld [vmem:[#allocation2 + $0x4] sm:$0xf]
        %v1816 = vld [vmem:[#allocation2 + $0x8] sm:$0xf]
        %v1817 = vld [vmem:[#allocation2 + $0xc] sm:$0xf]
        %v1818 = vld [vmem:[#allocation2 + $0x10] sm:$0xf]
        %v1819 = vld [vmem:[#allocation2 + $0x14] sm:$0xf]
        %v1820 = vld [vmem:[#allocation2 + $0x18] sm:$0xf]
        %v1821 = vld [vmem:[#allocation2 + $0x1c] sm:$0xf]
        %v1822 = vld [vmem:[#allocation2 + $0x20] sm:$0xf]
        %v1823 = vld [vmem:[#allocation2 + $0x24] sm:$0xf]
        %v1824 = vld [vmem:[#allocation2 + $0x28] sm:$0xf]
        %v1825 = vld [vmem:[#allocation2 + $0x2c] sm:$0xf]
        %v1826 = vld [vmem:[#allocation2 + $0x30] sm:$0xf]
        %v1827 = vld [vmem:[#allocation2 + $0x34] sm:$0xf]
        %v1828 = vld [vmem:[#allocation2 + $0x38] sm:$0xf]
        %v1829 = vld [vmem:[#allocation2 + $0x3c] sm:$0xf]
        %v1830 = vld [vmem:[#allocation2 + $0x40] sm:$0xf]
        %v1831 = vld [vmem:[#allocation2 + $0x44] sm:$0xf]
        %v1832 = vld [vmem:[#allocation2 + $0x48] sm:$0xf]
        %v1833 = vld [vmem:[#allocation2 + $0x4c] sm:$0xf]
        %v1834 = vld [vmem:[#allocation2 + $0x50] sm:$0xf]
        %v1835 = vld [vmem:[#allocation2 + $0x54] sm:$0xf]
        %v1836 = vld [vmem:[#allocation2 + $0x58] sm:$0xf]
        %v1837 = vld [vmem:[#allocation2 + $0x5c] sm:$0xf]
        %v1838 = vld [vmem:[#allocation2 + $0x60] sm:$0xf]
        %v1839 = vld [vmem:[#allocation2 + $0x64] sm:$0xf]
        %v1840 = vld [vmem:[#allocation2 + $0x68] sm:$0xf]
        %v1841 = vld [vmem:[#allocation2 + $0x6c] sm:$0xf]
        %v1842 = vld [vmem:[#allocation2 + $0x70] sm:$0xf]
        %v1843 = vld [vmem:[#allocation2 + $0x74] sm:$0xf]
        %v1844 = vld [vmem:[#allocation2 + $0x78] sm:$0xf]
        %v1845 = vld [vmem:[#allocation2 + $0x7c] sm:$0xf]
        %v1846 = vld [vmem:[#allocation2 + $0x80] sm:$0xf]
        %v1847 = vld [vmem:[#allocation2 + $0x84] sm:$0xf]
        %v1848 = vld [vmem:[#allocation2 + $0x88] sm:$0xf]
        %v1849 = vld [vmem:[#allocation2 + $0x8c] sm:$0xf]
        %v1850 = vld [vmem:[#allocation2 + $0x90] sm:$0xf]
        %v1851 = vld [vmem:[#allocation2 + $0x94] sm:$0xf]
        %v1852 = vld [vmem:[#allocation2 + $0x98] sm:$0xf]
        %v1853 = vld [vmem:[#allocation2 + $0x9c] sm:$0xf]
        %v1854 = vld [vmem:[#allocation2 + $0xa0] sm:$0xf]
        %v1855 = vld [vmem:[#allocation2 + $0xa4] sm:$0x7]
        %vm1898 = vcmask 1040384
        %vm1899 = vcmask 1044484
        %vm1900 = vmor %vm1898, %vm1899
        %v1901 = vrot.slane %v1814, 7
        %v1902 = vrot.slane %v1901, 4
        %v1903 = vrot.slane %v1815, 7
        %v1904 = vsel %vm1900, %v1902, %v1903
        %v1905 = vrot.slane %v1903, 4
        %v1906 = vrot.slane %v1816, 7
        %v1907 = vsel %vm1900, %v1905, %v1906
        %v1908 = vrot.slane %v1906, 4
        %v1909 = vrot.slane %v1817, 7
        %v1910 = vsel %vm1900, %v1908, %v1909
        %v1911 = vrot.slane %v1909, 4
        %v1912 = vrot.slane %v1818, 7
        %v1913 = vsel %vm1900, %v1911, %v1912
        %v1914 = vrot.slane %v1912, 4
        %v1915 = vrot.slane %v1819, 7
        %v1916 = vsel %vm1900, %v1914, %v1915
        %v1917 = vrot.slane %v1915, 4
        %v1918 = vrot.slane %v1820, 7
        %v1919 = vsel %vm1900, %v1917, %v1918
        %v1920 = vrot.slane %v1918, 4
        %v1921 = vrot.slane %v1821, 7
        %v1922 = vsel %vm1900, %v1920, %v1921
        %v1923 = vrot.slane %v1921, 4
        %v1924 = vrot.slane %v1822, 7
        %v1925 = vsel %vm1900, %v1923, %v1924
        %v1926 = vrot.slane %v1924, 4
        %v1927 = vrot.slane %v1823, 7
        %v1928 = vsel %vm1900, %v1926, %v1927
        %v1929 = vrot.slane %v1927, 4
        %v1930 = vrot.slane %v1824, 7
        %v1931 = vsel %vm1900, %v1929, %v1930
        %v1932 = vrot.slane %v1930, 4
        %v1933 = vrot.slane %v1825, 7
        %v1934 = vsel %vm1900, %v1932, %v1933
        %v1935 = vrot.slane %v1933, 4
        %v1936 = vrot.slane %v1826, 7
        %v1937 = vsel %vm1900, %v1935, %v1936
        %v1938 = vrot.slane %v1936, 4
        %v1939 = vrot.slane %v1827, 7
        %v1940 = vsel %vm1900, %v1938, %v1939
        %v1941 = vrot.slane %v1939, 4
        %v1942 = vrot.slane %v1828, 7
        %v1943 = vsel %vm1900, %v1941, %v1942
        %v1944 = vrot.slane %v1942, 4
        %v1945 = vrot.slane %v1829, 7
        %v1946 = vsel %vm1900, %v1944, %v1945
        %v1947 = vrot.slane %v1945, 4
        %v1948 = vrot.slane %v1830, 7
        %v1949 = vsel %vm1900, %v1947, %v1948
        %v1950 = vrot.slane %v1948, 4
        %v1951 = vrot.slane %v1831, 7
        %v1952 = vsel %vm1900, %v1950, %v1951
        %v1953 = vrot.slane %v1951, 4
        %v1954 = vrot.slane %v1832, 7
        %v1955 = vsel %vm1900, %v1953, %v1954
        %v1956 = vrot.slane %v1954, 4
        %v1957 = vrot.slane %v1833, 7
        %v1958 = vsel %vm1900, %v1956, %v1957
        %v1959 = vrot.slane %v1957, 4
        %v1960 = vrot.slane %v1834, 7
        %v1961 = vsel %vm1900, %v1959, %v1960
        %v1962 = vrot.slane %v1960, 4
        %v1963 = vrot.slane %v1835, 7
        %v1964 = vsel %vm1900, %v1962, %v1963
        %v1965 = vrot.slane %v1963, 4
        %v1966 = vrot.slane %v1836, 7
        %v1967 = vsel %vm1900, %v1965, %v1966
        %v1968 = vrot.slane %v1966, 4
        %v1969 = vrot.slane %v1837, 7
        %v1970 = vsel %vm1900, %v1968, %v1969
        %v1971 = vrot.slane %v1969, 4
        %v1972 = vrot.slane %v1838, 7
        %v1973 = vsel %vm1900, %v1971, %v1972
        %v1974 = vrot.slane %v1972, 4
        %v1975 = vrot.slane %v1839, 7
        %v1976 = vsel %vm1900, %v1974, %v1975
        %v1977 = vrot.slane %v1975, 4
        %v1978 = vrot.slane %v1840, 7
        %v1979 = vsel %vm1900, %v1977, %v1978
        %v1980 = vrot.slane %v1978, 4
        %v1981 = vrot.slane %v1841, 7
        %v1982 = vsel %vm1900, %v1980, %v1981
        %v1983 = vrot.slane %v1981, 4
        %v1984 = vrot.slane %v1842, 7
        %v1985 = vsel %vm1900, %v1983, %v1984
        %v1986 = vrot.slane %v1984, 4
        %v1987 = vrot.slane %v1843, 7
        %v1988 = vsel %vm1900, %v1986, %v1987
        %v1989 = vrot.slane %v1987, 4
        %v1990 = vrot.slane %v1844, 7
        %v1991 = vsel %vm1900, %v1989, %v1990
        %v1992 = vrot.slane %v1990, 4
        %v1993 = vrot.slane %v1845, 7
        %v1994 = vsel %vm1900, %v1992, %v1993
        %v1995 = vrot.slane %v1993, 4
        %v1996 = vrot.slane %v1846, 7
        %v1997 = vsel %vm1900, %v1995, %v1996
        %v1998 = vrot.slane %v1996, 4
        %v1999 = vrot.slane %v1847, 7
        %v2000 = vsel %vm1900, %v1998, %v1999
        %v2001 = vrot.slane %v1999, 4
        %v2002 = vrot.slane %v1848, 7
        %v2003 = vsel %vm1900, %v2001, %v2002
        %v2004 = vrot.slane %v2002, 4
        %v2005 = vrot.slane %v1849, 7
        %v2006 = vsel %vm1900, %v2004, %v2005
        %v2007 = vrot.slane %v2005, 4
        %v2008 = vrot.slane %v1850, 7
        %v2009 = vsel %vm1900, %v2007, %v2008
        %v2010 = vrot.slane %v2008, 4
        %v2011 = vrot.slane %v1851, 7
        %v2012 = vsel %vm1900, %v2010, %v2011
        %v2013 = vrot.slane %v2011, 4
        %v2014 = vrot.slane %v1852, 7
        %v2015 = vsel %vm1900, %v2013, %v2014
        %v2016 = vrot.slane %v2014, 4
        %v2017 = vrot.slane %v1853, 7
        %v2018 = vsel %vm1900, %v2016, %v2017
        %v2019 = vrot.slane %v2017, 4
        %v2020 = vrot.slane %v1854, 7
        %v2021 = vsel %vm1900, %v2019, %v2020
        %v2022 = vrot.slane %v2020, 4
        %v2023 = vrot.slane %v1855, 7
        %v2024 = vsel %vm1900, %v2022, %v2023
        %2025 = vrot.lane.b32.xlu0 %v1904, 16
        %v2026 = vpop.permute.xlu0 %2025
        %2027 = vrot.lane.b32.xlu0 %v1907, 16
        %v2028 = vpop.permute.xlu0 %2027
        %2029 = vrot.lane.b32.xlu0 %v1910, 16
        %v2030 = vpop.permute.xlu0 %2029
        %2031 = vrot.lane.b32.xlu0 %v1913, 16
        %v2032 = vpop.permute.xlu0 %2031
        %2033 = vrot.lane.b32.xlu0 %v1916, 16
        %v2034 = vpop.permute.xlu0 %2033
        %2035 = vrot.lane.b32.xlu0 %v1919, 16
        %v2036 = vpop.permute.xlu0 %2035
        %2037 = vrot.lane.b32.xlu0 %v1922, 16
        %v2038 = vpop.permute.xlu0 %2037
        %2039 = vrot.lane.b32.xlu0 %v1925, 16
        %v2040 = vpop.permute.xlu0 %2039
        %2041 = vrot.lane.b32.xlu0 %v1928, 16
        %v2042 = vpop.permute.xlu0 %2041
        %2043 = vrot.lane.b32.xlu0 %v1931, 16
        %v2044 = vpop.permute.xlu0 %2043
        %2045 = vrot.lane.b32.xlu0 %v1934, 16
        %v2046 = vpop.permute.xlu0 %2045
        %2047 = vrot.lane.b32.xlu0 %v1937, 16
        %v2048 = vpop.permute.xlu0 %2047
        %2049 = vrot.lane.b32.xlu0 %v1940, 16
        %v2050 = vpop.permute.xlu0 %2049
        %2051 = vrot.lane.b32.xlu0 %v1943, 16
        %v2052 = vpop.permute.xlu0 %2051
        %2053 = vrot.lane.b32.xlu0 %v1946, 16
        %v2054 = vpop.permute.xlu0 %2053
        %2055 = vrot.lane.b32.xlu0 %v1949, 16
        %v2056 = vpop.permute.xlu0 %2055
        %2057 = vrot.lane.b32.xlu0 %v1952, 16
        %v2058 = vpop.permute.xlu0 %2057
        %2059 = vrot.lane.b32.xlu0 %v1955, 16
        %v2060 = vpop.permute.xlu0 %2059
        %2061 = vrot.lane.b32.xlu0 %v1958, 16
        %v2062 = vpop.permute.xlu0 %2061
        %2063 = vrot.lane.b32.xlu0 %v1961, 16
        %v2064 = vpop.permute.xlu0 %2063
        %2065 = vrot.lane.b32.xlu0 %v1964, 16
        %v2066 = vpop.permute.xlu0 %2065
        %2067 = vrot.lane.b32.xlu0 %v1967, 16
        %v2068 = vpop.permute.xlu0 %2067
        %2069 = vrot.lane.b32.xlu0 %v1970, 16
        %v2070 = vpop.permute.xlu0 %2069
        %2071 = vrot.lane.b32.xlu0 %v1973, 16
        %v2072 = vpop.permute.xlu0 %2071
        %2073 = vrot.lane.b32.xlu0 %v1976, 16
        %v2074 = vpop.permute.xlu0 %2073
        %2075 = vrot.lane.b32.xlu0 %v1979, 16
        %v2076 = vpop.permute.xlu0 %2075
        %2077 = vrot.lane.b32.xlu0 %v1982, 16
        %v2078 = vpop.permute.xlu0 %2077
        %2079 = vrot.lane.b32.xlu0 %v1985, 16
        %v2080 = vpop.permute.xlu0 %2079
        %2081 = vrot.lane.b32.xlu0 %v1988, 16
        %v2082 = vpop.permute.xlu0 %2081
        %2083 = vrot.lane.b32.xlu0 %v1991, 16
        %v2084 = vpop.permute.xlu0 %2083
        %2085 = vrot.lane.b32.xlu0 %v1994, 16
        %v2086 = vpop.permute.xlu0 %2085
        %2087 = vrot.lane.b32.xlu0 %v1997, 16
        %v2088 = vpop.permute.xlu0 %2087
        %2089 = vrot.lane.b32.xlu0 %v2000, 16
        %v2090 = vpop.permute.xlu0 %2089
        %2091 = vrot.lane.b32.xlu0 %v2003, 16
        %v2092 = vpop.permute.xlu0 %2091
        %2093 = vrot.lane.b32.xlu0 %v2006, 16
        %v2094 = vpop.permute.xlu0 %2093
        %2095 = vrot.lane.b32.xlu0 %v2009, 16
        %v2096 = vpop.permute.xlu0 %2095
        %2097 = vrot.lane.b32.xlu0 %v2012, 16
        %v2098 = vpop.permute.xlu0 %2097
        %2099 = vrot.lane.b32.xlu0 %v2015, 16
        %v2100 = vpop.permute.xlu0 %2099
        %2101 = vrot.lane.b32.xlu0 %v2018, 16
        %v2102 = vpop.permute.xlu0 %2101
        %2103 = vrot.lane.b32.xlu0 %v2021, 16
        %v2104 = vpop.permute.xlu0 %2103
        %2105 = vrot.lane.b32.xlu0 %v2024, 16
        %v2106 = vpop.permute.xlu0 %2105
        %vm2148 = vcmask 257152
        %2149 = vst.msk [vmem:[#allocation3] sm:$0xf] %vm2148, %v2026
        %2150 = vst.msk [vmem:[#allocation3 + $0xc] sm:$0xf] %vm2148, %v2028
        %2151 = vst.msk [vmem:[#allocation3 + $0x18] sm:$0xf] %vm2148, %v2030
        %2152 = vst.msk [vmem:[#allocation3 + $0x24] sm:$0xf] %vm2148, %v2032
        %2153 = vst.msk [vmem:[#allocation3 + $0x30] sm:$0xf] %vm2148, %v2034
        %2154 = vst.msk [vmem:[#allocation3 + $0x3c] sm:$0xf] %vm2148, %v2036
        %2155 = vst.msk [vmem:[#allocation3 + $0x48] sm:$0xf] %vm2148, %v2038
        %2156 = vst.msk [vmem:[#allocation3 + $0x54] sm:$0xf] %vm2148, %v2040
        %2157 = vst.msk [vmem:[#allocation3 + $0x60] sm:$0xf] %vm2148, %v2042
        %2158 = vst.msk [vmem:[#allocation3 + $0x6c] sm:$0xf] %vm2148, %v2044
        %2159 = vst.msk [vmem:[#allocation3 + $0x78] sm:$0xf] %vm2148, %v2046
        %2160 = vst.msk [vmem:[#allocation3 + $0x84] sm:$0xf] %vm2148, %v2048
        %2161 = vst.msk [vmem:[#allocation3 + $0x90] sm:$0xf] %vm2148, %v2050
        %2162 = vst.msk [vmem:[#allocation3 + $0x9c] sm:$0xf] %vm2148, %v2052
        %2163 = vst.msk [vmem:[#allocation3 + $0xa8] sm:$0xf] %vm2148, %v2054
        %2164 = vst.msk [vmem:[#allocation3 + $0xb4] sm:$0xf] %vm2148, %v2056
        %2165 = vst.msk [vmem:[#allocation3 + $0xc0] sm:$0xf] %vm2148, %v2058
        %2166 = vst.msk [vmem:[#allocation3 + $0xcc] sm:$0xf] %vm2148, %v2060
        %2167 = vst.msk [vmem:[#allocation3 + $0xd8] sm:$0xf] %vm2148, %v2062
        %2168 = vst.msk [vmem:[#allocation3 + $0xe4] sm:$0xf] %vm2148, %v2064
        %2169 = vst.msk [vmem:[#allocation3 + $0xf0] sm:$0xf] %vm2148, %v2066
        %2170 = vst.msk [vmem:[#allocation3 + $0xfc] sm:$0xf] %vm2148, %v2068
        %2171 = vst.msk [vmem:[#allocation3 + $0x108] sm:$0xf] %vm2148, %v2070
        %2172 = vst.msk [vmem:[#allocation3 + $0x114] sm:$0xf] %vm2148, %v2072
        %2173 = vst.msk [vmem:[#allocation3 + $0x120] sm:$0xf] %vm2148, %v2074
        %2174 = vst.msk [vmem:[#allocation3 + $0x12c] sm:$0xf] %vm2148, %v2076
        %2175 = vst.msk [vmem:[#allocation3 + $0x138] sm:$0xf] %vm2148, %v2078
        %2176 = vst.msk [vmem:[#allocation3 + $0x144] sm:$0xf] %vm2148, %v2080
        %2177 = vst.msk [vmem:[#allocation3 + $0x150] sm:$0xf] %vm2148, %v2082
        %2178 = vst.msk [vmem:[#allocation3 + $0x15c] sm:$0xf] %vm2148, %v2084
        %2179 = vst.msk [vmem:[#allocation3 + $0x168] sm:$0xf] %vm2148, %v2086
        %2180 = vst.msk [vmem:[#allocation3 + $0x174] sm:$0xf] %vm2148, %v2088
        %2181 = vst.msk [vmem:[#allocation3 + $0x180] sm:$0xf] %vm2148, %v2090
        %2182 = vst.msk [vmem:[#allocation3 + $0x18c] sm:$0xf] %vm2148, %v2092
        %2183 = vst.msk [vmem:[#allocation3 + $0x198] sm:$0xf] %vm2148, %v2094
        %2184 = vst.msk [vmem:[#allocation3 + $0x1a4] sm:$0xf] %vm2148, %v2096
        %2185 = vst.msk [vmem:[#allocation3 + $0x1b0] sm:$0xf] %vm2148, %v2098
        %2186 = vst.msk [vmem:[#allocation3 + $0x1bc] sm:$0xf] %vm2148, %v2100
        %2187 = vst.msk [vmem:[#allocation3 + $0x1c8] sm:$0xf] %vm2148, %v2102
        %2188 = vst.msk [vmem:[#allocation3 + $0x1d4] sm:$0xf] %vm2148, %v2104
        %2189 = vst.msk [vmem:[#allocation3 + $0x1e0] sm:$0xf] %vm2148, %v2106
        %v2190 = vld [vmem:[#allocation2] sm:$0x8]
        %v2191 = vld [vmem:[#allocation2 + $0x4] sm:$0xf]
        %v2192 = vld [vmem:[#allocation2 + $0x8] sm:$0xf]
        %v2193 = vld [vmem:[#allocation2 + $0xc] sm:$0xf]
        %v2194 = vld [vmem:[#allocation2 + $0x10] sm:$0xf]
        %v2195 = vld [vmem:[#allocation2 + $0x14] sm:$0xf]
        %v2196 = vld [vmem:[#allocation2 + $0x18] sm:$0xf]
        %v2197 = vld [vmem:[#allocation2 + $0x1c] sm:$0xf]
        %v2198 = vld [vmem:[#allocation2 + $0x20] sm:$0xf]
        %v2199 = vld [vmem:[#allocation2 + $0x24] sm:$0xf]
        %v2200 = vld [vmem:[#allocation2 + $0x28] sm:$0xf]
        %v2201 = vld [vmem:[#allocation2 + $0x2c] sm:$0xf]
        %v2202 = vld [vmem:[#allocation2 + $0x30] sm:$0xf]
        %v2203 = vld [vmem:[#allocation2 + $0x34] sm:$0xf]
        %v2204 = vld [vmem:[#allocation2 + $0x38] sm:$0xf]
        %v2205 = vld [vmem:[#allocation2 + $0x3c] sm:$0xf]
        %v2206 = vld [vmem:[#allocation2 + $0x40] sm:$0xf]
        %v2207 = vld [vmem:[#allocation2 + $0x44] sm:$0xf]
        %v2208 = vld [vmem:[#allocation2 + $0x48] sm:$0xf]
        %v2209 = vld [vmem:[#allocation2 + $0x4c] sm:$0xf]
        %v2210 = vld [vmem:[#allocation2 + $0x50] sm:$0xf]
        %v2211 = vld [vmem:[#allocation2 + $0x54] sm:$0xf]
        %v2212 = vld [vmem:[#allocation2 + $0x58] sm:$0xf]
        %v2213 = vld [vmem:[#allocation2 + $0x5c] sm:$0xf]
        %v2214 = vld [vmem:[#allocation2 + $0x60] sm:$0xf]
        %v2215 = vld [vmem:[#allocation2 + $0x64] sm:$0xf]
        %v2216 = vld [vmem:[#allocation2 + $0x68] sm:$0xf]
        %v2217 = vld [vmem:[#allocation2 + $0x6c] sm:$0xf]
        %v2218 = vld [vmem:[#allocation2 + $0x70] sm:$0xf]
        %v2219 = vld [vmem:[#allocation2 + $0x74] sm:$0xf]
        %v2220 = vld [vmem:[#allocation2 + $0x78] sm:$0xf]
        %v2221 = vld [vmem:[#allocation2 + $0x7c] sm:$0xf]
        %v2222 = vld [vmem:[#allocation2 + $0x80] sm:$0xf]
        %v2223 = vld [vmem:[#allocation2 + $0x84] sm:$0xf]
        %v2224 = vld [vmem:[#allocation2 + $0x88] sm:$0xf]
        %v2225 = vld [vmem:[#allocation2 + $0x8c] sm:$0xf]
        %v2226 = vld [vmem:[#allocation2 + $0x90] sm:$0xf]
        %v2227 = vld [vmem:[#allocation2 + $0x94] sm:$0xf]
        %v2228 = vld [vmem:[#allocation2 + $0x98] sm:$0xf]
        %v2229 = vld [vmem:[#allocation2 + $0x9c] sm:$0xf]
        %v2230 = vld [vmem:[#allocation2 + $0xa0] sm:$0xf]
        %v2231 = vld [vmem:[#allocation2 + $0xa4] sm:$0xf]
        %vm2232 = vsmask.f32 256
        %vm2233 = vsmask.f32 4368
        %vm2234 = vmor %vm2232, %vm2233
        %v2236 = vshrl.u32 %v2190, 16
        %v2238 = vrot.slane %v2236, 7
        %v2239 = vrot.slane %v2238, 4
        %v2241 = vshrl.u32 %v2191, 16
        %v2243 = vrot.slane %v2241, 7
        %v2244 = vshll.u32 %v2191, 16
        %v2246 = vor.u32 %v2243, %v2244
        %v2247 = vsel %vm2234, %v2239, %v2246
        %v2248 = vrot.slane %v2243, 4
        %v2250 = vshrl.u32 %v2192, 16
        %v2252 = vrot.slane %v2250, 7
        %v2253 = vshll.u32 %v2192, 16
        %v2255 = vor.u32 %v2252, %v2253
        %v2256 = vsel %vm2234, %v2248, %v2255
        %v2257 = vrot.slane %v2252, 4
        %v2259 = vshrl.u32 %v2193, 16
        %v2261 = vrot.slane %v2259, 7
        %v2262 = vshll.u32 %v2193, 16
        %v2264 = vor.u32 %v2261, %v2262
        %v2265 = vsel %vm2234, %v2257, %v2264
        %v2266 = vrot.slane %v2261, 4
        %v2268 = vshrl.u32 %v2194, 16
        %v2270 = vrot.slane %v2268, 7
        %v2271 = vshll.u32 %v2194, 16
        %v2273 = vor.u32 %v2270, %v2271
        %v2274 = vsel %vm2234, %v2266, %v2273
        %v2275 = vrot.slane %v2270, 4
        %v2277 = vshrl.u32 %v2195, 16
        %v2279 = vrot.slane %v2277, 7
        %v2280 = vshll.u32 %v2195, 16
        %v2282 = vor.u32 %v2279, %v2280
        %v2283 = vsel %vm2234, %v2275, %v2282
        %v2284 = vrot.slane %v2279, 4
        %v2286 = vshrl.u32 %v2196, 16
        %v2288 = vrot.slane %v2286, 7
        %v2289 = vshll.u32 %v2196, 16
        %v2291 = vor.u32 %v2288, %v2289
        %v2292 = vsel %vm2234, %v2284, %v2291
        %v2293 = vrot.slane %v2288, 4
        %v2295 = vshrl.u32 %v2197, 16
        %v2297 = vrot.slane %v2295, 7
        %v2298 = vshll.u32 %v2197, 16
        %v2300 = vor.u32 %v2297, %v2298
        %v2301 = vsel %vm2234, %v2293, %v2300
        %v2302 = vrot.slane %v2297, 4
        %v2304 = vshrl.u32 %v2198, 16
        %v2306 = vrot.slane %v2304, 7
        %v2307 = vshll.u32 %v2198, 16
        %v2309 = vor.u32 %v2306, %v2307
        %v2310 = vsel %vm2234, %v2302, %v2309
        %v2311 = vrot.slane %v2306, 4
        %v2313 = vshrl.u32 %v2199, 16
        %v2315 = vrot.slane %v2313, 7
        %v2316 = vshll.u32 %v2199, 16
        %v2318 = vor.u32 %v2315, %v2316
        %v2319 = vsel %vm2234, %v2311, %v2318
        %v2320 = vrot.slane %v2315, 4
        %v2322 = vshrl.u32 %v2200, 16
        %v2324 = vrot.slane %v2322, 7
        %v2325 = vshll.u32 %v2200, 16
        %v2327 = vor.u32 %v2324, %v2325
        %v2328 = vsel %vm2234, %v2320, %v2327
        %v2329 = vrot.slane %v2324, 4
        %v2331 = vshrl.u32 %v2201, 16
        %v2333 = vrot.slane %v2331, 7
        %v2334 = vshll.u32 %v2201, 16
        %v2336 = vor.u32 %v2333, %v2334
        %v2337 = vsel %vm2234, %v2329, %v2336
        %v2338 = vrot.slane %v2333, 4
        %v2340 = vshrl.u32 %v2202, 16
        %v2342 = vrot.slane %v2340, 7
        %v2343 = vshll.u32 %v2202, 16
        %v2345 = vor.u32 %v2342, %v2343
        %v2346 = vsel %vm2234, %v2338, %v2345
        %v2347 = vrot.slane %v2342, 4
        %v2349 = vshrl.u32 %v2203, 16
        %v2351 = vrot.slane %v2349, 7
        %v2352 = vshll.u32 %v2203, 16
        %v2354 = vor.u32 %v2351, %v2352
        %v2355 = vsel %vm2234, %v2347, %v2354
        %v2356 = vrot.slane %v2351, 4
        %v2358 = vshrl.u32 %v2204, 16
        %v2360 = vrot.slane %v2358, 7
        %v2361 = vshll.u32 %v2204, 16
        %v2363 = vor.u32 %v2360, %v2361
        %v2364 = vsel %vm2234, %v2356, %v2363
        %v2365 = vrot.slane %v2360, 4
        %v2367 = vshrl.u32 %v2205, 16
        %v2369 = vrot.slane %v2367, 7
        %v2370 = vshll.u32 %v2205, 16
        %v2372 = vor.u32 %v2369, %v2370
        %v2373 = vsel %vm2234, %v2365, %v2372
        %v2374 = vrot.slane %v2369, 4
        %v2376 = vshrl.u32 %v2206, 16
        %v2378 = vrot.slane %v2376, 7
        %v2379 = vshll.u32 %v2206, 16
        %v2381 = vor.u32 %v2378, %v2379
        %v2382 = vsel %vm2234, %v2374, %v2381
        %v2383 = vrot.slane %v2378, 4
        %v2385 = vshrl.u32 %v2207, 16
        %v2387 = vrot.slane %v2385, 7
        %v2388 = vshll.u32 %v2207, 16
        %v2390 = vor.u32 %v2387, %v2388
        %v2391 = vsel %vm2234, %v2383, %v2390
        %v2392 = vrot.slane %v2387, 4
        %v2394 = vshrl.u32 %v2208, 16
        %v2396 = vrot.slane %v2394, 7
        %v2397 = vshll.u32 %v2208, 16
        %v2399 = vor.u32 %v2396, %v2397
        %v2400 = vsel %vm2234, %v2392, %v2399
        %v2401 = vrot.slane %v2396, 4
        %v2403 = vshrl.u32 %v2209, 16
        %v2405 = vrot.slane %v2403, 7
        %v2406 = vshll.u32 %v2209, 16
        %v2408 = vor.u32 %v2405, %v2406
        %v2409 = vsel %vm2234, %v2401, %v2408
        %v2410 = vrot.slane %v2405, 4
        %v2412 = vshrl.u32 %v2210, 16
        %v2414 = vrot.slane %v2412, 7
        %v2415 = vshll.u32 %v2210, 16
        %v2417 = vor.u32 %v2414, %v2415
        %v2418 = vsel %vm2234, %v2410, %v2417
        %v2419 = vrot.slane %v2414, 4
        %v2421 = vshrl.u32 %v2211, 16
        %v2423 = vrot.slane %v2421, 7
        %v2424 = vshll.u32 %v2211, 16
        %v2426 = vor.u32 %v2423, %v2424
        %v2427 = vsel %vm2234, %v2419, %v2426
        %v2428 = vrot.slane %v2423, 4
        %v2430 = vshrl.u32 %v2212, 16
        %v2432 = vrot.slane %v2430, 7
        %v2433 = vshll.u32 %v2212, 16
        %v2435 = vor.u32 %v2432, %v2433
        %v2436 = vsel %vm2234, %v2428, %v2435
        %v2437 = vrot.slane %v2432, 4
        %v2439 = vshrl.u32 %v2213, 16
        %v2441 = vrot.slane %v2439, 7
        %v2442 = vshll.u32 %v2213, 16
        %v2444 = vor.u32 %v2441, %v2442
        %v2445 = vsel %vm2234, %v2437, %v2444
        %v2446 = vrot.slane %v2441, 4
        %v2448 = vshrl.u32 %v2214, 16
        %v2450 = vrot.slane %v2448, 7
        %v2451 = vshll.u32 %v2214, 16
        %v2453 = vor.u32 %v2450, %v2451
        %v2454 = vsel %vm2234, %v2446, %v2453
        %v2455 = vrot.slane %v2450, 4
        %v2457 = vshrl.u32 %v2215, 16
        %v2459 = vrot.slane %v2457, 7
        %v2460 = vshll.u32 %v2215, 16
        %v2462 = vor.u32 %v2459, %v2460
        %v2463 = vsel %vm2234, %v2455, %v2462
        %v2464 = vrot.slane %v2459, 4
        %v2466 = vshrl.u32 %v2216, 16
        %v2468 = vrot.slane %v2466, 7
        %v2469 = vshll.u32 %v2216, 16
        %v2471 = vor.u32 %v2468, %v2469
        %v2472 = vsel %vm2234, %v2464, %v2471
        %v2473 = vrot.slane %v2468, 4
        %v2475 = vshrl.u32 %v2217, 16
        %v2477 = vrot.slane %v2475, 7
        %v2478 = vshll.u32 %v2217, 16
        %v2480 = vor.u32 %v2477, %v2478
        %v2481 = vsel %vm2234, %v2473, %v2480
        %v2482 = vrot.slane %v2477, 4
        %v2484 = vshrl.u32 %v2218, 16
        %v2486 = vrot.slane %v2484, 7
        %v2487 = vshll.u32 %v2218, 16
        %v2489 = vor.u32 %v2486, %v2487
        %v2490 = vsel %vm2234, %v2482, %v2489
        %v2491 = vrot.slane %v2486, 4
        %v2493 = vshrl.u32 %v2219, 16
        %v2495 = vrot.slane %v2493, 7
        %v2496 = vshll.u32 %v2219, 16
        %v2498 = vor.u32 %v2495, %v2496
        %v2499 = vsel %vm2234, %v2491, %v2498
        %v2500 = vrot.slane %v2495, 4
        %v2502 = vshrl.u32 %v2220, 16
        %v2504 = vrot.slane %v2502, 7
        %v2505 = vshll.u32 %v2220, 16
        %v2507 = vor.u32 %v2504, %v2505
        %v2508 = vsel %vm2234, %v2500, %v2507
        %v2509 = vrot.slane %v2504, 4
        %v2511 = vshrl.u32 %v2221, 16
        %v2513 = vrot.slane %v2511, 7
        %v2514 = vshll.u32 %v2221, 16
        %v2516 = vor.u32 %v2513, %v2514
        %v2517 = vsel %vm2234, %v2509, %v2516
        %v2518 = vrot.slane %v2513, 4
        %v2520 = vshrl.u32 %v2222, 16
        %v2522 = vrot.slane %v2520, 7
        %v2523 = vshll.u32 %v2222, 16
        %v2525 = vor.u32 %v2522, %v2523
        %v2526 = vsel %vm2234, %v2518, %v2525
        %v2527 = vrot.slane %v2522, 4
        %v2529 = vshrl.u32 %v2223, 16
        %v2531 = vrot.slane %v2529, 7
        %v2532 = vshll.u32 %v2223, 16
        %v2534 = vor.u32 %v2531, %v2532
        %v2535 = vsel %vm2234, %v2527, %v2534
        %v2536 = vrot.slane %v2531, 4
        %v2538 = vshrl.u32 %v2224, 16
        %v2540 = vrot.slane %v2538, 7
        %v2541 = vshll.u32 %v2224, 16
        %v2543 = vor.u32 %v2540, %v2541
        %v2544 = vsel %vm2234, %v2536, %v2543
        %v2545 = vrot.slane %v2540, 4
        %v2547 = vshrl.u32 %v2225, 16
        %v2549 = vrot.slane %v2547, 7
        %v2550 = vshll.u32 %v2225, 16
        %v2552 = vor.u32 %v2549, %v2550
        %v2553 = vsel %vm2234, %v2545, %v2552
        %v2554 = vrot.slane %v2549, 4
        %v2556 = vshrl.u32 %v2226, 16
        %v2558 = vrot.slane %v2556, 7
        %v2559 = vshll.u32 %v2226, 16
        %v2561 = vor.u32 %v2558, %v2559
        %v2562 = vsel %vm2234, %v2554, %v2561
        %v2563 = vrot.slane %v2558, 4
        %v2565 = vshrl.u32 %v2227, 16
        %v2567 = vrot.slane %v2565, 7
        %v2568 = vshll.u32 %v2227, 16
        %v2570 = vor.u32 %v2567, %v2568
        %v2571 = vsel %vm2234, %v2563, %v2570
        %v2572 = vrot.slane %v2567, 4
        %v2574 = vshrl.u32 %v2228, 16
        %v2576 = vrot.slane %v2574, 7
        %v2577 = vshll.u32 %v2228, 16
        %v2579 = vor.u32 %v2576, %v2577
        %v2580 = vsel %vm2234, %v2572, %v2579
        %v2581 = vrot.slane %v2576, 4
        %v2583 = vshrl.u32 %v2229, 16
        %v2585 = vrot.slane %v2583, 7
        %v2586 = vshll.u32 %v2229, 16
        %v2588 = vor.u32 %v2585, %v2586
        %v2589 = vsel %vm2234, %v2581, %v2588
        %v2590 = vrot.slane %v2585, 4
        %v2592 = vshrl.u32 %v2230, 16
        %v2594 = vrot.slane %v2592, 7
        %v2595 = vshll.u32 %v2230, 16
        %v2597 = vor.u32 %v2594, %v2595
        %v2598 = vsel %vm2234, %v2590, %v2597
        %v2599 = vrot.slane %v2594, 4
        %v2601 = vshrl.u32 %v2231, 16
        %v2603 = vrot.slane %v2601, 7
        %v2604 = vshll.u32 %v2231, 16
        %v2606 = vor.u32 %v2603, %v2604
        %v2607 = vsel %vm2234, %v2599, %v2606
        %2608 = vrot.lane.b32.xlu0 %v2247, 32
        %v2609 = vpop.permute.xlu0 %2608
        %2610 = vrot.lane.b32.xlu0 %v2256, 32
        %v2611 = vpop.permute.xlu0 %2610
        %2612 = vrot.lane.b32.xlu0 %v2265, 32
        %v2613 = vpop.permute.xlu0 %2612
        %2614 = vrot.lane.b32.xlu0 %v2274, 32
        %v2615 = vpop.permute.xlu0 %2614
        %2616 = vrot.lane.b32.xlu0 %v2283, 32
        %v2617 = vpop.permute.xlu0 %2616
        %2618 = vrot.lane.b32.xlu0 %v2292, 32
        %v2619 = vpop.permute.xlu0 %2618
        %2620 = vrot.lane.b32.xlu0 %v2301, 32
        %v2621 = vpop.permute.xlu0 %2620
        %2622 = vrot.lane.b32.xlu0 %v2310, 32
        %v2623 = vpop.permute.xlu0 %2622
        %2624 = vrot.lane.b32.xlu0 %v2319, 32
        %v2625 = vpop.permute.xlu0 %2624
        %2626 = vrot.lane.b32.xlu0 %v2328, 32
        %v2627 = vpop.permute.xlu0 %2626
        %2628 = vrot.lane.b32.xlu0 %v2337, 32
        %v2629 = vpop.permute.xlu0 %2628
        %2630 = vrot.lane.b32.xlu0 %v2346, 32
        %v2631 = vpop.permute.xlu0 %2630
        %2632 = vrot.lane.b32.xlu0 %v2355, 32
        %v2633 = vpop.permute.xlu0 %2632
        %2634 = vrot.lane.b32.xlu0 %v2364, 32
        %v2635 = vpop.permute.xlu0 %2634
        %2636 = vrot.lane.b32.xlu0 %v2373, 32
        %v2637 = vpop.permute.xlu0 %2636
        %2638 = vrot.lane.b32.xlu0 %v2382, 32
        %v2639 = vpop.permute.xlu0 %2638
        %2640 = vrot.lane.b32.xlu0 %v2391, 32
        %v2641 = vpop.permute.xlu0 %2640
        %2642 = vrot.lane.b32.xlu0 %v2400, 32
        %v2643 = vpop.permute.xlu0 %2642
        %2644 = vrot.lane.b32.xlu0 %v2409, 32
        %v2645 = vpop.permute.xlu0 %2644
        %2646 = vrot.lane.b32.xlu0 %v2418, 32
        %v2647 = vpop.permute.xlu0 %2646
        %2648 = vrot.lane.b32.xlu0 %v2427, 32
        %v2649 = vpop.permute.xlu0 %2648
        %2650 = vrot.lane.b32.xlu0 %v2436, 32
        %v2651 = vpop.permute.xlu0 %2650
        %2652 = vrot.lane.b32.xlu0 %v2445, 32
        %v2653 = vpop.permute.xlu0 %2652
        %2654 = vrot.lane.b32.xlu0 %v2454, 32
        %v2655 = vpop.permute.xlu0 %2654
        %2656 = vrot.lane.b32.xlu0 %v2463, 32
        %v2657 = vpop.permute.xlu0 %2656
        %2658 = vrot.lane.b32.xlu0 %v2472, 32
        %v2659 = vpop.permute.xlu0 %2658
        %2660 = vrot.lane.b32.xlu0 %v2481, 32
        %v2661 = vpop.permute.xlu0 %2660
        %2662 = vrot.lane.b32.xlu0 %v2490, 32
        %v2663 = vpop.permute.xlu0 %2662
        %2664 = vrot.lane.b32.xlu0 %v2499, 32
        %v2665 = vpop.permute.xlu0 %2664
        %2666 = vrot.lane.b32.xlu0 %v2508, 32
        %v2667 = vpop.permute.xlu0 %2666
        %2668 = vrot.lane.b32.xlu0 %v2517, 32
        %v2669 = vpop.permute.xlu0 %2668
        %2670 = vrot.lane.b32.xlu0 %v2526, 32
        %v2671 = vpop.permute.xlu0 %2670
        %2672 = vrot.lane.b32.xlu0 %v2535, 32
        %v2673 = vpop.permute.xlu0 %2672
        %2674 = vrot.lane.b32.xlu0 %v2544, 32
        %v2675 = vpop.permute.xlu0 %2674
        %2676 = vrot.lane.b32.xlu0 %v2553, 32
        %v2677 = vpop.permute.xlu0 %2676
        %2678 = vrot.lane.b32.xlu0 %v2562, 32
        %v2679 = vpop.permute.xlu0 %2678
        %2680 = vrot.lane.b32.xlu0 %v2571, 32
        %v2681 = vpop.permute.xlu0 %2680
        %2682 = vrot.lane.b32.xlu0 %v2580, 32
        %v2683 = vpop.permute.xlu0 %2682
        %2684 = vrot.lane.b32.xlu0 %v2589, 32
        %v2685 = vpop.permute.xlu0 %2684
        %2686 = vrot.lane.b32.xlu0 %v2598, 32
        %v2687 = vpop.permute.xlu0 %2686
        %2688 = vrot.lane.b32.xlu0 %v2607, 32
        %v2689 = vpop.permute.xlu0 %2688
        %vm2731 = vcmask 388352
        %2732 = vst.msk [vmem:[#allocation3] sm:$0xf] %vm2731, %v2609
        %2733 = vst.msk [vmem:[#allocation3 + $0xc] sm:$0xf] %vm2731, %v2611
        %2734 = vst.msk [vmem:[#allocation3 + $0x18] sm:$0xf] %vm2731, %v2613
        %2735 = vst.msk [vmem:[#allocation3 + $0x24] sm:$0xf] %vm2731, %v2615
        %2736 = vst.msk [vmem:[#allocation3 + $0x30] sm:$0xf] %vm2731, %v2617
        %2737 = vst.msk [vmem:[#allocation3 + $0x3c] sm:$0xf] %vm2731, %v2619
        %2738 = vst.msk [vmem:[#allocation3 + $0x48] sm:$0xf] %vm2731, %v2621
        %2739 = vst.msk [vmem:[#allocation3 + $0x54] sm:$0xf] %vm2731, %v2623
        %2740 = vst.msk [vmem:[#allocation3 + $0x60] sm:$0xf] %vm2731, %v2625
        %2741 = vst.msk [vmem:[#allocation3 + $0x6c] sm:$0xf] %vm2731, %v2627
        %2742 = vst.msk [vmem:[#allocation3 + $0x78] sm:$0xf] %vm2731, %v2629
        %2743 = vst.msk [vmem:[#allocation3 + $0x84] sm:$0xf] %vm2731, %v2631
        %2744 = vst.msk [vmem:[#allocation3 + $0x90] sm:$0xf] %vm2731, %v2633
        %2745 = vst.msk [vmem:[#allocation3 + $0x9c] sm:$0xf] %vm2731, %v2635
        %2746 = vst.msk [vmem:[#allocation3 + $0xa8] sm:$0xf] %vm2731, %v2637
        %2747 = vst.msk [vmem:[#allocation3 + $0xb4] sm:$0xf] %vm2731, %v2639
        %2748 = vst.msk [vmem:[#allocation3 + $0xc0] sm:$0xf] %vm2731, %v2641
        %2749 = vst.msk [vmem:[#allocation3 + $0xcc] sm:$0xf] %vm2731, %v2643
        %2750 = vst.msk [vmem:[#allocation3 + $0xd8] sm:$0xf] %vm2731, %v2645
        %2751 = vst.msk [vmem:[#allocation3 + $0xe4] sm:$0xf] %vm2731, %v2647
        %2752 = vst.msk [vmem:[#allocation3 + $0xf0] sm:$0xf] %vm2731, %v2649
        %2753 = vst.msk [vmem:[#allocation3 + $0xfc] sm:$0xf] %vm2731, %v2651
        %2754 = vst.msk [vmem:[#allocation3 + $0x108] sm:$0xf] %vm2731, %v2653
        %2755 = vst.msk [vmem:[#allocation3 + $0x114] sm:$0xf] %vm2731, %v2655
        %2756 = vst.msk [vmem:[#allocation3 + $0x120] sm:$0xf] %vm2731, %v2657
        %2757 = vst.msk [vmem:[#allocation3 + $0x12c] sm:$0xf] %vm2731, %v2659
        %2758 = vst.msk [vmem:[#allocation3 + $0x138] sm:$0xf] %vm2731, %v2661
        %2759 = vst.msk [vmem:[#allocation3 + $0x144] sm:$0xf] %vm2731, %v2663
        %2760 = vst.msk [vmem:[#allocation3 + $0x150] sm:$0xf] %vm2731, %v2665
        %2761 = vst.msk [vmem:[#allocation3 + $0x15c] sm:$0xf] %vm2731, %v2667
        %2762 = vst.msk [vmem:[#allocation3 + $0x168] sm:$0xf] %vm2731, %v2669
        %2763 = vst.msk [vmem:[#allocation3 + $0x174] sm:$0xf] %vm2731, %v2671
        %2764 = vst.msk [vmem:[#allocation3 + $0x180] sm:$0xf] %vm2731, %v2673
        %2765 = vst.msk [vmem:[#allocation3 + $0x18c] sm:$0xf] %vm2731, %v2675
        %2766 = vst.msk [vmem:[#allocation3 + $0x198] sm:$0xf] %vm2731, %v2677
        %2767 = vst.msk [vmem:[#allocation3 + $0x1a4] sm:$0xf] %vm2731, %v2679
        %2768 = vst.msk [vmem:[#allocation3 + $0x1b0] sm:$0xf] %vm2731, %v2681
        %2769 = vst.msk [vmem:[#allocation3 + $0x1bc] sm:$0xf] %vm2731, %v2683
        %2770 = vst.msk [vmem:[#allocation3 + $0x1c8] sm:$0xf] %vm2731, %v2685
        %2771 = vst.msk [vmem:[#allocation3 + $0x1d4] sm:$0xf] %vm2731, %v2687
        %2772 = vst.msk [vmem:[#allocation3 + $0x1e0] sm:$0xf] %vm2731, %v2689
        %v2773 = vld [vmem:[#allocation2 + $0x8] sm:$0x8]
        %v2774 = vld [vmem:[#allocation2 + $0xc] sm:$0xf]
        %v2775 = vld [vmem:[#allocation2 + $0x10] sm:$0xf]
        %v2776 = vld [vmem:[#allocation2 + $0x14] sm:$0xf]
        %v2777 = vld [vmem:[#allocation2 + $0x18] sm:$0xf]
        %v2778 = vld [vmem:[#allocation2 + $0x1c] sm:$0xf]
        %v2779 = vld [vmem:[#allocation2 + $0x20] sm:$0xf]
        %v2780 = vld [vmem:[#allocation2 + $0x24] sm:$0xf]
        %v2781 = vld [vmem:[#allocation2 + $0x28] sm:$0xf]
        %v2782 = vld [vmem:[#allocation2 + $0x2c] sm:$0xf]
        %v2783 = vld [vmem:[#allocation2 + $0x30] sm:$0xf]
        %v2784 = vld [vmem:[#allocation2 + $0x34] sm:$0xf]
        %v2785 = vld [vmem:[#allocation2 + $0x38] sm:$0xf]
        %v2786 = vld [vmem:[#allocation2 + $0x3c] sm:$0xf]
        %v2787 = vld [vmem:[#allocation2 + $0x40] sm:$0xf]
        %v2788 = vld [vmem:[#allocation2 + $0x44] sm:$0xf]
        %v2789 = vld [vmem:[#allocation2 + $0x48] sm:$0xf]
        %v2790 = vld [vmem:[#allocation2 + $0x4c] sm:$0xf]
        %v2791 = vld [vmem:[#allocation2 + $0x50] sm:$0xf]
        %v2792 = vld [vmem:[#allocation2 + $0x54] sm:$0xf]
        %v2793 = vld [vmem:[#allocation2 + $0x58] sm:$0xf]
        %v2794 = vld [vmem:[#allocation2 + $0x5c] sm:$0xf]
        %v2795 = vld [vmem:[#allocation2 + $0x60] sm:$0xf]
        %v2796 = vld [vmem:[#allocation2 + $0x64] sm:$0xf]
        %v2797 = vld [vmem:[#allocation2 + $0x68] sm:$0xf]
        %v2798 = vld [vmem:[#allocation2 + $0x6c] sm:$0xf]
        %v2799 = vld [vmem:[#allocation2 + $0x70] sm:$0xf]
        %v2800 = vld [vmem:[#allocation2 + $0x74] sm:$0xf]
        %v2801 = vld [vmem:[#allocation2 + $0x78] sm:$0xf]
        %v2802 = vld [vmem:[#allocation2 + $0x7c] sm:$0xf]
        %v2803 = vld [vmem:[#allocation2 + $0x80] sm:$0xf]
        %v2804 = vld [vmem:[#allocation2 + $0x84] sm:$0xf]
        %v2805 = vld [vmem:[#allocation2 + $0x88] sm:$0xf]
        %v2806 = vld [vmem:[#allocation2 + $0x8c] sm:$0xf]
        %v2807 = vld [vmem:[#allocation2 + $0x90] sm:$0xf]
        %v2808 = vld [vmem:[#allocation2 + $0x94] sm:$0xf]
        %v2809 = vld [vmem:[#allocation2 + $0x98] sm:$0xf]
        %v2810 = vld [vmem:[#allocation2 + $0x9c] sm:$0xf]
        %v2811 = vld [vmem:[#allocation2 + $0xa0] sm:$0xf]
        %v2812 = vld [vmem:[#allocation2 + $0xa4] sm:$0xf]
        %v2813 = vld [vmem:[#allocation2 + $0xa8] sm:$0xf]
        %v2814 = vld [vmem:[#allocation2 + $0xac] sm:$0xf]
        %v2816 = vshrl.u32 %v2773, 16
        %v2818 = vrot.slane %v2816, 7
        %v2819 = vrot.slane %v2818, 4
        %v2821 = vshrl.u32 %v2774, 16
        %v2823 = vrot.slane %v2821, 7
        %v2824 = vshll.u32 %v2774, 16
        %v2826 = vor.u32 %v2823, %v2824
        %v2827 = vsel %vm2234, %v2819, %v2826
        %v2828 = vrot.slane %v2823, 4
        %v2830 = vshrl.u32 %v2775, 16
        %v2832 = vrot.slane %v2830, 7
        %v2833 = vshll.u32 %v2775, 16
        %v2835 = vor.u32 %v2832, %v2833
        %v2836 = vsel %vm2234, %v2828, %v2835
        %v2837 = vrot.slane %v2832, 4
        %v2839 = vshrl.u32 %v2776, 16
        %v2841 = vrot.slane %v2839, 7
        %v2842 = vshll.u32 %v2776, 16
        %v2844 = vor.u32 %v2841, %v2842
        %v2845 = vsel %vm2234, %v2837, %v2844
        %v2846 = vrot.slane %v2841, 4
        %v2848 = vshrl.u32 %v2777, 16
        %v2850 = vrot.slane %v2848, 7
        %v2851 = vshll.u32 %v2777, 16
        %v2853 = vor.u32 %v2850, %v2851
        %v2854 = vsel %vm2234, %v2846, %v2853
        %v2855 = vrot.slane %v2850, 4
        %v2857 = vshrl.u32 %v2778, 16
        %v2859 = vrot.slane %v2857, 7
        %v2860 = vshll.u32 %v2778, 16
        %v2862 = vor.u32 %v2859, %v2860
        %v2863 = vsel %vm2234, %v2855, %v2862
        %v2864 = vrot.slane %v2859, 4
        %v2866 = vshrl.u32 %v2779, 16
        %v2868 = vrot.slane %v2866, 7
        %v2869 = vshll.u32 %v2779, 16
        %v2871 = vor.u32 %v2868, %v2869
        %v2872 = vsel %vm2234, %v2864, %v2871
        %v2873 = vrot.slane %v2868, 4
        %v2875 = vshrl.u32 %v2780, 16
        %v2877 = vrot.slane %v2875, 7
        %v2878 = vshll.u32 %v2780, 16
        %v2880 = vor.u32 %v2877, %v2878
        %v2881 = vsel %vm2234, %v2873, %v2880
        %v2882 = vrot.slane %v2877, 4
        %v2884 = vshrl.u32 %v2781, 16
        %v2886 = vrot.slane %v2884, 7
        %v2887 = vshll.u32 %v2781, 16
        %v2889 = vor.u32 %v2886, %v2887
        %v2890 = vsel %vm2234, %v2882, %v2889
        %v2891 = vrot.slane %v2886, 4
        %v2893 = vshrl.u32 %v2782, 16
        %v2895 = vrot.slane %v2893, 7
        %v2896 = vshll.u32 %v2782, 16
        %v2898 = vor.u32 %v2895, %v2896
        %v2899 = vsel %vm2234, %v2891, %v2898
        %v2900 = vrot.slane %v2895, 4
        %v2902 = vshrl.u32 %v2783, 16
        %v2904 = vrot.slane %v2902, 7
        %v2905 = vshll.u32 %v2783, 16
        %v2907 = vor.u32 %v2904, %v2905
        %v2908 = vsel %vm2234, %v2900, %v2907
        %v2909 = vrot.slane %v2904, 4
        %v2911 = vshrl.u32 %v2784, 16
        %v2913 = vrot.slane %v2911, 7
        %v2914 = vshll.u32 %v2784, 16
        %v2916 = vor.u32 %v2913, %v2914
        %v2917 = vsel %vm2234, %v2909, %v2916
        %v2918 = vrot.slane %v2913, 4
        %v2920 = vshrl.u32 %v2785, 16
        %v2922 = vrot.slane %v2920, 7
        %v2923 = vshll.u32 %v2785, 16
        %v2925 = vor.u32 %v2922, %v2923
        %v2926 = vsel %vm2234, %v2918, %v2925
        %v2927 = vrot.slane %v2922, 4
        %v2929 = vshrl.u32 %v2786, 16
        %v2931 = vrot.slane %v2929, 7
        %v2932 = vshll.u32 %v2786, 16
        %v2934 = vor.u32 %v2931, %v2932
        %v2935 = vsel %vm2234, %v2927, %v2934
        %v2936 = vrot.slane %v2931, 4
        %v2938 = vshrl.u32 %v2787, 16
        %v2940 = vrot.slane %v2938, 7
        %v2941 = vshll.u32 %v2787, 16
        %v2943 = vor.u32 %v2940, %v2941
        %v2944 = vsel %vm2234, %v2936, %v2943
        %v2945 = vrot.slane %v2940, 4
        %v2947 = vshrl.u32 %v2788, 16
        %v2949 = vrot.slane %v2947, 7
        %v2950 = vshll.u32 %v2788, 16
        %v2952 = vor.u32 %v2949, %v2950
        %v2953 = vsel %vm2234, %v2945, %v2952
        %v2954 = vrot.slane %v2949, 4
        %v2956 = vshrl.u32 %v2789, 16
        %v2958 = vrot.slane %v2956, 7
        %v2959 = vshll.u32 %v2789, 16
        %v2961 = vor.u32 %v2958, %v2959
        %v2962 = vsel %vm2234, %v2954, %v2961
        %v2963 = vrot.slane %v2958, 4
        %v2965 = vshrl.u32 %v2790, 16
        %v2967 = vrot.slane %v2965, 7
        %v2968 = vshll.u32 %v2790, 16
        %v2970 = vor.u32 %v2967, %v2968
        %v2971 = vsel %vm2234, %v2963, %v2970
        %v2972 = vrot.slane %v2967, 4
        %v2974 = vshrl.u32 %v2791, 16
        %v2976 = vrot.slane %v2974, 7
        %v2977 = vshll.u32 %v2791, 16
        %v2979 = vor.u32 %v2976, %v2977
        %v2980 = vsel %vm2234, %v2972, %v2979
        %v2981 = vrot.slane %v2976, 4
        %v2983 = vshrl.u32 %v2792, 16
        %v2985 = vrot.slane %v2983, 7
        %v2986 = vshll.u32 %v2792, 16
        %v2988 = vor.u32 %v2985, %v2986
        %v2989 = vsel %vm2234, %v2981, %v2988
        %v2990 = vrot.slane %v2985, 4
        %v2992 = vshrl.u32 %v2793, 16
        %v2994 = vrot.slane %v2992, 7
        %v2995 = vshll.u32 %v2793, 16
        %v2997 = vor.u32 %v2994, %v2995
        %v2998 = vsel %vm2234, %v2990, %v2997
        %v2999 = vrot.slane %v2994, 4
        %v3001 = vshrl.u32 %v2794, 16
        %v3003 = vrot.slane %v3001, 7
        %v3004 = vshll.u32 %v2794, 16
        %v3006 = vor.u32 %v3003, %v3004
        %v3007 = vsel %vm2234, %v2999, %v3006
        %v3008 = vrot.slane %v3003, 4
        %v3010 = vshrl.u32 %v2795, 16
        %v3012 = vrot.slane %v3010, 7
        %v3013 = vshll.u32 %v2795, 16
        %v3015 = vor.u32 %v3012, %v3013
        %v3016 = vsel %vm2234, %v3008, %v3015
        %v3017 = vrot.slane %v3012, 4
        %v3019 = vshrl.u32 %v2796, 16
        %v3021 = vrot.slane %v3019, 7
        %v3022 = vshll.u32 %v2796, 16
        %v3024 = vor.u32 %v3021, %v3022
        %v3025 = vsel %vm2234, %v3017, %v3024
        %v3026 = vrot.slane %v3021, 4
        %v3028 = vshrl.u32 %v2797, 16
        %v3030 = vrot.slane %v3028, 7
        %v3031 = vshll.u32 %v2797, 16
        %v3033 = vor.u32 %v3030, %v3031
        %v3034 = vsel %vm2234, %v3026, %v3033
        %v3035 = vrot.slane %v3030, 4
        %v3037 = vshrl.u32 %v2798, 16
        %v3039 = vrot.slane %v3037, 7
        %v3040 = vshll.u32 %v2798, 16
        %v3042 = vor.u32 %v3039, %v3040
        %v3043 = vsel %vm2234, %v3035, %v3042
        %v3044 = vrot.slane %v3039, 4
        %v3046 = vshrl.u32 %v2799, 16
        %v3048 = vrot.slane %v3046, 7
        %v3049 = vshll.u32 %v2799, 16
        %v3051 = vor.u32 %v3048, %v3049
        %v3052 = vsel %vm2234, %v3044, %v3051
        %v3053 = vrot.slane %v3048, 4
        %v3055 = vshrl.u32 %v2800, 16
        %v3057 = vrot.slane %v3055, 7
        %v3058 = vshll.u32 %v2800, 16
        %v3060 = vor.u32 %v3057, %v3058
        %v3061 = vsel %vm2234, %v3053, %v3060
        %v3062 = vrot.slane %v3057, 4
        %v3064 = vshrl.u32 %v2801, 16
        %v3066 = vrot.slane %v3064, 7
        %v3067 = vshll.u32 %v2801, 16
        %v3069 = vor.u32 %v3066, %v3067
        %v3070 = vsel %vm2234, %v3062, %v3069
        %v3071 = vrot.slane %v3066, 4
        %v3073 = vshrl.u32 %v2802, 16
        %v3075 = vrot.slane %v3073, 7
        %v3076 = vshll.u32 %v2802, 16
        %v3078 = vor.u32 %v3075, %v3076
        %v3079 = vsel %vm2234, %v3071, %v3078
        %v3080 = vrot.slane %v3075, 4
        %v3082 = vshrl.u32 %v2803, 16
        %v3084 = vrot.slane %v3082, 7
        %v3085 = vshll.u32 %v2803, 16
        %v3087 = vor.u32 %v3084, %v3085
        %v3088 = vsel %vm2234, %v3080, %v3087
        %v3089 = vrot.slane %v3084, 4
        %v3091 = vshrl.u32 %v2804, 16
        %v3093 = vrot.slane %v3091, 7
        %v3094 = vshll.u32 %v2804, 16
        %v3096 = vor.u32 %v3093, %v3094
        %v3097 = vsel %vm2234, %v3089, %v3096
        %v3098 = vrot.slane %v3093, 4
        %v3100 = vshrl.u32 %v2805, 16
        %v3102 = vrot.slane %v3100, 7
        %v3103 = vshll.u32 %v2805, 16
        %v3105 = vor.u32 %v3102, %v3103
        %v3106 = vsel %vm2234, %v3098, %v3105
        %v3107 = vrot.slane %v3102, 4
        %v3109 = vshrl.u32 %v2806, 16
        %v3111 = vrot.slane %v3109, 7
        %v3112 = vshll.u32 %v2806, 16
        %v3114 = vor.u32 %v3111, %v3112
        %v3115 = vsel %vm2234, %v3107, %v3114
        %v3116 = vrot.slane %v3111, 4
        %v3118 = vshrl.u32 %v2807, 16
        %v3120 = vrot.slane %v3118, 7
        %v3121 = vshll.u32 %v2807, 16
        %v3123 = vor.u32 %v3120, %v3121
        %v3124 = vsel %vm2234, %v3116, %v3123
        %v3125 = vrot.slane %v3120, 4
        %v3127 = vshrl.u32 %v2808, 16
        %v3129 = vrot.slane %v3127, 7
        %v3130 = vshll.u32 %v2808, 16
        %v3132 = vor.u32 %v3129, %v3130
        %v3133 = vsel %vm2234, %v3125, %v3132
        %v3134 = vrot.slane %v3129, 4
        %v3136 = vshrl.u32 %v2809, 16
        %v3138 = vrot.slane %v3136, 7
        %v3139 = vshll.u32 %v2809, 16
        %v3141 = vor.u32 %v3138, %v3139
        %v3142 = vsel %vm2234, %v3134, %v3141
        %v3143 = vrot.slane %v3138, 4
        %v3145 = vshrl.u32 %v2810, 16
        %v3147 = vrot.slane %v3145, 7
        %v3148 = vshll.u32 %v2810, 16
        %v3150 = vor.u32 %v3147, %v3148
        %v3151 = vsel %vm2234, %v3143, %v3150
        %v3152 = vrot.slane %v3147, 4
        %v3154 = vshrl.u32 %v2811, 16
        %v3156 = vrot.slane %v3154, 7
        %v3157 = vshll.u32 %v2811, 16
        %v3159 = vor.u32 %v3156, %v3157
        %v3160 = vsel %vm2234, %v3152, %v3159
        %v3161 = vrot.slane %v3156, 4
        %v3163 = vshrl.u32 %v2812, 16
        %v3165 = vrot.slane %v3163, 7
        %v3166 = vshll.u32 %v2812, 16
        %v3168 = vor.u32 %v3165, %v3166
        %v3169 = vsel %vm2234, %v3161, %v3168
        %v3170 = vrot.slane %v3165, 4
        %v3172 = vshrl.u32 %v2813, 16
        %v3174 = vrot.slane %v3172, 7
        %v3175 = vshll.u32 %v2813, 16
        %v3177 = vor.u32 %v3174, %v3175
        %v3178 = vsel %vm2234, %v3170, %v3177
        %v3179 = vrot.slane %v3174, 4
        %v3181 = vshrl.u32 %v2814, 16
        %v3183 = vrot.slane %v3181, 7
        %v3184 = vshll.u32 %v2814, 16
        %v3186 = vor.u32 %v3183, %v3184
        %v3187 = vsel %vm2234, %v3179, %v3186
        %3188 = vrot.lane.b32.xlu0 %v2827, 48
        %v3189 = vpop.permute.xlu0 %3188
        %3190 = vrot.lane.b32.xlu0 %v2836, 48
        %v3191 = vpop.permute.xlu0 %3190
        %3192 = vrot.lane.b32.xlu0 %v2845, 48
        %v3193 = vpop.permute.xlu0 %3192
        %3194 = vrot.lane.b32.xlu0 %v2854, 48
        %v3195 = vpop.permute.xlu0 %3194
        %3196 = vrot.lane.b32.xlu0 %v2863, 48
        %v3197 = vpop.permute.xlu0 %3196
        %3198 = vrot.lane.b32.xlu0 %v2872, 48
        %v3199 = vpop.permute.xlu0 %3198
        %3200 = vrot.lane.b32.xlu0 %v2881, 48
        %v3201 = vpop.permute.xlu0 %3200
        %3202 = vrot.lane.b32.xlu0 %v2890, 48
        %v3203 = vpop.permute.xlu0 %3202
        %3204 = vrot.lane.b32.xlu0 %v2899, 48
        %v3205 = vpop.permute.xlu0 %3204
        %3206 = vrot.lane.b32.xlu0 %v2908, 48
        %v3207 = vpop.permute.xlu0 %3206
        %3208 = vrot.lane.b32.xlu0 %v2917, 48
        %v3209 = vpop.permute.xlu0 %3208
        %3210 = vrot.lane.b32.xlu0 %v2926, 48
        %v3211 = vpop.permute.xlu0 %3210
        %3212 = vrot.lane.b32.xlu0 %v2935, 48
        %v3213 = vpop.permute.xlu0 %3212
        %3214 = vrot.lane.b32.xlu0 %v2944, 48
        %v3215 = vpop.permute.xlu0 %3214
        %3216 = vrot.lane.b32.xlu0 %v2953, 48
        %v3217 = vpop.permute.xlu0 %3216
        %3218 = vrot.lane.b32.xlu0 %v2962, 48
        %v3219 = vpop.permute.xlu0 %3218
        %3220 = vrot.lane.b32.xlu0 %v2971, 48
        %v3221 = vpop.permute.xlu0 %3220
        %3222 = vrot.lane.b32.xlu0 %v2980, 48
        %v3223 = vpop.permute.xlu0 %3222
        %3224 = vrot.lane.b32.xlu0 %v2989, 48
        %v3225 = vpop.permute.xlu0 %3224
        %3226 = vrot.lane.b32.xlu0 %v2998, 48
        %v3227 = vpop.permute.xlu0 %3226
        %3228 = vrot.lane.b32.xlu0 %v3007, 48
        %v3229 = vpop.permute.xlu0 %3228
        %3230 = vrot.lane.b32.xlu0 %v3016, 48
        %v3231 = vpop.permute.xlu0 %3230
        %3232 = vrot.lane.b32.xlu0 %v3025, 48
        %v3233 = vpop.permute.xlu0 %3232
        %3234 = vrot.lane.b32.xlu0 %v3034, 48
        %v3235 = vpop.permute.xlu0 %3234
        %3236 = vrot.lane.b32.xlu0 %v3043, 48
        %v3237 = vpop.permute.xlu0 %3236
        %3238 = vrot.lane.b32.xlu0 %v3052, 48
        %v3239 = vpop.permute.xlu0 %3238
        %3240 = vrot.lane.b32.xlu0 %v3061, 48
        %v3241 = vpop.permute.xlu0 %3240
        %3242 = vrot.lane.b32.xlu0 %v3070, 48
        %v3243 = vpop.permute.xlu0 %3242
        %3244 = vrot.lane.b32.xlu0 %v3079, 48
        %v3245 = vpop.permute.xlu0 %3244
        %3246 = vrot.lane.b32.xlu0 %v3088, 48
        %v3247 = vpop.permute.xlu0 %3246
        %3248 = vrot.lane.b32.xlu0 %v3097, 48
        %v3249 = vpop.permute.xlu0 %3248
        %3250 = vrot.lane.b32.xlu0 %v3106, 48
        %v3251 = vpop.permute.xlu0 %3250
        %3252 = vrot.lane.b32.xlu0 %v3115, 48
        %v3253 = vpop.permute.xlu0 %3252
        %3254 = vrot.lane.b32.xlu0 %v3124, 48
        %v3255 = vpop.permute.xlu0 %3254
        %3256 = vrot.lane.b32.xlu0 %v3133, 48
        %v3257 = vpop.permute.xlu0 %3256
        %3258 = vrot.lane.b32.xlu0 %v3142, 48
        %v3259 = vpop.permute.xlu0 %3258
        %3260 = vrot.lane.b32.xlu0 %v3151, 48
        %v3261 = vpop.permute.xlu0 %3260
        %3262 = vrot.lane.b32.xlu0 %v3160, 48
        %v3263 = vpop.permute.xlu0 %3262
        %3264 = vrot.lane.b32.xlu0 %v3169, 48
        %v3265 = vpop.permute.xlu0 %3264
        %3266 = vrot.lane.b32.xlu0 %v3178, 48
        %v3267 = vpop.permute.xlu0 %3266
        %3268 = vrot.lane.b32.xlu0 %v3187, 48
        %v3269 = vpop.permute.xlu0 %3268
        %vm3311 = vcmask 519552
        %3312 = vst.msk [vmem:[#allocation3] sm:$0xf] %vm3311, %v3189
        %3313 = vst.msk [vmem:[#allocation3 + $0xc] sm:$0xf] %vm3311, %v3191
        %3314 = vst.msk [vmem:[#allocation3 + $0x18] sm:$0xf] %vm3311, %v3193
        %3315 = vst.msk [vmem:[#allocation3 + $0x24] sm:$0xf] %vm3311, %v3195
        %3316 = vst.msk [vmem:[#allocation3 + $0x30] sm:$0xf] %vm3311, %v3197
        %3317 = vst.msk [vmem:[#allocation3 + $0x3c] sm:$0xf] %vm3311, %v3199
        %3318 = vst.msk [vmem:[#allocation3 + $0x48] sm:$0xf] %vm3311, %v3201
        %3319 = vst.msk [vmem:[#allocation3 + $0x54] sm:$0xf] %vm3311, %v3203
        %3320 = vst.msk [vmem:[#allocation3 + $0x60] sm:$0xf] %vm3311, %v3205
        %3321 = vst.msk [vmem:[#allocation3 + $0x6c] sm:$0xf] %vm3311, %v3207
        %3322 = vst.msk [vmem:[#allocation3 + $0x78] sm:$0xf] %vm3311, %v3209
        %3323 = vst.msk [vmem:[#allocation3 + $0x84] sm:$0xf] %vm3311, %v3211
        %3324 = vst.msk [vmem:[#allocation3 + $0x90] sm:$0xf] %vm3311, %v3213
        %3325 = vst.msk [vmem:[#allocation3 + $0x9c] sm:$0xf] %vm3311, %v3215
        %3326 = vst.msk [vmem:[#allocation3 + $0xa8] sm:$0xf] %vm3311, %v3217
        %3327 = vst.msk [vmem:[#allocation3 + $0xb4] sm:$0xf] %vm3311, %v3219
        %3328 = vst.msk [vmem:[#allocation3 + $0xc0] sm:$0xf] %vm3311, %v3221
        %3329 = vst.msk [vmem:[#allocation3 + $0xcc] sm:$0xf] %vm3311, %v3223
        %3330 = vst.msk [vmem:[#allocation3 + $0xd8] sm:$0xf] %vm3311, %v3225
        %3331 = vst.msk [vmem:[#allocation3 + $0xe4] sm:$0xf] %vm3311, %v3227
        %3332 = vst.msk [vmem:[#allocation3 + $0xf0] sm:$0xf] %vm3311, %v3229
        %3333 = vst.msk [vmem:[#allocation3 + $0xfc] sm:$0xf] %vm3311, %v3231
        %3334 = vst.msk [vmem:[#allocation3 + $0x108] sm:$0xf] %vm3311, %v3233
        %3335 = vst.msk [vmem:[#allocation3 + $0x114] sm:$0xf] %vm3311, %v3235
        %3336 = vst.msk [vmem:[#allocation3 + $0x120] sm:$0xf] %vm3311, %v3237
        %3337 = vst.msk [vmem:[#allocation3 + $0x12c] sm:$0xf] %vm3311, %v3239
        %3338 = vst.msk [vmem:[#allocation3 + $0x138] sm:$0xf] %vm3311, %v3241
        %3339 = vst.msk [vmem:[#allocation3 + $0x144] sm:$0xf] %vm3311, %v3243
        %3340 = vst.msk [vmem:[#allocation3 + $0x150] sm:$0xf] %vm3311, %v3245
        %3341 = vst.msk [vmem:[#allocation3 + $0x15c] sm:$0xf] %vm3311, %v3247
        %3342 = vst.msk [vmem:[#allocation3 + $0x168] sm:$0xf] %vm3311, %v3249
        %3343 = vst.msk [vmem:[#allocation3 + $0x174] sm:$0xf] %vm3311, %v3251
        %3344 = vst.msk [vmem:[#allocation3 + $0x180] sm:$0xf] %vm3311, %v3253
        %3345 = vst.msk [vmem:[#allocation3 + $0x18c] sm:$0xf] %vm3311, %v3255
        %3346 = vst.msk [vmem:[#allocation3 + $0x198] sm:$0xf] %vm3311, %v3257
        %3347 = vst.msk [vmem:[#allocation3 + $0x1a4] sm:$0xf] %vm3311, %v3259
        %3348 = vst.msk [vmem:[#allocation3 + $0x1b0] sm:$0xf] %vm3311, %v3261
        %3349 = vst.msk [vmem:[#allocation3 + $0x1bc] sm:$0xf] %vm3311, %v3263
        %3350 = vst.msk [vmem:[#allocation3 + $0x1c8] sm:$0xf] %vm3311, %v3265
        %3351 = vst.msk [vmem:[#allocation3 + $0x1d4] sm:$0xf] %vm3311, %v3267
        %3352 = vst.msk [vmem:[#allocation3 + $0x1e0] sm:$0xf] %vm3311, %v3269
        %v3353 = vld [vmem:[#allocation2 + $0xc] sm:$0xf]
        %v3354 = vld [vmem:[#allocation2 + $0x10] sm:$0xf]
        %v3355 = vld [vmem:[#allocation2 + $0x14] sm:$0xf]
        %v3356 = vld [vmem:[#allocation2 + $0x18] sm:$0xf]
        %v3357 = vld [vmem:[#allocation2 + $0x1c] sm:$0xf]
        %v3358 = vld [vmem:[#allocation2 + $0x20] sm:$0xf]
        %v3359 = vld [vmem:[#allocation2 + $0x24] sm:$0xf]
        %v3360 = vld [vmem:[#allocation2 + $0x28] sm:$0xf]
        %v3361 = vld [vmem:[#allocation2 + $0x2c] sm:$0xf]
        %v3362 = vld [vmem:[#allocation2 + $0x30] sm:$0xf]
        %v3363 = vld [vmem:[#allocation2 + $0x34] sm:$0xf]
        %v3364 = vld [vmem:[#allocation2 + $0x38] sm:$0xf]
        %v3365 = vld [vmem:[#allocation2 + $0x3c] sm:$0xf]
        %v3366 = vld [vmem:[#allocation2 + $0x40] sm:$0xf]
        %v3367 = vld [vmem:[#allocation2 + $0x44] sm:$0xf]
        %v3368 = vld [vmem:[#allocation2 + $0x48] sm:$0xf]
        %v3369 = vld [vmem:[#allocation2 + $0x4c] sm:$0xf]
        %v3370 = vld [vmem:[#allocation2 + $0x50] sm:$0xf]
        %v3371 = vld [vmem:[#allocation2 + $0x54] sm:$0xf]
        %v3372 = vld [vmem:[#allocation2 + $0x58] sm:$0xf]
        %v3373 = vld [vmem:[#allocation2 + $0x5c] sm:$0xf]
        %v3374 = vld [vmem:[#allocation2 + $0x60] sm:$0xf]
        %v3375 = vld [vmem:[#allocation2 + $0x64] sm:$0xf]
        %v3376 = vld [vmem:[#allocation2 + $0x68] sm:$0xf]
        %v3377 = vld [vmem:[#allocation2 + $0x6c] sm:$0xf]
        %v3378 = vld [vmem:[#allocation2 + $0x70] sm:$0xf]
        %v3379 = vld [vmem:[#allocation2 + $0x74] sm:$0xf]
        %v3380 = vld [vmem:[#allocation2 + $0x78] sm:$0xf]
        %v3381 = vld [vmem:[#allocation2 + $0x7c] sm:$0xf]
        %v3382 = vld [vmem:[#allocation2 + $0x80] sm:$0xf]
        %v3383 = vld [vmem:[#allocation2 + $0x84] sm:$0xf]
        %v3384 = vld [vmem:[#allocation2 + $0x88] sm:$0xf]
        %v3385 = vld [vmem:[#allocation2 + $0x8c] sm:$0xf]
        %v3386 = vld [vmem:[#allocation2 + $0x90] sm:$0xf]
        %v3387 = vld [vmem:[#allocation2 + $0x94] sm:$0xf]
        %v3388 = vld [vmem:[#allocation2 + $0x98] sm:$0xf]
        %v3389 = vld [vmem:[#allocation2 + $0x9c] sm:$0xf]
        %v3390 = vld [vmem:[#allocation2 + $0xa0] sm:$0xf]
        %v3391 = vld [vmem:[#allocation2 + $0xa4] sm:$0xf]
        %v3392 = vld [vmem:[#allocation2 + $0xa8] sm:$0xf]
        %v3393 = vld [vmem:[#allocation2 + $0xac] sm:$0xf]
        %3435 = vrot.lane.b32.xlu0 %v3353, 64
        %v3436 = vpop.permute.xlu0 %3435
        %3437 = vrot.lane.b32.xlu0 %v3354, 64
        %v3438 = vpop.permute.xlu0 %3437
        %3439 = vrot.lane.b32.xlu0 %v3355, 64
        %v3440 = vpop.permute.xlu0 %3439
        %3441 = vrot.lane.b32.xlu0 %v3356, 64
        %v3442 = vpop.permute.xlu0 %3441
        %3443 = vrot.lane.b32.xlu0 %v3357, 64
        %v3444 = vpop.permute.xlu0 %3443
        %3445 = vrot.lane.b32.xlu0 %v3358, 64
        %v3446 = vpop.permute.xlu0 %3445
        %3447 = vrot.lane.b32.xlu0 %v3359, 64
        %v3448 = vpop.permute.xlu0 %3447
        %3449 = vrot.lane.b32.xlu0 %v3360, 64
        %v3450 = vpop.permute.xlu0 %3449
        %3451 = vrot.lane.b32.xlu0 %v3361, 64
        %v3452 = vpop.permute.xlu0 %3451
        %3453 = vrot.lane.b32.xlu0 %v3362, 64
        %v3454 = vpop.permute.xlu0 %3453
        %3455 = vrot.lane.b32.xlu0 %v3363, 64
        %v3456 = vpop.permute.xlu0 %3455
        %3457 = vrot.lane.b32.xlu0 %v3364, 64
        %v3458 = vpop.permute.xlu0 %3457
        %3459 = vrot.lane.b32.xlu0 %v3365, 64
        %v3460 = vpop.permute.xlu0 %3459
        %3461 = vrot.lane.b32.xlu0 %v3366, 64
        %v3462 = vpop.permute.xlu0 %3461
        %3463 = vrot.lane.b32.xlu0 %v3367, 64
        %v3464 = vpop.permute.xlu0 %3463
        %3465 = vrot.lane.b32.xlu0 %v3368, 64
        %v3466 = vpop.permute.xlu0 %3465
        %3467 = vrot.lane.b32.xlu0 %v3369, 64
        %v3468 = vpop.permute.xlu0 %3467
        %3469 = vrot.lane.b32.xlu0 %v3370, 64
        %v3470 = vpop.permute.xlu0 %3469
        %3471 = vrot.lane.b32.xlu0 %v3371, 64
        %v3472 = vpop.permute.xlu0 %3471
        %3473 = vrot.lane.b32.xlu0 %v3372, 64
        %v3474 = vpop.permute.xlu0 %3473
        %3475 = vrot.lane.b32.xlu0 %v3373, 64
        %v3476 = vpop.permute.xlu0 %3475
        %3477 = vrot.lane.b32.xlu0 %v3374, 64
        %v3478 = vpop.permute.xlu0 %3477
        %3479 = vrot.lane.b32.xlu0 %v3375, 64
        %v3480 = vpop.permute.xlu0 %3479
        %3481 = vrot.lane.b32.xlu0 %v3376, 64
        %v3482 = vpop.permute.xlu0 %3481
        %3483 = vrot.lane.b32.xlu0 %v3377, 64
        %v3484 = vpop.permute.xlu0 %3483
        %3485 = vrot.lane.b32.xlu0 %v3378, 64
        %v3486 = vpop.permute.xlu0 %3485
        %3487 = vrot.lane.b32.xlu0 %v3379, 64
        %v3488 = vpop.permute.xlu0 %3487
        %3489 = vrot.lane.b32.xlu0 %v3380, 64
        %v3490 = vpop.permute.xlu0 %3489
        %3491 = vrot.lane.b32.xlu0 %v3381, 64
        %v3492 = vpop.permute.xlu0 %3491
        %3493 = vrot.lane.b32.xlu0 %v3382, 64
        %v3494 = vpop.permute.xlu0 %3493
        %3495 = vrot.lane.b32.xlu0 %v3383, 64
        %v3496 = vpop.permute.xlu0 %3495
        %3497 = vrot.lane.b32.xlu0 %v3384, 64
        %v3498 = vpop.permute.xlu0 %3497
        %3499 = vrot.lane.b32.xlu0 %v3385, 64
        %v3500 = vpop.permute.xlu0 %3499
        %3501 = vrot.lane.b32.xlu0 %v3386, 64
        %v3502 = vpop.permute.xlu0 %3501
        %3503 = vrot.lane.b32.xlu0 %v3387, 64
        %v3504 = vpop.permute.xlu0 %3503
        %3505 = vrot.lane.b32.xlu0 %v3388, 64
        %v3506 = vpop.permute.xlu0 %3505
        %3507 = vrot.lane.b32.xlu0 %v3389, 64
        %v3508 = vpop.permute.xlu0 %3507
        %3509 = vrot.lane.b32.xlu0 %v3390, 64
        %v3510 = vpop.permute.xlu0 %3509
        %3511 = vrot.lane.b32.xlu0 %v3391, 64
        %v3512 = vpop.permute.xlu0 %3511
        %3513 = vrot.lane.b32.xlu0 %v3392, 64
        %v3514 = vpop.permute.xlu0 %3513
        %3515 = vrot.lane.b32.xlu0 %v3393, 64
        %v3516 = vpop.permute.xlu0 %3515
        %vm3558 = vcmask 650752
        %3559 = vst.msk [vmem:[#allocation3] sm:$0xf] %vm3558, %v3436
        %3560 = vst.msk [vmem:[#allocation3 + $0xc] sm:$0xf] %vm3558, %v3438
        %3561 = vst.msk [vmem:[#allocation3 + $0x18] sm:$0xf] %vm3558, %v3440
        %3562 = vst.msk [vmem:[#allocation3 + $0x24] sm:$0xf] %vm3558, %v3442
        %3563 = vst.msk [vmem:[#allocation3 + $0x30] sm:$0xf] %vm3558, %v3444
        %3564 = vst.msk [vmem:[#allocation3 + $0x3c] sm:$0xf] %vm3558, %v3446
        %3565 = vst.msk [vmem:[#allocation3 + $0x48] sm:$0xf] %vm3558, %v3448
        %3566 = vst.msk [vmem:[#allocation3 + $0x54] sm:$0xf] %vm3558, %v3450
        %3567 = vst.msk [vmem:[#allocation3 + $0x60] sm:$0xf] %vm3558, %v3452
        %3568 = vst.msk [vmem:[#allocation3 + $0x6c] sm:$0xf] %vm3558, %v3454
        %3569 = vst.msk [vmem:[#allocation3 + $0x78] sm:$0xf] %vm3558, %v3456
        %3570 = vst.msk [vmem:[#allocation3 + $0x84] sm:$0xf] %vm3558, %v3458
        %3571 = vst.msk [vmem:[#allocation3 + $0x90] sm:$0xf] %vm3558, %v3460
        %3572 = vst.msk [vmem:[#allocation3 + $0x9c] sm:$0xf] %vm3558, %v3462
        %3573 = vst.msk [vmem:[#allocation3 + $0xa8] sm:$0xf] %vm3558, %v3464
        %3574 = vst.msk [vmem:[#allocation3 + $0xb4] sm:$0xf] %vm3558, %v3466
        %3575 = vst.msk [vmem:[#allocation3 + $0xc0] sm:$0xf] %vm3558, %v3468
        %3576 = vst.msk [vmem:[#allocation3 + $0xcc] sm:$0xf] %vm3558, %v3470
        %3577 = vst.msk [vmem:[#allocation3 + $0xd8] sm:$0xf] %vm3558, %v3472
        %3578 = vst.msk [vmem:[#allocation3 + $0xe4] sm:$0xf] %vm3558, %v3474
        %3579 = vst.msk [vmem:[#allocation3 + $0xf0] sm:$0xf] %vm3558, %v3476
        %3580 = vst.msk [vmem:[#allocation3 + $0xfc] sm:$0xf] %vm3558, %v3478
        %3581 = vst.msk [vmem:[#allocation3 + $0x108] sm:$0xf] %vm3558, %v3480
        %3582 = vst.msk [vmem:[#allocation3 + $0x114] sm:$0xf] %vm3558, %v3482
        %3583 = vst.msk [vmem:[#allocation3 + $0x120] sm:$0xf] %vm3558, %v3484
        %3584 = vst.msk [vmem:[#allocation3 + $0x12c] sm:$0xf] %vm3558, %v3486
        %3585 = vst.msk [vmem:[#allocation3 + $0x138] sm:$0xf] %vm3558, %v3488
        %3586 = vst.msk [vmem:[#allocation3 + $0x144] sm:$0xf] %vm3558, %v3490
        %3587 = vst.msk [vmem:[#allocation3 + $0x150] sm:$0xf] %vm3558, %v3492
        %3588 = vst.msk [vmem:[#allocation3 + $0x15c] sm:$0xf] %vm3558, %v3494
        %3589 = vst.msk [vmem:[#allocation3 + $0x168] sm:$0xf] %vm3558, %v3496
        %3590 = vst.msk [vmem:[#allocation3 + $0x174] sm:$0xf] %vm3558, %v3498
        %3591 = vst.msk [vmem:[#allocation3 + $0x180] sm:$0xf] %vm3558, %v3500
        %3592 = vst.msk [vmem:[#allocation3 + $0x18c] sm:$0xf] %vm3558, %v3502
        %3593 = vst.msk [vmem:[#allocation3 + $0x198] sm:$0xf] %vm3558, %v3504
        %3594 = vst.msk [vmem:[#allocation3 + $0x1a4] sm:$0xf] %vm3558, %v3506
        %3595 = vst.msk [vmem:[#allocation3 + $0x1b0] sm:$0xf] %vm3558, %v3508
        %3596 = vst.msk [vmem:[#allocation3 + $0x1bc] sm:$0xf] %vm3558, %v3510
        %3597 = vst.msk [vmem:[#allocation3 + $0x1c8] sm:$0xf] %vm3558, %v3512
        %3598 = vst.msk [vmem:[#allocation3 + $0x1d4] sm:$0xf] %vm3558, %v3514
        %3599 = vst.msk [vmem:[#allocation3 + $0x1e0] sm:$0xf] %vm3558, %v3516
        %v3600 = vld [vmem:[#allocation2 + $0xc] sm:$0xf]
        %v3601 = vld [vmem:[#allocation2 + $0x10] sm:$0xf]
        %v3602 = vld [vmem:[#allocation2 + $0x14] sm:$0xf]
        %v3603 = vld [vmem:[#allocation2 + $0x18] sm:$0xf]
        %v3604 = vld [vmem:[#allocation2 + $0x1c] sm:$0xf]
        %v3605 = vld [vmem:[#allocation2 + $0x20] sm:$0xf]
        %v3606 = vld [vmem:[#allocation2 + $0x24] sm:$0xf]
        %v3607 = vld [vmem:[#allocation2 + $0x28] sm:$0xf]
        %v3608 = vld [vmem:[#allocation2 + $0x2c] sm:$0xf]
        %v3609 = vld [vmem:[#allocation2 + $0x30] sm:$0xf]
        %v3610 = vld [vmem:[#allocation2 + $0x34] sm:$0xf]
        %v3611 = vld [vmem:[#allocation2 + $0x38] sm:$0xf]
        %v3612 = vld [vmem:[#allocation2 + $0x3c] sm:$0xf]
        %v3613 = vld [vmem:[#allocation2 + $0x40] sm:$0xf]
        %v3614 = vld [vmem:[#allocation2 + $0x44] sm:$0xf]
        %v3615 = vld [vmem:[#allocation2 + $0x48] sm:$0xf]
        %v3616 = vld [vmem:[#allocation2 + $0x4c] sm:$0xf]
        %v3617 = vld [vmem:[#allocation2 + $0x50] sm:$0xf]
        %v3618 = vld [vmem:[#allocation2 + $0x54] sm:$0xf]
        %v3619 = vld [vmem:[#allocation2 + $0x58] sm:$0xf]
        %v3620 = vld [vmem:[#allocation2 + $0x5c] sm:$0xf]
        %v3621 = vld [vmem:[#allocation2 + $0x60] sm:$0xf]
        %v3622 = vld [vmem:[#allocation2 + $0x64] sm:$0xf]
        %v3623 = vld [vmem:[#allocation2 + $0x68] sm:$0xf]
        %v3624 = vld [vmem:[#allocation2 + $0x6c] sm:$0xf]
        %v3625 = vld [vmem:[#allocation2 + $0x70] sm:$0xf]
        %v3626 = vld [vmem:[#allocation2 + $0x74] sm:$0xf]
        %v3627 = vld [vmem:[#allocation2 + $0x78] sm:$0xf]
        %v3628 = vld [vmem:[#allocation2 + $0x7c] sm:$0xf]
        %v3629 = vld [vmem:[#allocation2 + $0x80] sm:$0xf]
        %v3630 = vld [vmem:[#allocation2 + $0x84] sm:$0xf]
        %v3631 = vld [vmem:[#allocation2 + $0x88] sm:$0xf]
        %v3632 = vld [vmem:[#allocation2 + $0x8c] sm:$0xf]
        %v3633 = vld [vmem:[#allocation2 + $0x90] sm:$0xf]
        %v3634 = vld [vmem:[#allocation2 + $0x94] sm:$0xf]
        %v3635 = vld [vmem:[#allocation2 + $0x98] sm:$0xf]
        %v3636 = vld [vmem:[#allocation2 + $0x9c] sm:$0xf]
        %v3637 = vld [vmem:[#allocation2 + $0xa0] sm:$0xf]
        %v3638 = vld [vmem:[#allocation2 + $0xa4] sm:$0xf]
        %v3639 = vld [vmem:[#allocation2 + $0xa8] sm:$0xf]
        %v3640 = vld [vmem:[#allocation2 + $0xac] sm:$0xf]
        %v3641 = vld [vmem:[#allocation2 + $0xb0] sm:$0x1]
        %vm3642 = vsmask.f32 3328
        %vm3643 = vsmask.f32 7440
        %vm3644 = vmor %vm3642, %vm3643
        %v3646 = vshrl.u32 %v3600, 16
        %v3648 = vrot.slane %v3646, 4
        %v3649 = vshll.u32 %v3600, 16
        %v3651 = vrot.slane %v3649, 5
        %v3652 = vor.u32 %v3648, %v3651
        %v3653 = vrot.slane %v3652, 4
        %v3655 = vshll.u32 %v3601, 16
        %v3657 = vrot.slane %v3655, 5
        %v3658 = vsel %vm3644, %v3653, %v3657
        %v3659 = vshrl.u32 %v3601, 16
        %v3661 = vrot.slane %v3659, 4
        %v3662 = vor.u32 %v3661, %v3657
        %v3663 = vrot.slane %v3662, 4
        %v3665 = vshll.u32 %v3602, 16
        %v3667 = vrot.slane %v3665, 5
        %v3668 = vsel %vm3644, %v3663, %v3667
        %v3669 = vshrl.u32 %v3602, 16
        %v3671 = vrot.slane %v3669, 4
        %v3672 = vor.u32 %v3671, %v3667
        %v3673 = vrot.slane %v3672, 4
        %v3675 = vshll.u32 %v3603, 16
        %v3677 = vrot.slane %v3675, 5
        %v3678 = vsel %vm3644, %v3673, %v3677
        %v3679 = vshrl.u32 %v3603, 16
        %v3681 = vrot.slane %v3679, 4
        %v3682 = vor.u32 %v3681, %v3677
        %v3683 = vrot.slane %v3682, 4
        %v3685 = vshll.u32 %v3604, 16
        %v3687 = vrot.slane %v3685, 5
        %v3688 = vsel %vm3644, %v3683, %v3687
        %v3689 = vshrl.u32 %v3604, 16
        %v3691 = vrot.slane %v3689, 4
        %v3692 = vor.u32 %v3691, %v3687
        %v3693 = vrot.slane %v3692, 4
        %v3695 = vshll.u32 %v3605, 16
        %v3697 = vrot.slane %v3695, 5
        %v3698 = vsel %vm3644, %v3693, %v3697
        %v3699 = vshrl.u32 %v3605, 16
        %v3701 = vrot.slane %v3699, 4
        %v3702 = vor.u32 %v3701, %v3697
        %v3703 = vrot.slane %v3702, 4
        %v3705 = vshll.u32 %v3606, 16
        %v3707 = vrot.slane %v3705, 5
        %v3708 = vsel %vm3644, %v3703, %v3707
        %v3709 = vshrl.u32 %v3606, 16
        %v3711 = vrot.slane %v3709, 4
        %v3712 = vor.u32 %v3711, %v3707
        %v3713 = vrot.slane %v3712, 4
        %v3715 = vshll.u32 %v3607, 16
        %v3717 = vrot.slane %v3715, 5
        %v3718 = vsel %vm3644, %v3713, %v3717
        %v3719 = vshrl.u32 %v3607, 16
        %v3721 = vrot.slane %v3719, 4
        %v3722 = vor.u32 %v3721, %v3717
        %v3723 = vrot.slane %v3722, 4
        %v3725 = vshll.u32 %v3608, 16
        %v3727 = vrot.slane %v3725, 5
        %v3728 = vsel %vm3644, %v3723, %v3727
        %v3729 = vshrl.u32 %v3608, 16
        %v3731 = vrot.slane %v3729, 4
        %v3732 = vor.u32 %v3731, %v3727
        %v3733 = vrot.slane %v3732, 4
        %v3735 = vshll.u32 %v3609, 16
        %v3737 = vrot.slane %v3735, 5
        %v3738 = vsel %vm3644, %v3733, %v3737
        %v3739 = vshrl.u32 %v3609, 16
        %v3741 = vrot.slane %v3739, 4
        %v3742 = vor.u32 %v3741, %v3737
        %v3743 = vrot.slane %v3742, 4
        %v3745 = vshll.u32 %v3610, 16
        %v3747 = vrot.slane %v3745, 5
        %v3748 = vsel %vm3644, %v3743, %v3747
        %v3749 = vshrl.u32 %v3610, 16
        %v3751 = vrot.slane %v3749, 4
        %v3752 = vor.u32 %v3751, %v3747
        %v3753 = vrot.slane %v3752, 4
        %v3755 = vshll.u32 %v3611, 16
        %v3757 = vrot.slane %v3755, 5
        %v3758 = vsel %vm3644, %v3753, %v3757
        %v3759 = vshrl.u32 %v3611, 16
        %v3761 = vrot.slane %v3759, 4
        %v3762 = vor.u32 %v3761, %v3757
        %v3763 = vrot.slane %v3762, 4
        %v3765 = vshll.u32 %v3612, 16
        %v3767 = vrot.slane %v3765, 5
        %v3768 = vsel %vm3644, %v3763, %v3767
        %v3769 = vshrl.u32 %v3612, 16
        %v3771 = vrot.slane %v3769, 4
        %v3772 = vor.u32 %v3771, %v3767
        %v3773 = vrot.slane %v3772, 4
        %v3775 = vshll.u32 %v3613, 16
        %v3777 = vrot.slane %v3775, 5
        %v3778 = vsel %vm3644, %v3773, %v3777
        %v3779 = vshrl.u32 %v3613, 16
        %v3781 = vrot.slane %v3779, 4
        %v3782 = vor.u32 %v3781, %v3777
        %v3783 = vrot.slane %v3782, 4
        %v3785 = vshll.u32 %v3614, 16
        %v3787 = vrot.slane %v3785, 5
        %v3788 = vsel %vm3644, %v3783, %v3787
        %v3789 = vshrl.u32 %v3614, 16
        %v3791 = vrot.slane %v3789, 4
        %v3792 = vor.u32 %v3791, %v3787
        %v3793 = vrot.slane %v3792, 4
        %v3795 = vshll.u32 %v3615, 16
        %v3797 = vrot.slane %v3795, 5
        %v3798 = vsel %vm3644, %v3793, %v3797
        %v3799 = vshrl.u32 %v3615, 16
        %v3801 = vrot.slane %v3799, 4
        %v3802 = vor.u32 %v3801, %v3797
        %v3803 = vrot.slane %v3802, 4
        %v3805 = vshll.u32 %v3616, 16
        %v3807 = vrot.slane %v3805, 5
        %v3808 = vsel %vm3644, %v3803, %v3807
        %v3809 = vshrl.u32 %v3616, 16
        %v3811 = vrot.slane %v3809, 4
        %v3812 = vor.u32 %v3811, %v3807
        %v3813 = vrot.slane %v3812, 4
        %v3815 = vshll.u32 %v3617, 16
        %v3817 = vrot.slane %v3815, 5
        %v3818 = vsel %vm3644, %v3813, %v3817
        %v3819 = vshrl.u32 %v3617, 16
        %v3821 = vrot.slane %v3819, 4
        %v3822 = vor.u32 %v3821, %v3817
        %v3823 = vrot.slane %v3822, 4
        %v3825 = vshll.u32 %v3618, 16
        %v3827 = vrot.slane %v3825, 5
        %v3828 = vsel %vm3644, %v3823, %v3827
        %v3829 = vshrl.u32 %v3618, 16
        %v3831 = vrot.slane %v3829, 4
        %v3832 = vor.u32 %v3831, %v3827
        %v3833 = vrot.slane %v3832, 4
        %v3835 = vshll.u32 %v3619, 16
        %v3837 = vrot.slane %v3835, 5
        %v3838 = vsel %vm3644, %v3833, %v3837
        %v3839 = vshrl.u32 %v3619, 16
        %v3841 = vrot.slane %v3839, 4
        %v3842 = vor.u32 %v3841, %v3837
        %v3843 = vrot.slane %v3842, 4
        %v3845 = vshll.u32 %v3620, 16
        %v3847 = vrot.slane %v3845, 5
        %v3848 = vsel %vm3644, %v3843, %v3847
        %v3849 = vshrl.u32 %v3620, 16
        %v3851 = vrot.slane %v3849, 4
        %v3852 = vor.u32 %v3851, %v3847
        %v3853 = vrot.slane %v3852, 4
        %v3855 = vshll.u32 %v3621, 16
        %v3857 = vrot.slane %v3855, 5
        %v3858 = vsel %vm3644, %v3853, %v3857
        %v3859 = vshrl.u32 %v3621, 16
        %v3861 = vrot.slane %v3859, 4
        %v3862 = vor.u32 %v3861, %v3857
        %v3863 = vrot.slane %v3862, 4
        %v3865 = vshll.u32 %v3622, 16
        %v3867 = vrot.slane %v3865, 5
        %v3868 = vsel %vm3644, %v3863, %v3867
        %v3869 = vshrl.u32 %v3622, 16
        %v3871 = vrot.slane %v3869, 4
        %v3872 = vor.u32 %v3871, %v3867
        %v3873 = vrot.slane %v3872, 4
        %v3875 = vshll.u32 %v3623, 16
        %v3877 = vrot.slane %v3875, 5
        %v3878 = vsel %vm3644, %v3873, %v3877
        %v3879 = vshrl.u32 %v3623, 16
        %v3881 = vrot.slane %v3879, 4
        %v3882 = vor.u32 %v3881, %v3877
        %v3883 = vrot.slane %v3882, 4
        %v3885 = vshll.u32 %v3624, 16
        %v3887 = vrot.slane %v3885, 5
        %v3888 = vsel %vm3644, %v3883, %v3887
        %v3889 = vshrl.u32 %v3624, 16
        %v3891 = vrot.slane %v3889, 4
        %v3892 = vor.u32 %v3891, %v3887
        %v3893 = vrot.slane %v3892, 4
        %v3895 = vshll.u32 %v3625, 16
        %v3897 = vrot.slane %v3895, 5
        %v3898 = vsel %vm3644, %v3893, %v3897
        %v3899 = vshrl.u32 %v3625, 16
        %v3901 = vrot.slane %v3899, 4
        %v3902 = vor.u32 %v3901, %v3897
        %v3903 = vrot.slane %v3902, 4
        %v3905 = vshll.u32 %v3626, 16
        %v3907 = vrot.slane %v3905, 5
        %v3908 = vsel %vm3644, %v3903, %v3907
        %v3909 = vshrl.u32 %v3626, 16
        %v3911 = vrot.slane %v3909, 4
        %v3912 = vor.u32 %v3911, %v3907
        %v3913 = vrot.slane %v3912, 4
        %v3915 = vshll.u32 %v3627, 16
        %v3917 = vrot.slane %v3915, 5
        %v3918 = vsel %vm3644, %v3913, %v3917
        %v3919 = vshrl.u32 %v3627, 16
        %v3921 = vrot.slane %v3919, 4
        %v3922 = vor.u32 %v3921, %v3917
        %v3923 = vrot.slane %v3922, 4
        %v3925 = vshll.u32 %v3628, 16
        %v3927 = vrot.slane %v3925, 5
        %v3928 = vsel %vm3644, %v3923, %v3927
        %v3929 = vshrl.u32 %v3628, 16
        %v3931 = vrot.slane %v3929, 4
        %v3932 = vor.u32 %v3931, %v3927
        %v3933 = vrot.slane %v3932, 4
        %v3935 = vshll.u32 %v3629, 16
        %v3937 = vrot.slane %v3935, 5
        %v3938 = vsel %vm3644, %v3933, %v3937
        %v3939 = vshrl.u32 %v3629, 16
        %v3941 = vrot.slane %v3939, 4
        %v3942 = vor.u32 %v3941, %v3937
        %v3943 = vrot.slane %v3942, 4
        %v3945 = vshll.u32 %v3630, 16
        %v3947 = vrot.slane %v3945, 5
        %v3948 = vsel %vm3644, %v3943, %v3947
        %v3949 = vshrl.u32 %v3630, 16
        %v3951 = vrot.slane %v3949, 4
        %v3952 = vor.u32 %v3951, %v3947
        %v3953 = vrot.slane %v3952, 4
        %v3955 = vshll.u32 %v3631, 16
        %v3957 = vrot.slane %v3955, 5
        %v3958 = vsel %vm3644, %v3953, %v3957
        %v3959 = vshrl.u32 %v3631, 16
        %v3961 = vrot.slane %v3959, 4
        %v3962 = vor.u32 %v3961, %v3957
        %v3963 = vrot.slane %v3962, 4
        %v3965 = vshll.u32 %v3632, 16
        %v3967 = vrot.slane %v3965, 5
        %v3968 = vsel %vm3644, %v3963, %v3967
        %v3969 = vshrl.u32 %v3632, 16
        %v3971 = vrot.slane %v3969, 4
        %v3972 = vor.u32 %v3971, %v3967
        %v3973 = vrot.slane %v3972, 4
        %v3975 = vshll.u32 %v3633, 16
        %v3977 = vrot.slane %v3975, 5
        %v3978 = vsel %vm3644, %v3973, %v3977
        %v3979 = vshrl.u32 %v3633, 16
        %v3981 = vrot.slane %v3979, 4
        %v3982 = vor.u32 %v3981, %v3977
        %v3983 = vrot.slane %v3982, 4
        %v3985 = vshll.u32 %v3634, 16
        %v3987 = vrot.slane %v3985, 5
        %v3988 = vsel %vm3644, %v3983, %v3987
        %v3989 = vshrl.u32 %v3634, 16
        %v3991 = vrot.slane %v3989, 4
        %v3992 = vor.u32 %v3991, %v3987
        %v3993 = vrot.slane %v3992, 4
        %v3995 = vshll.u32 %v3635, 16
        %v3997 = vrot.slane %v3995, 5
        %v3998 = vsel %vm3644, %v3993, %v3997
        %v3999 = vshrl.u32 %v3635, 16
        %v4001 = vrot.slane %v3999, 4
        %v4002 = vor.u32 %v4001, %v3997
        %v4003 = vrot.slane %v4002, 4
        %v4005 = vshll.u32 %v3636, 16
        %v4007 = vrot.slane %v4005, 5
        %v4008 = vsel %vm3644, %v4003, %v4007
        %v4009 = vshrl.u32 %v3636, 16
        %v4011 = vrot.slane %v4009, 4
        %v4012 = vor.u32 %v4011, %v4007
        %v4013 = vrot.slane %v4012, 4
        %v4015 = vshll.u32 %v3637, 16
        %v4017 = vrot.slane %v4015, 5
        %v4018 = vsel %vm3644, %v4013, %v4017
        %v4019 = vshrl.u32 %v3637, 16
        %v4021 = vrot.slane %v4019, 4
        %v4022 = vor.u32 %v4021, %v4017
        %v4023 = vrot.slane %v4022, 4
        %v4025 = vshll.u32 %v3638, 16
        %v4027 = vrot.slane %v4025, 5
        %v4028 = vsel %vm3644, %v4023, %v4027
        %v4029 = vshrl.u32 %v3638, 16
        %v4031 = vrot.slane %v4029, 4
        %v4032 = vor.u32 %v4031, %v4027
        %v4033 = vrot.slane %v4032, 4
        %v4035 = vshll.u32 %v3639, 16
        %v4037 = vrot.slane %v4035, 5
        %v4038 = vsel %vm3644, %v4033, %v4037
        %v4039 = vshrl.u32 %v3639, 16
        %v4041 = vrot.slane %v4039, 4
        %v4042 = vor.u32 %v4041, %v4037
        %v4043 = vrot.slane %v4042, 4
        %v4045 = vshll.u32 %v3640, 16
        %v4047 = vrot.slane %v4045, 5
        %v4048 = vsel %vm3644, %v4043, %v4047
        %v4049 = vshrl.u32 %v3640, 16
        %v4051 = vrot.slane %v4049, 4
        %v4052 = vor.u32 %v4051, %v4047
        %v4053 = vrot.slane %v4052, 4
        %v4055 = vshll.u32 %v3641, 16
        %v4057 = vrot.slane %v4055, 5
        %v4058 = vsel %vm3644, %v4053, %v4057
        %4059 = vrot.lane.b32.xlu0 %v3658, 80
        %v4060 = vpop.permute.xlu0 %4059
        %4061 = vrot.lane.b32.xlu0 %v3668, 80
        %v4062 = vpop.permute.xlu0 %4061
        %4063 = vrot.lane.b32.xlu0 %v3678, 80
        %v4064 = vpop.permute.xlu0 %4063
        %4065 = vrot.lane.b32.xlu0 %v3688, 80
        %v4066 = vpop.permute.xlu0 %4065
        %4067 = vrot.lane.b32.xlu0 %v3698, 80
        %v4068 = vpop.permute.xlu0 %4067
        %4069 = vrot.lane.b32.xlu0 %v3708, 80
        %v4070 = vpop.permute.xlu0 %4069
        %4071 = vrot.lane.b32.xlu0 %v3718, 80
        %v4072 = vpop.permute.xlu0 %4071
        %4073 = vrot.lane.b32.xlu0 %v3728, 80
        %v4074 = vpop.permute.xlu0 %4073
        %4075 = vrot.lane.b32.xlu0 %v3738, 80
        %v4076 = vpop.permute.xlu0 %4075
        %4077 = vrot.lane.b32.xlu0 %v3748, 80
        %v4078 = vpop.permute.xlu0 %4077
        %4079 = vrot.lane.b32.xlu0 %v3758, 80
        %v4080 = vpop.permute.xlu0 %4079
        %4081 = vrot.lane.b32.xlu0 %v3768, 80
        %v4082 = vpop.permute.xlu0 %4081
        %4083 = vrot.lane.b32.xlu0 %v3778, 80
        %v4084 = vpop.permute.xlu0 %4083
        %4085 = vrot.lane.b32.xlu0 %v3788, 80
        %v4086 = vpop.permute.xlu0 %4085
        %4087 = vrot.lane.b32.xlu0 %v3798, 80
        %v4088 = vpop.permute.xlu0 %4087
        %4089 = vrot.lane.b32.xlu0 %v3808, 80
        %v4090 = vpop.permute.xlu0 %4089
        %4091 = vrot.lane.b32.xlu0 %v3818, 80
        %v4092 = vpop.permute.xlu0 %4091
        %4093 = vrot.lane.b32.xlu0 %v3828, 80
        %v4094 = vpop.permute.xlu0 %4093
        %4095 = vrot.lane.b32.xlu0 %v3838, 80
        %v4096 = vpop.permute.xlu0 %4095
        %4097 = vrot.lane.b32.xlu0 %v3848, 80
        %v4098 = vpop.permute.xlu0 %4097
        %4099 = vrot.lane.b32.xlu0 %v3858, 80
        %v4100 = vpop.permute.xlu0 %4099
        %4101 = vrot.lane.b32.xlu0 %v3868, 80
        %v4102 = vpop.permute.xlu0 %4101
        %4103 = vrot.lane.b32.xlu0 %v3878, 80
        %v4104 = vpop.permute.xlu0 %4103
        %4105 = vrot.lane.b32.xlu0 %v3888, 80
        %v4106 = vpop.permute.xlu0 %4105
        %4107 = vrot.lane.b32.xlu0 %v3898, 80
        %v4108 = vpop.permute.xlu0 %4107
        %4109 = vrot.lane.b32.xlu0 %v3908, 80
        %v4110 = vpop.permute.xlu0 %4109
        %4111 = vrot.lane.b32.xlu0 %v3918, 80
        %v4112 = vpop.permute.xlu0 %4111
        %4113 = vrot.lane.b32.xlu0 %v3928, 80
        %v4114 = vpop.permute.xlu0 %4113
        %4115 = vrot.lane.b32.xlu0 %v3938, 80
        %v4116 = vpop.permute.xlu0 %4115
        %4117 = vrot.lane.b32.xlu0 %v3948, 80
        %v4118 = vpop.permute.xlu0 %4117
        %4119 = vrot.lane.b32.xlu0 %v3958, 80
        %v4120 = vpop.permute.xlu0 %4119
        %4121 = vrot.lane.b32.xlu0 %v3968, 80
        %v4122 = vpop.permute.xlu0 %4121
        %4123 = vrot.lane.b32.xlu0 %v3978, 80
        %v4124 = vpop.permute.xlu0 %4123
        %4125 = vrot.lane.b32.xlu0 %v3988, 80
        %v4126 = vpop.permute.xlu0 %4125
        %4127 = vrot.lane.b32.xlu0 %v3998, 80
        %v4128 = vpop.permute.xlu0 %4127
        %4129 = vrot.lane.b32.xlu0 %v4008, 80
        %v4130 = vpop.permute.xlu0 %4129
        %4131 = vrot.lane.b32.xlu0 %v4018, 80
        %v4132 = vpop.permute.xlu0 %4131
        %4133 = vrot.lane.b32.xlu0 %v4028, 80
        %v4134 = vpop.permute.xlu0 %4133
        %4135 = vrot.lane.b32.xlu0 %v4038, 80
        %v4136 = vpop.permute.xlu0 %4135
        %4137 = vrot.lane.b32.xlu0 %v4048, 80
        %v4138 = vpop.permute.xlu0 %4137
        %4139 = vrot.lane.b32.xlu0 %v4058, 80
        %v4140 = vpop.permute.xlu0 %4139
        %vm4182 = vcmask 781952
        %4183 = vst.msk [vmem:[#allocation3] sm:$0xf] %vm4182, %v4060
        %4184 = vst.msk [vmem:[#allocation3 + $0xc] sm:$0xf] %vm4182, %v4062
        %4185 = vst.msk [vmem:[#allocation3 + $0x18] sm:$0xf] %vm4182, %v4064
        %4186 = vst.msk [vmem:[#allocation3 + $0x24] sm:$0xf] %vm4182, %v4066
        %4187 = vst.msk [vmem:[#allocation3 + $0x30] sm:$0xf] %vm4182, %v4068
        %4188 = vst.msk [vmem:[#allocation3 + $0x3c] sm:$0xf] %vm4182, %v4070
        %4189 = vst.msk [vmem:[#allocation3 + $0x48] sm:$0xf] %vm4182, %v4072
        %4190 = vst.msk [vmem:[#allocation3 + $0x54] sm:$0xf] %vm4182, %v4074
        %4191 = vst.msk [vmem:[#allocation3 + $0x60] sm:$0xf] %vm4182, %v4076
        %4192 = vst.msk [vmem:[#allocation3 + $0x6c] sm:$0xf] %vm4182, %v4078
        %4193 = vst.msk [vmem:[#allocation3 + $0x78] sm:$0xf] %vm4182, %v4080
        %4194 = vst.msk [vmem:[#allocation3 + $0x84] sm:$0xf] %vm4182, %v4082
        %4195 = vst.msk [vmem:[#allocation3 + $0x90] sm:$0xf] %vm4182, %v4084
        %4196 = vst.msk [vmem:[#allocation3 + $0x9c] sm:$0xf] %vm4182, %v4086
        %4197 = vst.msk [vmem:[#allocation3 + $0xa8] sm:$0xf] %vm4182, %v4088
        %4198 = vst.msk [vmem:[#allocation3 + $0xb4] sm:$0xf] %vm4182, %v4090
        %4199 = vst.msk [vmem:[#allocation3 + $0xc0] sm:$0xf] %vm4182, %v4092
        %4200 = vst.msk [vmem:[#allocation3 + $0xcc] sm:$0xf] %vm4182, %v4094
        %4201 = vst.msk [vmem:[#allocation3 + $0xd8] sm:$0xf] %vm4182, %v4096
        %4202 = vst.msk [vmem:[#allocation3 + $0xe4] sm:$0xf] %vm4182, %v4098
        %4203 = vst.msk [vmem:[#allocation3 + $0xf0] sm:$0xf] %vm4182, %v4100
        %4204 = vst.msk [vmem:[#allocation3 + $0xfc] sm:$0xf] %vm4182, %v4102
        %4205 = vst.msk [vmem:[#allocation3 + $0x108] sm:$0xf] %vm4182, %v4104
        %4206 = vst.msk [vmem:[#allocation3 + $0x114] sm:$0xf] %vm4182, %v4106
        %4207 = vst.msk [vmem:[#allocation3 + $0x120] sm:$0xf] %vm4182, %v4108
        %4208 = vst.msk [vmem:[#allocation3 + $0x12c] sm:$0xf] %vm4182, %v4110
        %4209 = vst.msk [vmem:[#allocation3 + $0x138] sm:$0xf] %vm4182, %v4112
        %4210 = vst.msk [vmem:[#allocation3 + $0x144] sm:$0xf] %vm4182, %v4114
        %4211 = vst.msk [vmem:[#allocation3 + $0x150] sm:$0xf] %vm4182, %v4116
        %4212 = vst.msk [vmem:[#allocation3 + $0x15c] sm:$0xf] %vm4182, %v4118
        %4213 = vst.msk [vmem:[#allocation3 + $0x168] sm:$0xf] %vm4182, %v4120
        %4214 = vst.msk [vmem:[#allocation3 + $0x174] sm:$0xf] %vm4182, %v4122
        %4215 = vst.msk [vmem:[#allocation3 + $0x180] sm:$0xf] %vm4182, %v4124
        %4216 = vst.msk [vmem:[#allocation3 + $0x18c] sm:$0xf] %vm4182, %v4126
        %4217 = vst.msk [vmem:[#allocation3 + $0x198] sm:$0xf] %vm4182, %v4128
        %4218 = vst.msk [vmem:[#allocation3 + $0x1a4] sm:$0xf] %vm4182, %v4130
        %4219 = vst.msk [vmem:[#allocation3 + $0x1b0] sm:$0xf] %vm4182, %v4132
        %4220 = vst.msk [vmem:[#allocation3 + $0x1bc] sm:$0xf] %vm4182, %v4134
        %4221 = vst.msk [vmem:[#allocation3 + $0x1c8] sm:$0xf] %vm4182, %v4136
        %4222 = vst.msk [vmem:[#allocation3 + $0x1d4] sm:$0xf] %vm4182, %v4138
        %4223 = vst.msk [vmem:[#allocation3 + $0x1e0] sm:$0xf] %vm4182, %v4140
        %v4224 = vld [vmem:[#allocation2 + $0x14] sm:$0xf]
        %v4225 = vld [vmem:[#allocation2 + $0x18] sm:$0xf]
        %v4226 = vld [vmem:[#allocation2 + $0x1c] sm:$0xf]
        %v4227 = vld [vmem:[#allocation2 + $0x20] sm:$0xf]
        %v4228 = vld [vmem:[#allocation2 + $0x24] sm:$0xf]
        %v4229 = vld [vmem:[#allocation2 + $0x28] sm:$0xf]
        %v4230 = vld [vmem:[#allocation2 + $0x2c] sm:$0xf]
        %v4231 = vld [vmem:[#allocation2 + $0x30] sm:$0xf]
        %v4232 = vld [vmem:[#allocation2 + $0x34] sm:$0xf]
        %v4233 = vld [vmem:[#allocation2 + $0x38] sm:$0xf]
        %v4234 = vld [vmem:[#allocation2 + $0x3c] sm:$0xf]
        %v4235 = vld [vmem:[#allocation2 + $0x40] sm:$0xf]
        %v4236 = vld [vmem:[#allocation2 + $0x44] sm:$0xf]
        %v4237 = vld [vmem:[#allocation2 + $0x48] sm:$0xf]
        %v4238 = vld [vmem:[#allocation2 + $0x4c] sm:$0xf]
        %v4239 = vld [vmem:[#allocation2 + $0x50] sm:$0xf]
        %v4240 = vld [vmem:[#allocation2 + $0x54] sm:$0xf]
        %v4241 = vld [vmem:[#allocation2 + $0x58] sm:$0xf]
        %v4242 = vld [vmem:[#allocation2 + $0x5c] sm:$0xf]
        %v4243 = vld [vmem:[#allocation2 + $0x60] sm:$0xf]
        %v4244 = vld [vmem:[#allocation2 + $0x64] sm:$0xf]
        %v4245 = vld [vmem:[#allocation2 + $0x68] sm:$0xf]
        %v4246 = vld [vmem:[#allocation2 + $0x6c] sm:$0xf]
        %v4247 = vld [vmem:[#allocation2 + $0x70] sm:$0xf]
        %v4248 = vld [vmem:[#allocation2 + $0x74] sm:$0xf]
        %v4249 = vld [vmem:[#allocation2 + $0x78] sm:$0xf]
        %v4250 = vld [vmem:[#allocation2 + $0x7c] sm:$0xf]
        %v4251 = vld [vmem:[#allocation2 + $0x80] sm:$0xf]
        %v4252 = vld [vmem:[#allocation2 + $0x84] sm:$0xf]
        %v4253 = vld [vmem:[#allocation2 + $0x88] sm:$0xf]
        %v4254 = vld [vmem:[#allocation2 + $0x8c] sm:$0xf]
        %v4255 = vld [vmem:[#allocation2 + $0x90] sm:$0xf]
        %v4256 = vld [vmem:[#allocation2 + $0x94] sm:$0xf]
        %v4257 = vld [vmem:[#allocation2 + $0x98] sm:$0xf]
        %v4258 = vld [vmem:[#allocation2 + $0x9c] sm:$0xf]
        %v4259 = vld [vmem:[#allocation2 + $0xa0] sm:$0xf]
        %v4260 = vld [vmem:[#allocation2 + $0xa4] sm:$0xf]
        %v4261 = vld [vmem:[#allocation2 + $0xa8] sm:$0xf]
        %v4262 = vld [vmem:[#allocation2 + $0xac] sm:$0xf]
        %v4263 = vld [vmem:[#allocation2 + $0xb0] sm:$0xf]
        %v4264 = vld [vmem:[#allocation2 + $0xb4] sm:$0xf]
        %v4265 = vld [vmem:[#allocation2 + $0xb8] sm:$0x1]
        %v4267 = vshrl.u32 %v4224, 16
        %v4269 = vrot.slane %v4267, 4
        %v4270 = vshll.u32 %v4224, 16
        %v4272 = vrot.slane %v4270, 5
        %v4273 = vor.u32 %v4269, %v4272
        %v4274 = vrot.slane %v4273, 4
        %v4276 = vshll.u32 %v4225, 16
        %v4278 = vrot.slane %v4276, 5
        %v4279 = vsel %vm3644, %v4274, %v4278
        %v4280 = vshrl.u32 %v4225, 16
        %v4282 = vrot.slane %v4280, 4
        %v4283 = vor.u32 %v4282, %v4278
        %v4284 = vrot.slane %v4283, 4
        %v4286 = vshll.u32 %v4226, 16
        %v4288 = vrot.slane %v4286, 5
        %v4289 = vsel %vm3644, %v4284, %v4288
        %v4290 = vshrl.u32 %v4226, 16
        %v4292 = vrot.slane %v4290, 4
        %v4293 = vor.u32 %v4292, %v4288
        %v4294 = vrot.slane %v4293, 4
        %v4296 = vshll.u32 %v4227, 16
        %v4298 = vrot.slane %v4296, 5
        %v4299 = vsel %vm3644, %v4294, %v4298
        %v4300 = vshrl.u32 %v4227, 16
        %v4302 = vrot.slane %v4300, 4
        %v4303 = vor.u32 %v4302, %v4298
        %v4304 = vrot.slane %v4303, 4
        %v4306 = vshll.u32 %v4228, 16
        %v4308 = vrot.slane %v4306, 5
        %v4309 = vsel %vm3644, %v4304, %v4308
        %v4310 = vshrl.u32 %v4228, 16
        %v4312 = vrot.slane %v4310, 4
        %v4313 = vor.u32 %v4312, %v4308
        %v4314 = vrot.slane %v4313, 4
        %v4316 = vshll.u32 %v4229, 16
        %v4318 = vrot.slane %v4316, 5
        %v4319 = vsel %vm3644, %v4314, %v4318
        %v4320 = vshrl.u32 %v4229, 16
        %v4322 = vrot.slane %v4320, 4
        %v4323 = vor.u32 %v4322, %v4318
        %v4324 = vrot.slane %v4323, 4
        %v4326 = vshll.u32 %v4230, 16
        %v4328 = vrot.slane %v4326, 5
        %v4329 = vsel %vm3644, %v4324, %v4328
        %v4330 = vshrl.u32 %v4230, 16
        %v4332 = vrot.slane %v4330, 4
        %v4333 = vor.u32 %v4332, %v4328
        %v4334 = vrot.slane %v4333, 4
        %v4336 = vshll.u32 %v4231, 16
        %v4338 = vrot.slane %v4336, 5
        %v4339 = vsel %vm3644, %v4334, %v4338
        %v4340 = vshrl.u32 %v4231, 16
        %v4342 = vrot.slane %v4340, 4
        %v4343 = vor.u32 %v4342, %v4338
        %v4344 = vrot.slane %v4343, 4
        %v4346 = vshll.u32 %v4232, 16
        %v4348 = vrot.slane %v4346, 5
        %v4349 = vsel %vm3644, %v4344, %v4348
        %v4350 = vshrl.u32 %v4232, 16
        %v4352 = vrot.slane %v4350, 4
        %v4353 = vor.u32 %v4352, %v4348
        %v4354 = vrot.slane %v4353, 4
        %v4356 = vshll.u32 %v4233, 16
        %v4358 = vrot.slane %v4356, 5
        %v4359 = vsel %vm3644, %v4354, %v4358
        %v4360 = vshrl.u32 %v4233, 16
        %v4362 = vrot.slane %v4360, 4
        %v4363 = vor.u32 %v4362, %v4358
        %v4364 = vrot.slane %v4363, 4
        %v4366 = vshll.u32 %v4234, 16
        %v4368 = vrot.slane %v4366, 5
        %v4369 = vsel %vm3644, %v4364, %v4368
        %v4370 = vshrl.u32 %v4234, 16
        %v4372 = vrot.slane %v4370, 4
        %v4373 = vor.u32 %v4372, %v4368
        %v4374 = vrot.slane %v4373, 4
        %v4376 = vshll.u32 %v4235, 16
        %v4378 = vrot.slane %v4376, 5
        %v4379 = vsel %vm3644, %v4374, %v4378
        %v4380 = vshrl.u32 %v4235, 16
        %v4382 = vrot.slane %v4380, 4
        %v4383 = vor.u32 %v4382, %v4378
        %v4384 = vrot.slane %v4383, 4
        %v4386 = vshll.u32 %v4236, 16
        %v4388 = vrot.slane %v4386, 5
        %v4389 = vsel %vm3644, %v4384, %v4388
        %v4390 = vshrl.u32 %v4236, 16
        %v4392 = vrot.slane %v4390, 4
        %v4393 = vor.u32 %v4392, %v4388
        %v4394 = vrot.slane %v4393, 4
        %v4396 = vshll.u32 %v4237, 16
        %v4398 = vrot.slane %v4396, 5
        %v4399 = vsel %vm3644, %v4394, %v4398
        %v4400 = vshrl.u32 %v4237, 16
        %v4402 = vrot.slane %v4400, 4
        %v4403 = vor.u32 %v4402, %v4398
        %v4404 = vrot.slane %v4403, 4
        %v4406 = vshll.u32 %v4238, 16
        %v4408 = vrot.slane %v4406, 5
        %v4409 = vsel %vm3644, %v4404, %v4408
        %v4410 = vshrl.u32 %v4238, 16
        %v4412 = vrot.slane %v4410, 4
        %v4413 = vor.u32 %v4412, %v4408
        %v4414 = vrot.slane %v4413, 4
        %v4416 = vshll.u32 %v4239, 16
        %v4418 = vrot.slane %v4416, 5
        %v4419 = vsel %vm3644, %v4414, %v4418
        %v4420 = vshrl.u32 %v4239, 16
        %v4422 = vrot.slane %v4420, 4
        %v4423 = vor.u32 %v4422, %v4418
        %v4424 = vrot.slane %v4423, 4
        %v4426 = vshll.u32 %v4240, 16
        %v4428 = vrot.slane %v4426, 5
        %v4429 = vsel %vm3644, %v4424, %v4428
        %v4430 = vshrl.u32 %v4240, 16
        %v4432 = vrot.slane %v4430, 4
        %v4433 = vor.u32 %v4432, %v4428
        %v4434 = vrot.slane %v4433, 4
        %v4436 = vshll.u32 %v4241, 16
        %v4438 = vrot.slane %v4436, 5
        %v4439 = vsel %vm3644, %v4434, %v4438
        %v4440 = vshrl.u32 %v4241, 16
        %v4442 = vrot.slane %v4440, 4
        %v4443 = vor.u32 %v4442, %v4438
        %v4444 = vrot.slane %v4443, 4
        %v4446 = vshll.u32 %v4242, 16
        %v4448 = vrot.slane %v4446, 5
        %v4449 = vsel %vm3644, %v4444, %v4448
        %v4450 = vshrl.u32 %v4242, 16
        %v4452 = vrot.slane %v4450, 4
        %v4453 = vor.u32 %v4452, %v4448
        %v4454 = vrot.slane %v4453, 4
        %v4456 = vshll.u32 %v4243, 16
        %v4458 = vrot.slane %v4456, 5
        %v4459 = vsel %vm3644, %v4454, %v4458
        %v4460 = vshrl.u32 %v4243, 16
        %v4462 = vrot.slane %v4460, 4
        %v4463 = vor.u32 %v4462, %v4458
        %v4464 = vrot.slane %v4463, 4
        %v4466 = vshll.u32 %v4244, 16
        %v4468 = vrot.slane %v4466, 5
        %v4469 = vsel %vm3644, %v4464, %v4468
        %v4470 = vshrl.u32 %v4244, 16
        %v4472 = vrot.slane %v4470, 4
        %v4473 = vor.u32 %v4472, %v4468
        %v4474 = vrot.slane %v4473, 4
        %v4476 = vshll.u32 %v4245, 16
        %v4478 = vrot.slane %v4476, 5
        %v4479 = vsel %vm3644, %v4474, %v4478
        %v4480 = vshrl.u32 %v4245, 16
        %v4482 = vrot.slane %v4480, 4
        %v4483 = vor.u32 %v4482, %v4478
        %v4484 = vrot.slane %v4483, 4
        %v4486 = vshll.u32 %v4246, 16
        %v4488 = vrot.slane %v4486, 5
        %v4489 = vsel %vm3644, %v4484, %v4488
        %v4490 = vshrl.u32 %v4246, 16
        %v4492 = vrot.slane %v4490, 4
        %v4493 = vor.u32 %v4492, %v4488
        %v4494 = vrot.slane %v4493, 4
        %v4496 = vshll.u32 %v4247, 16
        %v4498 = vrot.slane %v4496, 5
        %v4499 = vsel %vm3644, %v4494, %v4498
        %v4500 = vshrl.u32 %v4247, 16
        %v4502 = vrot.slane %v4500, 4
        %v4503 = vor.u32 %v4502, %v4498
        %v4504 = vrot.slane %v4503, 4
        %v4506 = vshll.u32 %v4248, 16
        %v4508 = vrot.slane %v4506, 5
        %v4509 = vsel %vm3644, %v4504, %v4508
        %v4510 = vshrl.u32 %v4248, 16
        %v4512 = vrot.slane %v4510, 4
        %v4513 = vor.u32 %v4512, %v4508
        %v4514 = vrot.slane %v4513, 4
        %v4516 = vshll.u32 %v4249, 16
        %v4518 = vrot.slane %v4516, 5
        %v4519 = vsel %vm3644, %v4514, %v4518
        %v4520 = vshrl.u32 %v4249, 16
        %v4522 = vrot.slane %v4520, 4
        %v4523 = vor.u32 %v4522, %v4518
        %v4524 = vrot.slane %v4523, 4
        %v4526 = vshll.u32 %v4250, 16
        %v4528 = vrot.slane %v4526, 5
        %v4529 = vsel %vm3644, %v4524, %v4528
        %v4530 = vshrl.u32 %v4250, 16
        %v4532 = vrot.slane %v4530, 4
        %v4533 = vor.u32 %v4532, %v4528
        %v4534 = vrot.slane %v4533, 4
        %v4536 = vshll.u32 %v4251, 16
        %v4538 = vrot.slane %v4536, 5
        %v4539 = vsel %vm3644, %v4534, %v4538
        %v4540 = vshrl.u32 %v4251, 16
        %v4542 = vrot.slane %v4540, 4
        %v4543 = vor.u32 %v4542, %v4538
        %v4544 = vrot.slane %v4543, 4
        %v4546 = vshll.u32 %v4252, 16
        %v4548 = vrot.slane %v4546, 5
        %v4549 = vsel %vm3644, %v4544, %v4548
        %v4550 = vshrl.u32 %v4252, 16
        %v4552 = vrot.slane %v4550, 4
        %v4553 = vor.u32 %v4552, %v4548
        %v4554 = vrot.slane %v4553, 4
        %v4556 = vshll.u32 %v4253, 16
        %v4558 = vrot.slane %v4556, 5
        %v4559 = vsel %vm3644, %v4554, %v4558
        %v4560 = vshrl.u32 %v4253, 16
        %v4562 = vrot.slane %v4560, 4
        %v4563 = vor.u32 %v4562, %v4558
        %v4564 = vrot.slane %v4563, 4
        %v4566 = vshll.u32 %v4254, 16
        %v4568 = vrot.slane %v4566, 5
        %v4569 = vsel %vm3644, %v4564, %v4568
        %v4570 = vshrl.u32 %v4254, 16
        %v4572 = vrot.slane %v4570, 4
        %v4573 = vor.u32 %v4572, %v4568
        %v4574 = vrot.slane %v4573, 4
        %v4576 = vshll.u32 %v4255, 16
        %v4578 = vrot.slane %v4576, 5
        %v4579 = vsel %vm3644, %v4574, %v4578
        %v4580 = vshrl.u32 %v4255, 16
        %v4582 = vrot.slane %v4580, 4
        %v4583 = vor.u32 %v4582, %v4578
        %v4584 = vrot.slane %v4583, 4
        %v4586 = vshll.u32 %v4256, 16
        %v4588 = vrot.slane %v4586, 5
        %v4589 = vsel %vm3644, %v4584, %v4588
        %v4590 = vshrl.u32 %v4256, 16
        %v4592 = vrot.slane %v4590, 4
        %v4593 = vor.u32 %v4592, %v4588
        %v4594 = vrot.slane %v4593, 4
        %v4596 = vshll.u32 %v4257, 16
        %v4598 = vrot.slane %v4596, 5
        %v4599 = vsel %vm3644, %v4594, %v4598
        %v4600 = vshrl.u32 %v4257, 16
        %v4602 = vrot.slane %v4600, 4
        %v4603 = vor.u32 %v4602, %v4598
        %v4604 = vrot.slane %v4603, 4
        %v4606 = vshll.u32 %v4258, 16
        %v4608 = vrot.slane %v4606, 5
        %v4609 = vsel %vm3644, %v4604, %v4608
        %v4610 = vshrl.u32 %v4258, 16
        %v4612 = vrot.slane %v4610, 4
        %v4613 = vor.u32 %v4612, %v4608
        %v4614 = vrot.slane %v4613, 4
        %v4616 = vshll.u32 %v4259, 16
        %v4618 = vrot.slane %v4616, 5
        %v4619 = vsel %vm3644, %v4614, %v4618
        %v4620 = vshrl.u32 %v4259, 16
        %v4622 = vrot.slane %v4620, 4
        %v4623 = vor.u32 %v4622, %v4618
        %v4624 = vrot.slane %v4623, 4
        %v4626 = vshll.u32 %v4260, 16
        %v4628 = vrot.slane %v4626, 5
        %v4629 = vsel %vm3644, %v4624, %v4628
        %v4630 = vshrl.u32 %v4260, 16
        %v4632 = vrot.slane %v4630, 4
        %v4633 = vor.u32 %v4632, %v4628
        %v4634 = vrot.slane %v4633, 4
        %v4636 = vshll.u32 %v4261, 16
        %v4638 = vrot.slane %v4636, 5
        %v4639 = vsel %vm3644, %v4634, %v4638
        %v4640 = vshrl.u32 %v4261, 16
        %v4642 = vrot.slane %v4640, 4
        %v4643 = vor.u32 %v4642, %v4638
        %v4644 = vrot.slane %v4643, 4
        %v4646 = vshll.u32 %v4262, 16
        %v4648 = vrot.slane %v4646, 5
        %v4649 = vsel %vm3644, %v4644, %v4648
        %v4650 = vshrl.u32 %v4262, 16
        %v4652 = vrot.slane %v4650, 4
        %v4653 = vor.u32 %v4652, %v4648
        %v4654 = vrot.slane %v4653, 4
        %v4656 = vshll.u32 %v4263, 16
        %v4658 = vrot.slane %v4656, 5
        %v4659 = vsel %vm3644, %v4654, %v4658
        %v4660 = vshrl.u32 %v4263, 16
        %v4662 = vrot.slane %v4660, 4
        %v4663 = vor.u32 %v4662, %v4658
        %v4664 = vrot.slane %v4663, 4
        %v4666 = vshll.u32 %v4264, 16
        %v4668 = vrot.slane %v4666, 5
        %v4669 = vsel %vm3644, %v4664, %v4668
        %v4670 = vshrl.u32 %v4264, 16
        %v4672 = vrot.slane %v4670, 4
        %v4673 = vor.u32 %v4672, %v4668
        %v4674 = vrot.slane %v4673, 4
        %v4676 = vshll.u32 %v4265, 16
        %v4678 = vrot.slane %v4676, 5
        %v4679 = vsel %vm3644, %v4674, %v4678
        %4680 = vrot.lane.b32.xlu0 %v4279, 96
        %v4681 = vpop.permute.xlu0 %4680
        %4682 = vrot.lane.b32.xlu0 %v4289, 96
        %v4683 = vpop.permute.xlu0 %4682
        %4684 = vrot.lane.b32.xlu0 %v4299, 96
        %v4685 = vpop.permute.xlu0 %4684
        %4686 = vrot.lane.b32.xlu0 %v4309, 96
        %v4687 = vpop.permute.xlu0 %4686
        %4688 = vrot.lane.b32.xlu0 %v4319, 96
        %v4689 = vpop.permute.xlu0 %4688
        %4690 = vrot.lane.b32.xlu0 %v4329, 96
        %v4691 = vpop.permute.xlu0 %4690
        %4692 = vrot.lane.b32.xlu0 %v4339, 96
        %v4693 = vpop.permute.xlu0 %4692
        %4694 = vrot.lane.b32.xlu0 %v4349, 96
        %v4695 = vpop.permute.xlu0 %4694
        %4696 = vrot.lane.b32.xlu0 %v4359, 96
        %v4697 = vpop.permute.xlu0 %4696
        %4698 = vrot.lane.b32.xlu0 %v4369, 96
        %v4699 = vpop.permute.xlu0 %4698
        %4700 = vrot.lane.b32.xlu0 %v4379, 96
        %v4701 = vpop.permute.xlu0 %4700
        %4702 = vrot.lane.b32.xlu0 %v4389, 96
        %v4703 = vpop.permute.xlu0 %4702
        %4704 = vrot.lane.b32.xlu0 %v4399, 96
        %v4705 = vpop.permute.xlu0 %4704
        %4706 = vrot.lane.b32.xlu0 %v4409, 96
        %v4707 = vpop.permute.xlu0 %4706
        %4708 = vrot.lane.b32.xlu0 %v4419, 96
        %v4709 = vpop.permute.xlu0 %4708
        %4710 = vrot.lane.b32.xlu0 %v4429, 96
        %v4711 = vpop.permute.xlu0 %4710
        %4712 = vrot.lane.b32.xlu0 %v4439, 96
        %v4713 = vpop.permute.xlu0 %4712
        %4714 = vrot.lane.b32.xlu0 %v4449, 96
        %v4715 = vpop.permute.xlu0 %4714
        %4716 = vrot.lane.b32.xlu0 %v4459, 96
        %v4717 = vpop.permute.xlu0 %4716
        %4718 = vrot.lane.b32.xlu0 %v4469, 96
        %v4719 = vpop.permute.xlu0 %4718
        %4720 = vrot.lane.b32.xlu0 %v4479, 96
        %v4721 = vpop.permute.xlu0 %4720
        %4722 = vrot.lane.b32.xlu0 %v4489, 96
        %v4723 = vpop.permute.xlu0 %4722
        %4724 = vrot.lane.b32.xlu0 %v4499, 96
        %v4725 = vpop.permute.xlu0 %4724
        %4726 = vrot.lane.b32.xlu0 %v4509, 96
        %v4727 = vpop.permute.xlu0 %4726
        %4728 = vrot.lane.b32.xlu0 %v4519, 96
        %v4729 = vpop.permute.xlu0 %4728
        %4730 = vrot.lane.b32.xlu0 %v4529, 96
        %v4731 = vpop.permute.xlu0 %4730
        %4732 = vrot.lane.b32.xlu0 %v4539, 96
        %v4733 = vpop.permute.xlu0 %4732
        %4734 = vrot.lane.b32.xlu0 %v4549, 96
        %v4735 = vpop.permute.xlu0 %4734
        %4736 = vrot.lane.b32.xlu0 %v4559, 96
        %v4737 = vpop.permute.xlu0 %4736
        %4738 = vrot.lane.b32.xlu0 %v4569, 96
        %v4739 = vpop.permute.xlu0 %4738
        %4740 = vrot.lane.b32.xlu0 %v4579, 96
        %v4741 = vpop.permute.xlu0 %4740
        %4742 = vrot.lane.b32.xlu0 %v4589, 96
        %v4743 = vpop.permute.xlu0 %4742
        %4744 = vrot.lane.b32.xlu0 %v4599, 96
        %v4745 = vpop.permute.xlu0 %4744
        %4746 = vrot.lane.b32.xlu0 %v4609, 96
        %v4747 = vpop.permute.xlu0 %4746
        %4748 = vrot.lane.b32.xlu0 %v4619, 96
        %v4749 = vpop.permute.xlu0 %4748
        %4750 = vrot.lane.b32.xlu0 %v4629, 96
        %v4751 = vpop.permute.xlu0 %4750
        %4752 = vrot.lane.b32.xlu0 %v4639, 96
        %v4753 = vpop.permute.xlu0 %4752
        %4754 = vrot.lane.b32.xlu0 %v4649, 96
        %v4755 = vpop.permute.xlu0 %4754
        %4756 = vrot.lane.b32.xlu0 %v4659, 96
        %v4757 = vpop.permute.xlu0 %4756
        %4758 = vrot.lane.b32.xlu0 %v4669, 96
        %v4759 = vpop.permute.xlu0 %4758
        %4760 = vrot.lane.b32.xlu0 %v4679, 96
        %v4761 = vpop.permute.xlu0 %4760
        %vm4803 = vcmask 913152
        %4804 = vst.msk [vmem:[#allocation3] sm:$0xf] %vm4803, %v4681
        %4805 = vst.msk [vmem:[#allocation3 + $0xc] sm:$0xf] %vm4803, %v4683
        %4806 = vst.msk [vmem:[#allocation3 + $0x18] sm:$0xf] %vm4803, %v4685
        %4807 = vst.msk [vmem:[#allocation3 + $0x24] sm:$0xf] %vm4803, %v4687
        %4808 = vst.msk [vmem:[#allocation3 + $0x30] sm:$0xf] %vm4803, %v4689
        %4809 = vst.msk [vmem:[#allocation3 + $0x3c] sm:$0xf] %vm4803, %v4691
        %4810 = vst.msk [vmem:[#allocation3 + $0x48] sm:$0xf] %vm4803, %v4693
        %4811 = vst.msk [vmem:[#allocation3 + $0x54] sm:$0xf] %vm4803, %v4695
        %4812 = vst.msk [vmem:[#allocation3 + $0x60] sm:$0xf] %vm4803, %v4697
        %4813 = vst.msk [vmem:[#allocation3 + $0x6c] sm:$0xf] %vm4803, %v4699
        %4814 = vst.msk [vmem:[#allocation3 + $0x78] sm:$0xf] %vm4803, %v4701
        %4815 = vst.msk [vmem:[#allocation3 + $0x84] sm:$0xf] %vm4803, %v4703
        %4816 = vst.msk [vmem:[#allocation3 + $0x90] sm:$0xf] %vm4803, %v4705
        %4817 = vst.msk [vmem:[#allocation3 + $0x9c] sm:$0xf] %vm4803, %v4707
        %4818 = vst.msk [vmem:[#allocation3 + $0xa8] sm:$0xf] %vm4803, %v4709
        %4819 = vst.msk [vmem:[#allocation3 + $0xb4] sm:$0xf] %vm4803, %v4711
        %4820 = vst.msk [vmem:[#allocation3 + $0xc0] sm:$0xf] %vm4803, %v4713
        %4821 = vst.msk [vmem:[#allocation3 + $0xcc] sm:$0xf] %vm4803, %v4715
        %4822 = vst.msk [vmem:[#allocation3 + $0xd8] sm:$0xf] %vm4803, %v4717
        %4823 = vst.msk [vmem:[#allocation3 + $0xe4] sm:$0xf] %vm4803, %v4719
        %4824 = vst.msk [vmem:[#allocation3 + $0xf0] sm:$0xf] %vm4803, %v4721
        %4825 = vst.msk [vmem:[#allocation3 + $0xfc] sm:$0xf] %vm4803, %v4723
        %4826 = vst.msk [vmem:[#allocation3 + $0x108] sm:$0xf] %vm4803, %v4725
        %4827 = vst.msk [vmem:[#allocation3 + $0x114] sm:$0xf] %vm4803, %v4727
        %4828 = vst.msk [vmem:[#allocation3 + $0x120] sm:$0xf] %vm4803, %v4729
        %4829 = vst.msk [vmem:[#allocation3 + $0x12c] sm:$0xf] %vm4803, %v4731
        %4830 = vst.msk [vmem:[#allocation3 + $0x138] sm:$0xf] %vm4803, %v4733
        %4831 = vst.msk [vmem:[#allocation3 + $0x144] sm:$0xf] %vm4803, %v4735
        %4832 = vst.msk [vmem:[#allocation3 + $0x150] sm:$0xf] %vm4803, %v4737
        %4833 = vst.msk [vmem:[#allocation3 + $0x15c] sm:$0xf] %vm4803, %v4739
        %4834 = vst.msk [vmem:[#allocation3 + $0x168] sm:$0xf] %vm4803, %v4741
        %4835 = vst.msk [vmem:[#allocation3 + $0x174] sm:$0xf] %vm4803, %v4743
        %4836 = vst.msk [vmem:[#allocation3 + $0x180] sm:$0xf] %vm4803, %v4745
        %4837 = vst.msk [vmem:[#allocation3 + $0x18c] sm:$0xf] %vm4803, %v4747
        %4838 = vst.msk [vmem:[#allocation3 + $0x198] sm:$0xf] %vm4803, %v4749
        %4839 = vst.msk [vmem:[#allocation3 + $0x1a4] sm:$0xf] %vm4803, %v4751
        %4840 = vst.msk [vmem:[#allocation3 + $0x1b0] sm:$0xf] %vm4803, %v4753
        %4841 = vst.msk [vmem:[#allocation3 + $0x1bc] sm:$0xf] %vm4803, %v4755
        %4842 = vst.msk [vmem:[#allocation3 + $0x1c8] sm:$0xf] %vm4803, %v4757
        %4843 = vst.msk [vmem:[#allocation3 + $0x1d4] sm:$0xf] %vm4803, %v4759
        %4844 = vst.msk [vmem:[#allocation3 + $0x1e0] sm:$0xf] %vm4803, %v4761
        %v4845 = vld [vmem:[#allocation2 + $0x14] sm:$0xe]
        %v4846 = vld [vmem:[#allocation2 + $0x18] sm:$0xf]
        %v4847 = vld [vmem:[#allocation2 + $0x1c] sm:$0xf]
        %v4848 = vld [vmem:[#allocation2 + $0x20] sm:$0xf]
        %v4849 = vld [vmem:[#allocation2 + $0x24] sm:$0xf]
        %v4850 = vld [vmem:[#allocation2 + $0x28] sm:$0xf]
        %v4851 = vld [vmem:[#allocation2 + $0x2c] sm:$0xf]
        %v4852 = vld [vmem:[#allocation2 + $0x30] sm:$0xf]
        %v4853 = vld [vmem:[#allocation2 + $0x34] sm:$0xf]
        %v4854 = vld [vmem:[#allocation2 + $0x38] sm:$0xf]
        %v4855 = vld [vmem:[#allocation2 + $0x3c] sm:$0xf]
        %v4856 = vld [vmem:[#allocation2 + $0x40] sm:$0xf]
        %v4857 = vld [vmem:[#allocation2 + $0x44] sm:$0xf]
        %v4858 = vld [vmem:[#allocation2 + $0x48] sm:$0xf]
        %v4859 = vld [vmem:[#allocation2 + $0x4c] sm:$0xf]
        %v4860 = vld [vmem:[#allocation2 + $0x50] sm:$0xf]
        %v4861 = vld [vmem:[#allocation2 + $0x54] sm:$0xf]
        %v4862 = vld [vmem:[#allocation2 + $0x58] sm:$0xf]
        %v4863 = vld [vmem:[#allocation2 + $0x5c] sm:$0xf]
        %v4864 = vld [vmem:[#allocation2 + $0x60] sm:$0xf]
        %v4865 = vld [vmem:[#allocation2 + $0x64] sm:$0xf]
        %v4866 = vld [vmem:[#allocation2 + $0x68] sm:$0xf]
        %v4867 = vld [vmem:[#allocation2 + $0x6c] sm:$0xf]
        %v4868 = vld [vmem:[#allocation2 + $0x70] sm:$0xf]
        %v4869 = vld [vmem:[#allocation2 + $0x74] sm:$0xf]
        %v4870 = vld [vmem:[#allocation2 + $0x78] sm:$0xf]
        %v4871 = vld [vmem:[#allocation2 + $0x7c] sm:$0xf]
        %v4872 = vld [vmem:[#allocation2 + $0x80] sm:$0xf]
        %v4873 = vld [vmem:[#allocation2 + $0x84] sm:$0xf]
        %v4874 = vld [vmem:[#allocation2 + $0x88] sm:$0xf]
        %v4875 = vld [vmem:[#allocation2 + $0x8c] sm:$0xf]
        %v4876 = vld [vmem:[#allocation2 + $0x90] sm:$0xf]
        %v4877 = vld [vmem:[#allocation2 + $0x94] sm:$0xf]
        %v4878 = vld [vmem:[#allocation2 + $0x98] sm:$0xf]
        %v4879 = vld [vmem:[#allocation2 + $0x9c] sm:$0xf]
        %v4880 = vld [vmem:[#allocation2 + $0xa0] sm:$0xf]
        %v4881 = vld [vmem:[#allocation2 + $0xa4] sm:$0xf]
        %v4882 = vld [vmem:[#allocation2 + $0xa8] sm:$0xf]
        %v4883 = vld [vmem:[#allocation2 + $0xac] sm:$0xf]
        %v4884 = vld [vmem:[#allocation2 + $0xb0] sm:$0xf]
        %v4885 = vld [vmem:[#allocation2 + $0xb4] sm:$0xf]
        %v4886 = vld [vmem:[#allocation2 + $0xb8] sm:$0x1]
        %vm4929 = vcmask 1042432
        %vm4930 = vcmask 1046532
        %vm4931 = vmor %vm4929, %vm4930
        %v4932 = vrot.slane %v4845, 5
        %v4933 = vrot.slane %v4932, 4
        %v4934 = vrot.slane %v4846, 5
        %v4935 = vsel %vm4931, %v4933, %v4934
        %v4936 = vrot.slane %v4934, 4
        %v4937 = vrot.slane %v4847, 5
        %v4938 = vsel %vm4931, %v4936, %v4937
        %v4939 = vrot.slane %v4937, 4
        %v4940 = vrot.slane %v4848, 5
        %v4941 = vsel %vm4931, %v4939, %v4940
        %v4942 = vrot.slane %v4940, 4
        %v4943 = vrot.slane %v4849, 5
        %v4944 = vsel %vm4931, %v4942, %v4943
        %v4945 = vrot.slane %v4943, 4
        %v4946 = vrot.slane %v4850, 5
        %v4947 = vsel %vm4931, %v4945, %v4946
        %v4948 = vrot.slane %v4946, 4
        %v4949 = vrot.slane %v4851, 5
        %v4950 = vsel %vm4931, %v4948, %v4949
        %v4951 = vrot.slane %v4949, 4
        %v4952 = vrot.slane %v4852, 5
        %v4953 = vsel %vm4931, %v4951, %v4952
        %v4954 = vrot.slane %v4952, 4
        %v4955 = vrot.slane %v4853, 5
        %v4956 = vsel %vm4931, %v4954, %v4955
        %v4957 = vrot.slane %v4955, 4
        %v4958 = vrot.slane %v4854, 5
        %v4959 = vsel %vm4931, %v4957, %v4958
        %v4960 = vrot.slane %v4958, 4
        %v4961 = vrot.slane %v4855, 5
        %v4962 = vsel %vm4931, %v4960, %v4961
        %v4963 = vrot.slane %v4961, 4
        %v4964 = vrot.slane %v4856, 5
        %v4965 = vsel %vm4931, %v4963, %v4964
        %v4966 = vrot.slane %v4964, 4
        %v4967 = vrot.slane %v4857, 5
        %v4968 = vsel %vm4931, %v4966, %v4967
        %v4969 = vrot.slane %v4967, 4
        %v4970 = vrot.slane %v4858, 5
        %v4971 = vsel %vm4931, %v4969, %v4970
        %v4972 = vrot.slane %v4970, 4
        %v4973 = vrot.slane %v4859, 5
        %v4974 = vsel %vm4931, %v4972, %v4973
        %v4975 = vrot.slane %v4973, 4
        %v4976 = vrot.slane %v4860, 5
        %v4977 = vsel %vm4931, %v4975, %v4976
        %v4978 = vrot.slane %v4976, 4
        %v4979 = vrot.slane %v4861, 5
        %v4980 = vsel %vm4931, %v4978, %v4979
        %v4981 = vrot.slane %v4979, 4
        %v4982 = vrot.slane %v4862, 5
        %v4983 = vsel %vm4931, %v4981, %v4982
        %v4984 = vrot.slane %v4982, 4
        %v4985 = vrot.slane %v4863, 5
        %v4986 = vsel %vm4931, %v4984, %v4985
        %v4987 = vrot.slane %v4985, 4
        %v4988 = vrot.slane %v4864, 5
        %v4989 = vsel %vm4931, %v4987, %v4988
        %v4990 = vrot.slane %v4988, 4
        %v4991 = vrot.slane %v4865, 5
        %v4992 = vsel %vm4931, %v4990, %v4991
        %v4993 = vrot.slane %v4991, 4
        %v4994 = vrot.slane %v4866, 5
        %v4995 = vsel %vm4931, %v4993, %v4994
        %v4996 = vrot.slane %v4994, 4
        %v4997 = vrot.slane %v4867, 5
        %v4998 = vsel %vm4931, %v4996, %v4997
        %v4999 = vrot.slane %v4997, 4
        %v5000 = vrot.slane %v4868, 5
        %v5001 = vsel %vm4931, %v4999, %v5000
        %v5002 = vrot.slane %v5000, 4
        %v5003 = vrot.slane %v4869, 5
        %v5004 = vsel %vm4931, %v5002, %v5003
        %v5005 = vrot.slane %v5003, 4
        %v5006 = vrot.slane %v4870, 5
        %v5007 = vsel %vm4931, %v5005, %v5006
        %v5008 = vrot.slane %v5006, 4
        %v5009 = vrot.slane %v4871, 5
        %v5010 = vsel %vm4931, %v5008, %v5009
        %v5011 = vrot.slane %v5009, 4
        %v5012 = vrot.slane %v4872, 5
        %v5013 = vsel %vm4931, %v5011, %v5012
        %v5014 = vrot.slane %v5012, 4
        %v5015 = vrot.slane %v4873, 5
        %v5016 = vsel %vm4931, %v5014, %v5015
        %v5017 = vrot.slane %v5015, 4
        %v5018 = vrot.slane %v4874, 5
        %v5019 = vsel %vm4931, %v5017, %v5018
        %v5020 = vrot.slane %v5018, 4
        %v5021 = vrot.slane %v4875, 5
        %v5022 = vsel %vm4931, %v5020, %v5021
        %v5023 = vrot.slane %v5021, 4
        %v5024 = vrot.slane %v4876, 5
        %v5025 = vsel %vm4931, %v5023, %v5024
        %v5026 = vrot.slane %v5024, 4
        %v5027 = vrot.slane %v4877, 5
        %v5028 = vsel %vm4931, %v5026, %v5027
        %v5029 = vrot.slane %v5027, 4
        %v5030 = vrot.slane %v4878, 5
        %v5031 = vsel %vm4931, %v5029, %v5030
        %v5032 = vrot.slane %v5030, 4
        %v5033 = vrot.slane %v4879, 5
        %v5034 = vsel %vm4931, %v5032, %v5033
        %v5035 = vrot.slane %v5033, 4
        %v5036 = vrot.slane %v4880, 5
        %v5037 = vsel %vm4931, %v5035, %v5036
        %v5038 = vrot.slane %v5036, 4
        %v5039 = vrot.slane %v4881, 5
        %v5040 = vsel %vm4931, %v5038, %v5039
        %v5041 = vrot.slane %v5039, 4
        %v5042 = vrot.slane %v4882, 5
        %v5043 = vsel %vm4931, %v5041, %v5042
        %v5044 = vrot.slane %v5042, 4
        %v5045 = vrot.slane %v4883, 5
        %v5046 = vsel %vm4931, %v5044, %v5045
        %v5047 = vrot.slane %v5045, 4
        %v5048 = vrot.slane %v4884, 5
        %v5049 = vsel %vm4931, %v5047, %v5048
        %v5050 = vrot.slane %v5048, 4
        %v5051 = vrot.slane %v4885, 5
        %v5052 = vsel %vm4931, %v5050, %v5051
        %v5053 = vrot.slane %v5051, 4
        %v5054 = vrot.slane %v4886, 5
        %v5055 = vsel %vm4931, %v5053, %v5054
        %5056 = vrot.lane.b32.xlu0 %v4935, 112
        %v5057 = vpop.permute.xlu0 %5056
        %5058 = vrot.lane.b32.xlu0 %v4938, 112
        %v5059 = vpop.permute.xlu0 %5058
        %5060 = vrot.lane.b32.xlu0 %v4941, 112
        %v5061 = vpop.permute.xlu0 %5060
        %5062 = vrot.lane.b32.xlu0 %v4944, 112
        %v5063 = vpop.permute.xlu0 %5062
        %5064 = vrot.lane.b32.xlu0 %v4947, 112
        %v5065 = vpop.permute.xlu0 %5064
        %5066 = vrot.lane.b32.xlu0 %v4950, 112
        %v5067 = vpop.permute.xlu0 %5066
        %5068 = vrot.lane.b32.xlu0 %v4953, 112
        %v5069 = vpop.permute.xlu0 %5068
        %5070 = vrot.lane.b32.xlu0 %v4956, 112
        %v5071 = vpop.permute.xlu0 %5070
        %5072 = vrot.lane.b32.xlu0 %v4959, 112
        %v5073 = vpop.permute.xlu0 %5072
        %5074 = vrot.lane.b32.xlu0 %v4962, 112
        %v5075 = vpop.permute.xlu0 %5074
        %5076 = vrot.lane.b32.xlu0 %v4965, 112
        %v5077 = vpop.permute.xlu0 %5076
        %5078 = vrot.lane.b32.xlu0 %v4968, 112
        %v5079 = vpop.permute.xlu0 %5078
        %5080 = vrot.lane.b32.xlu0 %v4971, 112
        %v5081 = vpop.permute.xlu0 %5080
        %5082 = vrot.lane.b32.xlu0 %v4974, 112
        %v5083 = vpop.permute.xlu0 %5082
        %5084 = vrot.lane.b32.xlu0 %v4977, 112
        %v5085 = vpop.permute.xlu0 %5084
        %5086 = vrot.lane.b32.xlu0 %v4980, 112
        %v5087 = vpop.permute.xlu0 %5086
        %5088 = vrot.lane.b32.xlu0 %v4983, 112
        %v5089 = vpop.permute.xlu0 %5088
        %5090 = vrot.lane.b32.xlu0 %v4986, 112
        %v5091 = vpop.permute.xlu0 %5090
        %5092 = vrot.lane.b32.xlu0 %v4989, 112
        %v5093 = vpop.permute.xlu0 %5092
        %5094 = vrot.lane.b32.xlu0 %v4992, 112
        %v5095 = vpop.permute.xlu0 %5094
        %5096 = vrot.lane.b32.xlu0 %v4995, 112
        %v5097 = vpop.permute.xlu0 %5096
        %5098 = vrot.lane.b32.xlu0 %v4998, 112
        %v5099 = vpop.permute.xlu0 %5098
        %5100 = vrot.lane.b32.xlu0 %v5001, 112
        %v5101 = vpop.permute.xlu0 %5100
        %5102 = vrot.lane.b32.xlu0 %v5004, 112
        %v5103 = vpop.permute.xlu0 %5102
        %5104 = vrot.lane.b32.xlu0 %v5007, 112
        %v5105 = vpop.permute.xlu0 %5104
        %5106 = vrot.lane.b32.xlu0 %v5010, 112
        %v5107 = vpop.permute.xlu0 %5106
        %5108 = vrot.lane.b32.xlu0 %v5013, 112
        %v5109 = vpop.permute.xlu0 %5108
        %5110 = vrot.lane.b32.xlu0 %v5016, 112
        %v5111 = vpop.permute.xlu0 %5110
        %5112 = vrot.lane.b32.xlu0 %v5019, 112
        %v5113 = vpop.permute.xlu0 %5112
        %5114 = vrot.lane.b32.xlu0 %v5022, 112
        %v5115 = vpop.permute.xlu0 %5114
        %5116 = vrot.lane.b32.xlu0 %v5025, 112
        %v5117 = vpop.permute.xlu0 %5116
        %5118 = vrot.lane.b32.xlu0 %v5028, 112
        %v5119 = vpop.permute.xlu0 %5118
        %5120 = vrot.lane.b32.xlu0 %v5031, 112
        %v5121 = vpop.permute.xlu0 %5120
        %5122 = vrot.lane.b32.xlu0 %v5034, 112
        %v5123 = vpop.permute.xlu0 %5122
        %5124 = vrot.lane.b32.xlu0 %v5037, 112
        %v5125 = vpop.permute.xlu0 %5124
        %5126 = vrot.lane.b32.xlu0 %v5040, 112
        %v5127 = vpop.permute.xlu0 %5126
        %5128 = vrot.lane.b32.xlu0 %v5043, 112
        %v5129 = vpop.permute.xlu0 %5128
        %5130 = vrot.lane.b32.xlu0 %v5046, 112
        %v5131 = vpop.permute.xlu0 %5130
        %5132 = vrot.lane.b32.xlu0 %v5049, 112
        %v5133 = vpop.permute.xlu0 %5132
        %5134 = vrot.lane.b32.xlu0 %v5052, 112
        %v5135 = vpop.permute.xlu0 %5134
        %5136 = vrot.lane.b32.xlu0 %v5055, 112
        %v5137 = vpop.permute.xlu0 %5136
        %vm5179 = vcmask 1044352
        %5180 = vst.msk [vmem:[#allocation3] sm:$0xf] %vm5179, %v5057
        %5181 = vst.msk [vmem:[#allocation3 + $0xc] sm:$0xf] %vm5179, %v5059
        %5182 = vst.msk [vmem:[#allocation3 + $0x18] sm:$0xf] %vm5179, %v5061
        %5183 = vst.msk [vmem:[#allocation3 + $0x24] sm:$0xf] %vm5179, %v5063
        %5184 = vst.msk [vmem:[#allocation3 + $0x30] sm:$0xf] %vm5179, %v5065
        %5185 = vst.msk [vmem:[#allocation3 + $0x3c] sm:$0xf] %vm5179, %v5067
        %5186 = vst.msk [vmem:[#allocation3 + $0x48] sm:$0xf] %vm5179, %v5069
        %5187 = vst.msk [vmem:[#allocation3 + $0x54] sm:$0xf] %vm5179, %v5071
        %5188 = vst.msk [vmem:[#allocation3 + $0x60] sm:$0xf] %vm5179, %v5073
        %5189 = vst.msk [vmem:[#allocation3 + $0x6c] sm:$0xf] %vm5179, %v5075
        %5190 = vst.msk [vmem:[#allocation3 + $0x78] sm:$0xf] %vm5179, %v5077
        %5191 = vst.msk [vmem:[#allocation3 + $0x84] sm:$0xf] %vm5179, %v5079
        %5192 = vst.msk [vmem:[#allocation3 + $0x90] sm:$0xf] %vm5179, %v5081
        %5193 = vst.msk [vmem:[#allocation3 + $0x9c] sm:$0xf] %vm5179, %v5083
        %5194 = vst.msk [vmem:[#allocation3 + $0xa8] sm:$0xf] %vm5179, %v5085
        %5195 = vst.msk [vmem:[#allocation3 + $0xb4] sm:$0xf] %vm5179, %v5087
        %5196 = vst.msk [vmem:[#allocation3 + $0xc0] sm:$0xf] %vm5179, %v5089
        %5197 = vst.msk [vmem:[#allocation3 + $0xcc] sm:$0xf] %vm5179, %v5091
        %5198 = vst.msk [vmem:[#allocation3 + $0xd8] sm:$0xf] %vm5179, %v5093
        %5199 = vst.msk [vmem:[#allocation3 + $0xe4] sm:$0xf] %vm5179, %v5095
        %5200 = vst.msk [vmem:[#allocation3 + $0xf0] sm:$0xf] %vm5179, %v5097
        %5201 = vst.msk [vmem:[#allocation3 + $0xfc] sm:$0xf] %vm5179, %v5099
        %5202 = vst.msk [vmem:[#allocation3 + $0x108] sm:$0xf] %vm5179, %v5101
        %5203 = vst.msk [vmem:[#allocation3 + $0x114] sm:$0xf] %vm5179, %v5103
        %5204 = vst.msk [vmem:[#allocation3 + $0x120] sm:$0xf] %vm5179, %v5105
        %5205 = vst.msk [vmem:[#allocation3 + $0x12c] sm:$0xf] %vm5179, %v5107
        %5206 = vst.msk [vmem:[#allocation3 + $0x138] sm:$0xf] %vm5179, %v5109
        %5207 = vst.msk [vmem:[#allocation3 + $0x144] sm:$0xf] %vm5179, %v5111
        %5208 = vst.msk [vmem:[#allocation3 + $0x150] sm:$0xf] %vm5179, %v5113
        %5209 = vst.msk [vmem:[#allocation3 + $0x15c] sm:$0xf] %vm5179, %v5115
        %5210 = vst.msk [vmem:[#allocation3 + $0x168] sm:$0xf] %vm5179, %v5117
        %5211 = vst.msk [vmem:[#allocation3 + $0x174] sm:$0xf] %vm5179, %v5119
        %5212 = vst.msk [vmem:[#allocation3 + $0x180] sm:$0xf] %vm5179, %v5121
        %5213 = vst.msk [vmem:[#allocation3 + $0x18c] sm:$0xf] %vm5179, %v5123
        %5214 = vst.msk [vmem:[#allocation3 + $0x198] sm:$0xf] %vm5179, %v5125
        %5215 = vst.msk [vmem:[#allocation3 + $0x1a4] sm:$0xf] %vm5179, %v5127
        %5216 = vst.msk [vmem:[#allocation3 + $0x1b0] sm:$0xf] %vm5179, %v5129
        %5217 = vst.msk [vmem:[#allocation3 + $0x1bc] sm:$0xf] %vm5179, %v5131
        %5218 = vst.msk [vmem:[#allocation3 + $0x1c8] sm:$0xf] %vm5179, %v5133
        %5219 = vst.msk [vmem:[#allocation3 + $0x1d4] sm:$0xf] %vm5179, %v5135
        %5220 = vst.msk [vmem:[#allocation3 + $0x1e0] sm:$0xf] %vm5179, %v5137
        %v5221 = vld [vmem:[#allocation2 + $0x14] sm:$0xe]
        %v5222 = vld [vmem:[#allocation2 + $0x18] sm:$0xf]
        %v5223 = vld [vmem:[#allocation2 + $0x1c] sm:$0xf]
        %v5224 = vld [vmem:[#allocation2 + $0x20] sm:$0xf]
        %v5225 = vld [vmem:[#allocation2 + $0x24] sm:$0xf]
        %v5226 = vld [vmem:[#allocation2 + $0x28] sm:$0xf]
        %v5227 = vld [vmem:[#allocation2 + $0x2c] sm:$0xf]
        %v5228 = vld [vmem:[#allocation2 + $0x30] sm:$0xf]
        %v5229 = vld [vmem:[#allocation2 + $0x34] sm:$0xf]
        %v5230 = vld [vmem:[#allocation2 + $0x38] sm:$0xf]
        %v5231 = vld [vmem:[#allocation2 + $0x3c] sm:$0xf]
        %v5232 = vld [vmem:[#allocation2 + $0x40] sm:$0xf]
        %v5233 = vld [vmem:[#allocation2 + $0x44] sm:$0xf]
        %v5234 = vld [vmem:[#allocation2 + $0x48] sm:$0xf]
        %v5235 = vld [vmem:[#allocation2 + $0x4c] sm:$0xf]
        %v5236 = vld [vmem:[#allocation2 + $0x50] sm:$0xf]
        %v5237 = vld [vmem:[#allocation2 + $0x54] sm:$0xf]
        %v5238 = vld [vmem:[#allocation2 + $0x58] sm:$0xf]
        %v5239 = vld [vmem:[#allocation2 + $0x5c] sm:$0xf]
        %v5240 = vld [vmem:[#allocation2 + $0x60] sm:$0xf]
        %v5241 = vld [vmem:[#allocation2 + $0x64] sm:$0xf]
        %v5242 = vld [vmem:[#allocation2 + $0x68] sm:$0xf]
        %v5243 = vld [vmem:[#allocation2 + $0x6c] sm:$0xf]
        %v5244 = vld [vmem:[#allocation2 + $0x70] sm:$0xf]
        %v5245 = vld [vmem:[#allocation2 + $0x74] sm:$0xf]
        %v5246 = vld [vmem:[#allocation2 + $0x78] sm:$0xf]
        %v5247 = vld [vmem:[#allocation2 + $0x7c] sm:$0xf]
        %v5248 = vld [vmem:[#allocation2 + $0x80] sm:$0xf]
        %v5249 = vld [vmem:[#allocation2 + $0x84] sm:$0xf]
        %v5250 = vld [vmem:[#allocation2 + $0x88] sm:$0xf]
        %v5251 = vld [vmem:[#allocation2 + $0x8c] sm:$0xf]
        %v5252 = vld [vmem:[#allocation2 + $0x90] sm:$0xf]
        %v5253 = vld [vmem:[#allocation2 + $0x94] sm:$0xf]
        %v5254 = vld [vmem:[#allocation2 + $0x98] sm:$0xf]
        %v5255 = vld [vmem:[#allocation2 + $0x9c] sm:$0xf]
        %v5256 = vld [vmem:[#allocation2 + $0xa0] sm:$0xf]
        %v5257 = vld [vmem:[#allocation2 + $0xa4] sm:$0xf]
        %v5258 = vld [vmem:[#allocation2 + $0xa8] sm:$0xf]
        %v5259 = vld [vmem:[#allocation2 + $0xac] sm:$0xf]
        %v5260 = vld [vmem:[#allocation2 + $0xb0] sm:$0xf]
        %v5261 = vld [vmem:[#allocation2 + $0xb4] sm:$0xf]
        %v5262 = vld [vmem:[#allocation2 + $0xb8] sm:$0x3]
        %vm5263 = vsmask.f32 2304
        %vm5264 = vsmask.f32 6416
        %vm5265 = vmor %vm5263, %vm5264
        %v5267 = vshrl.u32 %v5221, 16
        %v5269 = vrot.slane %v5267, 5
        %v5270 = vshll.u32 %v5221, 16
        %v5272 = vrot.slane %v5270, 6
        %v5273 = vor.u32 %v5269, %v5272
        %v5274 = vrot.slane %v5273, 4
        %v5276 = vshrl.u32 %v5222, 16
        %v5278 = vrot.slane %v5276, 5
        %v5279 = vshll.u32 %v5222, 16
        %v5281 = vrot.slane %v5279, 6
        %v5282 = vor.u32 %v5278, %v5281
        %v5283 = vsel %vm5265, %v5274, %v5282
        %v5284 = vrot.slane %v5282, 4
        %v5286 = vshrl.u32 %v5223, 16
        %v5288 = vrot.slane %v5286, 5
        %v5289 = vshll.u32 %v5223, 16
        %v5291 = vrot.slane %v5289, 6
        %v5292 = vor.u32 %v5288, %v5291
        %v5293 = vsel %vm5265, %v5284, %v5292
        %v5294 = vrot.slane %v5292, 4
        %v5296 = vshrl.u32 %v5224, 16
        %v5298 = vrot.slane %v5296, 5
        %v5299 = vshll.u32 %v5224, 16
        %v5301 = vrot.slane %v5299, 6
        %v5302 = vor.u32 %v5298, %v5301
        %v5303 = vsel %vm5265, %v5294, %v5302
        %v5304 = vrot.slane %v5302, 4
        %v5306 = vshrl.u32 %v5225, 16
        %v5308 = vrot.slane %v5306, 5
        %v5309 = vshll.u32 %v5225, 16
        %v5311 = vrot.slane %v5309, 6
        %v5312 = vor.u32 %v5308, %v5311
        %v5313 = vsel %vm5265, %v5304, %v5312
        %v5314 = vrot.slane %v5312, 4
        %v5316 = vshrl.u32 %v5226, 16
        %v5318 = vrot.slane %v5316, 5
        %v5319 = vshll.u32 %v5226, 16
        %v5321 = vrot.slane %v5319, 6
        %v5322 = vor.u32 %v5318, %v5321
        %v5323 = vsel %vm5265, %v5314, %v5322
        %v5324 = vrot.slane %v5322, 4
        %v5326 = vshrl.u32 %v5227, 16
        %v5328 = vrot.slane %v5326, 5
        %v5329 = vshll.u32 %v5227, 16
        %v5331 = vrot.slane %v5329, 6
        %v5332 = vor.u32 %v5328, %v5331
        %v5333 = vsel %vm5265, %v5324, %v5332
        %v5334 = vrot.slane %v5332, 4
        %v5336 = vshrl.u32 %v5228, 16
        %v5338 = vrot.slane %v5336, 5
        %v5339 = vshll.u32 %v5228, 16
        %v5341 = vrot.slane %v5339, 6
        %v5342 = vor.u32 %v5338, %v5341
        %v5343 = vsel %vm5265, %v5334, %v5342
        %v5344 = vrot.slane %v5342, 4
        %v5346 = vshrl.u32 %v5229, 16
        %v5348 = vrot.slane %v5346, 5
        %v5349 = vshll.u32 %v5229, 16
        %v5351 = vrot.slane %v5349, 6
        %v5352 = vor.u32 %v5348, %v5351
        %v5353 = vsel %vm5265, %v5344, %v5352
        %v5354 = vrot.slane %v5352, 4
        %v5356 = vshrl.u32 %v5230, 16
        %v5358 = vrot.slane %v5356, 5
        %v5359 = vshll.u32 %v5230, 16
        %v5361 = vrot.slane %v5359, 6
        %v5362 = vor.u32 %v5358, %v5361
        %v5363 = vsel %vm5265, %v5354, %v5362
        %v5364 = vrot.slane %v5362, 4
        %v5366 = vshrl.u32 %v5231, 16
        %v5368 = vrot.slane %v5366, 5
        %v5369 = vshll.u32 %v5231, 16
        %v5371 = vrot.slane %v5369, 6
        %v5372 = vor.u32 %v5368, %v5371
        %v5373 = vsel %vm5265, %v5364, %v5372
        %v5374 = vrot.slane %v5372, 4
        %v5376 = vshrl.u32 %v5232, 16
        %v5378 = vrot.slane %v5376, 5
        %v5379 = vshll.u32 %v5232, 16
        %v5381 = vrot.slane %v5379, 6
        %v5382 = vor.u32 %v5378, %v5381
        %v5383 = vsel %vm5265, %v5374, %v5382
        %v5384 = vrot.slane %v5382, 4
        %v5386 = vshrl.u32 %v5233, 16
        %v5388 = vrot.slane %v5386, 5
        %v5389 = vshll.u32 %v5233, 16
        %v5391 = vrot.slane %v5389, 6
        %v5392 = vor.u32 %v5388, %v5391
        %v5393 = vsel %vm5265, %v5384, %v5392
        %v5394 = vrot.slane %v5392, 4
        %v5396 = vshrl.u32 %v5234, 16
        %v5398 = vrot.slane %v5396, 5
        %v5399 = vshll.u32 %v5234, 16
        %v5401 = vrot.slane %v5399, 6
        %v5402 = vor.u32 %v5398, %v5401
        %v5403 = vsel %vm5265, %v5394, %v5402
        %v5404 = vrot.slane %v5402, 4
        %v5406 = vshrl.u32 %v5235, 16
        %v5408 = vrot.slane %v5406, 5
        %v5409 = vshll.u32 %v5235, 16
        %v5411 = vrot.slane %v5409, 6
        %v5412 = vor.u32 %v5408, %v5411
        %v5413 = vsel %vm5265, %v5404, %v5412
        %v5414 = vrot.slane %v5412, 4
        %v5416 = vshrl.u32 %v5236, 16
        %v5418 = vrot.slane %v5416, 5
        %v5419 = vshll.u32 %v5236, 16
        %v5421 = vrot.slane %v5419, 6
        %v5422 = vor.u32 %v5418, %v5421
        %v5423 = vsel %vm5265, %v5414, %v5422
        %v5424 = vrot.slane %v5422, 4
        %v5426 = vshrl.u32 %v5237, 16
        %v5428 = vrot.slane %v5426, 5
        %v5429 = vshll.u32 %v5237, 16
        %v5431 = vrot.slane %v5429, 6
        %v5432 = vor.u32 %v5428, %v5431
        %v5433 = vsel %vm5265, %v5424, %v5432
        %v5434 = vrot.slane %v5432, 4
        %v5436 = vshrl.u32 %v5238, 16
        %v5438 = vrot.slane %v5436, 5
        %v5439 = vshll.u32 %v5238, 16
        %v5441 = vrot.slane %v5439, 6
        %v5442 = vor.u32 %v5438, %v5441
        %v5443 = vsel %vm5265, %v5434, %v5442
        %v5444 = vrot.slane %v5442, 4
        %v5446 = vshrl.u32 %v5239, 16
        %v5448 = vrot.slane %v5446, 5
        %v5449 = vshll.u32 %v5239, 16
        %v5451 = vrot.slane %v5449, 6
        %v5452 = vor.u32 %v5448, %v5451
        %v5453 = vsel %vm5265, %v5444, %v5452
        %v5454 = vrot.slane %v5452, 4
        %v5456 = vshrl.u32 %v5240, 16
        %v5458 = vrot.slane %v5456, 5
        %v5459 = vshll.u32 %v5240, 16
        %v5461 = vrot.slane %v5459, 6
        %v5462 = vor.u32 %v5458, %v5461
        %v5463 = vsel %vm5265, %v5454, %v5462
        %v5464 = vrot.slane %v5462, 4
        %v5466 = vshrl.u32 %v5241, 16
        %v5468 = vrot.slane %v5466, 5
        %v5469 = vshll.u32 %v5241, 16
        %v5471 = vrot.slane %v5469, 6
        %v5472 = vor.u32 %v5468, %v5471
        %v5473 = vsel %vm5265, %v5464, %v5472
        %v5474 = vrot.slane %v5472, 4
        %v5476 = vshrl.u32 %v5242, 16
        %v5478 = vrot.slane %v5476, 5
        %v5479 = vshll.u32 %v5242, 16
        %v5481 = vrot.slane %v5479, 6
        %v5482 = vor.u32 %v5478, %v5481
        %v5483 = vsel %vm5265, %v5474, %v5482
        %v5484 = vrot.slane %v5482, 4
        %v5486 = vshrl.u32 %v5243, 16
        %v5488 = vrot.slane %v5486, 5
        %v5489 = vshll.u32 %v5243, 16
        %v5491 = vrot.slane %v5489, 6
        %v5492 = vor.u32 %v5488, %v5491
        %v5493 = vsel %vm5265, %v5484, %v5492
        %v5494 = vrot.slane %v5492, 4
        %v5496 = vshrl.u32 %v5244, 16
        %v5498 = vrot.slane %v5496, 5
        %v5499 = vshll.u32 %v5244, 16
        %v5501 = vrot.slane %v5499, 6
        %v5502 = vor.u32 %v5498, %v5501
        %v5503 = vsel %vm5265, %v5494, %v5502
        %v5504 = vrot.slane %v5502, 4
        %v5506 = vshrl.u32 %v5245, 16
        %v5508 = vrot.slane %v5506, 5
        %v5509 = vshll.u32 %v5245, 16
        %v5511 = vrot.slane %v5509, 6
        %v5512 = vor.u32 %v5508, %v5511
        %v5513 = vsel %vm5265, %v5504, %v5512
        %v5514 = vrot.slane %v5512, 4
        %v5516 = vshrl.u32 %v5246, 16
        %v5518 = vrot.slane %v5516, 5
        %v5519 = vshll.u32 %v5246, 16
        %v5521 = vrot.slane %v5519, 6
        %v5522 = vor.u32 %v5518, %v5521
        %v5523 = vsel %vm5265, %v5514, %v5522
        %v5524 = vrot.slane %v5522, 4
        %v5526 = vshrl.u32 %v5247, 16
        %v5528 = vrot.slane %v5526, 5
        %v5529 = vshll.u32 %v5247, 16
        %v5531 = vrot.slane %v5529, 6
        %v5532 = vor.u32 %v5528, %v5531
        %v5533 = vsel %vm5265, %v5524, %v5532
        %v5534 = vrot.slane %v5532, 4
        %v5536 = vshrl.u32 %v5248, 16
        %v5538 = vrot.slane %v5536, 5
        %v5539 = vshll.u32 %v5248, 16
        %v5541 = vrot.slane %v5539, 6
        %v5542 = vor.u32 %v5538, %v5541
        %v5543 = vsel %vm5265, %v5534, %v5542
        %v5544 = vrot.slane %v5542, 4
        %v5546 = vshrl.u32 %v5249, 16
        %v5548 = vrot.slane %v5546, 5
        %v5549 = vshll.u32 %v5249, 16
        %v5551 = vrot.slane %v5549, 6
        %v5552 = vor.u32 %v5548, %v5551
        %v5553 = vsel %vm5265, %v5544, %v5552
        %v5554 = vrot.slane %v5552, 4
        %v5556 = vshrl.u32 %v5250, 16
        %v5558 = vrot.slane %v5556, 5
        %v5559 = vshll.u32 %v5250, 16
        %v5561 = vrot.slane %v5559, 6
        %v5562 = vor.u32 %v5558, %v5561
        %v5563 = vsel %vm5265, %v5554, %v5562
        %v5564 = vrot.slane %v5562, 4
        %v5566 = vshrl.u32 %v5251, 16
        %v5568 = vrot.slane %v5566, 5
        %v5569 = vshll.u32 %v5251, 16
        %v5571 = vrot.slane %v5569, 6
        %v5572 = vor.u32 %v5568, %v5571
        %v5573 = vsel %vm5265, %v5564, %v5572
        %v5574 = vrot.slane %v5572, 4
        %v5576 = vshrl.u32 %v5252, 16
        %v5578 = vrot.slane %v5576, 5
        %v5579 = vshll.u32 %v5252, 16
        %v5581 = vrot.slane %v5579, 6
        %v5582 = vor.u32 %v5578, %v5581
        %v5583 = vsel %vm5265, %v5574, %v5582
        %v5584 = vrot.slane %v5582, 4
        %v5586 = vshrl.u32 %v5253, 16
        %v5588 = vrot.slane %v5586, 5
        %v5589 = vshll.u32 %v5253, 16
        %v5591 = vrot.slane %v5589, 6
        %v5592 = vor.u32 %v5588, %v5591
        %v5593 = vsel %vm5265, %v5584, %v5592
        %v5594 = vrot.slane %v5592, 4
        %v5596 = vshrl.u32 %v5254, 16
        %v5598 = vrot.slane %v5596, 5
        %v5599 = vshll.u32 %v5254, 16
        %v5601 = vrot.slane %v5599, 6
        %v5602 = vor.u32 %v5598, %v5601
        %v5603 = vsel %vm5265, %v5594, %v5602
        %v5604 = vrot.slane %v5602, 4
        %v5606 = vshrl.u32 %v5255, 16
        %v5608 = vrot.slane %v5606, 5
        %v5609 = vshll.u32 %v5255, 16
        %v5611 = vrot.slane %v5609, 6
        %v5612 = vor.u32 %v5608, %v5611
        %v5613 = vsel %vm5265, %v5604, %v5612
        %v5614 = vrot.slane %v5612, 4
        %v5616 = vshrl.u32 %v5256, 16
        %v5618 = vrot.slane %v5616, 5
        %v5619 = vshll.u32 %v5256, 16
        %v5621 = vrot.slane %v5619, 6
        %v5622 = vor.u32 %v5618, %v5621
        %v5623 = vsel %vm5265, %v5614, %v5622
        %v5624 = vrot.slane %v5622, 4
        %v5626 = vshrl.u32 %v5257, 16
        %v5628 = vrot.slane %v5626, 5
        %v5629 = vshll.u32 %v5257, 16
        %v5631 = vrot.slane %v5629, 6
        %v5632 = vor.u32 %v5628, %v5631
        %v5633 = vsel %vm5265, %v5624, %v5632
        %v5634 = vrot.slane %v5632, 4
        %v5636 = vshrl.u32 %v5258, 16
        %v5638 = vrot.slane %v5636, 5
        %v5639 = vshll.u32 %v5258, 16
        %v5641 = vrot.slane %v5639, 6
        %v5642 = vor.u32 %v5638, %v5641
        %v5643 = vsel %vm5265, %v5634, %v5642
        %v5644 = vrot.slane %v5642, 4
        %v5646 = vshrl.u32 %v5259, 16
        %v5648 = vrot.slane %v5646, 5
        %v5649 = vshll.u32 %v5259, 16
        %v5651 = vrot.slane %v5649, 6
        %v5652 = vor.u32 %v5648, %v5651
        %v5653 = vsel %vm5265, %v5644, %v5652
        %v5654 = vrot.slane %v5652, 4
        %v5656 = vshrl.u32 %v5260, 16
        %v5658 = vrot.slane %v5656, 5
        %v5659 = vshll.u32 %v5260, 16
        %v5661 = vrot.slane %v5659, 6
        %v5662 = vor.u32 %v5658, %v5661
        %v5663 = vsel %vm5265, %v5654, %v5662
        %v5664 = vrot.slane %v5662, 4
        %v5666 = vshrl.u32 %v5261, 16
        %v5668 = vrot.slane %v5666, 5
        %v5669 = vshll.u32 %v5261, 16
        %v5671 = vrot.slane %v5669, 6
        %v5672 = vor.u32 %v5668, %v5671
        %v5673 = vsel %vm5265, %v5664, %v5672
        %v5674 = vrot.slane %v5672, 4
        %v5676 = vshrl.u32 %v5262, 16
        %v5678 = vrot.slane %v5676, 5
        %v5679 = vshll.u32 %v5262, 16
        %v5681 = vrot.slane %v5679, 6
        %v5682 = vor.u32 %v5678, %v5681
        %v5683 = vsel %vm5265, %v5674, %v5682
        %5725 = vst.msk [vmem:[#allocation3 + $0x4] sm:$0xf] %vm1227, %v5283
        %5726 = vst.msk [vmem:[#allocation3 + $0x10] sm:$0xf] %vm1227, %v5293
        %5727 = vst.msk [vmem:[#allocation3 + $0x1c] sm:$0xf] %vm1227, %v5303
        %5728 = vst.msk [vmem:[#allocation3 + $0x28] sm:$0xf] %vm1227, %v5313
        %5729 = vst.msk [vmem:[#allocation3 + $0x34] sm:$0xf] %vm1227, %v5323
        %5730 = vst.msk [vmem:[#allocation3 + $0x40] sm:$0xf] %vm1227, %v5333
        %5731 = vst.msk [vmem:[#allocation3 + $0x4c] sm:$0xf] %vm1227, %v5343
        %5732 = vst.msk [vmem:[#allocation3 + $0x58] sm:$0xf] %vm1227, %v5353
        %5733 = vst.msk [vmem:[#allocation3 + $0x64] sm:$0xf] %vm1227, %v5363
        %5734 = vst.msk [vmem:[#allocation3 + $0x70] sm:$0xf] %vm1227, %v5373
        %5735 = vst.msk [vmem:[#allocation3 + $0x7c] sm:$0xf] %vm1227, %v5383
        %5736 = vst.msk [vmem:[#allocation3 + $0x88] sm:$0xf] %vm1227, %v5393
        %5737 = vst.msk [vmem:[#allocation3 + $0x94] sm:$0xf] %vm1227, %v5403
        %5738 = vst.msk [vmem:[#allocation3 + $0xa0] sm:$0xf] %vm1227, %v5413
        %5739 = vst.msk [vmem:[#allocation3 + $0xac] sm:$0xf] %vm1227, %v5423
        %5740 = vst.msk [vmem:[#allocation3 + $0xb8] sm:$0xf] %vm1227, %v5433
        %5741 = vst.msk [vmem:[#allocation3 + $0xc4] sm:$0xf] %vm1227, %v5443
        %5742 = vst.msk [vmem:[#allocation3 + $0xd0] sm:$0xf] %vm1227, %v5453
        %5743 = vst.msk [vmem:[#allocation3 + $0xdc] sm:$0xf] %vm1227, %v5463
        %5744 = vst.msk [vmem:[#allocation3 + $0xe8] sm:$0xf] %vm1227, %v5473
        %5745 = vst.msk [vmem:[#allocation3 + $0xf4] sm:$0xf] %vm1227, %v5483
        %5746 = vst.msk [vmem:[#allocation3 + $0x100] sm:$0xf] %vm1227, %v5493
        %5747 = vst.msk [vmem:[#allocation3 + $0x10c] sm:$0xf] %vm1227, %v5503
        %5748 = vst.msk [vmem:[#allocation3 + $0x118] sm:$0xf] %vm1227, %v5513
        %5749 = vst.msk [vmem:[#allocation3 + $0x124] sm:$0xf] %vm1227, %v5523
        %5750 = vst.msk [vmem:[#allocation3 + $0x130] sm:$0xf] %vm1227, %v5533
        %5751 = vst.msk [vmem:[#allocation3 + $0x13c] sm:$0xf] %vm1227, %v5543
        %5752 = vst.msk [vmem:[#allocation3 + $0x148] sm:$0xf] %vm1227, %v5553
        %5753 = vst.msk [vmem:[#allocation3 + $0x154] sm:$0xf] %vm1227, %v5563
        %5754 = vst.msk [vmem:[#allocation3 + $0x160] sm:$0xf] %vm1227, %v5573
        %5755 = vst.msk [vmem:[#allocation3 + $0x16c] sm:$0xf] %vm1227, %v5583
        %5756 = vst.msk [vmem:[#allocation3 + $0x178] sm:$0xf] %vm1227, %v5593
        %5757 = vst.msk [vmem:[#allocation3 + $0x184] sm:$0xf] %vm1227, %v5603
        %5758 = vst.msk [vmem:[#allocation3 + $0x190] sm:$0xf] %vm1227, %v5613
        %5759 = vst.msk [vmem:[#allocation3 + $0x19c] sm:$0xf] %vm1227, %v5623
        %5760 = vst.msk [vmem:[#allocation3 + $0x1a8] sm:$0xf] %vm1227, %v5633
        %5761 = vst.msk [vmem:[#allocation3 + $0x1b4] sm:$0xf] %vm1227, %v5643
        %5762 = vst.msk [vmem:[#allocation3 + $0x1c0] sm:$0xf] %vm1227, %v5653
        %5763 = vst.msk [vmem:[#allocation3 + $0x1cc] sm:$0xf] %vm1227, %v5663
        %5764 = vst.msk [vmem:[#allocation3 + $0x1d8] sm:$0xf] %vm1227, %v5673
        %5765 = vst.msk [vmem:[#allocation3 + $0x1e4] sm:$0xf] %vm1227, %v5683
        %v5766 = vld [vmem:[#allocation3] sm:$0xff]
        %v5767 = vld [vmem:[#allocation3 + $0xc] sm:$0xff]
        %v5768 = vld [vmem:[#allocation3 + $0x18] sm:$0xff]
        %v5769 = vld [vmem:[#allocation3 + $0x24] sm:$0xff]
        %v5770 = vld [vmem:[#allocation3 + $0x30] sm:$0xff]
        %v5771 = vld [vmem:[#allocation3 + $0x3c] sm:$0xff]
        %v5772 = vld [vmem:[#allocation3 + $0x48] sm:$0xff]
        %v5773 = vld [vmem:[#allocation3 + $0x54] sm:$0xff]
        %v5774 = vld [vmem:[#allocation3 + $0x60] sm:$0xff]
        %v5775 = vld [vmem:[#allocation3 + $0x6c] sm:$0xff]
        %v5776 = vld [vmem:[#allocation3 + $0x78] sm:$0xff]
        %v5777 = vld [vmem:[#allocation3 + $0x84] sm:$0xff]
        %v5778 = vld [vmem:[#allocation3 + $0x90] sm:$0xff]
        %v5779 = vld [vmem:[#allocation3 + $0x9c] sm:$0xff]
        %v5780 = vld [vmem:[#allocation3 + $0xa8] sm:$0xff]
        %v5781 = vld [vmem:[#allocation3 + $0xb4] sm:$0xff]
        %v5782 = vld [vmem:[#allocation3 + $0xc0] sm:$0xff]
        %v5783 = vld [vmem:[#allocation3 + $0xcc] sm:$0xff]
        %v5784 = vld [vmem:[#allocation3 + $0xd8] sm:$0xff]
        %v5785 = vld [vmem:[#allocation3 + $0xe4] sm:$0xff]
        %v5786 = vld [vmem:[#allocation3 + $0xf0] sm:$0xff]
        %v5787 = vld [vmem:[#allocation3 + $0xfc] sm:$0xff]
        %v5788 = vld [vmem:[#allocation3 + $0x108] sm:$0xff]
        %v5789 = vld [vmem:[#allocation3 + $0x114] sm:$0xff]
        %v5790 = vld [vmem:[#allocation3 + $0x120] sm:$0xff]
        %v5791 = vld [vmem:[#allocation3 + $0x12c] sm:$0xff]
        %v5792 = vld [vmem:[#allocation3 + $0x138] sm:$0xff]
        %v5793 = vld [vmem:[#allocation3 + $0x144] sm:$0xff]
        %v5794 = vld [vmem:[#allocation3 + $0x150] sm:$0xff]
        %v5795 = vld [vmem:[#allocation3 + $0x15c] sm:$0xff]
        %v5796 = vld [vmem:[#allocation3 + $0x168] sm:$0xff]
        %v5797 = vld [vmem:[#allocation3 + $0x174] sm:$0xff]
        %v5798 = vld [vmem:[#allocation3 + $0x180] sm:$0xff]
        %v5799 = vld [vmem:[#allocation3 + $0x18c] sm:$0xff]
        %v5800 = vld [vmem:[#allocation3 + $0x198] sm:$0xff]
        %v5801 = vld [vmem:[#allocation3 + $0x1a4] sm:$0xff]
        %v5802 = vld [vmem:[#allocation3 + $0x1b0] sm:$0xff]
        %v5803 = vld [vmem:[#allocation3 + $0x1bc] sm:$0xff]
        %v5804 = vld [vmem:[#allocation3 + $0x1c8] sm:$0xff]
        %v5805 = vld [vmem:[#allocation3 + $0x1d4] sm:$0xff]
        %v5806 = vld [vmem:[#allocation3 + $0x1e0] sm:$0xff]
        %v5807 = vld [vmem:[%s4] sm:$0xf]
        %v5808 = vld [vmem:[%s4 + $0x4] sm:$0xf]
        %v5809 = vld [vmem:[%s4 + $0x8] sm:$0xf]
        %v5810 = vld [vmem:[%s4 + $0xc] sm:$0xf]
        %v5811 = vld [vmem:[%s4 + $0x10] sm:$0xf]
        %v5812 = vld [vmem:[%s4 + $0x14] sm:$0xf]
        %v5813 = vld [vmem:[%s4 + $0x18] sm:$0xf]
        %v5814 = vld [vmem:[%s4 + $0x1c] sm:$0xf]
        %v5815 = vld [vmem:[%s4 + $0x20] sm:$0xf]
        %v5816 = vld [vmem:[%s4 + $0x24] sm:$0xf]
        %v5817 = vld [vmem:[%s4 + $0x28] sm:$0xf]
        %v5818 = vld [vmem:[%s4 + $0x2c] sm:$0xf]
        %v5819 = vld [vmem:[%s4 + $0x30] sm:$0xf]
        %v5820 = vld [vmem:[%s4 + $0x34] sm:$0xf]
        %v5821 = vld [vmem:[%s4 + $0x38] sm:$0xf]
        %v5822 = vld [vmem:[%s4 + $0x3c] sm:$0xf]
        %v5823 = vld [vmem:[%s4 + $0x40] sm:$0xf]
        %v5824 = vld [vmem:[%s4 + $0x44] sm:$0xf]
        %v5825 = vld [vmem:[%s5] sm:$0x1]
        %v5827 = vperm.slane %v5825, 0
        %v5870 = vunpack.c.l.b16 %v5766
        %v5871 = vunpack.c.h.b16 %v5766
        %v5872 = vunpack.c.l.b16 %v5767
        %v5873 = vunpack.c.h.b16 %v5767
        %v5874 = vunpack.c.l.b16 %v5768
        %v5875 = vunpack.c.h.b16 %v5768
        %v5876 = vunpack.c.l.b16 %v5769
        %v5877 = vunpack.c.h.b16 %v5769
        %v5878 = vunpack.c.l.b16 %v5770
        %v5879 = vunpack.c.h.b16 %v5770
        %v5880 = vunpack.c.l.b16 %v5771
        %v5881 = vunpack.c.h.b16 %v5771
        %v5882 = vunpack.c.l.b16 %v5772
        %v5883 = vunpack.c.h.b16 %v5772
        %v5884 = vunpack.c.l.b16 %v5773
        %v5885 = vunpack.c.h.b16 %v5773
        %v5886 = vunpack.c.l.b16 %v5774
        %v5887 = vunpack.c.h.b16 %v5774
        %v5888 = vunpack.c.l.b16 %v5775
        %v5889 = vunpack.c.h.b16 %v5775
        %v5890 = vunpack.c.l.b16 %v5776
        %v5891 = vunpack.c.h.b16 %v5776
        %v5892 = vunpack.c.l.b16 %v5777
        %v5893 = vunpack.c.h.b16 %v5777
        %v5894 = vunpack.c.l.b16 %v5778
        %v5895 = vunpack.c.h.b16 %v5778
        %v5896 = vunpack.c.l.b16 %v5779
        %v5897 = vunpack.c.h.b16 %v5779
        %v5898 = vunpack.c.l.b16 %v5780
        %v5899 = vunpack.c.h.b16 %v5780
        %v5900 = vunpack.c.l.b16 %v5781
        %v5901 = vunpack.c.h.b16 %v5781
        %v5902 = vunpack.c.l.b16 %v5782
        %v5903 = vunpack.c.h.b16 %v5782
        %v5904 = vunpack.c.l.b16 %v5783
        %v5905 = vunpack.c.h.b16 %v5783
        %v5906 = vunpack.c.l.b16 %v5784
        %v5907 = vunpack.c.h.b16 %v5784
        %v5908 = vunpack.c.l.b16 %v5785
        %v5909 = vunpack.c.h.b16 %v5785
        %v5910 = vunpack.c.l.b16 %v5786
        %v5911 = vunpack.c.h.b16 %v5786
        %v5912 = vunpack.c.l.b16 %v5787
        %v5913 = vunpack.c.h.b16 %v5787
        %v5914 = vunpack.c.l.b16 %v5788
        %v5915 = vunpack.c.h.b16 %v5788
        %v5916 = vunpack.c.l.b16 %v5789
        %v5917 = vunpack.c.h.b16 %v5789
        %v5918 = vunpack.c.l.b16 %v5790
        %v5919 = vunpack.c.h.b16 %v5790
        %v5920 = vunpack.c.l.b16 %v5791
        %v5921 = vunpack.c.h.b16 %v5791
        %v5922 = vunpack.c.l.b16 %v5792
        %v5923 = vunpack.c.h.b16 %v5792
        %v5924 = vunpack.c.l.b16 %v5793
        %v5925 = vunpack.c.h.b16 %v5793
        %v5926 = vunpack.c.l.b16 %v5794
        %v5927 = vunpack.c.h.b16 %v5794
        %v5928 = vunpack.c.l.b16 %v5795
        %v5929 = vunpack.c.h.b16 %v5795
        %v5930 = vunpack.c.l.b16 %v5796
        %v5931 = vunpack.c.h.b16 %v5796
        %v5932 = vunpack.c.l.b16 %v5797
        %v5933 = vunpack.c.h.b16 %v5797
        %v5934 = vunpack.c.l.b16 %v5798
        %v5935 = vunpack.c.h.b16 %v5798
        %v5936 = vunpack.c.l.b16 %v5799
        %v5937 = vunpack.c.h.b16 %v5799
        %v5938 = vunpack.c.l.b16 %v5800
        %v5939 = vunpack.c.h.b16 %v5800
        %v5940 = vunpack.c.l.b16 %v5801
        %v5941 = vunpack.c.h.b16 %v5801
        %v5942 = vunpack.c.l.b16 %v5802
        %v5943 = vunpack.c.h.b16 %v5802
        %v5944 = vunpack.c.l.b16 %v5803
        %v5945 = vunpack.c.h.b16 %v5803
        %v5946 = vunpack.c.l.b16 %v5804
        %v5947 = vunpack.c.h.b16 %v5804
        %v5948 = vunpack.c.l.b16 %v5805
        %v5949 = vunpack.c.h.b16 %v5805
        %v5950 = vunpack.c.l.b16 %v5806
        %v5951 = vunpack.c.h.b16 %v5806
        %v5952 = vpack.c.b16 %v5872, %v5870
        %v5953 = vpack.c.b16 %v5873, %v5871
        %v5954 = vpack.c.b16 %v5876, %v5874
        %v5955 = vpack.c.b16 %v5877, %v5875
        %v5956 = vpack.c.b16 %v5880, %v5878
        %v5957 = vpack.c.b16 %v5881, %v5879
        %v5958 = vpack.c.b16 %v5884, %v5882
        %v5959 = vpack.c.b16 %v5885, %v5883
        %v5960 = vpack.c.b16 %v5888, %v5886
        %v5961 = vpack.c.b16 %v5889, %v5887
        %v5962 = vpack.c.b16 %v5892, %v5890
        %v5963 = vpack.c.b16 %v5893, %v5891
        %v5964 = vpack.c.b16 %v5896, %v5894
        %v5965 = vpack.c.b16 %v5897, %v5895
        %v5966 = vpack.c.b16 %v5900, %v5898
        %v5967 = vpack.c.b16 %v5901, %v5899
        %v5968 = vpack.c.b16 %v5904, %v5902
        %v5969 = vpack.c.b16 %v5905, %v5903
        %v5970 = vpack.c.b16 %v5908, %v5906
        %v5971 = vpack.c.b16 %v5909, %v5907
        %v5972 = vpack.c.b16 %v5912, %v5910
        %v5973 = vpack.c.b16 %v5913, %v5911
        %v5974 = vpack.c.b16 %v5916, %v5914
        %v5975 = vpack.c.b16 %v5917, %v5915
        %v5976 = vpack.c.b16 %v5920, %v5918
        %v5977 = vpack.c.b16 %v5921, %v5919
        %v5978 = vpack.c.b16 %v5924, %v5922
        %v5979 = vpack.c.b16 %v5925, %v5923
        %v5980 = vpack.c.b16 %v5928, %v5926
        %v5981 = vpack.c.b16 %v5929, %v5927
        %v5982 = vpack.c.b16 %v5932, %v5930
        %v5983 = vpack.c.b16 %v5933, %v5931
        %v5984 = vpack.c.b16 %v5936, %v5934
        %v5985 = vpack.c.b16 %v5937, %v5935
        %v5986 = vpack.c.b16 %v5940, %v5938
        %v5987 = vpack.c.b16 %v5941, %v5939
        %v5988 = vpack.c.b16 %v5944, %v5942
        %v5989 = vpack.c.b16 %v5945, %v5943
        %v5990 = vpack.c.b16 %v5948, %v5946
        %v5991 = vpack.c.b16 %v5949, %v5947
        %v5992 = vpack.c.b16 %v5950, %v5950
        %v5993 = vpack.c.b16 %v5951, %v5951
        %v6033 = vunpack.c.l.b16 %v5807
        %v6034 = vunpack.c.l.b16 %v5808
        %v6035 = vunpack.c.l.b16 %v5809
        %v6036 = vunpack.c.l.b16 %v5810
        %v6037 = vunpack.c.l.b16 %v5811
        %v6038 = vunpack.c.l.b16 %v5812
        %v6039 = vunpack.c.l.b16 %v5813
        %v6040 = vunpack.c.l.b16 %v5814
        %v6041 = vunpack.c.l.b16 %v5815
        %v6042 = vunpack.c.l.b16 %v5816
        %v6043 = vunpack.c.l.b16 %v5817
        %v6044 = vunpack.c.l.b16 %v5818
        %v6045 = vunpack.c.l.b16 %v5819
        %v6046 = vunpack.c.l.b16 %v5820
        %v6047 = vunpack.c.l.b16 %v5821
        %v6048 = vunpack.c.l.b16 %v5822
        %v6049 = vunpack.c.l.b16 %v5823
        %v6050 = vunpack.c.l.b16 %v5824
        %v6051 = vpack.c.b16 %v6034, %v6033
        %v6052 = vpack.c.b16 %v6036, %v6035
        %v6053 = vpack.c.b16 %v6038, %v6037
        %v6054 = vpack.c.b16 %v6040, %v6039
        %v6055 = vpack.c.b16 %v6042, %v6041
        %v6056 = vpack.c.b16 %v6044, %v6043
        %v6057 = vpack.c.b16 %v6046, %v6045
        %v6058 = vpack.c.b16 %v6048, %v6047
        %v6059 = vpack.c.b16 %v6050, %v6049
        %vm6069 = vcmask 130048
        %v6071 = vsel %vm6069, %v5953, 0
        %v6074 = vsel %vm6069, %v5955, 0
        %v6077 = vsel %vm6069, %v5957, 0
        %v6080 = vsel %vm6069, %v5959, 0
        %v6083 = vsel %vm6069, %v5961, 0
        %v6086 = vsel %vm6069, %v5963, 0
        %v6089 = vsel %vm6069, %v5965, 0
        %v6092 = vsel %vm6069, %v5967, 0
        %v6095 = vsel %vm6069, %v5969, 0
        %v6098 = vsel %vm6069, %v5971, 0
        %v6101 = vsel %vm6069, %v5973, 0
        %v6104 = vsel %vm6069, %v5975, 0
        %v6107 = vsel %vm6069, %v5977, 0
        %v6110 = vsel %vm6069, %v5979, 0
        %v6113 = vsel %vm6069, %v5981, 0
        %v6116 = vsel %vm6069, %v5983, 0
        %v6119 = vsel %vm6069, %v5985, 0
        %v6122 = vsel %vm6069, %v5987, 0
        %v6125 = vsel %vm6069, %v5989, 0
        %v6128 = vsel %vm6069, %v5991, 0
        %v6131 = vsel %vm6069, %v5993, 0
        %6133 = vmatpush.bf16.msra.mxu0 %v6058
        %6134 = vmatpush.bf16.msra.mxu0 %v6057
        %6135 = vmatpush.bf16.msra.mxu0 %v6056
        %6136 = vmatpush.bf16.msra.mxu0 %v6055
        %6137 = vmatpush.bf16.msra.mxu0 %v6054
        %6138 = vmatpush.bf16.msra.mxu0 %v6053
        %6139 = vmatpush.bf16.msra.mxu0 %v6052
        %6140 = vmatpush.bf16.msra.mxu0 %v6051
        %6141 = vmatmul.bf16.gmra.mxu0 %v5952
        %v6142 = vpop.f32.mrf.mxu0
        %v6143 = vadd.f32 %v5827, %v6142
        %v6144 = vpop.f32.mrf.mxu0
        %v6145 = vadd.f32 %v5827, %v6144
        %6146 = vmatmul.bf16.gmra.mxu0 %v5954
        %v6147 = vpop.f32.mrf.mxu0
        %v6148 = vadd.f32 %v5827, %v6147
        %v6149 = vpop.f32.mrf.mxu0
        %v6150 = vadd.f32 %v5827, %v6149
        %6151 = vmatmul.bf16.gmra.mxu0 %v5956
        %v6152 = vpop.f32.mrf.mxu0
        %v6153 = vadd.f32 %v5827, %v6152
        %v6154 = vpop.f32.mrf.mxu0
        %v6155 = vadd.f32 %v5827, %v6154
        %6156 = vmatmul.bf16.gmra.mxu0 %v5958
        %v6157 = vpop.f32.mrf.mxu0
        %v6158 = vadd.f32 %v5827, %v6157
        %v6159 = vpop.f32.mrf.mxu0
        %v6160 = vadd.f32 %v5827, %v6159
        %6161 = vmatmul.bf16.gmra.mxu0 %v5960
        %v6162 = vpop.f32.mrf.mxu0
        %v6163 = vadd.f32 %v5827, %v6162
        %v6164 = vpop.f32.mrf.mxu0
        %v6165 = vadd.f32 %v5827, %v6164
        %6166 = vmatmul.bf16.gmra.mxu0 %v5962
        %v6167 = vpop.f32.mrf.mxu0
        %v6168 = vadd.f32 %v5827, %v6167
        %v6169 = vpop.f32.mrf.mxu0
        %v6170 = vadd.f32 %v5827, %v6169
        %6171 = vmatmul.bf16.gmra.mxu0 %v5964
        %v6172 = vpop.f32.mrf.mxu0
        %v6173 = vadd.f32 %v5827, %v6172
        %v6174 = vpop.f32.mrf.mxu0
        %v6175 = vadd.f32 %v5827, %v6174
        %6176 = vmatmul.bf16.gmra.mxu0 %v5966
        %v6177 = vpop.f32.mrf.mxu0
        %v6178 = vadd.f32 %v5827, %v6177
        %v6179 = vpop.f32.mrf.mxu0
        %v6180 = vadd.f32 %v5827, %v6179
        %6181 = vmatmul.bf16.gmra.mxu0 %v5968
        %v6182 = vpop.f32.mrf.mxu0
        %v6183 = vadd.f32 %v5827, %v6182
        %v6184 = vpop.f32.mrf.mxu0
        %v6185 = vadd.f32 %v5827, %v6184
        %6186 = vmatmul.bf16.gmra.mxu0 %v5970
        %v6187 = vpop.f32.mrf.mxu0
        %v6188 = vadd.f32 %v5827, %v6187
        %v6189 = vpop.f32.mrf.mxu0
        %v6190 = vadd.f32 %v5827, %v6189
        %6191 = vmatmul.bf16.gmra.mxu0 %v5972
        %v6192 = vpop.f32.mrf.mxu0
        %v6193 = vadd.f32 %v5827, %v6192
        %v6194 = vpop.f32.mrf.mxu0
        %v6195 = vadd.f32 %v5827, %v6194
        %6196 = vmatmul.bf16.gmra.mxu0 %v5974
        %v6197 = vpop.f32.mrf.mxu0
        %v6198 = vadd.f32 %v5827, %v6197
        %v6199 = vpop.f32.mrf.mxu0
        %v6200 = vadd.f32 %v5827, %v6199
        %6201 = vmatmul.bf16.gmra.mxu0 %v5976
        %v6202 = vpop.f32.mrf.mxu0
        %v6203 = vadd.f32 %v5827, %v6202
        %v6204 = vpop.f32.mrf.mxu0
        %v6205 = vadd.f32 %v5827, %v6204
        %6206 = vmatmul.bf16.gmra.mxu0 %v5978
        %v6207 = vpop.f32.mrf.mxu0
        %v6208 = vadd.f32 %v5827, %v6207
        %v6209 = vpop.f32.mrf.mxu0
        %v6210 = vadd.f32 %v5827, %v6209
        %6211 = vmatmul.bf16.gmra.mxu0 %v5980
        %v6212 = vpop.f32.mrf.mxu0
        %v6213 = vadd.f32 %v5827, %v6212
        %v6214 = vpop.f32.mrf.mxu0
        %v6215 = vadd.f32 %v5827, %v6214
        %6216 = vmatmul.bf16.gmra.mxu0 %v5982
        %v6217 = vpop.f32.mrf.mxu0
        %v6218 = vadd.f32 %v5827, %v6217
        %v6219 = vpop.f32.mrf.mxu0
        %v6220 = vadd.f32 %v5827, %v6219
        %6221 = vmatmul.bf16.gmra.mxu0 %v5984
        %v6222 = vpop.f32.mrf.mxu0
        %v6223 = vadd.f32 %v5827, %v6222
        %v6224 = vpop.f32.mrf.mxu0
        %v6225 = vadd.f32 %v5827, %v6224
        %6226 = vmatmul.bf16.gmra.mxu0 %v5986
        %v6227 = vpop.f32.mrf.mxu0
        %v6228 = vadd.f32 %v5827, %v6227
        %v6229 = vpop.f32.mrf.mxu0
        %v6230 = vadd.f32 %v5827, %v6229
        %6231 = vmatmul.bf16.gmra.mxu0 %v5988
        %v6232 = vpop.f32.mrf.mxu0
        %v6233 = vadd.f32 %v5827, %v6232
        %v6234 = vpop.f32.mrf.mxu0
        %v6235 = vadd.f32 %v5827, %v6234
        %6236 = vmatmul.bf16.gmra.mxu0 %v5990
        %v6237 = vpop.f32.mrf.mxu0
        %v6238 = vadd.f32 %v5827, %v6237
        %v6239 = vpop.f32.mrf.mxu0
        %v6240 = vadd.f32 %v5827, %v6239
        %6241 = vmatmul.bf16.gmra.mxu0 %v5992
        %v6242 = vpop.f32.mrf.mxu0
        %v6243 = vadd.f32 %v5827, %v6242
        %v6244 = vpop.f32.mrf.mxu0
        %6245 = vdwg.mxu0
        %6246 = vmatpush.bf16.msra.mxu0 0
        %6247 = vmatpush.bf16.msra.mxu0 0
        %6248 = vmatpush.bf16.msra.mxu0 0
        %6249 = vmatpush.bf16.msra.mxu0 0
        %6250 = vmatpush.bf16.msra.mxu0 0
        %6251 = vmatpush.bf16.msra.mxu0 0
        %6252 = vmatpush.bf16.msra.mxu0 0
        %6253 = vmatpush.bf16.msra.mxu0 %v6059
        %6254 = vmatmul.bf16.gmra.mxu0 %v6071
        %v6255 = vpop.f32.mrf.mxu0
        %v6256 = vadd.f32 %v6143, %v6255
        %v6257 = vpop.f32.mrf.mxu0
        %v6258 = vadd.f32 %v6145, %v6257
        %6259 = vmatmul.bf16.gmra.mxu0 %v6074
        %v6260 = vpop.f32.mrf.mxu0
        %v6261 = vadd.f32 %v6148, %v6260
        %v6262 = vpop.f32.mrf.mxu0
        %v6263 = vadd.f32 %v6150, %v6262
        %6264 = vmatmul.bf16.gmra.mxu0 %v6077
        %v6265 = vpop.f32.mrf.mxu0
        %v6266 = vadd.f32 %v6153, %v6265
        %v6267 = vpop.f32.mrf.mxu0
        %v6268 = vadd.f32 %v6155, %v6267
        %6269 = vmatmul.bf16.gmra.mxu0 %v6080
        %v6270 = vpop.f32.mrf.mxu0
        %v6271 = vadd.f32 %v6158, %v6270
        %v6272 = vpop.f32.mrf.mxu0
        %v6273 = vadd.f32 %v6160, %v6272
        %6274 = vmatmul.bf16.gmra.mxu0 %v6083
        %v6275 = vpop.f32.mrf.mxu0
        %v6276 = vadd.f32 %v6163, %v6275
        %v6277 = vpop.f32.mrf.mxu0
        %v6278 = vadd.f32 %v6165, %v6277
        %6279 = vmatmul.bf16.gmra.mxu0 %v6086
        %v6280 = vpop.f32.mrf.mxu0
        %v6281 = vadd.f32 %v6168, %v6280
        %v6282 = vpop.f32.mrf.mxu0
        %v6283 = vadd.f32 %v6170, %v6282
        %6284 = vmatmul.bf16.gmra.mxu0 %v6089
        %v6285 = vpop.f32.mrf.mxu0
        %v6286 = vadd.f32 %v6173, %v6285
        %v6287 = vpop.f32.mrf.mxu0
        %v6288 = vadd.f32 %v6175, %v6287
        %6289 = vmatmul.bf16.gmra.mxu0 %v6092
        %v6290 = vpop.f32.mrf.mxu0
        %v6291 = vadd.f32 %v6178, %v6290
        %v6292 = vpop.f32.mrf.mxu0
        %v6293 = vadd.f32 %v6180, %v6292
        %6294 = vmatmul.bf16.gmra.mxu0 %v6095
        %v6295 = vpop.f32.mrf.mxu0
        %v6296 = vadd.f32 %v6183, %v6295
        %v6297 = vpop.f32.mrf.mxu0
        %v6298 = vadd.f32 %v6185, %v6297
        %6299 = vmatmul.bf16.gmra.mxu0 %v6098
        %v6300 = vpop.f32.mrf.mxu0
        %v6301 = vadd.f32 %v6188, %v6300
        %v6302 = vpop.f32.mrf.mxu0
        %v6303 = vadd.f32 %v6190, %v6302
        %6304 = vmatmul.bf16.gmra.mxu0 %v6101
        %v6305 = vpop.f32.mrf.mxu0
        %v6306 = vadd.f32 %v6193, %v6305
        %v6307 = vpop.f32.mrf.mxu0
        %v6308 = vadd.f32 %v6195, %v6307
        %6309 = vmatmul.bf16.gmra.mxu0 %v6104
        %v6310 = vpop.f32.mrf.mxu0
        %v6311 = vadd.f32 %v6198, %v6310
        %v6312 = vpop.f32.mrf.mxu0
        %v6313 = vadd.f32 %v6200, %v6312
        %6314 = vmatmul.bf16.gmra.mxu0 %v6107
        %v6315 = vpop.f32.mrf.mxu0
        %v6316 = vadd.f32 %v6203, %v6315
        %v6317 = vpop.f32.mrf.mxu0
        %v6318 = vadd.f32 %v6205, %v6317
        %6319 = vmatmul.bf16.gmra.mxu0 %v6110
        %v6320 = vpop.f32.mrf.mxu0
        %v6321 = vadd.f32 %v6208, %v6320
        %v6322 = vpop.f32.mrf.mxu0
        %v6323 = vadd.f32 %v6210, %v6322
        %6324 = vmatmul.bf16.gmra.mxu0 %v6113
        %v6325 = vpop.f32.mrf.mxu0
        %v6326 = vadd.f32 %v6213, %v6325
        %v6327 = vpop.f32.mrf.mxu0
        %v6328 = vadd.f32 %v6215, %v6327
        %6329 = vmatmul.bf16.gmra.mxu0 %v6116
        %v6330 = vpop.f32.mrf.mxu0
        %v6331 = vadd.f32 %v6218, %v6330
        %v6332 = vpop.f32.mrf.mxu0
        %v6333 = vadd.f32 %v6220, %v6332
        %6334 = vmatmul.bf16.gmra.mxu0 %v6119
        %v6335 = vpop.f32.mrf.mxu0
        %v6336 = vadd.f32 %v6223, %v6335
        %v6337 = vpop.f32.mrf.mxu0
        %v6338 = vadd.f32 %v6225, %v6337
        %6339 = vmatmul.bf16.gmra.mxu0 %v6122
        %v6340 = vpop.f32.mrf.mxu0
        %v6341 = vadd.f32 %v6228, %v6340
        %v6342 = vpop.f32.mrf.mxu0
        %v6343 = vadd.f32 %v6230, %v6342
        %6344 = vmatmul.bf16.gmra.mxu0 %v6125
        %v6345 = vpop.f32.mrf.mxu0
        %v6346 = vadd.f32 %v6233, %v6345
        %v6347 = vpop.f32.mrf.mxu0
        %v6348 = vadd.f32 %v6235, %v6347
        %6349 = vmatmul.bf16.gmra.mxu0 %v6128
        %v6350 = vpop.f32.mrf.mxu0
        %v6351 = vadd.f32 %v6238, %v6350
        %v6352 = vpop.f32.mrf.mxu0
        %v6353 = vadd.f32 %v6240, %v6352
        %6354 = vmatmul.bf16.gmra.mxu0 %v6131
        %v6355 = vpop.f32.mrf.mxu0
        %v6356 = vadd.f32 %v6243, %v6355
        %v6357 = vpop.f32.mrf.mxu0
        %6358 = vdwg.mxu0
        %v6359 = vmax.f32 %v6256, 0.0
        %v6360 = vmax.f32 %v6258, 0.0
        %v6361 = vmax.f32 %v6261, 0.0
        %v6362 = vmax.f32 %v6263, 0.0
        %v6363 = vmax.f32 %v6266, 0.0
        %v6364 = vmax.f32 %v6268, 0.0
        %v6365 = vmax.f32 %v6271, 0.0
        %v6366 = vmax.f32 %v6273, 0.0
        %v6367 = vmax.f32 %v6276, 0.0
        %v6368 = vmax.f32 %v6278, 0.0
        %v6369 = vmax.f32 %v6281, 0.0
        %v6370 = vmax.f32 %v6283, 0.0
        %v6371 = vmax.f32 %v6286, 0.0
        %v6372 = vmax.f32 %v6288, 0.0
        %v6373 = vmax.f32 %v6291, 0.0
        %v6374 = vmax.f32 %v6293, 0.0
        %v6375 = vmax.f32 %v6296, 0.0
        %v6376 = vmax.f32 %v6298, 0.0
        %v6377 = vmax.f32 %v6301, 0.0
        %v6378 = vmax.f32 %v6303, 0.0
        %v6379 = vmax.f32 %v6306, 0.0
        %v6380 = vmax.f32 %v6308, 0.0
        %v6381 = vmax.f32 %v6311, 0.0
        %v6382 = vmax.f32 %v6313, 0.0
        %v6383 = vmax.f32 %v6316, 0.0
        %v6384 = vmax.f32 %v6318, 0.0
        %v6385 = vmax.f32 %v6321, 0.0
        %v6386 = vmax.f32 %v6323, 0.0
        %v6387 = vmax.f32 %v6326, 0.0
        %v6388 = vmax.f32 %v6328, 0.0
        %v6389 = vmax.f32 %v6331, 0.0
        %v6390 = vmax.f32 %v6333, 0.0
        %v6391 = vmax.f32 %v6336, 0.0
        %v6392 = vmax.f32 %v6338, 0.0
        %v6393 = vmax.f32 %v6341, 0.0
        %v6394 = vmax.f32 %v6343, 0.0
        %v6395 = vmax.f32 %v6346, 0.0
        %v6396 = vmax.f32 %v6348, 0.0
        %v6397 = vmax.f32 %v6351, 0.0
        %v6398 = vmax.f32 %v6353, 0.0
        %v6399 = vmax.f32 %v6356, 0.0
        %v6400 = vsel %vm1104, %v6359, 0.0
        %v6401 = vsel %vm1105, %v6360, 0.0
        %v6402 = vsel %vm1106, %v6361, 0.0
        %v6403 = vsel %vm1107, %v6362, 0.0
        %v6404 = vsel %vm1108, %v6363, 0.0
        %v6405 = vsel %vm1109, %v6364, 0.0
        %v6406 = vsel %vm1110, %v6365, 0.0
        %v6407 = vsel %vm1111, %v6366, 0.0
        %v6408 = vsel %vm1112, %v6367, 0.0
        %v6409 = vsel %vm1113, %v6368, 0.0
        %v6410 = vsel %vm1114, %v6369, 0.0
        %v6411 = vsel %vm1115, %v6370, 0.0
        %v6412 = vsel %vm1116, %v6371, 0.0
        %v6413 = vsel %vm1117, %v6372, 0.0
        %v6414 = vsel %vm1118, %v6373, 0.0
        %v6415 = vsel %vm1119, %v6374, 0.0
        %v6416 = vsel %vm1120, %v6375, 0.0
        %v6417 = vsel %vm1121, %v6376, 0.0
        %v6418 = vsel %vm1122, %v6377, 0.0
        %v6419 = vsel %vm1123, %v6378, 0.0
        %v6420 = vsel %vm1124, %v6379, 0.0
        %v6421 = vsel %vm1125, %v6380, 0.0
        %v6422 = vsel %vm1126, %v6381, 0.0
        %v6423 = vsel %vm1127, %v6382, 0.0
        %v6424 = vsel %vm1128, %v6383, 0.0
        %v6425 = vsel %vm1129, %v6384, 0.0
        %v6426 = vsel %vm1130, %v6385, 0.0
        %v6427 = vsel %vm1131, %v6386, 0.0
        %v6428 = vsel %vm1132, %v6387, 0.0
        %v6429 = vsel %vm1133, %v6388, 0.0
        %v6430 = vsel %vm1134, %v6389, 0.0
        %v6431 = vsel %vm1135, %v6390, 0.0
        %v6432 = vsel %vm1136, %v6391, 0.0
        %v6433 = vsel %vm1137, %v6392, 0.0
        %v6434 = vsel %vm1138, %v6393, 0.0
        %v6435 = vsel %vm1139, %v6394, 0.0
        %v6436 = vsel %vm1140, %v6395, 0.0
        %v6437 = vsel %vm1141, %v6396, 0.0
        %v6438 = vsel %vm1142, %v6397, 0.0
        %v6439 = vsel %vm1143, %v6398, 0.0
        %v6440 = vsel %vm1144, %v6399, 0.0
        %v6441 = vpack.c.bf16 %v6400, %v6400
        %v6442 = vpack.c.bf16 %v6401, %v6401
        %v6443 = vpack.c.bf16 %v6402, %v6402
        %v6444 = vpack.c.bf16 %v6403, %v6403
        %v6445 = vpack.c.bf16 %v6404, %v6404
        %v6446 = vpack.c.bf16 %v6405, %v6405
        %v6447 = vpack.c.bf16 %v6406, %v6406
        %v6448 = vpack.c.bf16 %v6407, %v6407
        %v6449 = vpack.c.bf16 %v6408, %v6408
        %v6450 = vpack.c.bf16 %v6409, %v6409
        %v6451 = vpack.c.bf16 %v6410, %v6410
        %v6452 = vpack.c.bf16 %v6411, %v6411
        %v6453 = vpack.c.bf16 %v6412, %v6412
        %v6454 = vpack.c.bf16 %v6413, %v6413
        %v6455 = vpack.c.bf16 %v6414, %v6414
        %v6456 = vpack.c.bf16 %v6415, %v6415
        %v6457 = vpack.c.bf16 %v6416, %v6416
        %v6458 = vpack.c.bf16 %v6417, %v6417
        %v6459 = vpack.c.bf16 %v6418, %v6418
        %v6460 = vpack.c.bf16 %v6419, %v6419
        %v6461 = vpack.c.bf16 %v6420, %v6420
        %v6462 = vpack.c.bf16 %v6421, %v6421
        %v6463 = vpack.c.bf16 %v6422, %v6422
        %v6464 = vpack.c.bf16 %v6423, %v6423
        %v6465 = vpack.c.bf16 %v6424, %v6424
        %v6466 = vpack.c.bf16 %v6425, %v6425
        %v6467 = vpack.c.bf16 %v6426, %v6426
        %v6468 = vpack.c.bf16 %v6427, %v6427
        %v6469 = vpack.c.bf16 %v6428, %v6428
        %v6470 = vpack.c.bf16 %v6429, %v6429
        %v6471 = vpack.c.bf16 %v6430, %v6430
        %v6472 = vpack.c.bf16 %v6431, %v6431
        %v6473 = vpack.c.bf16 %v6432, %v6432
        %v6474 = vpack.c.bf16 %v6433, %v6433
        %v6475 = vpack.c.bf16 %v6434, %v6434
        %v6476 = vpack.c.bf16 %v6435, %v6435
        %v6477 = vpack.c.bf16 %v6436, %v6436
        %v6478 = vpack.c.bf16 %v6437, %v6437
        %v6479 = vpack.c.bf16 %v6438, %v6438
        %v6480 = vpack.c.bf16 %v6439, %v6439
        %v6481 = vpack.c.bf16 %v6440, %v6440
        %vm6482 = vcmask 257024
        %6483 = vst.msk [vmem:[#allocation2 + $0xc] sm:$0xf] %vm6482, %v6441
        %6484 = vst.msk [vmem:[#allocation2 + $0x10] sm:$0xf] %vm6482, %v6442
        %6485 = vst.msk [vmem:[#allocation2 + $0x14] sm:$0xf] %vm6482, %v6443
        %6486 = vst.msk [vmem:[#allocation2 + $0x18] sm:$0xf] %vm6482, %v6444
        %6487 = vst.msk [vmem:[#allocation2 + $0x1c] sm:$0xf] %vm6482, %v6445
        %6488 = vst.msk [vmem:[#allocation2 + $0x20] sm:$0xf] %vm6482, %v6446
        %6489 = vst.msk [vmem:[#allocation2 + $0x24] sm:$0xf] %vm6482, %v6447
        %6490 = vst.msk [vmem:[#allocation2 + $0x28] sm:$0xf] %vm6482, %v6448
        %6491 = vst.msk [vmem:[#allocation2 + $0x2c] sm:$0xf] %vm6482, %v6449
        %6492 = vst.msk [vmem:[#allocation2 + $0x30] sm:$0xf] %vm6482, %v6450
        %6493 = vst.msk [vmem:[#allocation2 + $0x34] sm:$0xf] %vm6482, %v6451
        %6494 = vst.msk [vmem:[#allocation2 + $0x38] sm:$0xf] %vm6482, %v6452
        %6495 = vst.msk [vmem:[#allocation2 + $0x3c] sm:$0xf] %vm6482, %v6453
        %6496 = vst.msk [vmem:[#allocation2 + $0x40] sm:$0xf] %vm6482, %v6454
        %6497 = vst.msk [vmem:[#allocation2 + $0x44] sm:$0xf] %vm6482, %v6455
        %6498 = vst.msk [vmem:[#allocation2 + $0x48] sm:$0xf] %vm6482, %v6456
        %6499 = vst.msk [vmem:[#allocation2 + $0x4c] sm:$0xf] %vm6482, %v6457
        %6500 = vst.msk [vmem:[#allocation2 + $0x50] sm:$0xf] %vm6482, %v6458
        %6501 = vst.msk [vmem:[#allocation2 + $0x54] sm:$0xf] %vm6482, %v6459
        %6502 = vst.msk [vmem:[#allocation2 + $0x58] sm:$0xf] %vm6482, %v6460
        %6503 = vst.msk [vmem:[#allocation2 + $0x5c] sm:$0xf] %vm6482, %v6461
        %6504 = vst.msk [vmem:[#allocation2 + $0x60] sm:$0xf] %vm6482, %v6462
        %6505 = vst.msk [vmem:[#allocation2 + $0x64] sm:$0xf] %vm6482, %v6463
        %6506 = vst.msk [vmem:[#allocation2 + $0x68] sm:$0xf] %vm6482, %v6464
        %6507 = vst.msk [vmem:[#allocation2 + $0x6c] sm:$0xf] %vm6482, %v6465
        %6508 = vst.msk [vmem:[#allocation2 + $0x70] sm:$0xf] %vm6482, %v6466
        %6509 = vst.msk [vmem:[#allocation2 + $0x74] sm:$0xf] %vm6482, %v6467
        %6510 = vst.msk [vmem:[#allocation2 + $0x78] sm:$0xf] %vm6482, %v6468
        %6511 = vst.msk [vmem:[#allocation2 + $0x7c] sm:$0xf] %vm6482, %v6469
        %6512 = vst.msk [vmem:[#allocation2 + $0x80] sm:$0xf] %vm6482, %v6470
        %6513 = vst.msk [vmem:[#allocation2 + $0x84] sm:$0xf] %vm6482, %v6471
        %6514 = vst.msk [vmem:[#allocation2 + $0x88] sm:$0xf] %vm6482, %v6472
        %6515 = vst.msk [vmem:[#allocation2 + $0x8c] sm:$0xf] %vm6482, %v6473
        %6516 = vst.msk [vmem:[#allocation2 + $0x90] sm:$0xf] %vm6482, %v6474
        %6517 = vst.msk [vmem:[#allocation2 + $0x94] sm:$0xf] %vm6482, %v6475
        %6518 = vst.msk [vmem:[#allocation2 + $0x98] sm:$0xf] %vm6482, %v6476
        %6519 = vst.msk [vmem:[#allocation2 + $0x9c] sm:$0xf] %vm6482, %v6477
        %6520 = vst.msk [vmem:[#allocation2 + $0xa0] sm:$0xf] %vm6482, %v6478
        %6521 = vst.msk [vmem:[#allocation2 + $0xa4] sm:$0xf] %vm6482, %v6479
        %6522 = vst.msk [vmem:[#allocation2 + $0xa8] sm:$0xf] %vm6482, %v6480
        %6523 = vst.msk [vmem:[#allocation2 + $0xac] sm:$0xf] %vm6482, %v6481
        %v6524 = vld [vmem:[#allocation2] sm:$0xc]
        %v6525 = vld [vmem:[#allocation2 + $0x4] sm:$0xf]
        %v6526 = vld [vmem:[#allocation2 + $0x8] sm:$0xf]
        %v6527 = vld [vmem:[#allocation2 + $0xc] sm:$0xf]
        %v6528 = vld [vmem:[#allocation2 + $0x10] sm:$0xf]
        %v6529 = vld [vmem:[#allocation2 + $0x14] sm:$0xf]
        %v6530 = vld [vmem:[#allocation2 + $0x18] sm:$0xf]
        %v6531 = vld [vmem:[#allocation2 + $0x1c] sm:$0xf]
        %v6532 = vld [vmem:[#allocation2 + $0x20] sm:$0xf]
        %v6533 = vld [vmem:[#allocation2 + $0x24] sm:$0xf]
        %v6534 = vld [vmem:[#allocation2 + $0x28] sm:$0xf]
        %v6535 = vld [vmem:[#allocation2 + $0x2c] sm:$0xf]
        %v6536 = vld [vmem:[#allocation2 + $0x30] sm:$0xf]
        %v6537 = vld [vmem:[#allocation2 + $0x34] sm:$0xf]
        %v6538 = vld [vmem:[#allocation2 + $0x38] sm:$0xf]
        %v6539 = vld [vmem:[#allocation2 + $0x3c] sm:$0xf]
        %v6540 = vld [vmem:[#allocation2 + $0x40] sm:$0xf]
        %v6541 = vld [vmem:[#allocation2 + $0x44] sm:$0xf]
        %v6542 = vld [vmem:[#allocation2 + $0x48] sm:$0xf]
        %v6543 = vld [vmem:[#allocation2 + $0x4c] sm:$0xf]
        %v6544 = vld [vmem:[#allocation2 + $0x50] sm:$0xf]
        %v6545 = vld [vmem:[#allocation2 + $0x54] sm:$0xf]
        %v6546 = vld [vmem:[#allocation2 + $0x58] sm:$0xf]
        %v6547 = vld [vmem:[#allocation2 + $0x5c] sm:$0xf]
        %v6548 = vld [vmem:[#allocation2 + $0x60] sm:$0xf]
        %v6549 = vld [vmem:[#allocation2 + $0x64] sm:$0xf]
        %v6550 = vld [vmem:[#allocation2 + $0x68] sm:$0xf]
        %v6551 = vld [vmem:[#allocation2 + $0x6c] sm:$0xf]
        %v6552 = vld [vmem:[#allocation2 + $0x70] sm:$0xf]
        %v6553 = vld [vmem:[#allocation2 + $0x74] sm:$0xf]
        %v6554 = vld [vmem:[#allocation2 + $0x78] sm:$0xf]
        %v6555 = vld [vmem:[#allocation2 + $0x7c] sm:$0xf]
        %v6556 = vld [vmem:[#allocation2 + $0x80] sm:$0xf]
        %v6557 = vld [vmem:[#allocation2 + $0x84] sm:$0xf]
        %v6558 = vld [vmem:[#allocation2 + $0x88] sm:$0xf]
        %v6559 = vld [vmem:[#allocation2 + $0x8c] sm:$0xf]
        %v6560 = vld [vmem:[#allocation2 + $0x90] sm:$0xf]
        %v6561 = vld [vmem:[#allocation2 + $0x94] sm:$0xf]
        %v6562 = vld [vmem:[#allocation2 + $0x98] sm:$0xf]
        %v6563 = vld [vmem:[#allocation2 + $0x9c] sm:$0xf]
        %v6564 = vld [vmem:[#allocation2 + $0xa0] sm:$0xf]
        %v6565 = vld [vmem:[#allocation2 + $0xa4] sm:$0x7]
        %v6567 = vshrl.u32 %v6524, 16
        %v6569 = vrot.slane %v6567, 6
        %v6570 = vshll.u32 %v6524, 16
        %v6572 = vrot.slane %v6570, 7
        %v6573 = vor.u32 %v6569, %v6572
        %v6574 = vrot.slane %v6573, 4
        %v6576 = vshrl.u32 %v6525, 16
        %v6578 = vrot.slane %v6576, 6
        %v6579 = vshll.u32 %v6525, 16
        %v6581 = vrot.slane %v6579, 7
        %v6582 = vor.u32 %v6578, %v6581
        %v6583 = vsel %vm1313, %v6574, %v6582
        %v6584 = vrot.slane %v6582, 4
        %v6586 = vshrl.u32 %v6526, 16
        %v6588 = vrot.slane %v6586, 6
        %v6589 = vshll.u32 %v6526, 16
        %v6591 = vrot.slane %v6589, 7
        %v6592 = vor.u32 %v6588, %v6591
        %v6593 = vsel %vm1313, %v6584, %v6592
        %v6594 = vrot.slane %v6592, 4
        %v6596 = vshrl.u32 %v6527, 16
        %v6598 = vrot.slane %v6596, 6
        %v6599 = vshll.u32 %v6527, 16
        %v6601 = vrot.slane %v6599, 7
        %v6602 = vor.u32 %v6598, %v6601
        %v6603 = vsel %vm1313, %v6594, %v6602
        %v6604 = vrot.slane %v6602, 4
        %v6606 = vshrl.u32 %v6528, 16
        %v6608 = vrot.slane %v6606, 6
        %v6609 = vshll.u32 %v6528, 16
        %v6611 = vrot.slane %v6609, 7
        %v6612 = vor.u32 %v6608, %v6611
        %v6613 = vsel %vm1313, %v6604, %v6612
        %v6614 = vrot.slane %v6612, 4
        %v6616 = vshrl.u32 %v6529, 16
        %v6618 = vrot.slane %v6616, 6
        %v6619 = vshll.u32 %v6529, 16
        %v6621 = vrot.slane %v6619, 7
        %v6622 = vor.u32 %v6618, %v6621
        %v6623 = vsel %vm1313, %v6614, %v6622
        %v6624 = vrot.slane %v6622, 4
        %v6626 = vshrl.u32 %v6530, 16
        %v6628 = vrot.slane %v6626, 6
        %v6629 = vshll.u32 %v6530, 16
        %v6631 = vrot.slane %v6629, 7
        %v6632 = vor.u32 %v6628, %v6631
        %v6633 = vsel %vm1313, %v6624, %v6632
        %v6634 = vrot.slane %v6632, 4
        %v6636 = vshrl.u32 %v6531, 16
        %v6638 = vrot.slane %v6636, 6
        %v6639 = vshll.u32 %v6531, 16
        %v6641 = vrot.slane %v6639, 7
        %v6642 = vor.u32 %v6638, %v6641
        %v6643 = vsel %vm1313, %v6634, %v6642
        %v6644 = vrot.slane %v6642, 4
        %v6646 = vshrl.u32 %v6532, 16
        %v6648 = vrot.slane %v6646, 6
        %v6649 = vshll.u32 %v6532, 16
        %v6651 = vrot.slane %v6649, 7
        %v6652 = vor.u32 %v6648, %v6651
        %v6653 = vsel %vm1313, %v6644, %v6652
        %v6654 = vrot.slane %v6652, 4
        %v6656 = vshrl.u32 %v6533, 16
        %v6658 = vrot.slane %v6656, 6
        %v6659 = vshll.u32 %v6533, 16
        %v6661 = vrot.slane %v6659, 7
        %v6662 = vor.u32 %v6658, %v6661
        %v6663 = vsel %vm1313, %v6654, %v6662
        %v6664 = vrot.slane %v6662, 4
        %v6666 = vshrl.u32 %v6534, 16
        %v6668 = vrot.slane %v6666, 6
        %v6669 = vshll.u32 %v6534, 16
        %v6671 = vrot.slane %v6669, 7
        %v6672 = vor.u32 %v6668, %v6671
        %v6673 = vsel %vm1313, %v6664, %v6672
        %v6674 = vrot.slane %v6672, 4
        %v6676 = vshrl.u32 %v6535, 16
        %v6678 = vrot.slane %v6676, 6
        %v6679 = vshll.u32 %v6535, 16
        %v6681 = vrot.slane %v6679, 7
        %v6682 = vor.u32 %v6678, %v6681
        %v6683 = vsel %vm1313, %v6674, %v6682
        %v6684 = vrot.slane %v6682, 4
        %v6686 = vshrl.u32 %v6536, 16
        %v6688 = vrot.slane %v6686, 6
        %v6689 = vshll.u32 %v6536, 16
        %v6691 = vrot.slane %v6689, 7
        %v6692 = vor.u32 %v6688, %v6691
        %v6693 = vsel %vm1313, %v6684, %v6692
        %v6694 = vrot.slane %v6692, 4
        %v6696 = vshrl.u32 %v6537, 16
        %v6698 = vrot.slane %v6696, 6
        %v6699 = vshll.u32 %v6537, 16
        %v6701 = vrot.slane %v6699, 7
        %v6702 = vor.u32 %v6698, %v6701
        %v6703 = vsel %vm1313, %v6694, %v6702
        %v6704 = vrot.slane %v6702, 4
        %v6706 = vshrl.u32 %v6538, 16
        %v6708 = vrot.slane %v6706, 6
        %v6709 = vshll.u32 %v6538, 16
        %v6711 = vrot.slane %v6709, 7
        %v6712 = vor.u32 %v6708, %v6711
        %v6713 = vsel %vm1313, %v6704, %v6712
        %v6714 = vrot.slane %v6712, 4
        %v6716 = vshrl.u32 %v6539, 16
        %v6718 = vrot.slane %v6716, 6
        %v6719 = vshll.u32 %v6539, 16
        %v6721 = vrot.slane %v6719, 7
        %v6722 = vor.u32 %v6718, %v6721
        %v6723 = vsel %vm1313, %v6714, %v6722
        %v6724 = vrot.slane %v6722, 4
        %v6726 = vshrl.u32 %v6540, 16
        %v6728 = vrot.slane %v6726, 6
        %v6729 = vshll.u32 %v6540, 16
        %v6731 = vrot.slane %v6729, 7
        %v6732 = vor.u32 %v6728, %v6731
        %v6733 = vsel %vm1313, %v6724, %v6732
        %v6734 = vrot.slane %v6732, 4
        %v6736 = vshrl.u32 %v6541, 16
        %v6738 = vrot.slane %v6736, 6
        %v6739 = vshll.u32 %v6541, 16
        %v6741 = vrot.slane %v6739, 7
        %v6742 = vor.u32 %v6738, %v6741
        %v6743 = vsel %vm1313, %v6734, %v6742
        %v6744 = vrot.slane %v6742, 4
        %v6746 = vshrl.u32 %v6542, 16
        %v6748 = vrot.slane %v6746, 6
        %v6749 = vshll.u32 %v6542, 16
        %v6751 = vrot.slane %v6749, 7
        %v6752 = vor.u32 %v6748, %v6751
        %v6753 = vsel %vm1313, %v6744, %v6752
        %v6754 = vrot.slane %v6752, 4
        %v6756 = vshrl.u32 %v6543, 16
        %v6758 = vrot.slane %v6756, 6
        %v6759 = vshll.u32 %v6543, 16
        %v6761 = vrot.slane %v6759, 7
        %v6762 = vor.u32 %v6758, %v6761
        %v6763 = vsel %vm1313, %v6754, %v6762
        %v6764 = vrot.slane %v6762, 4
        %v6766 = vshrl.u32 %v6544, 16
        %v6768 = vrot.slane %v6766, 6
        %v6769 = vshll.u32 %v6544, 16
        %v6771 = vrot.slane %v6769, 7
        %v6772 = vor.u32 %v6768, %v6771
        %v6773 = vsel %vm1313, %v6764, %v6772
        %v6774 = vrot.slane %v6772, 4
        %v6776 = vshrl.u32 %v6545, 16
        %v6778 = vrot.slane %v6776, 6
        %v6779 = vshll.u32 %v6545, 16
        %v6781 = vrot.slane %v6779, 7
        %v6782 = vor.u32 %v6778, %v6781
        %v6783 = vsel %vm1313, %v6774, %v6782
        %v6784 = vrot.slane %v6782, 4
        %v6786 = vshrl.u32 %v6546, 16
        %v6788 = vrot.slane %v6786, 6
        %v6789 = vshll.u32 %v6546, 16
        %v6791 = vrot.slane %v6789, 7
        %v6792 = vor.u32 %v6788, %v6791
        %v6793 = vsel %vm1313, %v6784, %v6792
        %v6794 = vrot.slane %v6792, 4
        %v6796 = vshrl.u32 %v6547, 16
        %v6798 = vrot.slane %v6796, 6
        %v6799 = vshll.u32 %v6547, 16
        %v6801 = vrot.slane %v6799, 7
        %v6802 = vor.u32 %v6798, %v6801
        %v6803 = vsel %vm1313, %v6794, %v6802
        %v6804 = vrot.slane %v6802, 4
        %v6806 = vshrl.u32 %v6548, 16
        %v6808 = vrot.slane %v6806, 6
        %v6809 = vshll.u32 %v6548, 16
        %v6811 = vrot.slane %v6809, 7
        %v6812 = vor.u32 %v6808, %v6811
        %v6813 = vsel %vm1313, %v6804, %v6812
        %v6814 = vrot.slane %v6812, 4
        %v6816 = vshrl.u32 %v6549, 16
        %v6818 = vrot.slane %v6816, 6
        %v6819 = vshll.u32 %v6549, 16
        %v6821 = vrot.slane %v6819, 7
        %v6822 = vor.u32 %v6818, %v6821
        %v6823 = vsel %vm1313, %v6814, %v6822
        %v6824 = vrot.slane %v6822, 4
        %v6826 = vshrl.u32 %v6550, 16
        %v6828 = vrot.slane %v6826, 6
        %v6829 = vshll.u32 %v6550, 16
        %v6831 = vrot.slane %v6829, 7
        %v6832 = vor.u32 %v6828, %v6831
        %v6833 = vsel %vm1313, %v6824, %v6832
        %v6834 = vrot.slane %v6832, 4
        %v6836 = vshrl.u32 %v6551, 16
        %v6838 = vrot.slane %v6836, 6
        %v6839 = vshll.u32 %v6551, 16
        %v6841 = vrot.slane %v6839, 7
        %v6842 = vor.u32 %v6838, %v6841
        %v6843 = vsel %vm1313, %v6834, %v6842
        %v6844 = vrot.slane %v6842, 4
        %v6846 = vshrl.u32 %v6552, 16
        %v6848 = vrot.slane %v6846, 6
        %v6849 = vshll.u32 %v6552, 16
        %v6851 = vrot.slane %v6849, 7
        %v6852 = vor.u32 %v6848, %v6851
        %v6853 = vsel %vm1313, %v6844, %v6852
        %v6854 = vrot.slane %v6852, 4
        %v6856 = vshrl.u32 %v6553, 16
        %v6858 = vrot.slane %v6856, 6
        %v6859 = vshll.u32 %v6553, 16
        %v6861 = vrot.slane %v6859, 7
        %v6862 = vor.u32 %v6858, %v6861
        %v6863 = vsel %vm1313, %v6854, %v6862
        %v6864 = vrot.slane %v6862, 4
        %v6866 = vshrl.u32 %v6554, 16
        %v6868 = vrot.slane %v6866, 6
        %v6869 = vshll.u32 %v6554, 16
        %v6871 = vrot.slane %v6869, 7
        %v6872 = vor.u32 %v6868, %v6871
        %v6873 = vsel %vm1313, %v6864, %v6872
        %v6874 = vrot.slane %v6872, 4
        %v6876 = vshrl.u32 %v6555, 16
        %v6878 = vrot.slane %v6876, 6
        %v6879 = vshll.u32 %v6555, 16
        %v6881 = vrot.slane %v6879, 7
        %v6882 = vor.u32 %v6878, %v6881
        %v6883 = vsel %vm1313, %v6874, %v6882
        %v6884 = vrot.slane %v6882, 4
        %v6886 = vshrl.u32 %v6556, 16
        %v6888 = vrot.slane %v6886, 6
        %v6889 = vshll.u32 %v6556, 16
        %v6891 = vrot.slane %v6889, 7
        %v6892 = vor.u32 %v6888, %v6891
        %v6893 = vsel %vm1313, %v6884, %v6892
        %v6894 = vrot.slane %v6892, 4
        %v6896 = vshrl.u32 %v6557, 16
        %v6898 = vrot.slane %v6896, 6
        %v6899 = vshll.u32 %v6557, 16
        %v6901 = vrot.slane %v6899, 7
        %v6902 = vor.u32 %v6898, %v6901
        %v6903 = vsel %vm1313, %v6894, %v6902
        %v6904 = vrot.slane %v6902, 4
        %v6906 = vshrl.u32 %v6558, 16
        %v6908 = vrot.slane %v6906, 6
        %v6909 = vshll.u32 %v6558, 16
        %v6911 = vrot.slane %v6909, 7
        %v6912 = vor.u32 %v6908, %v6911
        %v6913 = vsel %vm1313, %v6904, %v6912
        %v6914 = vrot.slane %v6912, 4
        %v6916 = vshrl.u32 %v6559, 16
        %v6918 = vrot.slane %v6916, 6
        %v6919 = vshll.u32 %v6559, 16
        %v6921 = vrot.slane %v6919, 7
        %v6922 = vor.u32 %v6918, %v6921
        %v6923 = vsel %vm1313, %v6914, %v6922
        %v6924 = vrot.slane %v6922, 4
        %v6926 = vshrl.u32 %v6560, 16
        %v6928 = vrot.slane %v6926, 6
        %v6929 = vshll.u32 %v6560, 16
        %v6931 = vrot.slane %v6929, 7
        %v6932 = vor.u32 %v6928, %v6931
        %v6933 = vsel %vm1313, %v6924, %v6932
        %v6934 = vrot.slane %v6932, 4
        %v6936 = vshrl.u32 %v6561, 16
        %v6938 = vrot.slane %v6936, 6
        %v6939 = vshll.u32 %v6561, 16
        %v6941 = vrot.slane %v6939, 7
        %v6942 = vor.u32 %v6938, %v6941
        %v6943 = vsel %vm1313, %v6934, %v6942
        %v6944 = vrot.slane %v6942, 4
        %v6946 = vshrl.u32 %v6562, 16
        %v6948 = vrot.slane %v6946, 6
        %v6949 = vshll.u32 %v6562, 16
        %v6951 = vrot.slane %v6949, 7
        %v6952 = vor.u32 %v6948, %v6951
        %v6953 = vsel %vm1313, %v6944, %v6952
        %v6954 = vrot.slane %v6952, 4
        %v6956 = vshrl.u32 %v6563, 16
        %v6958 = vrot.slane %v6956, 6
        %v6959 = vshll.u32 %v6563, 16
        %v6961 = vrot.slane %v6959, 7
        %v6962 = vor.u32 %v6958, %v6961
        %v6963 = vsel %vm1313, %v6954, %v6962
        %v6964 = vrot.slane %v6962, 4
        %v6966 = vshrl.u32 %v6564, 16
        %v6968 = vrot.slane %v6966, 6
        %v6969 = vshll.u32 %v6564, 16
        %v6971 = vrot.slane %v6969, 7
        %v6972 = vor.u32 %v6968, %v6971
        %v6973 = vsel %vm1313, %v6964, %v6972
        %v6974 = vrot.slane %v6972, 4
        %v6976 = vshrl.u32 %v6565, 16
        %v6978 = vrot.slane %v6976, 6
        %v6979 = vshll.u32 %v6565, 16
        %v6981 = vrot.slane %v6979, 7
        %v6982 = vor.u32 %v6978, %v6981
        %v6983 = vsel %vm1313, %v6974, %v6982
        %7025 = vst.msk [vmem:[#allocation3] sm:$0xf] %vm6482, %v6583
        %7026 = vst.msk [vmem:[#allocation3 + $0xc] sm:$0xf] %vm6482, %v6593
        %7027 = vst.msk [vmem:[#allocation3 + $0x18] sm:$0xf] %vm6482, %v6603
        %7028 = vst.msk [vmem:[#allocation3 + $0x24] sm:$0xf] %vm6482, %v6613
        %7029 = vst.msk [vmem:[#allocation3 + $0x30] sm:$0xf] %vm6482, %v6623
        %7030 = vst.msk [vmem:[#allocation3 + $0x3c] sm:$0xf] %vm6482, %v6633
        %7031 = vst.msk [vmem:[#allocation3 + $0x48] sm:$0xf] %vm6482, %v6643
        %7032 = vst.msk [vmem:[#allocation3 + $0x54] sm:$0xf] %vm6482, %v6653
        %7033 = vst.msk [vmem:[#allocation3 + $0x60] sm:$0xf] %vm6482, %v6663
        %7034 = vst.msk [vmem:[#allocation3 + $0x6c] sm:$0xf] %vm6482, %v6673
        %7035 = vst.msk [vmem:[#allocation3 + $0x78] sm:$0xf] %vm6482, %v6683
        %7036 = vst.msk [vmem:[#allocation3 + $0x84] sm:$0xf] %vm6482, %v6693
        %7037 = vst.msk [vmem:[#allocation3 + $0x90] sm:$0xf] %vm6482, %v6703
        %7038 = vst.msk [vmem:[#allocation3 + $0x9c] sm:$0xf] %vm6482, %v6713
        %7039 = vst.msk [vmem:[#allocation3 + $0xa8] sm:$0xf] %vm6482, %v6723
        %7040 = vst.msk [vmem:[#allocation3 + $0xb4] sm:$0xf] %vm6482, %v6733
        %7041 = vst.msk [vmem:[#allocation3 + $0xc0] sm:$0xf] %vm6482, %v6743
        %7042 = vst.msk [vmem:[#allocation3 + $0xcc] sm:$0xf] %vm6482, %v6753
        %7043 = vst.msk [vmem:[#allocation3 + $0xd8] sm:$0xf] %vm6482, %v6763
        %7044 = vst.msk [vmem:[#allocation3 + $0xe4] sm:$0xf] %vm6482, %v6773
        %7045 = vst.msk [vmem:[#allocation3 + $0xf0] sm:$0xf] %vm6482, %v6783
        %7046 = vst.msk [vmem:[#allocation3 + $0xfc] sm:$0xf] %vm6482, %v6793
        %7047 = vst.msk [vmem:[#allocation3 + $0x108] sm:$0xf] %vm6482, %v6803
        %7048 = vst.msk [vmem:[#allocation3 + $0x114] sm:$0xf] %vm6482, %v6813
        %7049 = vst.msk [vmem:[#allocation3 + $0x120] sm:$0xf] %vm6482, %v6823
        %7050 = vst.msk [vmem:[#allocation3 + $0x12c] sm:$0xf] %vm6482, %v6833
        %7051 = vst.msk [vmem:[#allocation3 + $0x138] sm:$0xf] %vm6482, %v6843
        %7052 = vst.msk [vmem:[#allocation3 + $0x144] sm:$0xf] %vm6482, %v6853
        %7053 = vst.msk [vmem:[#allocation3 + $0x150] sm:$0xf] %vm6482, %v6863
        %7054 = vst.msk [vmem:[#allocation3 + $0x15c] sm:$0xf] %vm6482, %v6873
        %7055 = vst.msk [vmem:[#allocation3 + $0x168] sm:$0xf] %vm6482, %v6883
        %7056 = vst.msk [vmem:[#allocation3 + $0x174] sm:$0xf] %vm6482, %v6893
        %7057 = vst.msk [vmem:[#allocation3 + $0x180] sm:$0xf] %vm6482, %v6903
        %7058 = vst.msk [vmem:[#allocation3 + $0x18c] sm:$0xf] %vm6482, %v6913
        %7059 = vst.msk [vmem:[#allocation3 + $0x198] sm:$0xf] %vm6482, %v6923
        %7060 = vst.msk [vmem:[#allocation3 + $0x1a4] sm:$0xf] %vm6482, %v6933
        %7061 = vst.msk [vmem:[#allocation3 + $0x1b0] sm:$0xf] %vm6482, %v6943
        %7062 = vst.msk [vmem:[#allocation3 + $0x1bc] sm:$0xf] %vm6482, %v6953
        %7063 = vst.msk [vmem:[#allocation3 + $0x1c8] sm:$0xf] %vm6482, %v6963
        %7064 = vst.msk [vmem:[#allocation3 + $0x1d4] sm:$0xf] %vm6482, %v6973
        %7065 = vst.msk [vmem:[#allocation3 + $0x1e0] sm:$0xf] %vm6482, %v6983
        %v7066 = vld [vmem:[#allocation2] sm:$0x8]
        %v7067 = vld [vmem:[#allocation2 + $0x4] sm:$0xf]
        %v7068 = vld [vmem:[#allocation2 + $0x8] sm:$0xf]
        %v7069 = vld [vmem:[#allocation2 + $0xc] sm:$0xf]
        %v7070 = vld [vmem:[#allocation2 + $0x10] sm:$0xf]
        %v7071 = vld [vmem:[#allocation2 + $0x14] sm:$0xf]
        %v7072 = vld [vmem:[#allocation2 + $0x18] sm:$0xf]
        %v7073 = vld [vmem:[#allocation2 + $0x1c] sm:$0xf]
        %v7074 = vld [vmem:[#allocation2 + $0x20] sm:$0xf]
        %v7075 = vld [vmem:[#allocation2 + $0x24] sm:$0xf]
        %v7076 = vld [vmem:[#allocation2 + $0x28] sm:$0xf]
        %v7077 = vld [vmem:[#allocation2 + $0x2c] sm:$0xf]
        %v7078 = vld [vmem:[#allocation2 + $0x30] sm:$0xf]
        %v7079 = vld [vmem:[#allocation2 + $0x34] sm:$0xf]
        %v7080 = vld [vmem:[#allocation2 + $0x38] sm:$0xf]
        %v7081 = vld [vmem:[#allocation2 + $0x3c] sm:$0xf]
        %v7082 = vld [vmem:[#allocation2 + $0x40] sm:$0xf]
        %v7083 = vld [vmem:[#allocation2 + $0x44] sm:$0xf]
        %v7084 = vld [vmem:[#allocation2 + $0x48] sm:$0xf]
        %v7085 = vld [vmem:[#allocation2 + $0x4c] sm:$0xf]
        %v7086 = vld [vmem:[#allocation2 + $0x50] sm:$0xf]
        %v7087 = vld [vmem:[#allocation2 + $0x54] sm:$0xf]
        %v7088 = vld [vmem:[#allocation2 + $0x58] sm:$0xf]
        %v7089 = vld [vmem:[#allocation2 + $0x5c] sm:$0xf]
        %v7090 = vld [vmem:[#allocation2 + $0x60] sm:$0xf]
        %v7091 = vld [vmem:[#allocation2 + $0x64] sm:$0xf]
        %v7092 = vld [vmem:[#allocation2 + $0x68] sm:$0xf]
        %v7093 = vld [vmem:[#allocation2 + $0x6c] sm:$0xf]
        %v7094 = vld [vmem:[#allocation2 + $0x70] sm:$0xf]
        %v7095 = vld [vmem:[#allocation2 + $0x74] sm:$0xf]
        %v7096 = vld [vmem:[#allocation2 + $0x78] sm:$0xf]
        %v7097 = vld [vmem:[#allocation2 + $0x7c] sm:$0xf]
        %v7098 = vld [vmem:[#allocation2 + $0x80] sm:$0xf]
        %v7099 = vld [vmem:[#allocation2 + $0x84] sm:$0xf]
        %v7100 = vld [vmem:[#allocation2 + $0x88] sm:$0xf]
        %v7101 = vld [vmem:[#allocation2 + $0x8c] sm:$0xf]
        %v7102 = vld [vmem:[#allocation2 + $0x90] sm:$0xf]
        %v7103 = vld [vmem:[#allocation2 + $0x94] sm:$0xf]
        %v7104 = vld [vmem:[#allocation2 + $0x98] sm:$0xf]
        %v7105 = vld [vmem:[#allocation2 + $0x9c] sm:$0xf]
        %v7106 = vld [vmem:[#allocation2 + $0xa0] sm:$0xf]
        %v7107 = vld [vmem:[#allocation2 + $0xa4] sm:$0x7]
        %v7150 = vrot.slane %v7066, 7
        %v7151 = vrot.slane %v7150, 4
        %v7152 = vrot.slane %v7067, 7
        %v7153 = vsel %vm1900, %v7151, %v7152
        %v7154 = vrot.slane %v7152, 4
        %v7155 = vrot.slane %v7068, 7
        %v7156 = vsel %vm1900, %v7154, %v7155
        %v7157 = vrot.slane %v7155, 4
        %v7158 = vrot.slane %v7069, 7
        %v7159 = vsel %vm1900, %v7157, %v7158
        %v7160 = vrot.slane %v7158, 4
        %v7161 = vrot.slane %v7070, 7
        %v7162 = vsel %vm1900, %v7160, %v7161
        %v7163 = vrot.slane %v7161, 4
        %v7164 = vrot.slane %v7071, 7
        %v7165 = vsel %vm1900, %v7163, %v7164
        %v7166 = vrot.slane %v7164, 4
        %v7167 = vrot.slane %v7072, 7
        %v7168 = vsel %vm1900, %v7166, %v7167
        %v7169 = vrot.slane %v7167, 4
        %v7170 = vrot.slane %v7073, 7
        %v7171 = vsel %vm1900, %v7169, %v7170
        %v7172 = vrot.slane %v7170, 4
        %v7173 = vrot.slane %v7074, 7
        %v7174 = vsel %vm1900, %v7172, %v7173
        %v7175 = vrot.slane %v7173, 4
        %v7176 = vrot.slane %v7075, 7
        %v7177 = vsel %vm1900, %v7175, %v7176
        %v7178 = vrot.slane %v7176, 4
        %v7179 = vrot.slane %v7076, 7
        %v7180 = vsel %vm1900, %v7178, %v7179
        %v7181 = vrot.slane %v7179, 4
        %v7182 = vrot.slane %v7077, 7
        %v7183 = vsel %vm1900, %v7181, %v7182
        %v7184 = vrot.slane %v7182, 4
        %v7185 = vrot.slane %v7078, 7
        %v7186 = vsel %vm1900, %v7184, %v7185
        %v7187 = vrot.slane %v7185, 4
        %v7188 = vrot.slane %v7079, 7
        %v7189 = vsel %vm1900, %v7187, %v7188
        %v7190 = vrot.slane %v7188, 4
        %v7191 = vrot.slane %v7080, 7
        %v7192 = vsel %vm1900, %v7190, %v7191
        %v7193 = vrot.slane %v7191, 4
        %v7194 = vrot.slane %v7081, 7
        %v7195 = vsel %vm1900, %v7193, %v7194
        %v7196 = vrot.slane %v7194, 4
        %v7197 = vrot.slane %v7082, 7
        %v7198 = vsel %vm1900, %v7196, %v7197
        %v7199 = vrot.slane %v7197, 4
        %v7200 = vrot.slane %v7083, 7
        %v7201 = vsel %vm1900, %v7199, %v7200
        %v7202 = vrot.slane %v7200, 4
        %v7203 = vrot.slane %v7084, 7
        %v7204 = vsel %vm1900, %v7202, %v7203
        %v7205 = vrot.slane %v7203, 4
        %v7206 = vrot.slane %v7085, 7
        %v7207 = vsel %vm1900, %v7205, %v7206
        %v7208 = vrot.slane %v7206, 4
        %v7209 = vrot.slane %v7086, 7
        %v7210 = vsel %vm1900, %v7208, %v7209
        %v7211 = vrot.slane %v7209, 4
        %v7212 = vrot.slane %v7087, 7
        %v7213 = vsel %vm1900, %v7211, %v7212
        %v7214 = vrot.slane %v7212, 4
        %v7215 = vrot.slane %v7088, 7
        %v7216 = vsel %vm1900, %v7214, %v7215
        %v7217 = vrot.slane %v7215, 4
        %v7218 = vrot.slane %v7089, 7
        %v7219 = vsel %vm1900, %v7217, %v7218
        %v7220 = vrot.slane %v7218, 4
        %v7221 = vrot.slane %v7090, 7
        %v7222 = vsel %vm1900, %v7220, %v7221
        %v7223 = vrot.slane %v7221, 4
        %v7224 = vrot.slane %v7091, 7
        %v7225 = vsel %vm1900, %v7223, %v7224
        %v7226 = vrot.slane %v7224, 4
        %v7227 = vrot.slane %v7092, 7
        %v7228 = vsel %vm1900, %v7226, %v7227
        %v7229 = vrot.slane %v7227, 4
        %v7230 = vrot.slane %v7093, 7
        %v7231 = vsel %vm1900, %v7229, %v7230
        %v7232 = vrot.slane %v7230, 4
        %v7233 = vrot.slane %v7094, 7
        %v7234 = vsel %vm1900, %v7232, %v7233
        %v7235 = vrot.slane %v7233, 4
        %v7236 = vrot.slane %v7095, 7
        %v7237 = vsel %vm1900, %v7235, %v7236
        %v7238 = vrot.slane %v7236, 4
        %v7239 = vrot.slane %v7096, 7
        %v7240 = vsel %vm1900, %v7238, %v7239
        %v7241 = vrot.slane %v7239, 4
        %v7242 = vrot.slane %v7097, 7
        %v7243 = vsel %vm1900, %v7241, %v7242
        %v7244 = vrot.slane %v7242, 4
        %v7245 = vrot.slane %v7098, 7
        %v7246 = vsel %vm1900, %v7244, %v7245
        %v7247 = vrot.slane %v7245, 4
        %v7248 = vrot.slane %v7099, 7
        %v7249 = vsel %vm1900, %v7247, %v7248
        %v7250 = vrot.slane %v7248, 4
        %v7251 = vrot.slane %v7100, 7
        %v7252 = vsel %vm1900, %v7250, %v7251
        %v7253 = vrot.slane %v7251, 4
        %v7254 = vrot.slane %v7101, 7
        %v7255 = vsel %vm1900, %v7253, %v7254
        %v7256 = vrot.slane %v7254, 4
        %v7257 = vrot.slane %v7102, 7
        %v7258 = vsel %vm1900, %v7256, %v7257
        %v7259 = vrot.slane %v7257, 4
        %v7260 = vrot.slane %v7103, 7
        %v7261 = vsel %vm1900, %v7259, %v7260
        %v7262 = vrot.slane %v7260, 4
        %v7263 = vrot.slane %v7104, 7
        %v7264 = vsel %vm1900, %v7262, %v7263
        %v7265 = vrot.slane %v7263, 4
        %v7266 = vrot.slane %v7105, 7
        %v7267 = vsel %vm1900, %v7265, %v7266
        %v7268 = vrot.slane %v7266, 4
        %v7269 = vrot.slane %v7106, 7
        %v7270 = vsel %vm1900, %v7268, %v7269
        %v7271 = vrot.slane %v7269, 4
        %v7272 = vrot.slane %v7107, 7
        %v7273 = vsel %vm1900, %v7271, %v7272
        %7274 = vrot.lane.b32.xlu0 %v7153, 32
        %v7275 = vpop.permute.xlu0 %7274
        %7276 = vrot.lane.b32.xlu0 %v7156, 32
        %v7277 = vpop.permute.xlu0 %7276
        %7278 = vrot.lane.b32.xlu0 %v7159, 32
        %v7279 = vpop.permute.xlu0 %7278
        %7280 = vrot.lane.b32.xlu0 %v7162, 32
        %v7281 = vpop.permute.xlu0 %7280
        %7282 = vrot.lane.b32.xlu0 %v7165, 32
        %v7283 = vpop.permute.xlu0 %7282
        %7284 = vrot.lane.b32.xlu0 %v7168, 32
        %v7285 = vpop.permute.xlu0 %7284
        %7286 = vrot.lane.b32.xlu0 %v7171, 32
        %v7287 = vpop.permute.xlu0 %7286
        %7288 = vrot.lane.b32.xlu0 %v7174, 32
        %v7289 = vpop.permute.xlu0 %7288
        %7290 = vrot.lane.b32.xlu0 %v7177, 32
        %v7291 = vpop.permute.xlu0 %7290
        %7292 = vrot.lane.b32.xlu0 %v7180, 32
        %v7293 = vpop.permute.xlu0 %7292
        %7294 = vrot.lane.b32.xlu0 %v7183, 32
        %v7295 = vpop.permute.xlu0 %7294
        %7296 = vrot.lane.b32.xlu0 %v7186, 32
        %v7297 = vpop.permute.xlu0 %7296
        %7298 = vrot.lane.b32.xlu0 %v7189, 32
        %v7299 = vpop.permute.xlu0 %7298
        %7300 = vrot.lane.b32.xlu0 %v7192, 32
        %v7301 = vpop.permute.xlu0 %7300
        %7302 = vrot.lane.b32.xlu0 %v7195, 32
        %v7303 = vpop.permute.xlu0 %7302
        %7304 = vrot.lane.b32.xlu0 %v7198, 32
        %v7305 = vpop.permute.xlu0 %7304
        %7306 = vrot.lane.b32.xlu0 %v7201, 32
        %v7307 = vpop.permute.xlu0 %7306
        %7308 = vrot.lane.b32.xlu0 %v7204, 32
        %v7309 = vpop.permute.xlu0 %7308
        %7310 = vrot.lane.b32.xlu0 %v7207, 32
        %v7311 = vpop.permute.xlu0 %7310
        %7312 = vrot.lane.b32.xlu0 %v7210, 32
        %v7313 = vpop.permute.xlu0 %7312
        %7314 = vrot.lane.b32.xlu0 %v7213, 32
        %v7315 = vpop.permute.xlu0 %7314
        %7316 = vrot.lane.b32.xlu0 %v7216, 32
        %v7317 = vpop.permute.xlu0 %7316
        %7318 = vrot.lane.b32.xlu0 %v7219, 32
        %v7319 = vpop.permute.xlu0 %7318
        %7320 = vrot.lane.b32.xlu0 %v7222, 32
        %v7321 = vpop.permute.xlu0 %7320
        %7322 = vrot.lane.b32.xlu0 %v7225, 32
        %v7323 = vpop.permute.xlu0 %7322
        %7324 = vrot.lane.b32.xlu0 %v7228, 32
        %v7325 = vpop.permute.xlu0 %7324
        %7326 = vrot.lane.b32.xlu0 %v7231, 32
        %v7327 = vpop.permute.xlu0 %7326
        %7328 = vrot.lane.b32.xlu0 %v7234, 32
        %v7329 = vpop.permute.xlu0 %7328
        %7330 = vrot.lane.b32.xlu0 %v7237, 32
        %v7331 = vpop.permute.xlu0 %7330
        %7332 = vrot.lane.b32.xlu0 %v7240, 32
        %v7333 = vpop.permute.xlu0 %7332
        %7334 = vrot.lane.b32.xlu0 %v7243, 32
        %v7335 = vpop.permute.xlu0 %7334
        %7336 = vrot.lane.b32.xlu0 %v7246, 32
        %v7337 = vpop.permute.xlu0 %7336
        %7338 = vrot.lane.b32.xlu0 %v7249, 32
        %v7339 = vpop.permute.xlu0 %7338
        %7340 = vrot.lane.b32.xlu0 %v7252, 32
        %v7341 = vpop.permute.xlu0 %7340
        %7342 = vrot.lane.b32.xlu0 %v7255, 32
        %v7343 = vpop.permute.xlu0 %7342
        %7344 = vrot.lane.b32.xlu0 %v7258, 32
        %v7345 = vpop.permute.xlu0 %7344
        %7346 = vrot.lane.b32.xlu0 %v7261, 32
        %v7347 = vpop.permute.xlu0 %7346
        %7348 = vrot.lane.b32.xlu0 %v7264, 32
        %v7349 = vpop.permute.xlu0 %7348
        %7350 = vrot.lane.b32.xlu0 %v7267, 32
        %v7351 = vpop.permute.xlu0 %7350
        %7352 = vrot.lane.b32.xlu0 %v7270, 32
        %v7353 = vpop.permute.xlu0 %7352
        %7354 = vrot.lane.b32.xlu0 %v7273, 32
        %v7355 = vpop.permute.xlu0 %7354
        %vm7397 = vcmask 519424
        %7398 = vst.msk [vmem:[#allocation3] sm:$0xf] %vm7397, %v7275
        %7399 = vst.msk [vmem:[#allocation3 + $0xc] sm:$0xf] %vm7397, %v7277
        %7400 = vst.msk [vmem:[#allocation3 + $0x18] sm:$0xf] %vm7397, %v7279
        %7401 = vst.msk [vmem:[#allocation3 + $0x24] sm:$0xf] %vm7397, %v7281
        %7402 = vst.msk [vmem:[#allocation3 + $0x30] sm:$0xf] %vm7397, %v7283
        %7403 = vst.msk [vmem:[#allocation3 + $0x3c] sm:$0xf] %vm7397, %v7285
        %7404 = vst.msk [vmem:[#allocation3 + $0x48] sm:$0xf] %vm7397, %v7287
        %7405 = vst.msk [vmem:[#allocation3 + $0x54] sm:$0xf] %vm7397, %v7289
        %7406 = vst.msk [vmem:[#allocation3 + $0x60] sm:$0xf] %vm7397, %v7291
        %7407 = vst.msk [vmem:[#allocation3 + $0x6c] sm:$0xf] %vm7397, %v7293
        %7408 = vst.msk [vmem:[#allocation3 + $0x78] sm:$0xf] %vm7397, %v7295
        %7409 = vst.msk [vmem:[#allocation3 + $0x84] sm:$0xf] %vm7397, %v7297
        %7410 = vst.msk [vmem:[#allocation3 + $0x90] sm:$0xf] %vm7397, %v7299
        %7411 = vst.msk [vmem:[#allocation3 + $0x9c] sm:$0xf] %vm7397, %v7301
        %7412 = vst.msk [vmem:[#allocation3 + $0xa8] sm:$0xf] %vm7397, %v7303
        %7413 = vst.msk [vmem:[#allocation3 + $0xb4] sm:$0xf] %vm7397, %v7305
        %7414 = vst.msk [vmem:[#allocation3 + $0xc0] sm:$0xf] %vm7397, %v7307
        %7415 = vst.msk [vmem:[#allocation3 + $0xcc] sm:$0xf] %vm7397, %v7309
        %7416 = vst.msk [vmem:[#allocation3 + $0xd8] sm:$0xf] %vm7397, %v7311
        %7417 = vst.msk [vmem:[#allocation3 + $0xe4] sm:$0xf] %vm7397, %v7313
        %7418 = vst.msk [vmem:[#allocation3 + $0xf0] sm:$0xf] %vm7397, %v7315
        %7419 = vst.msk [vmem:[#allocation3 + $0xfc] sm:$0xf] %vm7397, %v7317
        %7420 = vst.msk [vmem:[#allocation3 + $0x108] sm:$0xf] %vm7397, %v7319
        %7421 = vst.msk [vmem:[#allocation3 + $0x114] sm:$0xf] %vm7397, %v7321
        %7422 = vst.msk [vmem:[#allocation3 + $0x120] sm:$0xf] %vm7397, %v7323
        %7423 = vst.msk [vmem:[#allocation3 + $0x12c] sm:$0xf] %vm7397, %v7325
        %7424 = vst.msk [vmem:[#allocation3 + $0x138] sm:$0xf] %vm7397, %v7327
        %7425 = vst.msk [vmem:[#allocation3 + $0x144] sm:$0xf] %vm7397, %v7329
        %7426 = vst.msk [vmem:[#allocation3 + $0x150] sm:$0xf] %vm7397, %v7331
        %7427 = vst.msk [vmem:[#allocation3 + $0x15c] sm:$0xf] %vm7397, %v7333
        %7428 = vst.msk [vmem:[#allocation3 + $0x168] sm:$0xf] %vm7397, %v7335
        %7429 = vst.msk [vmem:[#allocation3 + $0x174] sm:$0xf] %vm7397, %v7337
        %7430 = vst.msk [vmem:[#allocation3 + $0x180] sm:$0xf] %vm7397, %v7339
        %7431 = vst.msk [vmem:[#allocation3 + $0x18c] sm:$0xf] %vm7397, %v7341
        %7432 = vst.msk [vmem:[#allocation3 + $0x198] sm:$0xf] %vm7397, %v7343
        %7433 = vst.msk [vmem:[#allocation3 + $0x1a4] sm:$0xf] %vm7397, %v7345
        %7434 = vst.msk [vmem:[#allocation3 + $0x1b0] sm:$0xf] %vm7397, %v7347
        %7435 = vst.msk [vmem:[#allocation3 + $0x1bc] sm:$0xf] %vm7397, %v7349
        %7436 = vst.msk [vmem:[#allocation3 + $0x1c8] sm:$0xf] %vm7397, %v7351
        %7437 = vst.msk [vmem:[#allocation3 + $0x1d4] sm:$0xf] %vm7397, %v7353
        %7438 = vst.msk [vmem:[#allocation3 + $0x1e0] sm:$0xf] %vm7397, %v7355
        %v7439 = vld [vmem:[#allocation2] sm:$0x8]
        %v7440 = vld [vmem:[#allocation2 + $0x4] sm:$0xf]
        %v7441 = vld [vmem:[#allocation2 + $0x8] sm:$0xf]
        %v7442 = vld [vmem:[#allocation2 + $0xc] sm:$0xf]
        %v7443 = vld [vmem:[#allocation2 + $0x10] sm:$0xf]
        %v7444 = vld [vmem:[#allocation2 + $0x14] sm:$0xf]
        %v7445 = vld [vmem:[#allocation2 + $0x18] sm:$0xf]
        %v7446 = vld [vmem:[#allocation2 + $0x1c] sm:$0xf]
        %v7447 = vld [vmem:[#allocation2 + $0x20] sm:$0xf]
        %v7448 = vld [vmem:[#allocation2 + $0x24] sm:$0xf]
        %v7449 = vld [vmem:[#allocation2 + $0x28] sm:$0xf]
        %v7450 = vld [vmem:[#allocation2 + $0x2c] sm:$0xf]
        %v7451 = vld [vmem:[#allocation2 + $0x30] sm:$0xf]
        %v7452 = vld [vmem:[#allocation2 + $0x34] sm:$0xf]
        %v7453 = vld [vmem:[#allocation2 + $0x38] sm:$0xf]
        %v7454 = vld [vmem:[#allocation2 + $0x3c] sm:$0xf]
        %v7455 = vld [vmem:[#allocation2 + $0x40] sm:$0xf]
        %v7456 = vld [vmem:[#allocation2 + $0x44] sm:$0xf]
        %v7457 = vld [vmem:[#allocation2 + $0x48] sm:$0xf]
        %v7458 = vld [vmem:[#allocation2 + $0x4c] sm:$0xf]
        %v7459 = vld [vmem:[#allocation2 + $0x50] sm:$0xf]
        %v7460 = vld [vmem:[#allocation2 + $0x54] sm:$0xf]
        %v7461 = vld [vmem:[#allocation2 + $0x58] sm:$0xf]
        %v7462 = vld [vmem:[#allocation2 + $0x5c] sm:$0xf]
        %v7463 = vld [vmem:[#allocation2 + $0x60] sm:$0xf]
        %v7464 = vld [vmem:[#allocation2 + $0x64] sm:$0xf]
        %v7465 = vld [vmem:[#allocation2 + $0x68] sm:$0xf]
        %v7466 = vld [vmem:[#allocation2 + $0x6c] sm:$0xf]
        %v7467 = vld [vmem:[#allocation2 + $0x70] sm:$0xf]
        %v7468 = vld [vmem:[#allocation2 + $0x74] sm:$0xf]
        %v7469 = vld [vmem:[#allocation2 + $0x78] sm:$0xf]
        %v7470 = vld [vmem:[#allocation2 + $0x7c] sm:$0xf]
        %v7471 = vld [vmem:[#allocation2 + $0x80] sm:$0xf]
        %v7472 = vld [vmem:[#allocation2 + $0x84] sm:$0xf]
        %v7473 = vld [vmem:[#allocation2 + $0x88] sm:$0xf]
        %v7474 = vld [vmem:[#allocation2 + $0x8c] sm:$0xf]
        %v7475 = vld [vmem:[#allocation2 + $0x90] sm:$0xf]
        %v7476 = vld [vmem:[#allocation2 + $0x94] sm:$0xf]
        %v7477 = vld [vmem:[#allocation2 + $0x98] sm:$0xf]
        %v7478 = vld [vmem:[#allocation2 + $0x9c] sm:$0xf]
        %v7479 = vld [vmem:[#allocation2 + $0xa0] sm:$0xf]
        %v7480 = vld [vmem:[#allocation2 + $0xa4] sm:$0xf]
        %v7482 = vshrl.u32 %v7439, 16
        %v7484 = vrot.slane %v7482, 7
        %v7485 = vrot.slane %v7484, 4
        %v7487 = vshrl.u32 %v7440, 16
        %v7489 = vrot.slane %v7487, 7
        %v7490 = vshll.u32 %v7440, 16
        %v7492 = vor.u32 %v7489, %v7490
        %v7493 = vsel %vm2234, %v7485, %v7492
        %v7494 = vrot.slane %v7489, 4
        %v7496 = vshrl.u32 %v7441, 16
        %v7498 = vrot.slane %v7496, 7
        %v7499 = vshll.u32 %v7441, 16
        %v7501 = vor.u32 %v7498, %v7499
        %v7502 = vsel %vm2234, %v7494, %v7501
        %v7503 = vrot.slane %v7498, 4
        %v7505 = vshrl.u32 %v7442, 16
        %v7507 = vrot.slane %v7505, 7
        %v7508 = vshll.u32 %v7442, 16
        %v7510 = vor.u32 %v7507, %v7508
        %v7511 = vsel %vm2234, %v7503, %v7510
        %v7512 = vrot.slane %v7507, 4
        %v7514 = vshrl.u32 %v7443, 16
        %v7516 = vrot.slane %v7514, 7
        %v7517 = vshll.u32 %v7443, 16
        %v7519 = vor.u32 %v7516, %v7517
        %v7520 = vsel %vm2234, %v7512, %v7519
        %v7521 = vrot.slane %v7516, 4
        %v7523 = vshrl.u32 %v7444, 16
        %v7525 = vrot.slane %v7523, 7
        %v7526 = vshll.u32 %v7444, 16
        %v7528 = vor.u32 %v7525, %v7526
        %v7529 = vsel %vm2234, %v7521, %v7528
        %v7530 = vrot.slane %v7525, 4
        %v7532 = vshrl.u32 %v7445, 16
        %v7534 = vrot.slane %v7532, 7
        %v7535 = vshll.u32 %v7445, 16
        %v7537 = vor.u32 %v7534, %v7535
        %v7538 = vsel %vm2234, %v7530, %v7537
        %v7539 = vrot.slane %v7534, 4
        %v7541 = vshrl.u32 %v7446, 16
        %v7543 = vrot.slane %v7541, 7
        %v7544 = vshll.u32 %v7446, 16
        %v7546 = vor.u32 %v7543, %v7544
        %v7547 = vsel %vm2234, %v7539, %v7546
        %v7548 = vrot.slane %v7543, 4
        %v7550 = vshrl.u32 %v7447, 16
        %v7552 = vrot.slane %v7550, 7
        %v7553 = vshll.u32 %v7447, 16
        %v7555 = vor.u32 %v7552, %v7553
        %v7556 = vsel %vm2234, %v7548, %v7555
        %v7557 = vrot.slane %v7552, 4
        %v7559 = vshrl.u32 %v7448, 16
        %v7561 = vrot.slane %v7559, 7
        %v7562 = vshll.u32 %v7448, 16
        %v7564 = vor.u32 %v7561, %v7562
        %v7565 = vsel %vm2234, %v7557, %v7564
        %v7566 = vrot.slane %v7561, 4
        %v7568 = vshrl.u32 %v7449, 16
        %v7570 = vrot.slane %v7568, 7
        %v7571 = vshll.u32 %v7449, 16
        %v7573 = vor.u32 %v7570, %v7571
        %v7574 = vsel %vm2234, %v7566, %v7573
        %v7575 = vrot.slane %v7570, 4
        %v7577 = vshrl.u32 %v7450, 16
        %v7579 = vrot.slane %v7577, 7
        %v7580 = vshll.u32 %v7450, 16
        %v7582 = vor.u32 %v7579, %v7580
        %v7583 = vsel %vm2234, %v7575, %v7582
        %v7584 = vrot.slane %v7579, 4
        %v7586 = vshrl.u32 %v7451, 16
        %v7588 = vrot.slane %v7586, 7
        %v7589 = vshll.u32 %v7451, 16
        %v7591 = vor.u32 %v7588, %v7589
        %v7592 = vsel %vm2234, %v7584, %v7591
        %v7593 = vrot.slane %v7588, 4
        %v7595 = vshrl.u32 %v7452, 16
        %v7597 = vrot.slane %v7595, 7
        %v7598 = vshll.u32 %v7452, 16
        %v7600 = vor.u32 %v7597, %v7598
        %v7601 = vsel %vm2234, %v7593, %v7600
        %v7602 = vrot.slane %v7597, 4
        %v7604 = vshrl.u32 %v7453, 16
        %v7606 = vrot.slane %v7604, 7
        %v7607 = vshll.u32 %v7453, 16
        %v7609 = vor.u32 %v7606, %v7607
        %v7610 = vsel %vm2234, %v7602, %v7609
        %v7611 = vrot.slane %v7606, 4
        %v7613 = vshrl.u32 %v7454, 16
        %v7615 = vrot.slane %v7613, 7
        %v7616 = vshll.u32 %v7454, 16
        %v7618 = vor.u32 %v7615, %v7616
        %v7619 = vsel %vm2234, %v7611, %v7618
        %v7620 = vrot.slane %v7615, 4
        %v7622 = vshrl.u32 %v7455, 16
        %v7624 = vrot.slane %v7622, 7
        %v7625 = vshll.u32 %v7455, 16
        %v7627 = vor.u32 %v7624, %v7625
        %v7628 = vsel %vm2234, %v7620, %v7627
        %v7629 = vrot.slane %v7624, 4
        %v7631 = vshrl.u32 %v7456, 16
        %v7633 = vrot.slane %v7631, 7
        %v7634 = vshll.u32 %v7456, 16
        %v7636 = vor.u32 %v7633, %v7634
        %v7637 = vsel %vm2234, %v7629, %v7636
        %v7638 = vrot.slane %v7633, 4
        %v7640 = vshrl.u32 %v7457, 16
        %v7642 = vrot.slane %v7640, 7
        %v7643 = vshll.u32 %v7457, 16
        %v7645 = vor.u32 %v7642, %v7643
        %v7646 = vsel %vm2234, %v7638, %v7645
        %v7647 = vrot.slane %v7642, 4
        %v7649 = vshrl.u32 %v7458, 16
        %v7651 = vrot.slane %v7649, 7
        %v7652 = vshll.u32 %v7458, 16
        %v7654 = vor.u32 %v7651, %v7652
        %v7655 = vsel %vm2234, %v7647, %v7654
        %v7656 = vrot.slane %v7651, 4
        %v7658 = vshrl.u32 %v7459, 16
        %v7660 = vrot.slane %v7658, 7
        %v7661 = vshll.u32 %v7459, 16
        %v7663 = vor.u32 %v7660, %v7661
        %v7664 = vsel %vm2234, %v7656, %v7663
        %v7665 = vrot.slane %v7660, 4
        %v7667 = vshrl.u32 %v7460, 16
        %v7669 = vrot.slane %v7667, 7
        %v7670 = vshll.u32 %v7460, 16
        %v7672 = vor.u32 %v7669, %v7670
        %v7673 = vsel %vm2234, %v7665, %v7672
        %v7674 = vrot.slane %v7669, 4
        %v7676 = vshrl.u32 %v7461, 16
        %v7678 = vrot.slane %v7676, 7
        %v7679 = vshll.u32 %v7461, 16
        %v7681 = vor.u32 %v7678, %v7679
        %v7682 = vsel %vm2234, %v7674, %v7681
        %v7683 = vrot.slane %v7678, 4
        %v7685 = vshrl.u32 %v7462, 16
        %v7687 = vrot.slane %v7685, 7
        %v7688 = vshll.u32 %v7462, 16
        %v7690 = vor.u32 %v7687, %v7688
        %v7691 = vsel %vm2234, %v7683, %v7690
        %v7692 = vrot.slane %v7687, 4
        %v7694 = vshrl.u32 %v7463, 16
        %v7696 = vrot.slane %v7694, 7
        %v7697 = vshll.u32 %v7463, 16
        %v7699 = vor.u32 %v7696, %v7697
        %v7700 = vsel %vm2234, %v7692, %v7699
        %v7701 = vrot.slane %v7696, 4
        %v7703 = vshrl.u32 %v7464, 16
        %v7705 = vrot.slane %v7703, 7
        %v7706 = vshll.u32 %v7464, 16
        %v7708 = vor.u32 %v7705, %v7706
        %v7709 = vsel %vm2234, %v7701, %v7708
        %v7710 = vrot.slane %v7705, 4
        %v7712 = vshrl.u32 %v7465, 16
        %v7714 = vrot.slane %v7712, 7
        %v7715 = vshll.u32 %v7465, 16
        %v7717 = vor.u32 %v7714, %v7715
        %v7718 = vsel %vm2234, %v7710, %v7717
        %v7719 = vrot.slane %v7714, 4
        %v7721 = vshrl.u32 %v7466, 16
        %v7723 = vrot.slane %v7721, 7
        %v7724 = vshll.u32 %v7466, 16
        %v7726 = vor.u32 %v7723, %v7724
        %v7727 = vsel %vm2234, %v7719, %v7726
        %v7728 = vrot.slane %v7723, 4
        %v7730 = vshrl.u32 %v7467, 16
        %v7732 = vrot.slane %v7730, 7
        %v7733 = vshll.u32 %v7467, 16
        %v7735 = vor.u32 %v7732, %v7733
        %v7736 = vsel %vm2234, %v7728, %v7735
        %v7737 = vrot.slane %v7732, 4
        %v7739 = vshrl.u32 %v7468, 16
        %v7741 = vrot.slane %v7739, 7
        %v7742 = vshll.u32 %v7468, 16
        %v7744 = vor.u32 %v7741, %v7742
        %v7745 = vsel %vm2234, %v7737, %v7744
        %v7746 = vrot.slane %v7741, 4
        %v7748 = vshrl.u32 %v7469, 16
        %v7750 = vrot.slane %v7748, 7
        %v7751 = vshll.u32 %v7469, 16
        %v7753 = vor.u32 %v7750, %v7751
        %v7754 = vsel %vm2234, %v7746, %v7753
        %v7755 = vrot.slane %v7750, 4
        %v7757 = vshrl.u32 %v7470, 16
        %v7759 = vrot.slane %v7757, 7
        %v7760 = vshll.u32 %v7470, 16
        %v7762 = vor.u32 %v7759, %v7760
        %v7763 = vsel %vm2234, %v7755, %v7762
        %v7764 = vrot.slane %v7759, 4
        %v7766 = vshrl.u32 %v7471, 16
        %v7768 = vrot.slane %v7766, 7
        %v7769 = vshll.u32 %v7471, 16
        %v7771 = vor.u32 %v7768, %v7769
        %v7772 = vsel %vm2234, %v7764, %v7771
        %v7773 = vrot.slane %v7768, 4
        %v7775 = vshrl.u32 %v7472, 16
        %v7777 = vrot.slane %v7775, 7
        %v7778 = vshll.u32 %v7472, 16
        %v7780 = vor.u32 %v7777, %v7778
        %v7781 = vsel %vm2234, %v7773, %v7780
        %v7782 = vrot.slane %v7777, 4
        %v7784 = vshrl.u32 %v7473, 16
        %v7786 = vrot.slane %v7784, 7
        %v7787 = vshll.u32 %v7473, 16
        %v7789 = vor.u32 %v7786, %v7787
        %v7790 = vsel %vm2234, %v7782, %v7789
        %v7791 = vrot.slane %v7786, 4
        %v7793 = vshrl.u32 %v7474, 16
        %v7795 = vrot.slane %v7793, 7
        %v7796 = vshll.u32 %v7474, 16
        %v7798 = vor.u32 %v7795, %v7796
        %v7799 = vsel %vm2234, %v7791, %v7798
        %v7800 = vrot.slane %v7795, 4
        %v7802 = vshrl.u32 %v7475, 16
        %v7804 = vrot.slane %v7802, 7
        %v7805 = vshll.u32 %v7475, 16
        %v7807 = vor.u32 %v7804, %v7805
        %v7808 = vsel %vm2234, %v7800, %v7807
        %v7809 = vrot.slane %v7804, 4
        %v7811 = vshrl.u32 %v7476, 16
        %v7813 = vrot.slane %v7811, 7
        %v7814 = vshll.u32 %v7476, 16
        %v7816 = vor.u32 %v7813, %v7814
        %v7817 = vsel %vm2234, %v7809, %v7816
        %v7818 = vrot.slane %v7813, 4
        %v7820 = vshrl.u32 %v7477, 16
        %v7822 = vrot.slane %v7820, 7
        %v7823 = vshll.u32 %v7477, 16
        %v7825 = vor.u32 %v7822, %v7823
        %v7826 = vsel %vm2234, %v7818, %v7825
        %v7827 = vrot.slane %v7822, 4
        %v7829 = vshrl.u32 %v7478, 16
        %v7831 = vrot.slane %v7829, 7
        %v7832 = vshll.u32 %v7478, 16
        %v7834 = vor.u32 %v7831, %v7832
        %v7835 = vsel %vm2234, %v7827, %v7834
        %v7836 = vrot.slane %v7831, 4
        %v7838 = vshrl.u32 %v7479, 16
        %v7840 = vrot.slane %v7838, 7
        %v7841 = vshll.u32 %v7479, 16
        %v7843 = vor.u32 %v7840, %v7841
        %v7844 = vsel %vm2234, %v7836, %v7843
        %v7845 = vrot.slane %v7840, 4
        %v7847 = vshrl.u32 %v7480, 16
        %v7849 = vrot.slane %v7847, 7
        %v7850 = vshll.u32 %v7480, 16
        %v7852 = vor.u32 %v7849, %v7850
        %v7853 = vsel %vm2234, %v7845, %v7852
        %7854 = vrot.lane.b32.xlu0 %v7493, 64
        %v7855 = vpop.permute.xlu0 %7854
        %7856 = vrot.lane.b32.xlu0 %v7502, 64
        %v7857 = vpop.permute.xlu0 %7856
        %7858 = vrot.lane.b32.xlu0 %v7511, 64
        %v7859 = vpop.permute.xlu0 %7858
        %7860 = vrot.lane.b32.xlu0 %v7520, 64
        %v7861 = vpop.permute.xlu0 %7860
        %7862 = vrot.lane.b32.xlu0 %v7529, 64
        %v7863 = vpop.permute.xlu0 %7862
        %7864 = vrot.lane.b32.xlu0 %v7538, 64
        %v7865 = vpop.permute.xlu0 %7864
        %7866 = vrot.lane.b32.xlu0 %v7547, 64
        %v7867 = vpop.permute.xlu0 %7866
        %7868 = vrot.lane.b32.xlu0 %v7556, 64
        %v7869 = vpop.permute.xlu0 %7868
        %7870 = vrot.lane.b32.xlu0 %v7565, 64
        %v7871 = vpop.permute.xlu0 %7870
        %7872 = vrot.lane.b32.xlu0 %v7574, 64
        %v7873 = vpop.permute.xlu0 %7872
        %7874 = vrot.lane.b32.xlu0 %v7583, 64
        %v7875 = vpop.permute.xlu0 %7874
        %7876 = vrot.lane.b32.xlu0 %v7592, 64
        %v7877 = vpop.permute.xlu0 %7876
        %7878 = vrot.lane.b32.xlu0 %v7601, 64
        %v7879 = vpop.permute.xlu0 %7878
        %7880 = vrot.lane.b32.xlu0 %v7610, 64
        %v7881 = vpop.permute.xlu0 %7880
        %7882 = vrot.lane.b32.xlu0 %v7619, 64
        %v7883 = vpop.permute.xlu0 %7882
        %7884 = vrot.lane.b32.xlu0 %v7628, 64
        %v7885 = vpop.permute.xlu0 %7884
        %7886 = vrot.lane.b32.xlu0 %v7637, 64
        %v7887 = vpop.permute.xlu0 %7886
        %7888 = vrot.lane.b32.xlu0 %v7646, 64
        %v7889 = vpop.permute.xlu0 %7888
        %7890 = vrot.lane.b32.xlu0 %v7655, 64
        %v7891 = vpop.permute.xlu0 %7890
        %7892 = vrot.lane.b32.xlu0 %v7664, 64
        %v7893 = vpop.permute.xlu0 %7892
        %7894 = vrot.lane.b32.xlu0 %v7673, 64
        %v7895 = vpop.permute.xlu0 %7894
        %7896 = vrot.lane.b32.xlu0 %v7682, 64
        %v7897 = vpop.permute.xlu0 %7896
        %7898 = vrot.lane.b32.xlu0 %v7691, 64
        %v7899 = vpop.permute.xlu0 %7898
        %7900 = vrot.lane.b32.xlu0 %v7700, 64
        %v7901 = vpop.permute.xlu0 %7900
        %7902 = vrot.lane.b32.xlu0 %v7709, 64
        %v7903 = vpop.permute.xlu0 %7902
        %7904 = vrot.lane.b32.xlu0 %v7718, 64
        %v7905 = vpop.permute.xlu0 %7904
        %7906 = vrot.lane.b32.xlu0 %v7727, 64
        %v7907 = vpop.permute.xlu0 %7906
        %7908 = vrot.lane.b32.xlu0 %v7736, 64
        %v7909 = vpop.permute.xlu0 %7908
        %7910 = vrot.lane.b32.xlu0 %v7745, 64
        %v7911 = vpop.permute.xlu0 %7910
        %7912 = vrot.lane.b32.xlu0 %v7754, 64
        %v7913 = vpop.permute.xlu0 %7912
        %7914 = vrot.lane.b32.xlu0 %v7763, 64
        %v7915 = vpop.permute.xlu0 %7914
        %7916 = vrot.lane.b32.xlu0 %v7772, 64
        %v7917 = vpop.permute.xlu0 %7916
        %7918 = vrot.lane.b32.xlu0 %v7781, 64
        %v7919 = vpop.permute.xlu0 %7918
        %7920 = vrot.lane.b32.xlu0 %v7790, 64
        %v7921 = vpop.permute.xlu0 %7920
        %7922 = vrot.lane.b32.xlu0 %v7799, 64
        %v7923 = vpop.permute.xlu0 %7922
        %7924 = vrot.lane.b32.xlu0 %v7808, 64
        %v7925 = vpop.permute.xlu0 %7924
        %7926 = vrot.lane.b32.xlu0 %v7817, 64
        %v7927 = vpop.permute.xlu0 %7926
        %7928 = vrot.lane.b32.xlu0 %v7826, 64
        %v7929 = vpop.permute.xlu0 %7928
        %7930 = vrot.lane.b32.xlu0 %v7835, 64
        %v7931 = vpop.permute.xlu0 %7930
        %7932 = vrot.lane.b32.xlu0 %v7844, 64
        %v7933 = vpop.permute.xlu0 %7932
        %7934 = vrot.lane.b32.xlu0 %v7853, 64
        %v7935 = vpop.permute.xlu0 %7934
        %vm7977 = vcmask 781824
        %7978 = vst.msk [vmem:[#allocation3] sm:$0xf] %vm7977, %v7855
        %7979 = vst.msk [vmem:[#allocation3 + $0xc] sm:$0xf] %vm7977, %v7857
        %7980 = vst.msk [vmem:[#allocation3 + $0x18] sm:$0xf] %vm7977, %v7859
        %7981 = vst.msk [vmem:[#allocation3 + $0x24] sm:$0xf] %vm7977, %v7861
        %7982 = vst.msk [vmem:[#allocation3 + $0x30] sm:$0xf] %vm7977, %v7863
        %7983 = vst.msk [vmem:[#allocation3 + $0x3c] sm:$0xf] %vm7977, %v7865
        %7984 = vst.msk [vmem:[#allocation3 + $0x48] sm:$0xf] %vm7977, %v7867
        %7985 = vst.msk [vmem:[#allocation3 + $0x54] sm:$0xf] %vm7977, %v7869
        %7986 = vst.msk [vmem:[#allocation3 + $0x60] sm:$0xf] %vm7977, %v7871
        %7987 = vst.msk [vmem:[#allocation3 + $0x6c] sm:$0xf] %vm7977, %v7873
        %7988 = vst.msk [vmem:[#allocation3 + $0x78] sm:$0xf] %vm7977, %v7875
        %7989 = vst.msk [vmem:[#allocation3 + $0x84] sm:$0xf] %vm7977, %v7877
        %7990 = vst.msk [vmem:[#allocation3 + $0x90] sm:$0xf] %vm7977, %v7879
        %7991 = vst.msk [vmem:[#allocation3 + $0x9c] sm:$0xf] %vm7977, %v7881
        %7992 = vst.msk [vmem:[#allocation3 + $0xa8] sm:$0xf] %vm7977, %v7883
        %7993 = vst.msk [vmem:[#allocation3 + $0xb4] sm:$0xf] %vm7977, %v7885
        %7994 = vst.msk [vmem:[#allocation3 + $0xc0] sm:$0xf] %vm7977, %v7887
        %7995 = vst.msk [vmem:[#allocation3 + $0xcc] sm:$0xf] %vm7977, %v7889
        %7996 = vst.msk [vmem:[#allocation3 + $0xd8] sm:$0xf] %vm7977, %v7891
        %7997 = vst.msk [vmem:[#allocation3 + $0xe4] sm:$0xf] %vm7977, %v7893
        %7998 = vst.msk [vmem:[#allocation3 + $0xf0] sm:$0xf] %vm7977, %v7895
        %7999 = vst.msk [vmem:[#allocation3 + $0xfc] sm:$0xf] %vm7977, %v7897
        %8000 = vst.msk [vmem:[#allocation3 + $0x108] sm:$0xf] %vm7977, %v7899
        %8001 = vst.msk [vmem:[#allocation3 + $0x114] sm:$0xf] %vm7977, %v7901
        %8002 = vst.msk [vmem:[#allocation3 + $0x120] sm:$0xf] %vm7977, %v7903
        %8003 = vst.msk [vmem:[#allocation3 + $0x12c] sm:$0xf] %vm7977, %v7905
        %8004 = vst.msk [vmem:[#allocation3 + $0x138] sm:$0xf] %vm7977, %v7907
        %8005 = vst.msk [vmem:[#allocation3 + $0x144] sm:$0xf] %vm7977, %v7909
        %8006 = vst.msk [vmem:[#allocation3 + $0x150] sm:$0xf] %vm7977, %v7911
        %8007 = vst.msk [vmem:[#allocation3 + $0x15c] sm:$0xf] %vm7977, %v7913
        %8008 = vst.msk [vmem:[#allocation3 + $0x168] sm:$0xf] %vm7977, %v7915
        %8009 = vst.msk [vmem:[#allocation3 + $0x174] sm:$0xf] %vm7977, %v7917
        %8010 = vst.msk [vmem:[#allocation3 + $0x180] sm:$0xf] %vm7977, %v7919
        %8011 = vst.msk [vmem:[#allocation3 + $0x18c] sm:$0xf] %vm7977, %v7921
        %8012 = vst.msk [vmem:[#allocation3 + $0x198] sm:$0xf] %vm7977, %v7923
        %8013 = vst.msk [vmem:[#allocation3 + $0x1a4] sm:$0xf] %vm7977, %v7925
        %8014 = vst.msk [vmem:[#allocation3 + $0x1b0] sm:$0xf] %vm7977, %v7927
        %8015 = vst.msk [vmem:[#allocation3 + $0x1bc] sm:$0xf] %vm7977, %v7929
        %8016 = vst.msk [vmem:[#allocation3 + $0x1c8] sm:$0xf] %vm7977, %v7931
        %8017 = vst.msk [vmem:[#allocation3 + $0x1d4] sm:$0xf] %vm7977, %v7933
        %8018 = vst.msk [vmem:[#allocation3 + $0x1e0] sm:$0xf] %vm7977, %v7935
        %v8019 = vld [vmem:[#allocation2 + $0x8] sm:$0x8]
        %v8020 = vld [vmem:[#allocation2 + $0xc] sm:$0xf]
        %v8021 = vld [vmem:[#allocation2 + $0x10] sm:$0xf]
        %v8022 = vld [vmem:[#allocation2 + $0x14] sm:$0xf]
        %v8023 = vld [vmem:[#allocation2 + $0x18] sm:$0xf]
        %v8024 = vld [vmem:[#allocation2 + $0x1c] sm:$0xf]
        %v8025 = vld [vmem:[#allocation2 + $0x20] sm:$0xf]
        %v8026 = vld [vmem:[#allocation2 + $0x24] sm:$0xf]
        %v8027 = vld [vmem:[#allocation2 + $0x28] sm:$0xf]
        %v8028 = vld [vmem:[#allocation2 + $0x2c] sm:$0xf]
        %v8029 = vld [vmem:[#allocation2 + $0x30] sm:$0xf]
        %v8030 = vld [vmem:[#allocation2 + $0x34] sm:$0xf]
        %v8031 = vld [vmem:[#allocation2 + $0x38] sm:$0xf]
        %v8032 = vld [vmem:[#allocation2 + $0x3c] sm:$0xf]
        %v8033 = vld [vmem:[#allocation2 + $0x40] sm:$0xf]
        %v8034 = vld [vmem:[#allocation2 + $0x44] sm:$0xf]
        %v8035 = vld [vmem:[#allocation2 + $0x48] sm:$0xf]
        %v8036 = vld [vmem:[#allocation2 + $0x4c] sm:$0xf]
        %v8037 = vld [vmem:[#allocation2 + $0x50] sm:$0xf]
        %v8038 = vld [vmem:[#allocation2 + $0x54] sm:$0xf]
        %v8039 = vld [vmem:[#allocation2 + $0x58] sm:$0xf]
        %v8040 = vld [vmem:[#allocation2 + $0x5c] sm:$0xf]
        %v8041 = vld [vmem:[#allocation2 + $0x60] sm:$0xf]
        %v8042 = vld [vmem:[#allocation2 + $0x64] sm:$0xf]
        %v8043 = vld [vmem:[#allocation2 + $0x68] sm:$0xf]
        %v8044 = vld [vmem:[#allocation2 + $0x6c] sm:$0xf]
        %v8045 = vld [vmem:[#allocation2 + $0x70] sm:$0xf]
        %v8046 = vld [vmem:[#allocation2 + $0x74] sm:$0xf]
        %v8047 = vld [vmem:[#allocation2 + $0x78] sm:$0xf]
        %v8048 = vld [vmem:[#allocation2 + $0x7c] sm:$0xf]
        %v8049 = vld [vmem:[#allocation2 + $0x80] sm:$0xf]
        %v8050 = vld [vmem:[#allocation2 + $0x84] sm:$0xf]
        %v8051 = vld [vmem:[#allocation2 + $0x88] sm:$0xf]
        %v8052 = vld [vmem:[#allocation2 + $0x8c] sm:$0xf]
        %v8053 = vld [vmem:[#allocation2 + $0x90] sm:$0xf]
        %v8054 = vld [vmem:[#allocation2 + $0x94] sm:$0xf]
        %v8055 = vld [vmem:[#allocation2 + $0x98] sm:$0xf]
        %v8056 = vld [vmem:[#allocation2 + $0x9c] sm:$0xf]
        %v8057 = vld [vmem:[#allocation2 + $0xa0] sm:$0xf]
        %v8058 = vld [vmem:[#allocation2 + $0xa4] sm:$0xf]
        %v8059 = vld [vmem:[#allocation2 + $0xa8] sm:$0xf]
        %v8060 = vld [vmem:[#allocation2 + $0xac] sm:$0xf]
        %v8062 = vshrl.u32 %v8019, 16
        %v8064 = vrot.slane %v8062, 7
        %v8065 = vrot.slane %v8064, 4
        %v8067 = vshrl.u32 %v8020, 16
        %v8069 = vrot.slane %v8067, 7
        %v8070 = vshll.u32 %v8020, 16
        %v8072 = vor.u32 %v8069, %v8070
        %v8073 = vsel %vm2234, %v8065, %v8072
        %v8074 = vrot.slane %v8069, 4
        %v8076 = vshrl.u32 %v8021, 16
        %v8078 = vrot.slane %v8076, 7
        %v8079 = vshll.u32 %v8021, 16
        %v8081 = vor.u32 %v8078, %v8079
        %v8082 = vsel %vm2234, %v8074, %v8081
        %v8083 = vrot.slane %v8078, 4
        %v8085 = vshrl.u32 %v8022, 16
        %v8087 = vrot.slane %v8085, 7
        %v8088 = vshll.u32 %v8022, 16
        %v8090 = vor.u32 %v8087, %v8088
        %v8091 = vsel %vm2234, %v8083, %v8090
        %v8092 = vrot.slane %v8087, 4
        %v8094 = vshrl.u32 %v8023, 16
        %v8096 = vrot.slane %v8094, 7
        %v8097 = vshll.u32 %v8023, 16
        %v8099 = vor.u32 %v8096, %v8097
        %v8100 = vsel %vm2234, %v8092, %v8099
        %v8101 = vrot.slane %v8096, 4
        %v8103 = vshrl.u32 %v8024, 16
        %v8105 = vrot.slane %v8103, 7
        %v8106 = vshll.u32 %v8024, 16
        %v8108 = vor.u32 %v8105, %v8106
        %v8109 = vsel %vm2234, %v8101, %v8108
        %v8110 = vrot.slane %v8105, 4
        %v8112 = vshrl.u32 %v8025, 16
        %v8114 = vrot.slane %v8112, 7
        %v8115 = vshll.u32 %v8025, 16
        %v8117 = vor.u32 %v8114, %v8115
        %v8118 = vsel %vm2234, %v8110, %v8117
        %v8119 = vrot.slane %v8114, 4
        %v8121 = vshrl.u32 %v8026, 16
        %v8123 = vrot.slane %v8121, 7
        %v8124 = vshll.u32 %v8026, 16
        %v8126 = vor.u32 %v8123, %v8124
        %v8127 = vsel %vm2234, %v8119, %v8126
        %v8128 = vrot.slane %v8123, 4
        %v8130 = vshrl.u32 %v8027, 16
        %v8132 = vrot.slane %v8130, 7
        %v8133 = vshll.u32 %v8027, 16
        %v8135 = vor.u32 %v8132, %v8133
        %v8136 = vsel %vm2234, %v8128, %v8135
        %v8137 = vrot.slane %v8132, 4
        %v8139 = vshrl.u32 %v8028, 16
        %v8141 = vrot.slane %v8139, 7
        %v8142 = vshll.u32 %v8028, 16
        %v8144 = vor.u32 %v8141, %v8142
        %v8145 = vsel %vm2234, %v8137, %v8144
        %v8146 = vrot.slane %v8141, 4
        %v8148 = vshrl.u32 %v8029, 16
        %v8150 = vrot.slane %v8148, 7
        %v8151 = vshll.u32 %v8029, 16
        %v8153 = vor.u32 %v8150, %v8151
        %v8154 = vsel %vm2234, %v8146, %v8153
        %v8155 = vrot.slane %v8150, 4
        %v8157 = vshrl.u32 %v8030, 16
        %v8159 = vrot.slane %v8157, 7
        %v8160 = vshll.u32 %v8030, 16
        %v8162 = vor.u32 %v8159, %v8160
        %v8163 = vsel %vm2234, %v8155, %v8162
        %v8164 = vrot.slane %v8159, 4
        %v8166 = vshrl.u32 %v8031, 16
        %v8168 = vrot.slane %v8166, 7
        %v8169 = vshll.u32 %v8031, 16
        %v8171 = vor.u32 %v8168, %v8169
        %v8172 = vsel %vm2234, %v8164, %v8171
        %v8173 = vrot.slane %v8168, 4
        %v8175 = vshrl.u32 %v8032, 16
        %v8177 = vrot.slane %v8175, 7
        %v8178 = vshll.u32 %v8032, 16
        %v8180 = vor.u32 %v8177, %v8178
        %v8181 = vsel %vm2234, %v8173, %v8180
        %v8182 = vrot.slane %v8177, 4
        %v8184 = vshrl.u32 %v8033, 16
        %v8186 = vrot.slane %v8184, 7
        %v8187 = vshll.u32 %v8033, 16
        %v8189 = vor.u32 %v8186, %v8187
        %v8190 = vsel %vm2234, %v8182, %v8189
        %v8191 = vrot.slane %v8186, 4
        %v8193 = vshrl.u32 %v8034, 16
        %v8195 = vrot.slane %v8193, 7
        %v8196 = vshll.u32 %v8034, 16
        %v8198 = vor.u32 %v8195, %v8196
        %v8199 = vsel %vm2234, %v8191, %v8198
        %v8200 = vrot.slane %v8195, 4
        %v8202 = vshrl.u32 %v8035, 16
        %v8204 = vrot.slane %v8202, 7
        %v8205 = vshll.u32 %v8035, 16
        %v8207 = vor.u32 %v8204, %v8205
        %v8208 = vsel %vm2234, %v8200, %v8207
        %v8209 = vrot.slane %v8204, 4
        %v8211 = vshrl.u32 %v8036, 16
        %v8213 = vrot.slane %v8211, 7
        %v8214 = vshll.u32 %v8036, 16
        %v8216 = vor.u32 %v8213, %v8214
        %v8217 = vsel %vm2234, %v8209, %v8216
        %v8218 = vrot.slane %v8213, 4
        %v8220 = vshrl.u32 %v8037, 16
        %v8222 = vrot.slane %v8220, 7
        %v8223 = vshll.u32 %v8037, 16
        %v8225 = vor.u32 %v8222, %v8223
        %v8226 = vsel %vm2234, %v8218, %v8225
        %v8227 = vrot.slane %v8222, 4
        %v8229 = vshrl.u32 %v8038, 16
        %v8231 = vrot.slane %v8229, 7
        %v8232 = vshll.u32 %v8038, 16
        %v8234 = vor.u32 %v8231, %v8232
        %v8235 = vsel %vm2234, %v8227, %v8234
        %v8236 = vrot.slane %v8231, 4
        %v8238 = vshrl.u32 %v8039, 16
        %v8240 = vrot.slane %v8238, 7
        %v8241 = vshll.u32 %v8039, 16
        %v8243 = vor.u32 %v8240, %v8241
        %v8244 = vsel %vm2234, %v8236, %v8243
        %v8245 = vrot.slane %v8240, 4
        %v8247 = vshrl.u32 %v8040, 16
        %v8249 = vrot.slane %v8247, 7
        %v8250 = vshll.u32 %v8040, 16
        %v8252 = vor.u32 %v8249, %v8250
        %v8253 = vsel %vm2234, %v8245, %v8252
        %v8254 = vrot.slane %v8249, 4
        %v8256 = vshrl.u32 %v8041, 16
        %v8258 = vrot.slane %v8256, 7
        %v8259 = vshll.u32 %v8041, 16
        %v8261 = vor.u32 %v8258, %v8259
        %v8262 = vsel %vm2234, %v8254, %v8261
        %v8263 = vrot.slane %v8258, 4
        %v8265 = vshrl.u32 %v8042, 16
        %v8267 = vrot.slane %v8265, 7
        %v8268 = vshll.u32 %v8042, 16
        %v8270 = vor.u32 %v8267, %v8268
        %v8271 = vsel %vm2234, %v8263, %v8270
        %v8272 = vrot.slane %v8267, 4
        %v8274 = vshrl.u32 %v8043, 16
        %v8276 = vrot.slane %v8274, 7
        %v8277 = vshll.u32 %v8043, 16
        %v8279 = vor.u32 %v8276, %v8277
        %v8280 = vsel %vm2234, %v8272, %v8279
        %v8281 = vrot.slane %v8276, 4
        %v8283 = vshrl.u32 %v8044, 16
        %v8285 = vrot.slane %v8283, 7
        %v8286 = vshll.u32 %v8044, 16
        %v8288 = vor.u32 %v8285, %v8286
        %v8289 = vsel %vm2234, %v8281, %v8288
        %v8290 = vrot.slane %v8285, 4
        %v8292 = vshrl.u32 %v8045, 16
        %v8294 = vrot.slane %v8292, 7
        %v8295 = vshll.u32 %v8045, 16
        %v8297 = vor.u32 %v8294, %v8295
        %v8298 = vsel %vm2234, %v8290, %v8297
        %v8299 = vrot.slane %v8294, 4
        %v8301 = vshrl.u32 %v8046, 16
        %v8303 = vrot.slane %v8301, 7
        %v8304 = vshll.u32 %v8046, 16
        %v8306 = vor.u32 %v8303, %v8304
        %v8307 = vsel %vm2234, %v8299, %v8306
        %v8308 = vrot.slane %v8303, 4
        %v8310 = vshrl.u32 %v8047, 16
        %v8312 = vrot.slane %v8310, 7
        %v8313 = vshll.u32 %v8047, 16
        %v8315 = vor.u32 %v8312, %v8313
        %v8316 = vsel %vm2234, %v8308, %v8315
        %v8317 = vrot.slane %v8312, 4
        %v8319 = vshrl.u32 %v8048, 16
        %v8321 = vrot.slane %v8319, 7
        %v8322 = vshll.u32 %v8048, 16
        %v8324 = vor.u32 %v8321, %v8322
        %v8325 = vsel %vm2234, %v8317, %v8324
        %v8326 = vrot.slane %v8321, 4
        %v8328 = vshrl.u32 %v8049, 16
        %v8330 = vrot.slane %v8328, 7
        %v8331 = vshll.u32 %v8049, 16
        %v8333 = vor.u32 %v8330, %v8331
        %v8334 = vsel %vm2234, %v8326, %v8333
        %v8335 = vrot.slane %v8330, 4
        %v8337 = vshrl.u32 %v8050, 16
        %v8339 = vrot.slane %v8337, 7
        %v8340 = vshll.u32 %v8050, 16
        %v8342 = vor.u32 %v8339, %v8340
        %v8343 = vsel %vm2234, %v8335, %v8342
        %v8344 = vrot.slane %v8339, 4
        %v8346 = vshrl.u32 %v8051, 16
        %v8348 = vrot.slane %v8346, 7
        %v8349 = vshll.u32 %v8051, 16
        %v8351 = vor.u32 %v8348, %v8349
        %v8352 = vsel %vm2234, %v8344, %v8351
        %v8353 = vrot.slane %v8348, 4
        %v8355 = vshrl.u32 %v8052, 16
        %v8357 = vrot.slane %v8355, 7
        %v8358 = vshll.u32 %v8052, 16
        %v8360 = vor.u32 %v8357, %v8358
        %v8361 = vsel %vm2234, %v8353, %v8360
        %v8362 = vrot.slane %v8357, 4
        %v8364 = vshrl.u32 %v8053, 16
        %v8366 = vrot.slane %v8364, 7
        %v8367 = vshll.u32 %v8053, 16
        %v8369 = vor.u32 %v8366, %v8367
        %v8370 = vsel %vm2234, %v8362, %v8369
        %v8371 = vrot.slane %v8366, 4
        %v8373 = vshrl.u32 %v8054, 16
        %v8375 = vrot.slane %v8373, 7
        %v8376 = vshll.u32 %v8054, 16
        %v8378 = vor.u32 %v8375, %v8376
        %v8379 = vsel %vm2234, %v8371, %v8378
        %v8380 = vrot.slane %v8375, 4
        %v8382 = vshrl.u32 %v8055, 16
        %v8384 = vrot.slane %v8382, 7
        %v8385 = vshll.u32 %v8055, 16
        %v8387 = vor.u32 %v8384, %v8385
        %v8388 = vsel %vm2234, %v8380, %v8387
        %v8389 = vrot.slane %v8384, 4
        %v8391 = vshrl.u32 %v8056, 16
        %v8393 = vrot.slane %v8391, 7
        %v8394 = vshll.u32 %v8056, 16
        %v8396 = vor.u32 %v8393, %v8394
        %v8397 = vsel %vm2234, %v8389, %v8396
        %v8398 = vrot.slane %v8393, 4
        %v8400 = vshrl.u32 %v8057, 16
        %v8402 = vrot.slane %v8400, 7
        %v8403 = vshll.u32 %v8057, 16
        %v8405 = vor.u32 %v8402, %v8403
        %v8406 = vsel %vm2234, %v8398, %v8405
        %v8407 = vrot.slane %v8402, 4
        %v8409 = vshrl.u32 %v8058, 16
        %v8411 = vrot.slane %v8409, 7
        %v8412 = vshll.u32 %v8058, 16
        %v8414 = vor.u32 %v8411, %v8412
        %v8415 = vsel %vm2234, %v8407, %v8414
        %v8416 = vrot.slane %v8411, 4
        %v8418 = vshrl.u32 %v8059, 16
        %v8420 = vrot.slane %v8418, 7
        %v8421 = vshll.u32 %v8059, 16
        %v8423 = vor.u32 %v8420, %v8421
        %v8424 = vsel %vm2234, %v8416, %v8423
        %v8425 = vrot.slane %v8420, 4
        %v8427 = vshrl.u32 %v8060, 16
        %v8429 = vrot.slane %v8427, 7
        %v8430 = vshll.u32 %v8060, 16
        %v8432 = vor.u32 %v8429, %v8430
        %v8433 = vsel %vm2234, %v8425, %v8432
        %8434 = vrot.lane.b32.xlu0 %v8073, 96
        %v8435 = vpop.permute.xlu0 %8434
        %8436 = vrot.lane.b32.xlu0 %v8082, 96
        %v8437 = vpop.permute.xlu0 %8436
        %8438 = vrot.lane.b32.xlu0 %v8091, 96
        %v8439 = vpop.permute.xlu0 %8438
        %8440 = vrot.lane.b32.xlu0 %v8100, 96
        %v8441 = vpop.permute.xlu0 %8440
        %8442 = vrot.lane.b32.xlu0 %v8109, 96
        %v8443 = vpop.permute.xlu0 %8442
        %8444 = vrot.lane.b32.xlu0 %v8118, 96
        %v8445 = vpop.permute.xlu0 %8444
        %8446 = vrot.lane.b32.xlu0 %v8127, 96
        %v8447 = vpop.permute.xlu0 %8446
        %8448 = vrot.lane.b32.xlu0 %v8136, 96
        %v8449 = vpop.permute.xlu0 %8448
        %8450 = vrot.lane.b32.xlu0 %v8145, 96
        %v8451 = vpop.permute.xlu0 %8450
        %8452 = vrot.lane.b32.xlu0 %v8154, 96
        %v8453 = vpop.permute.xlu0 %8452
        %8454 = vrot.lane.b32.xlu0 %v8163, 96
        %v8455 = vpop.permute.xlu0 %8454
        %8456 = vrot.lane.b32.xlu0 %v8172, 96
        %v8457 = vpop.permute.xlu0 %8456
        %8458 = vrot.lane.b32.xlu0 %v8181, 96
        %v8459 = vpop.permute.xlu0 %8458
        %8460 = vrot.lane.b32.xlu0 %v8190, 96
        %v8461 = vpop.permute.xlu0 %8460
        %8462 = vrot.lane.b32.xlu0 %v8199, 96
        %v8463 = vpop.permute.xlu0 %8462
        %8464 = vrot.lane.b32.xlu0 %v8208, 96
        %v8465 = vpop.permute.xlu0 %8464
        %8466 = vrot.lane.b32.xlu0 %v8217, 96
        %v8467 = vpop.permute.xlu0 %8466
        %8468 = vrot.lane.b32.xlu0 %v8226, 96
        %v8469 = vpop.permute.xlu0 %8468
        %8470 = vrot.lane.b32.xlu0 %v8235, 96
        %v8471 = vpop.permute.xlu0 %8470
        %8472 = vrot.lane.b32.xlu0 %v8244, 96
        %v8473 = vpop.permute.xlu0 %8472
        %8474 = vrot.lane.b32.xlu0 %v8253, 96
        %v8475 = vpop.permute.xlu0 %8474
        %8476 = vrot.lane.b32.xlu0 %v8262, 96
        %v8477 = vpop.permute.xlu0 %8476
        %8478 = vrot.lane.b32.xlu0 %v8271, 96
        %v8479 = vpop.permute.xlu0 %8478
        %8480 = vrot.lane.b32.xlu0 %v8280, 96
        %v8481 = vpop.permute.xlu0 %8480
        %8482 = vrot.lane.b32.xlu0 %v8289, 96
        %v8483 = vpop.permute.xlu0 %8482
        %8484 = vrot.lane.b32.xlu0 %v8298, 96
        %v8485 = vpop.permute.xlu0 %8484
        %8486 = vrot.lane.b32.xlu0 %v8307, 96
        %v8487 = vpop.permute.xlu0 %8486
        %8488 = vrot.lane.b32.xlu0 %v8316, 96
        %v8489 = vpop.permute.xlu0 %8488
        %8490 = vrot.lane.b32.xlu0 %v8325, 96
        %v8491 = vpop.permute.xlu0 %8490
        %8492 = vrot.lane.b32.xlu0 %v8334, 96
        %v8493 = vpop.permute.xlu0 %8492
        %8494 = vrot.lane.b32.xlu0 %v8343, 96
        %v8495 = vpop.permute.xlu0 %8494
        %8496 = vrot.lane.b32.xlu0 %v8352, 96
        %v8497 = vpop.permute.xlu0 %8496
        %8498 = vrot.lane.b32.xlu0 %v8361, 96
        %v8499 = vpop.permute.xlu0 %8498
        %8500 = vrot.lane.b32.xlu0 %v8370, 96
        %v8501 = vpop.permute.xlu0 %8500
        %8502 = vrot.lane.b32.xlu0 %v8379, 96
        %v8503 = vpop.permute.xlu0 %8502
        %8504 = vrot.lane.b32.xlu0 %v8388, 96
        %v8505 = vpop.permute.xlu0 %8504
        %8506 = vrot.lane.b32.xlu0 %v8397, 96
        %v8507 = vpop.permute.xlu0 %8506
        %8508 = vrot.lane.b32.xlu0 %v8406, 96
        %v8509 = vpop.permute.xlu0 %8508
        %8510 = vrot.lane.b32.xlu0 %v8415, 96
        %v8511 = vpop.permute.xlu0 %8510
        %8512 = vrot.lane.b32.xlu0 %v8424, 96
        %v8513 = vpop.permute.xlu0 %8512
        %8514 = vrot.lane.b32.xlu0 %v8433, 96
        %v8515 = vpop.permute.xlu0 %8514
        %vm8557 = vcmask 1044224
        %8558 = vst.msk [vmem:[#allocation3] sm:$0xf] %vm8557, %v8435
        %8559 = vst.msk [vmem:[#allocation3 + $0xc] sm:$0xf] %vm8557, %v8437
        %8560 = vst.msk [vmem:[#allocation3 + $0x18] sm:$0xf] %vm8557, %v8439
        %8561 = vst.msk [vmem:[#allocation3 + $0x24] sm:$0xf] %vm8557, %v8441
        %8562 = vst.msk [vmem:[#allocation3 + $0x30] sm:$0xf] %vm8557, %v8443
        %8563 = vst.msk [vmem:[#allocation3 + $0x3c] sm:$0xf] %vm8557, %v8445
        %8564 = vst.msk [vmem:[#allocation3 + $0x48] sm:$0xf] %vm8557, %v8447
        %8565 = vst.msk [vmem:[#allocation3 + $0x54] sm:$0xf] %vm8557, %v8449
        %8566 = vst.msk [vmem:[#allocation3 + $0x60] sm:$0xf] %vm8557, %v8451
        %8567 = vst.msk [vmem:[#allocation3 + $0x6c] sm:$0xf] %vm8557, %v8453
        %8568 = vst.msk [vmem:[#allocation3 + $0x78] sm:$0xf] %vm8557, %v8455
        %8569 = vst.msk [vmem:[#allocation3 + $0x84] sm:$0xf] %vm8557, %v8457
        %8570 = vst.msk [vmem:[#allocation3 + $0x90] sm:$0xf] %vm8557, %v8459
        %8571 = vst.msk [vmem:[#allocation3 + $0x9c] sm:$0xf] %vm8557, %v8461
        %8572 = vst.msk [vmem:[#allocation3 + $0xa8] sm:$0xf] %vm8557, %v8463
        %8573 = vst.msk [vmem:[#allocation3 + $0xb4] sm:$0xf] %vm8557, %v8465
        %8574 = vst.msk [vmem:[#allocation3 + $0xc0] sm:$0xf] %vm8557, %v8467
        %8575 = vst.msk [vmem:[#allocation3 + $0xcc] sm:$0xf] %vm8557, %v8469
        %8576 = vst.msk [vmem:[#allocation3 + $0xd8] sm:$0xf] %vm8557, %v8471
        %8577 = vst.msk [vmem:[#allocation3 + $0xe4] sm:$0xf] %vm8557, %v8473
        %8578 = vst.msk [vmem:[#allocation3 + $0xf0] sm:$0xf] %vm8557, %v8475
        %8579 = vst.msk [vmem:[#allocation3 + $0xfc] sm:$0xf] %vm8557, %v8477
        %8580 = vst.msk [vmem:[#allocation3 + $0x108] sm:$0xf] %vm8557, %v8479
        %8581 = vst.msk [vmem:[#allocation3 + $0x114] sm:$0xf] %vm8557, %v8481
        %8582 = vst.msk [vmem:[#allocation3 + $0x120] sm:$0xf] %vm8557, %v8483
        %8583 = vst.msk [vmem:[#allocation3 + $0x12c] sm:$0xf] %vm8557, %v8485
        %8584 = vst.msk [vmem:[#allocation3 + $0x138] sm:$0xf] %vm8557, %v8487
        %8585 = vst.msk [vmem:[#allocation3 + $0x144] sm:$0xf] %vm8557, %v8489
        %8586 = vst.msk [vmem:[#allocation3 + $0x150] sm:$0xf] %vm8557, %v8491
        %8587 = vst.msk [vmem:[#allocation3 + $0x15c] sm:$0xf] %vm8557, %v8493
        %8588 = vst.msk [vmem:[#allocation3 + $0x168] sm:$0xf] %vm8557, %v8495
        %8589 = vst.msk [vmem:[#allocation3 + $0x174] sm:$0xf] %vm8557, %v8497
        %8590 = vst.msk [vmem:[#allocation3 + $0x180] sm:$0xf] %vm8557, %v8499
        %8591 = vst.msk [vmem:[#allocation3 + $0x18c] sm:$0xf] %vm8557, %v8501
        %8592 = vst.msk [vmem:[#allocation3 + $0x198] sm:$0xf] %vm8557, %v8503
        %8593 = vst.msk [vmem:[#allocation3 + $0x1a4] sm:$0xf] %vm8557, %v8505
        %8594 = vst.msk [vmem:[#allocation3 + $0x1b0] sm:$0xf] %vm8557, %v8507
        %8595 = vst.msk [vmem:[#allocation3 + $0x1bc] sm:$0xf] %vm8557, %v8509
        %8596 = vst.msk [vmem:[#allocation3 + $0x1c8] sm:$0xf] %vm8557, %v8511
        %8597 = vst.msk [vmem:[#allocation3 + $0x1d4] sm:$0xf] %vm8557, %v8513
        %8598 = vst.msk [vmem:[#allocation3 + $0x1e0] sm:$0xf] %vm8557, %v8515
        %v8599 = vld [vmem:[#allocation2 + $0xc] sm:$0xf]
        %v8600 = vld [vmem:[#allocation2 + $0x10] sm:$0xf]
        %v8601 = vld [vmem:[#allocation2 + $0x14] sm:$0xf]
        %v8602 = vld [vmem:[#allocation2 + $0x18] sm:$0xf]
        %v8603 = vld [vmem:[#allocation2 + $0x1c] sm:$0xf]
        %v8604 = vld [vmem:[#allocation2 + $0x20] sm:$0xf]
        %v8605 = vld [vmem:[#allocation2 + $0x24] sm:$0xf]
        %v8606 = vld [vmem:[#allocation2 + $0x28] sm:$0xf]
        %v8607 = vld [vmem:[#allocation2 + $0x2c] sm:$0xf]
        %v8608 = vld [vmem:[#allocation2 + $0x30] sm:$0xf]
        %v8609 = vld [vmem:[#allocation2 + $0x34] sm:$0xf]
        %v8610 = vld [vmem:[#allocation2 + $0x38] sm:$0xf]
        %v8611 = vld [vmem:[#allocation2 + $0x3c] sm:$0xf]
        %v8612 = vld [vmem:[#allocation2 + $0x40] sm:$0xf]
        %v8613 = vld [vmem:[#allocation2 + $0x44] sm:$0xf]
        %v8614 = vld [vmem:[#allocation2 + $0x48] sm:$0xf]
        %v8615 = vld [vmem:[#allocation2 + $0x4c] sm:$0xf]
        %v8616 = vld [vmem:[#allocation2 + $0x50] sm:$0xf]
        %v8617 = vld [vmem:[#allocation2 + $0x54] sm:$0xf]
        %v8618 = vld [vmem:[#allocation2 + $0x58] sm:$0xf]
        %v8619 = vld [vmem:[#allocation2 + $0x5c] sm:$0xf]
        %v8620 = vld [vmem:[#allocation2 + $0x60] sm:$0xf]
        %v8621 = vld [vmem:[#allocation2 + $0x64] sm:$0xf]
        %v8622 = vld [vmem:[#allocation2 + $0x68] sm:$0xf]
        %v8623 = vld [vmem:[#allocation2 + $0x6c] sm:$0xf]
        %v8624 = vld [vmem:[#allocation2 + $0x70] sm:$0xf]
        %v8625 = vld [vmem:[#allocation2 + $0x74] sm:$0xf]
        %v8626 = vld [vmem:[#allocation2 + $0x78] sm:$0xf]
        %v8627 = vld [vmem:[#allocation2 + $0x7c] sm:$0xf]
        %v8628 = vld [vmem:[#allocation2 + $0x80] sm:$0xf]
        %v8629 = vld [vmem:[#allocation2 + $0x84] sm:$0xf]
        %v8630 = vld [vmem:[#allocation2 + $0x88] sm:$0xf]
        %v8631 = vld [vmem:[#allocation2 + $0x8c] sm:$0xf]
        %v8632 = vld [vmem:[#allocation2 + $0x90] sm:$0xf]
        %v8633 = vld [vmem:[#allocation2 + $0x94] sm:$0xf]
        %v8634 = vld [vmem:[#allocation2 + $0x98] sm:$0xf]
        %v8635 = vld [vmem:[#allocation2 + $0x9c] sm:$0xf]
        %v8636 = vld [vmem:[#allocation2 + $0xa0] sm:$0xf]
        %v8637 = vld [vmem:[#allocation2 + $0xa4] sm:$0xf]
        %v8638 = vld [vmem:[#allocation2 + $0xa8] sm:$0xf]
        %v8639 = vld [vmem:[#allocation2 + $0xac] sm:$0xf]
        %8640 = vst.msk [vmem:[#allocation3 + $0x4] sm:$0xf] %vm6482, %v8599
        %8641 = vst.msk [vmem:[#allocation3 + $0x10] sm:$0xf] %vm6482, %v8600
        %8642 = vst.msk [vmem:[#allocation3 + $0x1c] sm:$0xf] %vm6482, %v8601
        %8643 = vst.msk [vmem:[#allocation3 + $0x28] sm:$0xf] %vm6482, %v8602
        %8644 = vst.msk [vmem:[#allocation3 + $0x34] sm:$0xf] %vm6482, %v8603
        %8645 = vst.msk [vmem:[#allocation3 + $0x40] sm:$0xf] %vm6482, %v8604
        %8646 = vst.msk [vmem:[#allocation3 + $0x4c] sm:$0xf] %vm6482, %v8605
        %8647 = vst.msk [vmem:[#allocation3 + $0x58] sm:$0xf] %vm6482, %v8606
        %8648 = vst.msk [vmem:[#allocation3 + $0x64] sm:$0xf] %vm6482, %v8607
        %8649 = vst.msk [vmem:[#allocation3 + $0x70] sm:$0xf] %vm6482, %v8608
        %8650 = vst.msk [vmem:[#allocation3 + $0x7c] sm:$0xf] %vm6482, %v8609
        %8651 = vst.msk [vmem:[#allocation3 + $0x88] sm:$0xf] %vm6482, %v8610
        %8652 = vst.msk [vmem:[#allocation3 + $0x94] sm:$0xf] %vm6482, %v8611
        %8653 = vst.msk [vmem:[#allocation3 + $0xa0] sm:$0xf] %vm6482, %v8612
        %8654 = vst.msk [vmem:[#allocation3 + $0xac] sm:$0xf] %vm6482, %v8613
        %8655 = vst.msk [vmem:[#allocation3 + $0xb8] sm:$0xf] %vm6482, %v8614
        %8656 = vst.msk [vmem:[#allocation3 + $0xc4] sm:$0xf] %vm6482, %v8615
        %8657 = vst.msk [vmem:[#allocation3 + $0xd0] sm:$0xf] %vm6482, %v8616
        %8658 = vst.msk [vmem:[#allocation3 + $0xdc] sm:$0xf] %vm6482, %v8617
        %8659 = vst.msk [vmem:[#allocation3 + $0xe8] sm:$0xf] %vm6482, %v8618
        %8660 = vst.msk [vmem:[#allocation3 + $0xf4] sm:$0xf] %vm6482, %v8619
        %8661 = vst.msk [vmem:[#allocation3 + $0x100] sm:$0xf] %vm6482, %v8620
        %8662 = vst.msk [vmem:[#allocation3 + $0x10c] sm:$0xf] %vm6482, %v8621
        %8663 = vst.msk [vmem:[#allocation3 + $0x118] sm:$0xf] %vm6482, %v8622
        %8664 = vst.msk [vmem:[#allocation3 + $0x124] sm:$0xf] %vm6482, %v8623
        %8665 = vst.msk [vmem:[#allocation3 + $0x130] sm:$0xf] %vm6482, %v8624
        %8666 = vst.msk [vmem:[#allocation3 + $0x13c] sm:$0xf] %vm6482, %v8625
        %8667 = vst.msk [vmem:[#allocation3 + $0x148] sm:$0xf] %vm6482, %v8626
        %8668 = vst.msk [vmem:[#allocation3 + $0x154] sm:$0xf] %vm6482, %v8627
        %8669 = vst.msk [vmem:[#allocation3 + $0x160] sm:$0xf] %vm6482, %v8628
        %8670 = vst.msk [vmem:[#allocation3 + $0x16c] sm:$0xf] %vm6482, %v8629
        %8671 = vst.msk [vmem:[#allocation3 + $0x178] sm:$0xf] %vm6482, %v8630
        %8672 = vst.msk [vmem:[#allocation3 + $0x184] sm:$0xf] %vm6482, %v8631
        %8673 = vst.msk [vmem:[#allocation3 + $0x190] sm:$0xf] %vm6482, %v8632
        %8674 = vst.msk [vmem:[#allocation3 + $0x19c] sm:$0xf] %vm6482, %v8633
        %8675 = vst.msk [vmem:[#allocation3 + $0x1a8] sm:$0xf] %vm6482, %v8634
        %8676 = vst.msk [vmem:[#allocation3 + $0x1b4] sm:$0xf] %vm6482, %v8635
        %8677 = vst.msk [vmem:[#allocation3 + $0x1c0] sm:$0xf] %vm6482, %v8636
        %8678 = vst.msk [vmem:[#allocation3 + $0x1cc] sm:$0xf] %vm6482, %v8637
        %8679 = vst.msk [vmem:[#allocation3 + $0x1d8] sm:$0xf] %vm6482, %v8638
        %8680 = vst.msk [vmem:[#allocation3 + $0x1e4] sm:$0xf] %vm6482, %v8639
        %v8681 = vld [vmem:[#allocation2 + $0xc] sm:$0xf]
        %v8682 = vld [vmem:[#allocation2 + $0x10] sm:$0xf]
        %v8683 = vld [vmem:[#allocation2 + $0x14] sm:$0xf]
        %v8684 = vld [vmem:[#allocation2 + $0x18] sm:$0xf]
        %v8685 = vld [vmem:[#allocation2 + $0x1c] sm:$0xf]
        %v8686 = vld [vmem:[#allocation2 + $0x20] sm:$0xf]
        %v8687 = vld [vmem:[#allocation2 + $0x24] sm:$0xf]
        %v8688 = vld [vmem:[#allocation2 + $0x28] sm:$0xf]
        %v8689 = vld [vmem:[#allocation2 + $0x2c] sm:$0xf]
        %v8690 = vld [vmem:[#allocation2 + $0x30] sm:$0xf]
        %v8691 = vld [vmem:[#allocation2 + $0x34] sm:$0xf]
        %v8692 = vld [vmem:[#allocation2 + $0x38] sm:$0xf]
        %v8693 = vld [vmem:[#allocation2 + $0x3c] sm:$0xf]
        %v8694 = vld [vmem:[#allocation2 + $0x40] sm:$0xf]
        %v8695 = vld [vmem:[#allocation2 + $0x44] sm:$0xf]
        %v8696 = vld [vmem:[#allocation2 + $0x48] sm:$0xf]
        %v8697 = vld [vmem:[#allocation2 + $0x4c] sm:$0xf]
        %v8698 = vld [vmem:[#allocation2 + $0x50] sm:$0xf]
        %v8699 = vld [vmem:[#allocation2 + $0x54] sm:$0xf]
        %v8700 = vld [vmem:[#allocation2 + $0x58] sm:$0xf]
        %v8701 = vld [vmem:[#allocation2 + $0x5c] sm:$0xf]
        %v8702 = vld [vmem:[#allocation2 + $0x60] sm:$0xf]
        %v8703 = vld [vmem:[#allocation2 + $0x64] sm:$0xf]
        %v8704 = vld [vmem:[#allocation2 + $0x68] sm:$0xf]
        %v8705 = vld [vmem:[#allocation2 + $0x6c] sm:$0xf]
        %v8706 = vld [vmem:[#allocation2 + $0x70] sm:$0xf]
        %v8707 = vld [vmem:[#allocation2 + $0x74] sm:$0xf]
        %v8708 = vld [vmem:[#allocation2 + $0x78] sm:$0xf]
        %v8709 = vld [vmem:[#allocation2 + $0x7c] sm:$0xf]
        %v8710 = vld [vmem:[#allocation2 + $0x80] sm:$0xf]
        %v8711 = vld [vmem:[#allocation2 + $0x84] sm:$0xf]
        %v8712 = vld [vmem:[#allocation2 + $0x88] sm:$0xf]
        %v8713 = vld [vmem:[#allocation2 + $0x8c] sm:$0xf]
        %v8714 = vld [vmem:[#allocation2 + $0x90] sm:$0xf]
        %v8715 = vld [vmem:[#allocation2 + $0x94] sm:$0xf]
        %v8716 = vld [vmem:[#allocation2 + $0x98] sm:$0xf]
        %v8717 = vld [vmem:[#allocation2 + $0x9c] sm:$0xf]
        %v8718 = vld [vmem:[#allocation2 + $0xa0] sm:$0xf]
        %v8719 = vld [vmem:[#allocation2 + $0xa4] sm:$0xf]
        %v8720 = vld [vmem:[#allocation2 + $0xa8] sm:$0xf]
        %v8721 = vld [vmem:[#allocation2 + $0xac] sm:$0xf]
        %v8722 = vld [vmem:[#allocation2 + $0xb0] sm:$0x1]
        %v8724 = vshrl.u32 %v8681, 16
        %v8726 = vrot.slane %v8724, 4
        %v8727 = vshll.u32 %v8681, 16
        %v8729 = vrot.slane %v8727, 5
        %v8730 = vor.u32 %v8726, %v8729
        %v8731 = vrot.slane %v8730, 4
        %v8733 = vshll.u32 %v8682, 16
        %v8735 = vrot.slane %v8733, 5
        %v8736 = vsel %vm3644, %v8731, %v8735
        %v8737 = vshrl.u32 %v8682, 16
        %v8739 = vrot.slane %v8737, 4
        %v8740 = vor.u32 %v8739, %v8735
        %v8741 = vrot.slane %v8740, 4
        %v8743 = vshll.u32 %v8683, 16
        %v8745 = vrot.slane %v8743, 5
        %v8746 = vsel %vm3644, %v8741, %v8745
        %v8747 = vshrl.u32 %v8683, 16
        %v8749 = vrot.slane %v8747, 4
        %v8750 = vor.u32 %v8749, %v8745
        %v8751 = vrot.slane %v8750, 4
        %v8753 = vshll.u32 %v8684, 16
        %v8755 = vrot.slane %v8753, 5
        %v8756 = vsel %vm3644, %v8751, %v8755
        %v8757 = vshrl.u32 %v8684, 16
        %v8759 = vrot.slane %v8757, 4
        %v8760 = vor.u32 %v8759, %v8755
        %v8761 = vrot.slane %v8760, 4
        %v8763 = vshll.u32 %v8685, 16
        %v8765 = vrot.slane %v8763, 5
        %v8766 = vsel %vm3644, %v8761, %v8765
        %v8767 = vshrl.u32 %v8685, 16
        %v8769 = vrot.slane %v8767, 4
        %v8770 = vor.u32 %v8769, %v8765
        %v8771 = vrot.slane %v8770, 4
        %v8773 = vshll.u32 %v8686, 16
        %v8775 = vrot.slane %v8773, 5
        %v8776 = vsel %vm3644, %v8771, %v8775
        %v8777 = vshrl.u32 %v8686, 16
        %v8779 = vrot.slane %v8777, 4
        %v8780 = vor.u32 %v8779, %v8775
        %v8781 = vrot.slane %v8780, 4
        %v8783 = vshll.u32 %v8687, 16
        %v8785 = vrot.slane %v8783, 5
        %v8786 = vsel %vm3644, %v8781, %v8785
        %v8787 = vshrl.u32 %v8687, 16
        %v8789 = vrot.slane %v8787, 4
        %v8790 = vor.u32 %v8789, %v8785
        %v8791 = vrot.slane %v8790, 4
        %v8793 = vshll.u32 %v8688, 16
        %v8795 = vrot.slane %v8793, 5
        %v8796 = vsel %vm3644, %v8791, %v8795
        %v8797 = vshrl.u32 %v8688, 16
        %v8799 = vrot.slane %v8797, 4
        %v8800 = vor.u32 %v8799, %v8795
        %v8801 = vrot.slane %v8800, 4
        %v8803 = vshll.u32 %v8689, 16
        %v8805 = vrot.slane %v8803, 5
        %v8806 = vsel %vm3644, %v8801, %v8805
        %v8807 = vshrl.u32 %v8689, 16
        %v8809 = vrot.slane %v8807, 4
        %v8810 = vor.u32 %v8809, %v8805
        %v8811 = vrot.slane %v8810, 4
        %v8813 = vshll.u32 %v8690, 16
        %v8815 = vrot.slane %v8813, 5
        %v8816 = vsel %vm3644, %v8811, %v8815
        %v8817 = vshrl.u32 %v8690, 16
        %v8819 = vrot.slane %v8817, 4
        %v8820 = vor.u32 %v8819, %v8815
        %v8821 = vrot.slane %v8820, 4
        %v8823 = vshll.u32 %v8691, 16
        %v8825 = vrot.slane %v8823, 5
        %v8826 = vsel %vm3644, %v8821, %v8825
        %v8827 = vshrl.u32 %v8691, 16
        %v8829 = vrot.slane %v8827, 4
        %v8830 = vor.u32 %v8829, %v8825
        %v8831 = vrot.slane %v8830, 4
        %v8833 = vshll.u32 %v8692, 16
        %v8835 = vrot.slane %v8833, 5
        %v8836 = vsel %vm3644, %v8831, %v8835
        %v8837 = vshrl.u32 %v8692, 16
        %v8839 = vrot.slane %v8837, 4
        %v8840 = vor.u32 %v8839, %v8835
        %v8841 = vrot.slane %v8840, 4
        %v8843 = vshll.u32 %v8693, 16
        %v8845 = vrot.slane %v8843, 5
        %v8846 = vsel %vm3644, %v8841, %v8845
        %v8847 = vshrl.u32 %v8693, 16
        %v8849 = vrot.slane %v8847, 4
        %v8850 = vor.u32 %v8849, %v8845
        %v8851 = vrot.slane %v8850, 4
        %v8853 = vshll.u32 %v8694, 16
        %v8855 = vrot.slane %v8853, 5
        %v8856 = vsel %vm3644, %v8851, %v8855
        %v8857 = vshrl.u32 %v8694, 16
        %v8859 = vrot.slane %v8857, 4
        %v8860 = vor.u32 %v8859, %v8855
        %v8861 = vrot.slane %v8860, 4
        %v8863 = vshll.u32 %v8695, 16
        %v8865 = vrot.slane %v8863, 5
        %v8866 = vsel %vm3644, %v8861, %v8865
        %v8867 = vshrl.u32 %v8695, 16
        %v8869 = vrot.slane %v8867, 4
        %v8870 = vor.u32 %v8869, %v8865
        %v8871 = vrot.slane %v8870, 4
        %v8873 = vshll.u32 %v8696, 16
        %v8875 = vrot.slane %v8873, 5
        %v8876 = vsel %vm3644, %v8871, %v8875
        %v8877 = vshrl.u32 %v8696, 16
        %v8879 = vrot.slane %v8877, 4
        %v8880 = vor.u32 %v8879, %v8875
        %v8881 = vrot.slane %v8880, 4
        %v8883 = vshll.u32 %v8697, 16
        %v8885 = vrot.slane %v8883, 5
        %v8886 = vsel %vm3644, %v8881, %v8885
        %v8887 = vshrl.u32 %v8697, 16
        %v8889 = vrot.slane %v8887, 4
        %v8890 = vor.u32 %v8889, %v8885
        %v8891 = vrot.slane %v8890, 4
        %v8893 = vshll.u32 %v8698, 16
        %v8895 = vrot.slane %v8893, 5
        %v8896 = vsel %vm3644, %v8891, %v8895
        %v8897 = vshrl.u32 %v8698, 16
        %v8899 = vrot.slane %v8897, 4
        %v8900 = vor.u32 %v8899, %v8895
        %v8901 = vrot.slane %v8900, 4
        %v8903 = vshll.u32 %v8699, 16
        %v8905 = vrot.slane %v8903, 5
        %v8906 = vsel %vm3644, %v8901, %v8905
        %v8907 = vshrl.u32 %v8699, 16
        %v8909 = vrot.slane %v8907, 4
        %v8910 = vor.u32 %v8909, %v8905
        %v8911 = vrot.slane %v8910, 4
        %v8913 = vshll.u32 %v8700, 16
        %v8915 = vrot.slane %v8913, 5
        %v8916 = vsel %vm3644, %v8911, %v8915
        %v8917 = vshrl.u32 %v8700, 16
        %v8919 = vrot.slane %v8917, 4
        %v8920 = vor.u32 %v8919, %v8915
        %v8921 = vrot.slane %v8920, 4
        %v8923 = vshll.u32 %v8701, 16
        %v8925 = vrot.slane %v8923, 5
        %v8926 = vsel %vm3644, %v8921, %v8925
        %v8927 = vshrl.u32 %v8701, 16
        %v8929 = vrot.slane %v8927, 4
        %v8930 = vor.u32 %v8929, %v8925
        %v8931 = vrot.slane %v8930, 4
        %v8933 = vshll.u32 %v8702, 16
        %v8935 = vrot.slane %v8933, 5
        %v8936 = vsel %vm3644, %v8931, %v8935
        %v8937 = vshrl.u32 %v8702, 16
        %v8939 = vrot.slane %v8937, 4
        %v8940 = vor.u32 %v8939, %v8935
        %v8941 = vrot.slane %v8940, 4
        %v8943 = vshll.u32 %v8703, 16
        %v8945 = vrot.slane %v8943, 5
        %v8946 = vsel %vm3644, %v8941, %v8945
        %v8947 = vshrl.u32 %v8703, 16
        %v8949 = vrot.slane %v8947, 4
        %v8950 = vor.u32 %v8949, %v8945
        %v8951 = vrot.slane %v8950, 4
        %v8953 = vshll.u32 %v8704, 16
        %v8955 = vrot.slane %v8953, 5
        %v8956 = vsel %vm3644, %v8951, %v8955
        %v8957 = vshrl.u32 %v8704, 16
        %v8959 = vrot.slane %v8957, 4
        %v8960 = vor.u32 %v8959, %v8955
        %v8961 = vrot.slane %v8960, 4
        %v8963 = vshll.u32 %v8705, 16
        %v8965 = vrot.slane %v8963, 5
        %v8966 = vsel %vm3644, %v8961, %v8965
        %v8967 = vshrl.u32 %v8705, 16
        %v8969 = vrot.slane %v8967, 4
        %v8970 = vor.u32 %v8969, %v8965
        %v8971 = vrot.slane %v8970, 4
        %v8973 = vshll.u32 %v8706, 16
        %v8975 = vrot.slane %v8973, 5
        %v8976 = vsel %vm3644, %v8971, %v8975
        %v8977 = vshrl.u32 %v8706, 16
        %v8979 = vrot.slane %v8977, 4
        %v8980 = vor.u32 %v8979, %v8975
        %v8981 = vrot.slane %v8980, 4
        %v8983 = vshll.u32 %v8707, 16
        %v8985 = vrot.slane %v8983, 5
        %v8986 = vsel %vm3644, %v8981, %v8985
        %v8987 = vshrl.u32 %v8707, 16
        %v8989 = vrot.slane %v8987, 4
        %v8990 = vor.u32 %v8989, %v8985
        %v8991 = vrot.slane %v8990, 4
        %v8993 = vshll.u32 %v8708, 16
        %v8995 = vrot.slane %v8993, 5
        %v8996 = vsel %vm3644, %v8991, %v8995
        %v8997 = vshrl.u32 %v8708, 16
        %v8999 = vrot.slane %v8997, 4
        %v9000 = vor.u32 %v8999, %v8995
        %v9001 = vrot.slane %v9000, 4
        %v9003 = vshll.u32 %v8709, 16
        %v9005 = vrot.slane %v9003, 5
        %v9006 = vsel %vm3644, %v9001, %v9005
        %v9007 = vshrl.u32 %v8709, 16
        %v9009 = vrot.slane %v9007, 4
        %v9010 = vor.u32 %v9009, %v9005
        %v9011 = vrot.slane %v9010, 4
        %v9013 = vshll.u32 %v8710, 16
        %v9015 = vrot.slane %v9013, 5
        %v9016 = vsel %vm3644, %v9011, %v9015
        %v9017 = vshrl.u32 %v8710, 16
        %v9019 = vrot.slane %v9017, 4
        %v9020 = vor.u32 %v9019, %v9015
        %v9021 = vrot.slane %v9020, 4
        %v9023 = vshll.u32 %v8711, 16
        %v9025 = vrot.slane %v9023, 5
        %v9026 = vsel %vm3644, %v9021, %v9025
        %v9027 = vshrl.u32 %v8711, 16
        %v9029 = vrot.slane %v9027, 4
        %v9030 = vor.u32 %v9029, %v9025
        %v9031 = vrot.slane %v9030, 4
        %v9033 = vshll.u32 %v8712, 16
        %v9035 = vrot.slane %v9033, 5
        %v9036 = vsel %vm3644, %v9031, %v9035
        %v9037 = vshrl.u32 %v8712, 16
        %v9039 = vrot.slane %v9037, 4
        %v9040 = vor.u32 %v9039, %v9035
        %v9041 = vrot.slane %v9040, 4
        %v9043 = vshll.u32 %v8713, 16
        %v9045 = vrot.slane %v9043, 5
        %v9046 = vsel %vm3644, %v9041, %v9045
        %v9047 = vshrl.u32 %v8713, 16
        %v9049 = vrot.slane %v9047, 4
        %v9050 = vor.u32 %v9049, %v9045
        %v9051 = vrot.slane %v9050, 4
        %v9053 = vshll.u32 %v8714, 16
        %v9055 = vrot.slane %v9053, 5
        %v9056 = vsel %vm3644, %v9051, %v9055
        %v9057 = vshrl.u32 %v8714, 16
        %v9059 = vrot.slane %v9057, 4
        %v9060 = vor.u32 %v9059, %v9055
        %v9061 = vrot.slane %v9060, 4
        %v9063 = vshll.u32 %v8715, 16
        %v9065 = vrot.slane %v9063, 5
        %v9066 = vsel %vm3644, %v9061, %v9065
        %v9067 = vshrl.u32 %v8715, 16
        %v9069 = vrot.slane %v9067, 4
        %v9070 = vor.u32 %v9069, %v9065
        %v9071 = vrot.slane %v9070, 4
        %v9073 = vshll.u32 %v8716, 16
        %v9075 = vrot.slane %v9073, 5
        %v9076 = vsel %vm3644, %v9071, %v9075
        %v9077 = vshrl.u32 %v8716, 16
        %v9079 = vrot.slane %v9077, 4
        %v9080 = vor.u32 %v9079, %v9075
        %v9081 = vrot.slane %v9080, 4
        %v9083 = vshll.u32 %v8717, 16
        %v9085 = vrot.slane %v9083, 5
        %v9086 = vsel %vm3644, %v9081, %v9085
        %v9087 = vshrl.u32 %v8717, 16
        %v9089 = vrot.slane %v9087, 4
        %v9090 = vor.u32 %v9089, %v9085
        %v9091 = vrot.slane %v9090, 4
        %v9093 = vshll.u32 %v8718, 16
        %v9095 = vrot.slane %v9093, 5
        %v9096 = vsel %vm3644, %v9091, %v9095
        %v9097 = vshrl.u32 %v8718, 16
        %v9099 = vrot.slane %v9097, 4
        %v9100 = vor.u32 %v9099, %v9095
        %v9101 = vrot.slane %v9100, 4
        %v9103 = vshll.u32 %v8719, 16
        %v9105 = vrot.slane %v9103, 5
        %v9106 = vsel %vm3644, %v9101, %v9105
        %v9107 = vshrl.u32 %v8719, 16
        %v9109 = vrot.slane %v9107, 4
        %v9110 = vor.u32 %v9109, %v9105
        %v9111 = vrot.slane %v9110, 4
        %v9113 = vshll.u32 %v8720, 16
        %v9115 = vrot.slane %v9113, 5
        %v9116 = vsel %vm3644, %v9111, %v9115
        %v9117 = vshrl.u32 %v8720, 16
        %v9119 = vrot.slane %v9117, 4
        %v9120 = vor.u32 %v9119, %v9115
        %v9121 = vrot.slane %v9120, 4
        %v9123 = vshll.u32 %v8721, 16
        %v9125 = vrot.slane %v9123, 5
        %v9126 = vsel %vm3644, %v9121, %v9125
        %v9127 = vshrl.u32 %v8721, 16
        %v9129 = vrot.slane %v9127, 4
        %v9130 = vor.u32 %v9129, %v9125
        %v9131 = vrot.slane %v9130, 4
        %v9133 = vshll.u32 %v8722, 16
        %v9135 = vrot.slane %v9133, 5
        %v9136 = vsel %vm3644, %v9131, %v9135
        %9137 = vrot.lane.b32.xlu0 %v8736, 32
        %v9138 = vpop.permute.xlu0 %9137
        %9139 = vrot.lane.b32.xlu0 %v8746, 32
        %v9140 = vpop.permute.xlu0 %9139
        %9141 = vrot.lane.b32.xlu0 %v8756, 32
        %v9142 = vpop.permute.xlu0 %9141
        %9143 = vrot.lane.b32.xlu0 %v8766, 32
        %v9144 = vpop.permute.xlu0 %9143
        %9145 = vrot.lane.b32.xlu0 %v8776, 32
        %v9146 = vpop.permute.xlu0 %9145
        %9147 = vrot.lane.b32.xlu0 %v8786, 32
        %v9148 = vpop.permute.xlu0 %9147
        %9149 = vrot.lane.b32.xlu0 %v8796, 32
        %v9150 = vpop.permute.xlu0 %9149
        %9151 = vrot.lane.b32.xlu0 %v8806, 32
        %v9152 = vpop.permute.xlu0 %9151
        %9153 = vrot.lane.b32.xlu0 %v8816, 32
        %v9154 = vpop.permute.xlu0 %9153
        %9155 = vrot.lane.b32.xlu0 %v8826, 32
        %v9156 = vpop.permute.xlu0 %9155
        %9157 = vrot.lane.b32.xlu0 %v8836, 32
        %v9158 = vpop.permute.xlu0 %9157
        %9159 = vrot.lane.b32.xlu0 %v8846, 32
        %v9160 = vpop.permute.xlu0 %9159
        %9161 = vrot.lane.b32.xlu0 %v8856, 32
        %v9162 = vpop.permute.xlu0 %9161
        %9163 = vrot.lane.b32.xlu0 %v8866, 32
        %v9164 = vpop.permute.xlu0 %9163
        %9165 = vrot.lane.b32.xlu0 %v8876, 32
        %v9166 = vpop.permute.xlu0 %9165
        %9167 = vrot.lane.b32.xlu0 %v8886, 32
        %v9168 = vpop.permute.xlu0 %9167
        %9169 = vrot.lane.b32.xlu0 %v8896, 32
        %v9170 = vpop.permute.xlu0 %9169
        %9171 = vrot.lane.b32.xlu0 %v8906, 32
        %v9172 = vpop.permute.xlu0 %9171
        %9173 = vrot.lane.b32.xlu0 %v8916, 32
        %v9174 = vpop.permute.xlu0 %9173
        %9175 = vrot.lane.b32.xlu0 %v8926, 32
        %v9176 = vpop.permute.xlu0 %9175
        %9177 = vrot.lane.b32.xlu0 %v8936, 32
        %v9178 = vpop.permute.xlu0 %9177
        %9179 = vrot.lane.b32.xlu0 %v8946, 32
        %v9180 = vpop.permute.xlu0 %9179
        %9181 = vrot.lane.b32.xlu0 %v8956, 32
        %v9182 = vpop.permute.xlu0 %9181
        %9183 = vrot.lane.b32.xlu0 %v8966, 32
        %v9184 = vpop.permute.xlu0 %9183
        %9185 = vrot.lane.b32.xlu0 %v8976, 32
        %v9186 = vpop.permute.xlu0 %9185
        %9187 = vrot.lane.b32.xlu0 %v8986, 32
        %v9188 = vpop.permute.xlu0 %9187
        %9189 = vrot.lane.b32.xlu0 %v8996, 32
        %v9190 = vpop.permute.xlu0 %9189
        %9191 = vrot.lane.b32.xlu0 %v9006, 32
        %v9192 = vpop.permute.xlu0 %9191
        %9193 = vrot.lane.b32.xlu0 %v9016, 32
        %v9194 = vpop.permute.xlu0 %9193
        %9195 = vrot.lane.b32.xlu0 %v9026, 32
        %v9196 = vpop.permute.xlu0 %9195
        %9197 = vrot.lane.b32.xlu0 %v9036, 32
        %v9198 = vpop.permute.xlu0 %9197
        %9199 = vrot.lane.b32.xlu0 %v9046, 32
        %v9200 = vpop.permute.xlu0 %9199
        %9201 = vrot.lane.b32.xlu0 %v9056, 32
        %v9202 = vpop.permute.xlu0 %9201
        %9203 = vrot.lane.b32.xlu0 %v9066, 32
        %v9204 = vpop.permute.xlu0 %9203
        %9205 = vrot.lane.b32.xlu0 %v9076, 32
        %v9206 = vpop.permute.xlu0 %9205
        %9207 = vrot.lane.b32.xlu0 %v9086, 32
        %v9208 = vpop.permute.xlu0 %9207
        %9209 = vrot.lane.b32.xlu0 %v9096, 32
        %v9210 = vpop.permute.xlu0 %9209
        %9211 = vrot.lane.b32.xlu0 %v9106, 32
        %v9212 = vpop.permute.xlu0 %9211
        %9213 = vrot.lane.b32.xlu0 %v9116, 32
        %v9214 = vpop.permute.xlu0 %9213
        %9215 = vrot.lane.b32.xlu0 %v9126, 32
        %v9216 = vpop.permute.xlu0 %9215
        %9217 = vrot.lane.b32.xlu0 %v9136, 32
        %v9218 = vpop.permute.xlu0 %9217
        %9260 = vst.msk [vmem:[#allocation3 + $0x4] sm:$0xf] %vm7397, %v9138
        %9261 = vst.msk [vmem:[#allocation3 + $0x10] sm:$0xf] %vm7397, %v9140
        %9262 = vst.msk [vmem:[#allocation3 + $0x1c] sm:$0xf] %vm7397, %v9142
        %9263 = vst.msk [vmem:[#allocation3 + $0x28] sm:$0xf] %vm7397, %v9144
        %9264 = vst.msk [vmem:[#allocation3 + $0x34] sm:$0xf] %vm7397, %v9146
        %9265 = vst.msk [vmem:[#allocation3 + $0x40] sm:$0xf] %vm7397, %v9148
        %9266 = vst.msk [vmem:[#allocation3 + $0x4c] sm:$0xf] %vm7397, %v9150
        %9267 = vst.msk [vmem:[#allocation3 + $0x58] sm:$0xf] %vm7397, %v9152
        %9268 = vst.msk [vmem:[#allocation3 + $0x64] sm:$0xf] %vm7397, %v9154
        %9269 = vst.msk [vmem:[#allocation3 + $0x70] sm:$0xf] %vm7397, %v9156
        %9270 = vst.msk [vmem:[#allocation3 + $0x7c] sm:$0xf] %vm7397, %v9158
        %9271 = vst.msk [vmem:[#allocation3 + $0x88] sm:$0xf] %vm7397, %v9160
        %9272 = vst.msk [vmem:[#allocation3 + $0x94] sm:$0xf] %vm7397, %v9162
        %9273 = vst.msk [vmem:[#allocation3 + $0xa0] sm:$0xf] %vm7397, %v9164
        %9274 = vst.msk [vmem:[#allocation3 + $0xac] sm:$0xf] %vm7397, %v9166
        %9275 = vst.msk [vmem:[#allocation3 + $0xb8] sm:$0xf] %vm7397, %v9168
        %9276 = vst.msk [vmem:[#allocation3 + $0xc4] sm:$0xf] %vm7397, %v9170
        %9277 = vst.msk [vmem:[#allocation3 + $0xd0] sm:$0xf] %vm7397, %v9172
        %9278 = vst.msk [vmem:[#allocation3 + $0xdc] sm:$0xf] %vm7397, %v9174
        %9279 = vst.msk [vmem:[#allocation3 + $0xe8] sm:$0xf] %vm7397, %v9176
        %9280 = vst.msk [vmem:[#allocation3 + $0xf4] sm:$0xf] %vm7397, %v9178
        %9281 = vst.msk [vmem:[#allocation3 + $0x100] sm:$0xf] %vm7397, %v9180
        %9282 = vst.msk [vmem:[#allocation3 + $0x10c] sm:$0xf] %vm7397, %v9182
        %9283 = vst.msk [vmem:[#allocation3 + $0x118] sm:$0xf] %vm7397, %v9184
        %9284 = vst.msk [vmem:[#allocation3 + $0x124] sm:$0xf] %vm7397, %v9186
        %9285 = vst.msk [vmem:[#allocation3 + $0x130] sm:$0xf] %vm7397, %v9188
        %9286 = vst.msk [vmem:[#allocation3 + $0x13c] sm:$0xf] %vm7397, %v9190
        %9287 = vst.msk [vmem:[#allocation3 + $0x148] sm:$0xf] %vm7397, %v9192
        %9288 = vst.msk [vmem:[#allocation3 + $0x154] sm:$0xf] %vm7397, %v9194
        %9289 = vst.msk [vmem:[#allocation3 + $0x160] sm:$0xf] %vm7397, %v9196
        %9290 = vst.msk [vmem:[#allocation3 + $0x16c] sm:$0xf] %vm7397, %v9198
        %9291 = vst.msk [vmem:[#allocation3 + $0x178] sm:$0xf] %vm7397, %v9200
        %9292 = vst.msk [vmem:[#allocation3 + $0x184] sm:$0xf] %vm7397, %v9202
        %9293 = vst.msk [vmem:[#allocation3 + $0x190] sm:$0xf] %vm7397, %v9204
        %9294 = vst.msk [vmem:[#allocation3 + $0x19c] sm:$0xf] %vm7397, %v9206
        %9295 = vst.msk [vmem:[#allocation3 + $0x1a8] sm:$0xf] %vm7397, %v9208
        %9296 = vst.msk [vmem:[#allocation3 + $0x1b4] sm:$0xf] %vm7397, %v9210
        %9297 = vst.msk [vmem:[#allocation3 + $0x1c0] sm:$0xf] %vm7397, %v9212
        %9298 = vst.msk [vmem:[#allocation3 + $0x1cc] sm:$0xf] %vm7397, %v9214
        %9299 = vst.msk [vmem:[#allocation3 + $0x1d8] sm:$0xf] %vm7397, %v9216
        %9300 = vst.msk [vmem:[#allocation3 + $0x1e4] sm:$0xf] %vm7397, %v9218
        %v9301 = vld [vmem:[#allocation2 + $0x14] sm:$0xf]
        %v9302 = vld [vmem:[#allocation2 + $0x18] sm:$0xf]
        %v9303 = vld [vmem:[#allocation2 + $0x1c] sm:$0xf]
        %v9304 = vld [vmem:[#allocation2 + $0x20] sm:$0xf]
        %v9305 = vld [vmem:[#allocation2 + $0x24] sm:$0xf]
        %v9306 = vld [vmem:[#allocation2 + $0x28] sm:$0xf]
        %v9307 = vld [vmem:[#allocation2 + $0x2c] sm:$0xf]
        %v9308 = vld [vmem:[#allocation2 + $0x30] sm:$0xf]
        %v9309 = vld [vmem:[#allocation2 + $0x34] sm:$0xf]
        %v9310 = vld [vmem:[#allocation2 + $0x38] sm:$0xf]
        %v9311 = vld [vmem:[#allocation2 + $0x3c] sm:$0xf]
        %v9312 = vld [vmem:[#allocation2 + $0x40] sm:$0xf]
        %v9313 = vld [vmem:[#allocation2 + $0x44] sm:$0xf]
        %v9314 = vld [vmem:[#allocation2 + $0x48] sm:$0xf]
        %v9315 = vld [vmem:[#allocation2 + $0x4c] sm:$0xf]
        %v9316 = vld [vmem:[#allocation2 + $0x50] sm:$0xf]
        %v9317 = vld [vmem:[#allocation2 + $0x54] sm:$0xf]
        %v9318 = vld [vmem:[#allocation2 + $0x58] sm:$0xf]
        %v9319 = vld [vmem:[#allocation2 + $0x5c] sm:$0xf]
        %v9320 = vld [vmem:[#allocation2 + $0x60] sm:$0xf]
        %v9321 = vld [vmem:[#allocation2 + $0x64] sm:$0xf]
        %v9322 = vld [vmem:[#allocation2 + $0x68] sm:$0xf]
        %v9323 = vld [vmem:[#allocation2 + $0x6c] sm:$0xf]
        %v9324 = vld [vmem:[#allocation2 + $0x70] sm:$0xf]
        %v9325 = vld [vmem:[#allocation2 + $0x74] sm:$0xf]
        %v9326 = vld [vmem:[#allocation2 + $0x78] sm:$0xf]
        %v9327 = vld [vmem:[#allocation2 + $0x7c] sm:$0xf]
        %v9328 = vld [vmem:[#allocation2 + $0x80] sm:$0xf]
        %v9329 = vld [vmem:[#allocation2 + $0x84] sm:$0xf]
        %v9330 = vld [vmem:[#allocation2 + $0x88] sm:$0xf]
        %v9331 = vld [vmem:[#allocation2 + $0x8c] sm:$0xf]
        %v9332 = vld [vmem:[#allocation2 + $0x90] sm:$0xf]
        %v9333 = vld [vmem:[#allocation2 + $0x94] sm:$0xf]
        %v9334 = vld [vmem:[#allocation2 + $0x98] sm:$0xf]
        %v9335 = vld [vmem:[#allocation2 + $0x9c] sm:$0xf]
        %v9336 = vld [vmem:[#allocation2 + $0xa0] sm:$0xf]
        %v9337 = vld [vmem:[#allocation2 + $0xa4] sm:$0xf]
        %v9338 = vld [vmem:[#allocation2 + $0xa8] sm:$0xf]
        %v9339 = vld [vmem:[#allocation2 + $0xac] sm:$0xf]
        %v9340 = vld [vmem:[#allocation2 + $0xb0] sm:$0xf]
        %v9341 = vld [vmem:[#allocation2 + $0xb4] sm:$0xf]
        %v9342 = vld [vmem:[#allocation2 + $0xb8] sm:$0x1]
        %v9344 = vshrl.u32 %v9301, 16
        %v9346 = vrot.slane %v9344, 4
        %v9347 = vshll.u32 %v9301, 16
        %v9349 = vrot.slane %v9347, 5
        %v9350 = vor.u32 %v9346, %v9349
        %v9351 = vrot.slane %v9350, 4
        %v9353 = vshll.u32 %v9302, 16
        %v9355 = vrot.slane %v9353, 5
        %v9356 = vsel %vm3644, %v9351, %v9355
        %v9357 = vshrl.u32 %v9302, 16
        %v9359 = vrot.slane %v9357, 4
        %v9360 = vor.u32 %v9359, %v9355
        %v9361 = vrot.slane %v9360, 4
        %v9363 = vshll.u32 %v9303, 16
        %v9365 = vrot.slane %v9363, 5
        %v9366 = vsel %vm3644, %v9361, %v9365
        %v9367 = vshrl.u32 %v9303, 16
        %v9369 = vrot.slane %v9367, 4
        %v9370 = vor.u32 %v9369, %v9365
        %v9371 = vrot.slane %v9370, 4
        %v9373 = vshll.u32 %v9304, 16
        %v9375 = vrot.slane %v9373, 5
        %v9376 = vsel %vm3644, %v9371, %v9375
        %v9377 = vshrl.u32 %v9304, 16
        %v9379 = vrot.slane %v9377, 4
        %v9380 = vor.u32 %v9379, %v9375
        %v9381 = vrot.slane %v9380, 4
        %v9383 = vshll.u32 %v9305, 16
        %v9385 = vrot.slane %v9383, 5
        %v9386 = vsel %vm3644, %v9381, %v9385
        %v9387 = vshrl.u32 %v9305, 16
        %v9389 = vrot.slane %v9387, 4
        %v9390 = vor.u32 %v9389, %v9385
        %v9391 = vrot.slane %v9390, 4
        %v9393 = vshll.u32 %v9306, 16
        %v9395 = vrot.slane %v9393, 5
        %v9396 = vsel %vm3644, %v9391, %v9395
        %v9397 = vshrl.u32 %v9306, 16
        %v9399 = vrot.slane %v9397, 4
        %v9400 = vor.u32 %v9399, %v9395
        %v9401 = vrot.slane %v9400, 4
        %v9403 = vshll.u32 %v9307, 16
        %v9405 = vrot.slane %v9403, 5
        %v9406 = vsel %vm3644, %v9401, %v9405
        %v9407 = vshrl.u32 %v9307, 16
        %v9409 = vrot.slane %v9407, 4
        %v9410 = vor.u32 %v9409, %v9405
        %v9411 = vrot.slane %v9410, 4
        %v9413 = vshll.u32 %v9308, 16
        %v9415 = vrot.slane %v9413, 5
        %v9416 = vsel %vm3644, %v9411, %v9415
        %v9417 = vshrl.u32 %v9308, 16
        %v9419 = vrot.slane %v9417, 4
        %v9420 = vor.u32 %v9419, %v9415
        %v9421 = vrot.slane %v9420, 4
        %v9423 = vshll.u32 %v9309, 16
        %v9425 = vrot.slane %v9423, 5
        %v9426 = vsel %vm3644, %v9421, %v9425
        %v9427 = vshrl.u32 %v9309, 16
        %v9429 = vrot.slane %v9427, 4
        %v9430 = vor.u32 %v9429, %v9425
        %v9431 = vrot.slane %v9430, 4
        %v9433 = vshll.u32 %v9310, 16
        %v9435 = vrot.slane %v9433, 5
        %v9436 = vsel %vm3644, %v9431, %v9435
        %v9437 = vshrl.u32 %v9310, 16
        %v9439 = vrot.slane %v9437, 4
        %v9440 = vor.u32 %v9439, %v9435
        %v9441 = vrot.slane %v9440, 4
        %v9443 = vshll.u32 %v9311, 16
        %v9445 = vrot.slane %v9443, 5
        %v9446 = vsel %vm3644, %v9441, %v9445
        %v9447 = vshrl.u32 %v9311, 16
        %v9449 = vrot.slane %v9447, 4
        %v9450 = vor.u32 %v9449, %v9445
        %v9451 = vrot.slane %v9450, 4
        %v9453 = vshll.u32 %v9312, 16
        %v9455 = vrot.slane %v9453, 5
        %v9456 = vsel %vm3644, %v9451, %v9455
        %v9457 = vshrl.u32 %v9312, 16
        %v9459 = vrot.slane %v9457, 4
        %v9460 = vor.u32 %v9459, %v9455
        %v9461 = vrot.slane %v9460, 4
        %v9463 = vshll.u32 %v9313, 16
        %v9465 = vrot.slane %v9463, 5
        %v9466 = vsel %vm3644, %v9461, %v9465
        %v9467 = vshrl.u32 %v9313, 16
        %v9469 = vrot.slane %v9467, 4
        %v9470 = vor.u32 %v9469, %v9465
        %v9471 = vrot.slane %v9470, 4
        %v9473 = vshll.u32 %v9314, 16
        %v9475 = vrot.slane %v9473, 5
        %v9476 = vsel %vm3644, %v9471, %v9475
        %v9477 = vshrl.u32 %v9314, 16
        %v9479 = vrot.slane %v9477, 4
        %v9480 = vor.u32 %v9479, %v9475
        %v9481 = vrot.slane %v9480, 4
        %v9483 = vshll.u32 %v9315, 16
        %v9485 = vrot.slane %v9483, 5
        %v9486 = vsel %vm3644, %v9481, %v9485
        %v9487 = vshrl.u32 %v9315, 16
        %v9489 = vrot.slane %v9487, 4
        %v9490 = vor.u32 %v9489, %v9485
        %v9491 = vrot.slane %v9490, 4
        %v9493 = vshll.u32 %v9316, 16
        %v9495 = vrot.slane %v9493, 5
        %v9496 = vsel %vm3644, %v9491, %v9495
        %v9497 = vshrl.u32 %v9316, 16
        %v9499 = vrot.slane %v9497, 4
        %v9500 = vor.u32 %v9499, %v9495
        %v9501 = vrot.slane %v9500, 4
        %v9503 = vshll.u32 %v9317, 16
        %v9505 = vrot.slane %v9503, 5
        %v9506 = vsel %vm3644, %v9501, %v9505
        %v9507 = vshrl.u32 %v9317, 16
        %v9509 = vrot.slane %v9507, 4
        %v9510 = vor.u32 %v9509, %v9505
        %v9511 = vrot.slane %v9510, 4
        %v9513 = vshll.u32 %v9318, 16
        %v9515 = vrot.slane %v9513, 5
        %v9516 = vsel %vm3644, %v9511, %v9515
        %v9517 = vshrl.u32 %v9318, 16
        %v9519 = vrot.slane %v9517, 4
        %v9520 = vor.u32 %v9519, %v9515
        %v9521 = vrot.slane %v9520, 4
        %v9523 = vshll.u32 %v9319, 16
        %v9525 = vrot.slane %v9523, 5
        %v9526 = vsel %vm3644, %v9521, %v9525
        %v9527 = vshrl.u32 %v9319, 16
        %v9529 = vrot.slane %v9527, 4
        %v9530 = vor.u32 %v9529, %v9525
        %v9531 = vrot.slane %v9530, 4
        %v9533 = vshll.u32 %v9320, 16
        %v9535 = vrot.slane %v9533, 5
        %v9536 = vsel %vm3644, %v9531, %v9535
        %v9537 = vshrl.u32 %v9320, 16
        %v9539 = vrot.slane %v9537, 4
        %v9540 = vor.u32 %v9539, %v9535
        %v9541 = vrot.slane %v9540, 4
        %v9543 = vshll.u32 %v9321, 16
        %v9545 = vrot.slane %v9543, 5
        %v9546 = vsel %vm3644, %v9541, %v9545
        %v9547 = vshrl.u32 %v9321, 16
        %v9549 = vrot.slane %v9547, 4
        %v9550 = vor.u32 %v9549, %v9545
        %v9551 = vrot.slane %v9550, 4
        %v9553 = vshll.u32 %v9322, 16
        %v9555 = vrot.slane %v9553, 5
        %v9556 = vsel %vm3644, %v9551, %v9555
        %v9557 = vshrl.u32 %v9322, 16
        %v9559 = vrot.slane %v9557, 4
        %v9560 = vor.u32 %v9559, %v9555
        %v9561 = vrot.slane %v9560, 4
        %v9563 = vshll.u32 %v9323, 16
        %v9565 = vrot.slane %v9563, 5
        %v9566 = vsel %vm3644, %v9561, %v9565
        %v9567 = vshrl.u32 %v9323, 16
        %v9569 = vrot.slane %v9567, 4
        %v9570 = vor.u32 %v9569, %v9565
        %v9571 = vrot.slane %v9570, 4
        %v9573 = vshll.u32 %v9324, 16
        %v9575 = vrot.slane %v9573, 5
        %v9576 = vsel %vm3644, %v9571, %v9575
        %v9577 = vshrl.u32 %v9324, 16
        %v9579 = vrot.slane %v9577, 4
        %v9580 = vor.u32 %v9579, %v9575
        %v9581 = vrot.slane %v9580, 4
        %v9583 = vshll.u32 %v9325, 16
        %v9585 = vrot.slane %v9583, 5
        %v9586 = vsel %vm3644, %v9581, %v9585
        %v9587 = vshrl.u32 %v9325, 16
        %v9589 = vrot.slane %v9587, 4
        %v9590 = vor.u32 %v9589, %v9585
        %v9591 = vrot.slane %v9590, 4
        %v9593 = vshll.u32 %v9326, 16
        %v9595 = vrot.slane %v9593, 5
        %v9596 = vsel %vm3644, %v9591, %v9595
        %v9597 = vshrl.u32 %v9326, 16
        %v9599 = vrot.slane %v9597, 4
        %v9600 = vor.u32 %v9599, %v9595
        %v9601 = vrot.slane %v9600, 4
        %v9603 = vshll.u32 %v9327, 16
        %v9605 = vrot.slane %v9603, 5
        %v9606 = vsel %vm3644, %v9601, %v9605
        %v9607 = vshrl.u32 %v9327, 16
        %v9609 = vrot.slane %v9607, 4
        %v9610 = vor.u32 %v9609, %v9605
        %v9611 = vrot.slane %v9610, 4
        %v9613 = vshll.u32 %v9328, 16
        %v9615 = vrot.slane %v9613, 5
        %v9616 = vsel %vm3644, %v9611, %v9615
        %v9617 = vshrl.u32 %v9328, 16
        %v9619 = vrot.slane %v9617, 4
        %v9620 = vor.u32 %v9619, %v9615
        %v9621 = vrot.slane %v9620, 4
        %v9623 = vshll.u32 %v9329, 16
        %v9625 = vrot.slane %v9623, 5
        %v9626 = vsel %vm3644, %v9621, %v9625
        %v9627 = vshrl.u32 %v9329, 16
        %v9629 = vrot.slane %v9627, 4
        %v9630 = vor.u32 %v9629, %v9625
        %v9631 = vrot.slane %v9630, 4
        %v9633 = vshll.u32 %v9330, 16
        %v9635 = vrot.slane %v9633, 5
        %v9636 = vsel %vm3644, %v9631, %v9635
        %v9637 = vshrl.u32 %v9330, 16
        %v9639 = vrot.slane %v9637, 4
        %v9640 = vor.u32 %v9639, %v9635
        %v9641 = vrot.slane %v9640, 4
        %v9643 = vshll.u32 %v9331, 16
        %v9645 = vrot.slane %v9643, 5
        %v9646 = vsel %vm3644, %v9641, %v9645
        %v9647 = vshrl.u32 %v9331, 16
        %v9649 = vrot.slane %v9647, 4
        %v9650 = vor.u32 %v9649, %v9645
        %v9651 = vrot.slane %v9650, 4
        %v9653 = vshll.u32 %v9332, 16
        %v9655 = vrot.slane %v9653, 5
        %v9656 = vsel %vm3644, %v9651, %v9655
        %v9657 = vshrl.u32 %v9332, 16
        %v9659 = vrot.slane %v9657, 4
        %v9660 = vor.u32 %v9659, %v9655
        %v9661 = vrot.slane %v9660, 4
        %v9663 = vshll.u32 %v9333, 16
        %v9665 = vrot.slane %v9663, 5
        %v9666 = vsel %vm3644, %v9661, %v9665
        %v9667 = vshrl.u32 %v9333, 16
        %v9669 = vrot.slane %v9667, 4
        %v9670 = vor.u32 %v9669, %v9665
        %v9671 = vrot.slane %v9670, 4
        %v9673 = vshll.u32 %v9334, 16
        %v9675 = vrot.slane %v9673, 5
        %v9676 = vsel %vm3644, %v9671, %v9675
        %v9677 = vshrl.u32 %v9334, 16
        %v9679 = vrot.slane %v9677, 4
        %v9680 = vor.u32 %v9679, %v9675
        %v9681 = vrot.slane %v9680, 4
        %v9683 = vshll.u32 %v9335, 16
        %v9685 = vrot.slane %v9683, 5
        %v9686 = vsel %vm3644, %v9681, %v9685
        %v9687 = vshrl.u32 %v9335, 16
        %v9689 = vrot.slane %v9687, 4
        %v9690 = vor.u32 %v9689, %v9685
        %v9691 = vrot.slane %v9690, 4
        %v9693 = vshll.u32 %v9336, 16
        %v9695 = vrot.slane %v9693, 5
        %v9696 = vsel %vm3644, %v9691, %v9695
        %v9697 = vshrl.u32 %v9336, 16
        %v9699 = vrot.slane %v9697, 4
        %v9700 = vor.u32 %v9699, %v9695
        %v9701 = vrot.slane %v9700, 4
        %v9703 = vshll.u32 %v9337, 16
        %v9705 = vrot.slane %v9703, 5
        %v9706 = vsel %vm3644, %v9701, %v9705
        %v9707 = vshrl.u32 %v9337, 16
        %v9709 = vrot.slane %v9707, 4
        %v9710 = vor.u32 %v9709, %v9705
        %v9711 = vrot.slane %v9710, 4
        %v9713 = vshll.u32 %v9338, 16
        %v9715 = vrot.slane %v9713, 5
        %v9716 = vsel %vm3644, %v9711, %v9715
        %v9717 = vshrl.u32 %v9338, 16
        %v9719 = vrot.slane %v9717, 4
        %v9720 = vor.u32 %v9719, %v9715
        %v9721 = vrot.slane %v9720, 4
        %v9723 = vshll.u32 %v9339, 16
        %v9725 = vrot.slane %v9723, 5
        %v9726 = vsel %vm3644, %v9721, %v9725
        %v9727 = vshrl.u32 %v9339, 16
        %v9729 = vrot.slane %v9727, 4
        %v9730 = vor.u32 %v9729, %v9725
        %v9731 = vrot.slane %v9730, 4
        %v9733 = vshll.u32 %v9340, 16
        %v9735 = vrot.slane %v9733, 5
        %v9736 = vsel %vm3644, %v9731, %v9735
        %v9737 = vshrl.u32 %v9340, 16
        %v9739 = vrot.slane %v9737, 4
        %v9740 = vor.u32 %v9739, %v9735
        %v9741 = vrot.slane %v9740, 4
        %v9743 = vshll.u32 %v9341, 16
        %v9745 = vrot.slane %v9743, 5
        %v9746 = vsel %vm3644, %v9741, %v9745
        %v9747 = vshrl.u32 %v9341, 16
        %v9749 = vrot.slane %v9747, 4
        %v9750 = vor.u32 %v9749, %v9745
        %v9751 = vrot.slane %v9750, 4
        %v9753 = vshll.u32 %v9342, 16
        %v9755 = vrot.slane %v9753, 5
        %v9756 = vsel %vm3644, %v9751, %v9755
        %9757 = vrot.lane.b32.xlu0 %v9356, 64
        %v9758 = vpop.permute.xlu0 %9757
        %9759 = vrot.lane.b32.xlu0 %v9366, 64
        %v9760 = vpop.permute.xlu0 %9759
        %9761 = vrot.lane.b32.xlu0 %v9376, 64
        %v9762 = vpop.permute.xlu0 %9761
        %9763 = vrot.lane.b32.xlu0 %v9386, 64
        %v9764 = vpop.permute.xlu0 %9763
        %9765 = vrot.lane.b32.xlu0 %v9396, 64
        %v9766 = vpop.permute.xlu0 %9765
        %9767 = vrot.lane.b32.xlu0 %v9406, 64
        %v9768 = vpop.permute.xlu0 %9767
        %9769 = vrot.lane.b32.xlu0 %v9416, 64
        %v9770 = vpop.permute.xlu0 %9769
        %9771 = vrot.lane.b32.xlu0 %v9426, 64
        %v9772 = vpop.permute.xlu0 %9771
        %9773 = vrot.lane.b32.xlu0 %v9436, 64
        %v9774 = vpop.permute.xlu0 %9773
        %9775 = vrot.lane.b32.xlu0 %v9446, 64
        %v9776 = vpop.permute.xlu0 %9775
        %9777 = vrot.lane.b32.xlu0 %v9456, 64
        %v9778 = vpop.permute.xlu0 %9777
        %9779 = vrot.lane.b32.xlu0 %v9466, 64
        %v9780 = vpop.permute.xlu0 %9779
        %9781 = vrot.lane.b32.xlu0 %v9476, 64
        %v9782 = vpop.permute.xlu0 %9781
        %9783 = vrot.lane.b32.xlu0 %v9486, 64
        %v9784 = vpop.permute.xlu0 %9783
        %9785 = vrot.lane.b32.xlu0 %v9496, 64
        %v9786 = vpop.permute.xlu0 %9785
        %9787 = vrot.lane.b32.xlu0 %v9506, 64
        %v9788 = vpop.permute.xlu0 %9787
        %9789 = vrot.lane.b32.xlu0 %v9516, 64
        %v9790 = vpop.permute.xlu0 %9789
        %9791 = vrot.lane.b32.xlu0 %v9526, 64
        %v9792 = vpop.permute.xlu0 %9791
        %9793 = vrot.lane.b32.xlu0 %v9536, 64
        %v9794 = vpop.permute.xlu0 %9793
        %9795 = vrot.lane.b32.xlu0 %v9546, 64
        %v9796 = vpop.permute.xlu0 %9795
        %9797 = vrot.lane.b32.xlu0 %v9556, 64
        %v9798 = vpop.permute.xlu0 %9797
        %9799 = vrot.lane.b32.xlu0 %v9566, 64
        %v9800 = vpop.permute.xlu0 %9799
        %9801 = vrot.lane.b32.xlu0 %v9576, 64
        %v9802 = vpop.permute.xlu0 %9801
        %9803 = vrot.lane.b32.xlu0 %v9586, 64
        %v9804 = vpop.permute.xlu0 %9803
        %9805 = vrot.lane.b32.xlu0 %v9596, 64
        %v9806 = vpop.permute.xlu0 %9805
        %9807 = vrot.lane.b32.xlu0 %v9606, 64
        %v9808 = vpop.permute.xlu0 %9807
        %9809 = vrot.lane.b32.xlu0 %v9616, 64
        %v9810 = vpop.permute.xlu0 %9809
        %9811 = vrot.lane.b32.xlu0 %v9626, 64
        %v9812 = vpop.permute.xlu0 %9811
        %9813 = vrot.lane.b32.xlu0 %v9636, 64
        %v9814 = vpop.permute.xlu0 %9813
        %9815 = vrot.lane.b32.xlu0 %v9646, 64
        %v9816 = vpop.permute.xlu0 %9815
        %9817 = vrot.lane.b32.xlu0 %v9656, 64
        %v9818 = vpop.permute.xlu0 %9817
        %9819 = vrot.lane.b32.xlu0 %v9666, 64
        %v9820 = vpop.permute.xlu0 %9819
        %9821 = vrot.lane.b32.xlu0 %v9676, 64
        %v9822 = vpop.permute.xlu0 %9821
        %9823 = vrot.lane.b32.xlu0 %v9686, 64
        %v9824 = vpop.permute.xlu0 %9823
        %9825 = vrot.lane.b32.xlu0 %v9696, 64
        %v9826 = vpop.permute.xlu0 %9825
        %9827 = vrot.lane.b32.xlu0 %v9706, 64
        %v9828 = vpop.permute.xlu0 %9827
        %9829 = vrot.lane.b32.xlu0 %v9716, 64
        %v9830 = vpop.permute.xlu0 %9829
        %9831 = vrot.lane.b32.xlu0 %v9726, 64
        %v9832 = vpop.permute.xlu0 %9831
        %9833 = vrot.lane.b32.xlu0 %v9736, 64
        %v9834 = vpop.permute.xlu0 %9833
        %9835 = vrot.lane.b32.xlu0 %v9746, 64
        %v9836 = vpop.permute.xlu0 %9835
        %9837 = vrot.lane.b32.xlu0 %v9756, 64
        %v9838 = vpop.permute.xlu0 %9837
        %9880 = vst.msk [vmem:[#allocation3 + $0x4] sm:$0xf] %vm7977, %v9758
        %9881 = vst.msk [vmem:[#allocation3 + $0x10] sm:$0xf] %vm7977, %v9760
        %9882 = vst.msk [vmem:[#allocation3 + $0x1c] sm:$0xf] %vm7977, %v9762
        %9883 = vst.msk [vmem:[#allocation3 + $0x28] sm:$0xf] %vm7977, %v9764
        %9884 = vst.msk [vmem:[#allocation3 + $0x34] sm:$0xf] %vm7977, %v9766
        %9885 = vst.msk [vmem:[#allocation3 + $0x40] sm:$0xf] %vm7977, %v9768
        %9886 = vst.msk [vmem:[#allocation3 + $0x4c] sm:$0xf] %vm7977, %v9770
        %9887 = vst.msk [vmem:[#allocation3 + $0x58] sm:$0xf] %vm7977, %v9772
        %9888 = vst.msk [vmem:[#allocation3 + $0x64] sm:$0xf] %vm7977, %v9774
        %9889 = vst.msk [vmem:[#allocation3 + $0x70] sm:$0xf] %vm7977, %v9776
        %9890 = vst.msk [vmem:[#allocation3 + $0x7c] sm:$0xf] %vm7977, %v9778
        %9891 = vst.msk [vmem:[#allocation3 + $0x88] sm:$0xf] %vm7977, %v9780
        %9892 = vst.msk [vmem:[#allocation3 + $0x94] sm:$0xf] %vm7977, %v9782
        %9893 = vst.msk [vmem:[#allocation3 + $0xa0] sm:$0xf] %vm7977, %v9784
        %9894 = vst.msk [vmem:[#allocation3 + $0xac] sm:$0xf] %vm7977, %v9786
        %9895 = vst.msk [vmem:[#allocation3 + $0xb8] sm:$0xf] %vm7977, %v9788
        %9896 = vst.msk [vmem:[#allocation3 + $0xc4] sm:$0xf] %vm7977, %v9790
        %9897 = vst.msk [vmem:[#allocation3 + $0xd0] sm:$0xf] %vm7977, %v9792
        %9898 = vst.msk [vmem:[#allocation3 + $0xdc] sm:$0xf] %vm7977, %v9794
        %9899 = vst.msk [vmem:[#allocation3 + $0xe8] sm:$0xf] %vm7977, %v9796
        %9900 = vst.msk [vmem:[#allocation3 + $0xf4] sm:$0xf] %vm7977, %v9798
        %9901 = vst.msk [vmem:[#allocation3 + $0x100] sm:$0xf] %vm7977, %v9800
        %9902 = vst.msk [vmem:[#allocation3 + $0x10c] sm:$0xf] %vm7977, %v9802
        %9903 = vst.msk [vmem:[#allocation3 + $0x118] sm:$0xf] %vm7977, %v9804
        %9904 = vst.msk [vmem:[#allocation3 + $0x124] sm:$0xf] %vm7977, %v9806
        %9905 = vst.msk [vmem:[#allocation3 + $0x130] sm:$0xf] %vm7977, %v9808
        %9906 = vst.msk [vmem:[#allocation3 + $0x13c] sm:$0xf] %vm7977, %v9810
        %9907 = vst.msk [vmem:[#allocation3 + $0x148] sm:$0xf] %vm7977, %v9812
        %9908 = vst.msk [vmem:[#allocation3 + $0x154] sm:$0xf] %vm7977, %v9814
        %9909 = vst.msk [vmem:[#allocation3 + $0x160] sm:$0xf] %vm7977, %v9816
        %9910 = vst.msk [vmem:[#allocation3 + $0x16c] sm:$0xf] %vm7977, %v9818
        %9911 = vst.msk [vmem:[#allocation3 + $0x178] sm:$0xf] %vm7977, %v9820
        %9912 = vst.msk [vmem:[#allocation3 + $0x184] sm:$0xf] %vm7977, %v9822
        %9913 = vst.msk [vmem:[#allocation3 + $0x190] sm:$0xf] %vm7977, %v9824
        %9914 = vst.msk [vmem:[#allocation3 + $0x19c] sm:$0xf] %vm7977, %v9826
        %9915 = vst.msk [vmem:[#allocation3 + $0x1a8] sm:$0xf] %vm7977, %v9828
        %9916 = vst.msk [vmem:[#allocation3 + $0x1b4] sm:$0xf] %vm7977, %v9830
        %9917 = vst.msk [vmem:[#allocation3 + $0x1c0] sm:$0xf] %vm7977, %v9832
        %9918 = vst.msk [vmem:[#allocation3 + $0x1cc] sm:$0xf] %vm7977, %v9834
        %9919 = vst.msk [vmem:[#allocation3 + $0x1d8] sm:$0xf] %vm7977, %v9836
        %9920 = vst.msk [vmem:[#allocation3 + $0x1e4] sm:$0xf] %vm7977, %v9838
        %v9921 = vld [vmem:[#allocation2 + $0x14] sm:$0xe]
        %v9922 = vld [vmem:[#allocation2 + $0x18] sm:$0xf]
        %v9923 = vld [vmem:[#allocation2 + $0x1c] sm:$0xf]
        %v9924 = vld [vmem:[#allocation2 + $0x20] sm:$0xf]
        %v9925 = vld [vmem:[#allocation2 + $0x24] sm:$0xf]
        %v9926 = vld [vmem:[#allocation2 + $0x28] sm:$0xf]
        %v9927 = vld [vmem:[#allocation2 + $0x2c] sm:$0xf]
        %v9928 = vld [vmem:[#allocation2 + $0x30] sm:$0xf]
        %v9929 = vld [vmem:[#allocation2 + $0x34] sm:$0xf]
        %v9930 = vld [vmem:[#allocation2 + $0x38] sm:$0xf]
        %v9931 = vld [vmem:[#allocation2 + $0x3c] sm:$0xf]
        %v9932 = vld [vmem:[#allocation2 + $0x40] sm:$0xf]
        %v9933 = vld [vmem:[#allocation2 + $0x44] sm:$0xf]
        %v9934 = vld [vmem:[#allocation2 + $0x48] sm:$0xf]
        %v9935 = vld [vmem:[#allocation2 + $0x4c] sm:$0xf]
        %v9936 = vld [vmem:[#allocation2 + $0x50] sm:$0xf]
        %v9937 = vld [vmem:[#allocation2 + $0x54] sm:$0xf]
        %v9938 = vld [vmem:[#allocation2 + $0x58] sm:$0xf]
        %v9939 = vld [vmem:[#allocation2 + $0x5c] sm:$0xf]
        %v9940 = vld [vmem:[#allocation2 + $0x60] sm:$0xf]
        %v9941 = vld [vmem:[#allocation2 + $0x64] sm:$0xf]
        %v9942 = vld [vmem:[#allocation2 + $0x68] sm:$0xf]
        %v9943 = vld [vmem:[#allocation2 + $0x6c] sm:$0xf]
        %v9944 = vld [vmem:[#allocation2 + $0x70] sm:$0xf]
        %v9945 = vld [vmem:[#allocation2 + $0x74] sm:$0xf]
        %v9946 = vld [vmem:[#allocation2 + $0x78] sm:$0xf]
        %v9947 = vld [vmem:[#allocation2 + $0x7c] sm:$0xf]
        %v9948 = vld [vmem:[#allocation2 + $0x80] sm:$0xf]
        %v9949 = vld [vmem:[#allocation2 + $0x84] sm:$0xf]
        %v9950 = vld [vmem:[#allocation2 + $0x88] sm:$0xf]
        %v9951 = vld [vmem:[#allocation2 + $0x8c] sm:$0xf]
        %v9952 = vld [vmem:[#allocation2 + $0x90] sm:$0xf]
        %v9953 = vld [vmem:[#allocation2 + $0x94] sm:$0xf]
        %v9954 = vld [vmem:[#allocation2 + $0x98] sm:$0xf]
        %v9955 = vld [vmem:[#allocation2 + $0x9c] sm:$0xf]
        %v9956 = vld [vmem:[#allocation2 + $0xa0] sm:$0xf]
        %v9957 = vld [vmem:[#allocation2 + $0xa4] sm:$0xf]
        %v9958 = vld [vmem:[#allocation2 + $0xa8] sm:$0xf]
        %v9959 = vld [vmem:[#allocation2 + $0xac] sm:$0xf]
        %v9960 = vld [vmem:[#allocation2 + $0xb0] sm:$0xf]
        %v9961 = vld [vmem:[#allocation2 + $0xb4] sm:$0xf]
        %v9962 = vld [vmem:[#allocation2 + $0xb8] sm:$0x1]
        %v10005 = vrot.slane %v9921, 5
        %v10006 = vrot.slane %v10005, 4
        %v10007 = vrot.slane %v9922, 5
        %v10008 = vsel %vm4931, %v10006, %v10007
        %v10009 = vrot.slane %v10007, 4
        %v10010 = vrot.slane %v9923, 5
        %v10011 = vsel %vm4931, %v10009, %v10010
        %v10012 = vrot.slane %v10010, 4
        %v10013 = vrot.slane %v9924, 5
        %v10014 = vsel %vm4931, %v10012, %v10013
        %v10015 = vrot.slane %v10013, 4
        %v10016 = vrot.slane %v9925, 5
        %v10017 = vsel %vm4931, %v10015, %v10016
        %v10018 = vrot.slane %v10016, 4
        %v10019 = vrot.slane %v9926, 5
        %v10020 = vsel %vm4931, %v10018, %v10019
        %v10021 = vrot.slane %v10019, 4
        %v10022 = vrot.slane %v9927, 5
        %v10023 = vsel %vm4931, %v10021, %v10022
        %v10024 = vrot.slane %v10022, 4
        %v10025 = vrot.slane %v9928, 5
        %v10026 = vsel %vm4931, %v10024, %v10025
        %v10027 = vrot.slane %v10025, 4
        %v10028 = vrot.slane %v9929, 5
        %v10029 = vsel %vm4931, %v10027, %v10028
        %v10030 = vrot.slane %v10028, 4
        %v10031 = vrot.slane %v9930, 5
        %v10032 = vsel %vm4931, %v10030, %v10031
        %v10033 = vrot.slane %v10031, 4
        %v10034 = vrot.slane %v9931, 5
        %v10035 = vsel %vm4931, %v10033, %v10034
        %v10036 = vrot.slane %v10034, 4
        %v10037 = vrot.slane %v9932, 5
        %v10038 = vsel %vm4931, %v10036, %v10037
        %v10039 = vrot.slane %v10037, 4
        %v10040 = vrot.slane %v9933, 5
        %v10041 = vsel %vm4931, %v10039, %v10040
        %v10042 = vrot.slane %v10040, 4
        %v10043 = vrot.slane %v9934, 5
        %v10044 = vsel %vm4931, %v10042, %v10043
        %v10045 = vrot.slane %v10043, 4
        %v10046 = vrot.slane %v9935, 5
        %v10047 = vsel %vm4931, %v10045, %v10046
        %v10048 = vrot.slane %v10046, 4
        %v10049 = vrot.slane %v9936, 5
        %v10050 = vsel %vm4931, %v10048, %v10049
        %v10051 = vrot.slane %v10049, 4
        %v10052 = vrot.slane %v9937, 5
        %v10053 = vsel %vm4931, %v10051, %v10052
        %v10054 = vrot.slane %v10052, 4
        %v10055 = vrot.slane %v9938, 5
        %v10056 = vsel %vm4931, %v10054, %v10055
        %v10057 = vrot.slane %v10055, 4
        %v10058 = vrot.slane %v9939, 5
        %v10059 = vsel %vm4931, %v10057, %v10058
        %v10060 = vrot.slane %v10058, 4
        %v10061 = vrot.slane %v9940, 5
        %v10062 = vsel %vm4931, %v10060, %v10061
        %v10063 = vrot.slane %v10061, 4
        %v10064 = vrot.slane %v9941, 5
        %v10065 = vsel %vm4931, %v10063, %v10064
        %v10066 = vrot.slane %v10064, 4
        %v10067 = vrot.slane %v9942, 5
        %v10068 = vsel %vm4931, %v10066, %v10067
        %v10069 = vrot.slane %v10067, 4
        %v10070 = vrot.slane %v9943, 5
        %v10071 = vsel %vm4931, %v10069, %v10070
        %v10072 = vrot.slane %v10070, 4
        %v10073 = vrot.slane %v9944, 5
        %v10074 = vsel %vm4931, %v10072, %v10073
        %v10075 = vrot.slane %v10073, 4
        %v10076 = vrot.slane %v9945, 5
        %v10077 = vsel %vm4931, %v10075, %v10076
        %v10078 = vrot.slane %v10076, 4
        %v10079 = vrot.slane %v9946, 5
        %v10080 = vsel %vm4931, %v10078, %v10079
        %v10081 = vrot.slane %v10079, 4
        %v10082 = vrot.slane %v9947, 5
        %v10083 = vsel %vm4931, %v10081, %v10082
        %v10084 = vrot.slane %v10082, 4
        %v10085 = vrot.slane %v9948, 5
        %v10086 = vsel %vm4931, %v10084, %v10085
        %v10087 = vrot.slane %v10085, 4
        %v10088 = vrot.slane %v9949, 5
        %v10089 = vsel %vm4931, %v10087, %v10088
        %v10090 = vrot.slane %v10088, 4
        %v10091 = vrot.slane %v9950, 5
        %v10092 = vsel %vm4931, %v10090, %v10091
        %v10093 = vrot.slane %v10091, 4
        %v10094 = vrot.slane %v9951, 5
        %v10095 = vsel %vm4931, %v10093, %v10094
        %v10096 = vrot.slane %v10094, 4
        %v10097 = vrot.slane %v9952, 5
        %v10098 = vsel %vm4931, %v10096, %v10097
        %v10099 = vrot.slane %v10097, 4
        %v10100 = vrot.slane %v9953, 5
        %v10101 = vsel %vm4931, %v10099, %v10100
        %v10102 = vrot.slane %v10100, 4
        %v10103 = vrot.slane %v9954, 5
        %v10104 = vsel %vm4931, %v10102, %v10103
        %v10105 = vrot.slane %v10103, 4
        %v10106 = vrot.slane %v9955, 5
        %v10107 = vsel %vm4931, %v10105, %v10106
        %v10108 = vrot.slane %v10106, 4
        %v10109 = vrot.slane %v9956, 5
        %v10110 = vsel %vm4931, %v10108, %v10109
        %v10111 = vrot.slane %v10109, 4
        %v10112 = vrot.slane %v9957, 5
        %v10113 = vsel %vm4931, %v10111, %v10112
        %v10114 = vrot.slane %v10112, 4
        %v10115 = vrot.slane %v9958, 5
        %v10116 = vsel %vm4931, %v10114, %v10115
        %v10117 = vrot.slane %v10115, 4
        %v10118 = vrot.slane %v9959, 5
        %v10119 = vsel %vm4931, %v10117, %v10118
        %v10120 = vrot.slane %v10118, 4
        %v10121 = vrot.slane %v9960, 5
        %v10122 = vsel %vm4931, %v10120, %v10121
        %v10123 = vrot.slane %v10121, 4
        %v10124 = vrot.slane %v9961, 5
        %v10125 = vsel %vm4931, %v10123, %v10124
        %v10126 = vrot.slane %v10124, 4
        %v10127 = vrot.slane %v9962, 5
        %v10128 = vsel %vm4931, %v10126, %v10127
        %10129 = vrot.lane.b32.xlu0 %v10008, 96
        %v10130 = vpop.permute.xlu0 %10129
        %10131 = vrot.lane.b32.xlu0 %v10011, 96
        %v10132 = vpop.permute.xlu0 %10131
        %10133 = vrot.lane.b32.xlu0 %v10014, 96
        %v10134 = vpop.permute.xlu0 %10133
        %10135 = vrot.lane.b32.xlu0 %v10017, 96
        %v10136 = vpop.permute.xlu0 %10135
        %10137 = vrot.lane.b32.xlu0 %v10020, 96
        %v10138 = vpop.permute.xlu0 %10137
        %10139 = vrot.lane.b32.xlu0 %v10023, 96
        %v10140 = vpop.permute.xlu0 %10139
        %10141 = vrot.lane.b32.xlu0 %v10026, 96
        %v10142 = vpop.permute.xlu0 %10141
        %10143 = vrot.lane.b32.xlu0 %v10029, 96
        %v10144 = vpop.permute.xlu0 %10143
        %10145 = vrot.lane.b32.xlu0 %v10032, 96
        %v10146 = vpop.permute.xlu0 %10145
        %10147 = vrot.lane.b32.xlu0 %v10035, 96
        %v10148 = vpop.permute.xlu0 %10147
        %10149 = vrot.lane.b32.xlu0 %v10038, 96
        %v10150 = vpop.permute.xlu0 %10149
        %10151 = vrot.lane.b32.xlu0 %v10041, 96
        %v10152 = vpop.permute.xlu0 %10151
        %10153 = vrot.lane.b32.xlu0 %v10044, 96
        %v10154 = vpop.permute.xlu0 %10153
        %10155 = vrot.lane.b32.xlu0 %v10047, 96
        %v10156 = vpop.permute.xlu0 %10155
        %10157 = vrot.lane.b32.xlu0 %v10050, 96
        %v10158 = vpop.permute.xlu0 %10157
        %10159 = vrot.lane.b32.xlu0 %v10053, 96
        %v10160 = vpop.permute.xlu0 %10159
        %10161 = vrot.lane.b32.xlu0 %v10056, 96
        %v10162 = vpop.permute.xlu0 %10161
        %10163 = vrot.lane.b32.xlu0 %v10059, 96
        %v10164 = vpop.permute.xlu0 %10163
        %10165 = vrot.lane.b32.xlu0 %v10062, 96
        %v10166 = vpop.permute.xlu0 %10165
        %10167 = vrot.lane.b32.xlu0 %v10065, 96
        %v10168 = vpop.permute.xlu0 %10167
        %10169 = vrot.lane.b32.xlu0 %v10068, 96
        %v10170 = vpop.permute.xlu0 %10169
        %10171 = vrot.lane.b32.xlu0 %v10071, 96
        %v10172 = vpop.permute.xlu0 %10171
        %10173 = vrot.lane.b32.xlu0 %v10074, 96
        %v10174 = vpop.permute.xlu0 %10173
        %10175 = vrot.lane.b32.xlu0 %v10077, 96
        %v10176 = vpop.permute.xlu0 %10175
        %10177 = vrot.lane.b32.xlu0 %v10080, 96
        %v10178 = vpop.permute.xlu0 %10177
        %10179 = vrot.lane.b32.xlu0 %v10083, 96
        %v10180 = vpop.permute.xlu0 %10179
        %10181 = vrot.lane.b32.xlu0 %v10086, 96
        %v10182 = vpop.permute.xlu0 %10181
        %10183 = vrot.lane.b32.xlu0 %v10089, 96
        %v10184 = vpop.permute.xlu0 %10183
        %10185 = vrot.lane.b32.xlu0 %v10092, 96
        %v10186 = vpop.permute.xlu0 %10185
        %10187 = vrot.lane.b32.xlu0 %v10095, 96
        %v10188 = vpop.permute.xlu0 %10187
        %10189 = vrot.lane.b32.xlu0 %v10098, 96
        %v10190 = vpop.permute.xlu0 %10189
        %10191 = vrot.lane.b32.xlu0 %v10101, 96
        %v10192 = vpop.permute.xlu0 %10191
        %10193 = vrot.lane.b32.xlu0 %v10104, 96
        %v10194 = vpop.permute.xlu0 %10193
        %10195 = vrot.lane.b32.xlu0 %v10107, 96
        %v10196 = vpop.permute.xlu0 %10195
        %10197 = vrot.lane.b32.xlu0 %v10110, 96
        %v10198 = vpop.permute.xlu0 %10197
        %10199 = vrot.lane.b32.xlu0 %v10113, 96
        %v10200 = vpop.permute.xlu0 %10199
        %10201 = vrot.lane.b32.xlu0 %v10116, 96
        %v10202 = vpop.permute.xlu0 %10201
        %10203 = vrot.lane.b32.xlu0 %v10119, 96
        %v10204 = vpop.permute.xlu0 %10203
        %10205 = vrot.lane.b32.xlu0 %v10122, 96
        %v10206 = vpop.permute.xlu0 %10205
        %10207 = vrot.lane.b32.xlu0 %v10125, 96
        %v10208 = vpop.permute.xlu0 %10207
        %10209 = vrot.lane.b32.xlu0 %v10128, 96
        %v10210 = vpop.permute.xlu0 %10209
        %10252 = vst.msk [vmem:[#allocation3 + $0x4] sm:$0xf] %vm8557, %v10130
        %10253 = vst.msk [vmem:[#allocation3 + $0x10] sm:$0xf] %vm8557, %v10132
        %10254 = vst.msk [vmem:[#allocation3 + $0x1c] sm:$0xf] %vm8557, %v10134
        %10255 = vst.msk [vmem:[#allocation3 + $0x28] sm:$0xf] %vm8557, %v10136
        %10256 = vst.msk [vmem:[#allocation3 + $0x34] sm:$0xf] %vm8557, %v10138
        %10257 = vst.msk [vmem:[#allocation3 + $0x40] sm:$0xf] %vm8557, %v10140
        %10258 = vst.msk [vmem:[#allocation3 + $0x4c] sm:$0xf] %vm8557, %v10142
        %10259 = vst.msk [vmem:[#allocation3 + $0x58] sm:$0xf] %vm8557, %v10144
        %10260 = vst.msk [vmem:[#allocation3 + $0x64] sm:$0xf] %vm8557, %v10146
        %10261 = vst.msk [vmem:[#allocation3 + $0x70] sm:$0xf] %vm8557, %v10148
        %10262 = vst.msk [vmem:[#allocation3 + $0x7c] sm:$0xf] %vm8557, %v10150
        %10263 = vst.msk [vmem:[#allocation3 + $0x88] sm:$0xf] %vm8557, %v10152
        %10264 = vst.msk [vmem:[#allocation3 + $0x94] sm:$0xf] %vm8557, %v10154
        %10265 = vst.msk [vmem:[#allocation3 + $0xa0] sm:$0xf] %vm8557, %v10156
        %10266 = vst.msk [vmem:[#allocation3 + $0xac] sm:$0xf] %vm8557, %v10158
        %10267 = vst.msk [vmem:[#allocation3 + $0xb8] sm:$0xf] %vm8557, %v10160
        %10268 = vst.msk [vmem:[#allocation3 + $0xc4] sm:$0xf] %vm8557, %v10162
        %10269 = vst.msk [vmem:[#allocation3 + $0xd0] sm:$0xf] %vm8557, %v10164
        %10270 = vst.msk [vmem:[#allocation3 + $0xdc] sm:$0xf] %vm8557, %v10166
        %10271 = vst.msk [vmem:[#allocation3 + $0xe8] sm:$0xf] %vm8557, %v10168
        %10272 = vst.msk [vmem:[#allocation3 + $0xf4] sm:$0xf] %vm8557, %v10170
        %10273 = vst.msk [vmem:[#allocation3 + $0x100] sm:$0xf] %vm8557, %v10172
        %10274 = vst.msk [vmem:[#allocation3 + $0x10c] sm:$0xf] %vm8557, %v10174
        %10275 = vst.msk [vmem:[#allocation3 + $0x118] sm:$0xf] %vm8557, %v10176
        %10276 = vst.msk [vmem:[#allocation3 + $0x124] sm:$0xf] %vm8557, %v10178
        %10277 = vst.msk [vmem:[#allocation3 + $0x130] sm:$0xf] %vm8557, %v10180
        %10278 = vst.msk [vmem:[#allocation3 + $0x13c] sm:$0xf] %vm8557, %v10182
        %10279 = vst.msk [vmem:[#allocation3 + $0x148] sm:$0xf] %vm8557, %v10184
        %10280 = vst.msk [vmem:[#allocation3 + $0x154] sm:$0xf] %vm8557, %v10186
        %10281 = vst.msk [vmem:[#allocation3 + $0x160] sm:$0xf] %vm8557, %v10188
        %10282 = vst.msk [vmem:[#allocation3 + $0x16c] sm:$0xf] %vm8557, %v10190
        %10283 = vst.msk [vmem:[#allocation3 + $0x178] sm:$0xf] %vm8557, %v10192
        %10284 = vst.msk [vmem:[#allocation3 + $0x184] sm:$0xf] %vm8557, %v10194
        %10285 = vst.msk [vmem:[#allocation3 + $0x190] sm:$0xf] %vm8557, %v10196
        %10286 = vst.msk [vmem:[#allocation3 + $0x19c] sm:$0xf] %vm8557, %v10198
        %10287 = vst.msk [vmem:[#allocation3 + $0x1a8] sm:$0xf] %vm8557, %v10200
        %10288 = vst.msk [vmem:[#allocation3 + $0x1b4] sm:$0xf] %vm8557, %v10202
        %10289 = vst.msk [vmem:[#allocation3 + $0x1c0] sm:$0xf] %vm8557, %v10204
        %10290 = vst.msk [vmem:[#allocation3 + $0x1cc] sm:$0xf] %vm8557, %v10206
        %10291 = vst.msk [vmem:[#allocation3 + $0x1d8] sm:$0xf] %vm8557, %v10208
        %10292 = vst.msk [vmem:[#allocation3 + $0x1e4] sm:$0xf] %vm8557, %v10210
        %v10293 = vld [vmem:[#allocation2 + $0x14] sm:$0xe]
        %v10294 = vld [vmem:[#allocation2 + $0x18] sm:$0xf]
        %v10295 = vld [vmem:[#allocation2 + $0x1c] sm:$0xf]
        %v10296 = vld [vmem:[#allocation2 + $0x20] sm:$0xf]
        %v10297 = vld [vmem:[#allocation2 + $0x24] sm:$0xf]
        %v10298 = vld [vmem:[#allocation2 + $0x28] sm:$0xf]
        %v10299 = vld [vmem:[#allocation2 + $0x2c] sm:$0xf]
        %v10300 = vld [vmem:[#allocation2 + $0x30] sm:$0xf]
        %v10301 = vld [vmem:[#allocation2 + $0x34] sm:$0xf]
        %v10302 = vld [vmem:[#allocation2 + $0x38] sm:$0xf]
        %v10303 = vld [vmem:[#allocation2 + $0x3c] sm:$0xf]
        %v10304 = vld [vmem:[#allocation2 + $0x40] sm:$0xf]
        %v10305 = vld [vmem:[#allocation2 + $0x44] sm:$0xf]
        %v10306 = vld [vmem:[#allocation2 + $0x48] sm:$0xf]
        %v10307 = vld [vmem:[#allocation2 + $0x4c] sm:$0xf]
        %v10308 = vld [vmem:[#allocation2 + $0x50] sm:$0xf]
        %v10309 = vld [vmem:[#allocation2 + $0x54] sm:$0xf]
        %v10310 = vld [vmem:[#allocation2 + $0x58] sm:$0xf]
        %v10311 = vld [vmem:[#allocation2 + $0x5c] sm:$0xf]
        %v10312 = vld [vmem:[#allocation2 + $0x60] sm:$0xf]
        %v10313 = vld [vmem:[#allocation2 + $0x64] sm:$0xf]
        %v10314 = vld [vmem:[#allocation2 + $0x68] sm:$0xf]
        %v10315 = vld [vmem:[#allocation2 + $0x6c] sm:$0xf]
        %v10316 = vld [vmem:[#allocation2 + $0x70] sm:$0xf]
        %v10317 = vld [vmem:[#allocation2 + $0x74] sm:$0xf]
        %v10318 = vld [vmem:[#allocation2 + $0x78] sm:$0xf]
        %v10319 = vld [vmem:[#allocation2 + $0x7c] sm:$0xf]
        %v10320 = vld [vmem:[#allocation2 + $0x80] sm:$0xf]
        %v10321 = vld [vmem:[#allocation2 + $0x84] sm:$0xf]
        %v10322 = vld [vmem:[#allocation2 + $0x88] sm:$0xf]
        %v10323 = vld [vmem:[#allocation2 + $0x8c] sm:$0xf]
        %v10324 = vld [vmem:[#allocation2 + $0x90] sm:$0xf]
        %v10325 = vld [vmem:[#allocation2 + $0x94] sm:$0xf]
        %v10326 = vld [vmem:[#allocation2 + $0x98] sm:$0xf]
        %v10327 = vld [vmem:[#allocation2 + $0x9c] sm:$0xf]
        %v10328 = vld [vmem:[#allocation2 + $0xa0] sm:$0xf]
        %v10329 = vld [vmem:[#allocation2 + $0xa4] sm:$0xf]
        %v10330 = vld [vmem:[#allocation2 + $0xa8] sm:$0xf]
        %v10331 = vld [vmem:[#allocation2 + $0xac] sm:$0xf]
        %v10332 = vld [vmem:[#allocation2 + $0xb0] sm:$0xf]
        %v10333 = vld [vmem:[#allocation2 + $0xb4] sm:$0xf]
        %v10334 = vld [vmem:[#allocation2 + $0xb8] sm:$0x3]
        %v10336 = vshrl.u32 %v10293, 16
        %v10338 = vrot.slane %v10336, 5
        %v10339 = vshll.u32 %v10293, 16
        %v10341 = vrot.slane %v10339, 6
        %v10342 = vor.u32 %v10338, %v10341
        %v10343 = vrot.slane %v10342, 4
        %v10345 = vshrl.u32 %v10294, 16
        %v10347 = vrot.slane %v10345, 5
        %v10348 = vshll.u32 %v10294, 16
        %v10350 = vrot.slane %v10348, 6
        %v10351 = vor.u32 %v10347, %v10350
        %v10352 = vsel %vm5265, %v10343, %v10351
        %v10353 = vrot.slane %v10351, 4
        %v10355 = vshrl.u32 %v10295, 16
        %v10357 = vrot.slane %v10355, 5
        %v10358 = vshll.u32 %v10295, 16
        %v10360 = vrot.slane %v10358, 6
        %v10361 = vor.u32 %v10357, %v10360
        %v10362 = vsel %vm5265, %v10353, %v10361
        %v10363 = vrot.slane %v10361, 4
        %v10365 = vshrl.u32 %v10296, 16
        %v10367 = vrot.slane %v10365, 5
        %v10368 = vshll.u32 %v10296, 16
        %v10370 = vrot.slane %v10368, 6
        %v10371 = vor.u32 %v10367, %v10370
        %v10372 = vsel %vm5265, %v10363, %v10371
        %v10373 = vrot.slane %v10371, 4
        %v10375 = vshrl.u32 %v10297, 16
        %v10377 = vrot.slane %v10375, 5
        %v10378 = vshll.u32 %v10297, 16
        %v10380 = vrot.slane %v10378, 6
        %v10381 = vor.u32 %v10377, %v10380
        %v10382 = vsel %vm5265, %v10373, %v10381
        %v10383 = vrot.slane %v10381, 4
        %v10385 = vshrl.u32 %v10298, 16
        %v10387 = vrot.slane %v10385, 5
        %v10388 = vshll.u32 %v10298, 16
        %v10390 = vrot.slane %v10388, 6
        %v10391 = vor.u32 %v10387, %v10390
        %v10392 = vsel %vm5265, %v10383, %v10391
        %v10393 = vrot.slane %v10391, 4
        %v10395 = vshrl.u32 %v10299, 16
        %v10397 = vrot.slane %v10395, 5
        %v10398 = vshll.u32 %v10299, 16
        %v10400 = vrot.slane %v10398, 6
        %v10401 = vor.u32 %v10397, %v10400
        %v10402 = vsel %vm5265, %v10393, %v10401
        %v10403 = vrot.slane %v10401, 4
        %v10405 = vshrl.u32 %v10300, 16
        %v10407 = vrot.slane %v10405, 5
        %v10408 = vshll.u32 %v10300, 16
        %v10410 = vrot.slane %v10408, 6
        %v10411 = vor.u32 %v10407, %v10410
        %v10412 = vsel %vm5265, %v10403, %v10411
        %v10413 = vrot.slane %v10411, 4
        %v10415 = vshrl.u32 %v10301, 16
        %v10417 = vrot.slane %v10415, 5
        %v10418 = vshll.u32 %v10301, 16
        %v10420 = vrot.slane %v10418, 6
        %v10421 = vor.u32 %v10417, %v10420
        %v10422 = vsel %vm5265, %v10413, %v10421
        %v10423 = vrot.slane %v10421, 4
        %v10425 = vshrl.u32 %v10302, 16
        %v10427 = vrot.slane %v10425, 5
        %v10428 = vshll.u32 %v10302, 16
        %v10430 = vrot.slane %v10428, 6
        %v10431 = vor.u32 %v10427, %v10430
        %v10432 = vsel %vm5265, %v10423, %v10431
        %v10433 = vrot.slane %v10431, 4
        %v10435 = vshrl.u32 %v10303, 16
        %v10437 = vrot.slane %v10435, 5
        %v10438 = vshll.u32 %v10303, 16
        %v10440 = vrot.slane %v10438, 6
        %v10441 = vor.u32 %v10437, %v10440
        %v10442 = vsel %vm5265, %v10433, %v10441
        %v10443 = vrot.slane %v10441, 4
        %v10445 = vshrl.u32 %v10304, 16
        %v10447 = vrot.slane %v10445, 5
        %v10448 = vshll.u32 %v10304, 16
        %v10450 = vrot.slane %v10448, 6
        %v10451 = vor.u32 %v10447, %v10450
        %v10452 = vsel %vm5265, %v10443, %v10451
        %v10453 = vrot.slane %v10451, 4
        %v10455 = vshrl.u32 %v10305, 16
        %v10457 = vrot.slane %v10455, 5
        %v10458 = vshll.u32 %v10305, 16
        %v10460 = vrot.slane %v10458, 6
        %v10461 = vor.u32 %v10457, %v10460
        %v10462 = vsel %vm5265, %v10453, %v10461
        %v10463 = vrot.slane %v10461, 4
        %v10465 = vshrl.u32 %v10306, 16
        %v10467 = vrot.slane %v10465, 5
        %v10468 = vshll.u32 %v10306, 16
        %v10470 = vrot.slane %v10468, 6
        %v10471 = vor.u32 %v10467, %v10470
        %v10472 = vsel %vm5265, %v10463, %v10471
        %v10473 = vrot.slane %v10471, 4
        %v10475 = vshrl.u32 %v10307, 16
        %v10477 = vrot.slane %v10475, 5
        %v10478 = vshll.u32 %v10307, 16
        %v10480 = vrot.slane %v10478, 6
        %v10481 = vor.u32 %v10477, %v10480
        %v10482 = vsel %vm5265, %v10473, %v10481
        %v10483 = vrot.slane %v10481, 4
        %v10485 = vshrl.u32 %v10308, 16
        %v10487 = vrot.slane %v10485, 5
        %v10488 = vshll.u32 %v10308, 16
        %v10490 = vrot.slane %v10488, 6
        %v10491 = vor.u32 %v10487, %v10490
        %v10492 = vsel %vm5265, %v10483, %v10491
        %v10493 = vrot.slane %v10491, 4
        %v10495 = vshrl.u32 %v10309, 16
        %v10497 = vrot.slane %v10495, 5
        %v10498 = vshll.u32 %v10309, 16
        %v10500 = vrot.slane %v10498, 6
        %v10501 = vor.u32 %v10497, %v10500
        %v10502 = vsel %vm5265, %v10493, %v10501
        %v10503 = vrot.slane %v10501, 4
        %v10505 = vshrl.u32 %v10310, 16
        %v10507 = vrot.slane %v10505, 5
        %v10508 = vshll.u32 %v10310, 16
        %v10510 = vrot.slane %v10508, 6
        %v10511 = vor.u32 %v10507, %v10510
        %v10512 = vsel %vm5265, %v10503, %v10511
        %v10513 = vrot.slane %v10511, 4
        %v10515 = vshrl.u32 %v10311, 16
        %v10517 = vrot.slane %v10515, 5
        %v10518 = vshll.u32 %v10311, 16
        %v10520 = vrot.slane %v10518, 6
        %v10521 = vor.u32 %v10517, %v10520
        %v10522 = vsel %vm5265, %v10513, %v10521
        %v10523 = vrot.slane %v10521, 4
        %v10525 = vshrl.u32 %v10312, 16
        %v10527 = vrot.slane %v10525, 5
        %v10528 = vshll.u32 %v10312, 16
        %v10530 = vrot.slane %v10528, 6
        %v10531 = vor.u32 %v10527, %v10530
        %v10532 = vsel %vm5265, %v10523, %v10531
        %v10533 = vrot.slane %v10531, 4
        %v10535 = vshrl.u32 %v10313, 16
        %v10537 = vrot.slane %v10535, 5
        %v10538 = vshll.u32 %v10313, 16
        %v10540 = vrot.slane %v10538, 6
        %v10541 = vor.u32 %v10537, %v10540
        %v10542 = vsel %vm5265, %v10533, %v10541
        %v10543 = vrot.slane %v10541, 4
        %v10545 = vshrl.u32 %v10314, 16
        %v10547 = vrot.slane %v10545, 5
        %v10548 = vshll.u32 %v10314, 16
        %v10550 = vrot.slane %v10548, 6
        %v10551 = vor.u32 %v10547, %v10550
        %v10552 = vsel %vm5265, %v10543, %v10551
        %v10553 = vrot.slane %v10551, 4
        %v10555 = vshrl.u32 %v10315, 16
        %v10557 = vrot.slane %v10555, 5
        %v10558 = vshll.u32 %v10315, 16
        %v10560 = vrot.slane %v10558, 6
        %v10561 = vor.u32 %v10557, %v10560
        %v10562 = vsel %vm5265, %v10553, %v10561
        %v10563 = vrot.slane %v10561, 4
        %v10565 = vshrl.u32 %v10316, 16
        %v10567 = vrot.slane %v10565, 5
        %v10568 = vshll.u32 %v10316, 16
        %v10570 = vrot.slane %v10568, 6
        %v10571 = vor.u32 %v10567, %v10570
        %v10572 = vsel %vm5265, %v10563, %v10571
        %v10573 = vrot.slane %v10571, 4
        %v10575 = vshrl.u32 %v10317, 16
        %v10577 = vrot.slane %v10575, 5
        %v10578 = vshll.u32 %v10317, 16
        %v10580 = vrot.slane %v10578, 6
        %v10581 = vor.u32 %v10577, %v10580
        %v10582 = vsel %vm5265, %v10573, %v10581
        %v10583 = vrot.slane %v10581, 4
        %v10585 = vshrl.u32 %v10318, 16
        %v10587 = vrot.slane %v10585, 5
        %v10588 = vshll.u32 %v10318, 16
        %v10590 = vrot.slane %v10588, 6
        %v10591 = vor.u32 %v10587, %v10590
        %v10592 = vsel %vm5265, %v10583, %v10591
        %v10593 = vrot.slane %v10591, 4
        %v10595 = vshrl.u32 %v10319, 16
        %v10597 = vrot.slane %v10595, 5
        %v10598 = vshll.u32 %v10319, 16
        %v10600 = vrot.slane %v10598, 6
        %v10601 = vor.u32 %v10597, %v10600
        %v10602 = vsel %vm5265, %v10593, %v10601
        %v10603 = vrot.slane %v10601, 4
        %v10605 = vshrl.u32 %v10320, 16
        %v10607 = vrot.slane %v10605, 5
        %v10608 = vshll.u32 %v10320, 16
        %v10610 = vrot.slane %v10608, 6
        %v10611 = vor.u32 %v10607, %v10610
        %v10612 = vsel %vm5265, %v10603, %v10611
        %v10613 = vrot.slane %v10611, 4
        %v10615 = vshrl.u32 %v10321, 16
        %v10617 = vrot.slane %v10615, 5
        %v10618 = vshll.u32 %v10321, 16
        %v10620 = vrot.slane %v10618, 6
        %v10621 = vor.u32 %v10617, %v10620
        %v10622 = vsel %vm5265, %v10613, %v10621
        %v10623 = vrot.slane %v10621, 4
        %v10625 = vshrl.u32 %v10322, 16
        %v10627 = vrot.slane %v10625, 5
        %v10628 = vshll.u32 %v10322, 16
        %v10630 = vrot.slane %v10628, 6
        %v10631 = vor.u32 %v10627, %v10630
        %v10632 = vsel %vm5265, %v10623, %v10631
        %v10633 = vrot.slane %v10631, 4
        %v10635 = vshrl.u32 %v10323, 16
        %v10637 = vrot.slane %v10635, 5
        %v10638 = vshll.u32 %v10323, 16
        %v10640 = vrot.slane %v10638, 6
        %v10641 = vor.u32 %v10637, %v10640
        %v10642 = vsel %vm5265, %v10633, %v10641
        %v10643 = vrot.slane %v10641, 4
        %v10645 = vshrl.u32 %v10324, 16
        %v10647 = vrot.slane %v10645, 5
        %v10648 = vshll.u32 %v10324, 16
        %v10650 = vrot.slane %v10648, 6
        %v10651 = vor.u32 %v10647, %v10650
        %v10652 = vsel %vm5265, %v10643, %v10651
        %v10653 = vrot.slane %v10651, 4
        %v10655 = vshrl.u32 %v10325, 16
        %v10657 = vrot.slane %v10655, 5
        %v10658 = vshll.u32 %v10325, 16
        %v10660 = vrot.slane %v10658, 6
        %v10661 = vor.u32 %v10657, %v10660
        %v10662 = vsel %vm5265, %v10653, %v10661
        %v10663 = vrot.slane %v10661, 4
        %v10665 = vshrl.u32 %v10326, 16
        %v10667 = vrot.slane %v10665, 5
        %v10668 = vshll.u32 %v10326, 16
        %v10670 = vrot.slane %v10668, 6
        %v10671 = vor.u32 %v10667, %v10670
        %v10672 = vsel %vm5265, %v10663, %v10671
        %v10673 = vrot.slane %v10671, 4
        %v10675 = vshrl.u32 %v10327, 16
        %v10677 = vrot.slane %v10675, 5
        %v10678 = vshll.u32 %v10327, 16
        %v10680 = vrot.slane %v10678, 6
        %v10681 = vor.u32 %v10677, %v10680
        %v10682 = vsel %vm5265, %v10673, %v10681
        %v10683 = vrot.slane %v10681, 4
        %v10685 = vshrl.u32 %v10328, 16
        %v10687 = vrot.slane %v10685, 5
        %v10688 = vshll.u32 %v10328, 16
        %v10690 = vrot.slane %v10688, 6
        %v10691 = vor.u32 %v10687, %v10690
        %v10692 = vsel %vm5265, %v10683, %v10691
        %v10693 = vrot.slane %v10691, 4
        %v10695 = vshrl.u32 %v10329, 16
        %v10697 = vrot.slane %v10695, 5
        %v10698 = vshll.u32 %v10329, 16
        %v10700 = vrot.slane %v10698, 6
        %v10701 = vor.u32 %v10697, %v10700
        %v10702 = vsel %vm5265, %v10693, %v10701
        %v10703 = vrot.slane %v10701, 4
        %v10705 = vshrl.u32 %v10330, 16
        %v10707 = vrot.slane %v10705, 5
        %v10708 = vshll.u32 %v10330, 16
        %v10710 = vrot.slane %v10708, 6
        %v10711 = vor.u32 %v10707, %v10710
        %v10712 = vsel %vm5265, %v10703, %v10711
        %v10713 = vrot.slane %v10711, 4
        %v10715 = vshrl.u32 %v10331, 16
        %v10717 = vrot.slane %v10715, 5
        %v10718 = vshll.u32 %v10331, 16
        %v10720 = vrot.slane %v10718, 6
        %v10721 = vor.u32 %v10717, %v10720
        %v10722 = vsel %vm5265, %v10713, %v10721
        %v10723 = vrot.slane %v10721, 4
        %v10725 = vshrl.u32 %v10332, 16
        %v10727 = vrot.slane %v10725, 5
        %v10728 = vshll.u32 %v10332, 16
        %v10730 = vrot.slane %v10728, 6
        %v10731 = vor.u32 %v10727, %v10730
        %v10732 = vsel %vm5265, %v10723, %v10731
        %v10733 = vrot.slane %v10731, 4
        %v10735 = vshrl.u32 %v10333, 16
        %v10737 = vrot.slane %v10735, 5
        %v10738 = vshll.u32 %v10333, 16
        %v10740 = vrot.slane %v10738, 6
        %v10741 = vor.u32 %v10737, %v10740
        %v10742 = vsel %vm5265, %v10733, %v10741
        %v10743 = vrot.slane %v10741, 4
        %v10745 = vshrl.u32 %v10334, 16
        %v10747 = vrot.slane %v10745, 5
        %v10748 = vshll.u32 %v10334, 16
        %v10750 = vrot.slane %v10748, 6
        %v10751 = vor.u32 %v10747, %v10750
        %v10752 = vsel %vm5265, %v10743, %v10751
        %10794 = vst.msk [vmem:[#allocation3 + $0x8] sm:$0xf] %vm6482, %v10352
        %10795 = vst.msk [vmem:[#allocation3 + $0x14] sm:$0xf] %vm6482, %v10362
        %10796 = vst.msk [vmem:[#allocation3 + $0x20] sm:$0xf] %vm6482, %v10372
        %10797 = vst.msk [vmem:[#allocation3 + $0x2c] sm:$0xf] %vm6482, %v10382
        %10798 = vst.msk [vmem:[#allocation3 + $0x38] sm:$0xf] %vm6482, %v10392
        %10799 = vst.msk [vmem:[#allocation3 + $0x44] sm:$0xf] %vm6482, %v10402
        %10800 = vst.msk [vmem:[#allocation3 + $0x50] sm:$0xf] %vm6482, %v10412
        %10801 = vst.msk [vmem:[#allocation3 + $0x5c] sm:$0xf] %vm6482, %v10422
        %10802 = vst.msk [vmem:[#allocation3 + $0x68] sm:$0xf] %vm6482, %v10432
        %10803 = vst.msk [vmem:[#allocation3 + $0x74] sm:$0xf] %vm6482, %v10442
        %10804 = vst.msk [vmem:[#allocation3 + $0x80] sm:$0xf] %vm6482, %v10452
        %10805 = vst.msk [vmem:[#allocation3 + $0x8c] sm:$0xf] %vm6482, %v10462
        %10806 = vst.msk [vmem:[#allocation3 + $0x98] sm:$0xf] %vm6482, %v10472
        %10807 = vst.msk [vmem:[#allocation3 + $0xa4] sm:$0xf] %vm6482, %v10482
        %10808 = vst.msk [vmem:[#allocation3 + $0xb0] sm:$0xf] %vm6482, %v10492
        %10809 = vst.msk [vmem:[#allocation3 + $0xbc] sm:$0xf] %vm6482, %v10502
        %10810 = vst.msk [vmem:[#allocation3 + $0xc8] sm:$0xf] %vm6482, %v10512
        %10811 = vst.msk [vmem:[#allocation3 + $0xd4] sm:$0xf] %vm6482, %v10522
        %10812 = vst.msk [vmem:[#allocation3 + $0xe0] sm:$0xf] %vm6482, %v10532
        %10813 = vst.msk [vmem:[#allocation3 + $0xec] sm:$0xf] %vm6482, %v10542
        %10814 = vst.msk [vmem:[#allocation3 + $0xf8] sm:$0xf] %vm6482, %v10552
        %10815 = vst.msk [vmem:[#allocation3 + $0x104] sm:$0xf] %vm6482, %v10562
        %10816 = vst.msk [vmem:[#allocation3 + $0x110] sm:$0xf] %vm6482, %v10572
        %10817 = vst.msk [vmem:[#allocation3 + $0x11c] sm:$0xf] %vm6482, %v10582
        %10818 = vst.msk [vmem:[#allocation3 + $0x128] sm:$0xf] %vm6482, %v10592
        %10819 = vst.msk [vmem:[#allocation3 + $0x134] sm:$0xf] %vm6482, %v10602
        %10820 = vst.msk [vmem:[#allocation3 + $0x140] sm:$0xf] %vm6482, %v10612
        %10821 = vst.msk [vmem:[#allocation3 + $0x14c] sm:$0xf] %vm6482, %v10622
        %10822 = vst.msk [vmem:[#allocation3 + $0x158] sm:$0xf] %vm6482, %v10632
        %10823 = vst.msk [vmem:[#allocation3 + $0x164] sm:$0xf] %vm6482, %v10642
        %10824 = vst.msk [vmem:[#allocation3 + $0x170] sm:$0xf] %vm6482, %v10652
        %10825 = vst.msk [vmem:[#allocation3 + $0x17c] sm:$0xf] %vm6482, %v10662
        %10826 = vst.msk [vmem:[#allocation3 + $0x188] sm:$0xf] %vm6482, %v10672
        %10827 = vst.msk [vmem:[#allocation3 + $0x194] sm:$0xf] %vm6482, %v10682
        %10828 = vst.msk [vmem:[#allocation3 + $0x1a0] sm:$0xf] %vm6482, %v10692
        %10829 = vst.msk [vmem:[#allocation3 + $0x1ac] sm:$0xf] %vm6482, %v10702
        %10830 = vst.msk [vmem:[#allocation3 + $0x1b8] sm:$0xf] %vm6482, %v10712
        %10831 = vst.msk [vmem:[#allocation3 + $0x1c4] sm:$0xf] %vm6482, %v10722
        %10832 = vst.msk [vmem:[#allocation3 + $0x1d0] sm:$0xf] %vm6482, %v10732
        %10833 = vst.msk [vmem:[#allocation3 + $0x1dc] sm:$0xf] %vm6482, %v10742
        %10834 = vst.msk [vmem:[#allocation3 + $0x1e8] sm:$0xf] %vm6482, %v10752
        %v10835 = vld [vmem:[#allocation3] sm:$0xff]
        %v10836 = vld [vmem:[#allocation3 + $0x8] sm:$0xf]
        %v10837 = vld [vmem:[#allocation3 + $0xc] sm:$0xff]
        %v10838 = vld [vmem:[#allocation3 + $0x14] sm:$0xf]
        %v10839 = vld [vmem:[#allocation3 + $0x18] sm:$0xff]
        %v10840 = vld [vmem:[#allocation3 + $0x20] sm:$0xf]
        %v10841 = vld [vmem:[#allocation3 + $0x24] sm:$0xff]
        %v10842 = vld [vmem:[#allocation3 + $0x2c] sm:$0xf]
        %v10843 = vld [vmem:[#allocation3 + $0x30] sm:$0xff]
        %v10844 = vld [vmem:[#allocation3 + $0x38] sm:$0xf]
        %v10845 = vld [vmem:[#allocation3 + $0x3c] sm:$0xff]
        %v10846 = vld [vmem:[#allocation3 + $0x44] sm:$0xf]
        %v10847 = vld [vmem:[#allocation3 + $0x48] sm:$0xff]
        %v10848 = vld [vmem:[#allocation3 + $0x50] sm:$0xf]
        %v10849 = vld [vmem:[#allocation3 + $0x54] sm:$0xff]
        %v10850 = vld [vmem:[#allocation3 + $0x5c] sm:$0xf]
        %v10851 = vld [vmem:[#allocation3 + $0x60] sm:$0xff]
        %v10852 = vld [vmem:[#allocation3 + $0x68] sm:$0xf]
        %v10853 = vld [vmem:[#allocation3 + $0x6c] sm:$0xff]
        %v10854 = vld [vmem:[#allocation3 + $0x74] sm:$0xf]
        %v10855 = vld [vmem:[#allocation3 + $0x78] sm:$0xff]
        %v10856 = vld [vmem:[#allocation3 + $0x80] sm:$0xf]
        %v10857 = vld [vmem:[#allocation3 + $0x84] sm:$0xff]
        %v10858 = vld [vmem:[#allocation3 + $0x8c] sm:$0xf]
        %v10859 = vld [vmem:[#allocation3 + $0x90] sm:$0xff]
        %v10860 = vld [vmem:[#allocation3 + $0x98] sm:$0xf]
        %v10861 = vld [vmem:[#allocation3 + $0x9c] sm:$0xff]
        %v10862 = vld [vmem:[#allocation3 + $0xa4] sm:$0xf]
        %v10863 = vld [vmem:[#allocation3 + $0xa8] sm:$0xff]
        %v10864 = vld [vmem:[#allocation3 + $0xb0] sm:$0xf]
        %v10865 = vld [vmem:[#allocation3 + $0xb4] sm:$0xff]
        %v10866 = vld [vmem:[#allocation3 + $0xbc] sm:$0xf]
        %v10867 = vld [vmem:[#allocation3 + $0xc0] sm:$0xff]
        %v10868 = vld [vmem:[#allocation3 + $0xc8] sm:$0xf]
        %v10869 = vld [vmem:[#allocation3 + $0xcc] sm:$0xff]
        %v10870 = vld [vmem:[#allocation3 + $0xd4] sm:$0xf]
        %v10871 = vld [vmem:[#allocation3 + $0xd8] sm:$0xff]
        %v10872 = vld [vmem:[#allocation3 + $0xe0] sm:$0xf]
        %v10873 = vld [vmem:[#allocation3 + $0xe4] sm:$0xff]
        %v10874 = vld [vmem:[#allocation3 + $0xec] sm:$0xf]
        %v10875 = vld [vmem:[#allocation3 + $0xf0] sm:$0xff]
        %v10876 = vld [vmem:[#allocation3 + $0xf8] sm:$0xf]
        %v10877 = vld [vmem:[#allocation3 + $0xfc] sm:$0xff]
        %v10878 = vld [vmem:[#allocation3 + $0x104] sm:$0xf]
        %v10879 = vld [vmem:[#allocation3 + $0x108] sm:$0xff]
        %v10880 = vld [vmem:[#allocation3 + $0x110] sm:$0xf]
        %v10881 = vld [vmem:[#allocation3 + $0x114] sm:$0xff]
        %v10882 = vld [vmem:[#allocation3 + $0x11c] sm:$0xf]
        %v10883 = vld [vmem:[#allocation3 + $0x120] sm:$0xff]
        %v10884 = vld [vmem:[#allocation3 + $0x128] sm:$0xf]
        %v10885 = vld [vmem:[#allocation3 + $0x12c] sm:$0xff]
        %v10886 = vld [vmem:[#allocation3 + $0x134] sm:$0xf]
        %v10887 = vld [vmem:[#allocation3 + $0x138] sm:$0xff]
        %v10888 = vld [vmem:[#allocation3 + $0x140] sm:$0xf]
        %v10889 = vld [vmem:[#allocation3 + $0x144] sm:$0xff]
        %v10890 = vld [vmem:[#allocation3 + $0x14c] sm:$0xf]
        %v10891 = vld [vmem:[#allocation3 + $0x150] sm:$0xff]
        %v10892 = vld [vmem:[#allocation3 + $0x158] sm:$0xf]
        %v10893 = vld [vmem:[#allocation3 + $0x15c] sm:$0xff]
        %v10894 = vld [vmem:[#allocation3 + $0x164] sm:$0xf]
        %v10895 = vld [vmem:[#allocation3 + $0x168] sm:$0xff]
        %v10896 = vld [vmem:[#allocation3 + $0x170] sm:$0xf]
        %v10897 = vld [vmem:[#allocation3 + $0x174] sm:$0xff]
        %v10898 = vld [vmem:[#allocation3 + $0x17c] sm:$0xf]
        %v10899 = vld [vmem:[#allocation3 + $0x180] sm:$0xff]
        %v10900 = vld [vmem:[#allocation3 + $0x188] sm:$0xf]
        %v10901 = vld [vmem:[#allocation3 + $0x18c] sm:$0xff]
        %v10902 = vld [vmem:[#allocation3 + $0x194] sm:$0xf]
        %v10903 = vld [vmem:[#allocation3 + $0x198] sm:$0xff]
        %v10904 = vld [vmem:[#allocation3 + $0x1a0] sm:$0xf]
        %v10905 = vld [vmem:[#allocation3 + $0x1a4] sm:$0xff]
        %v10906 = vld [vmem:[#allocation3 + $0x1ac] sm:$0xf]
        %v10907 = vld [vmem:[#allocation3 + $0x1b0] sm:$0xff]
        %v10908 = vld [vmem:[#allocation3 + $0x1b8] sm:$0xf]
        %v10909 = vld [vmem:[#allocation3 + $0x1bc] sm:$0xff]
        %v10910 = vld [vmem:[#allocation3 + $0x1c4] sm:$0xf]
        %v10911 = vld [vmem:[#allocation3 + $0x1c8] sm:$0xff]
        %v10912 = vld [vmem:[#allocation3 + $0x1d0] sm:$0xf]
        %v10913 = vld [vmem:[#allocation3 + $0x1d4] sm:$0xff]
        %v10914 = vld [vmem:[#allocation3 + $0x1dc] sm:$0xf]
        %v10915 = vld [vmem:[#allocation3 + $0x1e0] sm:$0xff]
        %v10916 = vld [vmem:[#allocation3 + $0x1e8] sm:$0xf]
        %v10917 = vld [vmem:[%s6] sm:$0xf]
        %v10918 = vld [vmem:[%s6 + $0x4] sm:$0xf]
        %v10919 = vld [vmem:[%s6 + $0x8] sm:$0xf]
        %v10920 = vld [vmem:[%s6 + $0xc] sm:$0xf]
        %v10921 = vld [vmem:[%s6 + $0x10] sm:$0xf]
        %v10922 = vld [vmem:[%s6 + $0x14] sm:$0xf]
        %v10923 = vld [vmem:[%s6 + $0x18] sm:$0xf]
        %v10924 = vld [vmem:[%s6 + $0x1c] sm:$0xf]
        %v10925 = vld [vmem:[%s6 + $0x20] sm:$0xf]
        %v10926 = vld [vmem:[%s6 + $0x24] sm:$0xf]
        %v10927 = vld [vmem:[%s6 + $0x28] sm:$0xf]
        %v10928 = vld [vmem:[%s6 + $0x2c] sm:$0xf]
        %v10929 = vld [vmem:[%s6 + $0x30] sm:$0xf]
        %v10930 = vld [vmem:[%s6 + $0x34] sm:$0xf]
        %v10931 = vld [vmem:[%s6 + $0x38] sm:$0xf]
        %v10932 = vld [vmem:[%s6 + $0x3c] sm:$0xf]
        %v10933 = vld [vmem:[%s6 + $0x40] sm:$0xf]
        %v10934 = vld [vmem:[%s6 + $0x44] sm:$0xf]
        %v10935 = vld [vmem:[%s6 + $0x48] sm:$0xf]
        %v10936 = vld [vmem:[%s6 + $0x4c] sm:$0xf]
        %v10937 = vld [vmem:[%s6 + $0x50] sm:$0xf]
        %v10938 = vld [vmem:[%s6 + $0x54] sm:$0xf]
        %v10939 = vld [vmem:[%s6 + $0x58] sm:$0xf]
        %v10940 = vld [vmem:[%s6 + $0x5c] sm:$0xf]
        %v10941 = vld [vmem:[%s6 + $0x60] sm:$0xf]
        %v10942 = vld [vmem:[%s6 + $0x64] sm:$0xf]
        %v10943 = vld [vmem:[%s6 + $0x68] sm:$0xf]
        %v10944 = vld [vmem:[%s6 + $0x6c] sm:$0xf]
        %v10945 = vld [vmem:[%s6 + $0x70] sm:$0xf]
        %v10946 = vld [vmem:[%s6 + $0x74] sm:$0xf]
        %v10947 = vld [vmem:[%s6 + $0x78] sm:$0xf]
        %v10948 = vld [vmem:[%s6 + $0x7c] sm:$0xf]
        %v10949 = vld [vmem:[%s6 + $0x80] sm:$0xf]
        %v10950 = vld [vmem:[%s6 + $0x84] sm:$0xf]
        %v10951 = vld [vmem:[%s6 + $0x88] sm:$0xf]
        %v10952 = vld [vmem:[%s6 + $0x8c] sm:$0xf]
        %v10953 = vld [vmem:[%s7] sm:$0x1]
        %v10955 = vperm.slane %v10953, 0
        %v11039 = vunpack.c.l.b16 %v10835
        %v11040 = vunpack.c.h.b16 %v10835
        %v11041 = vunpack.c.l.b16 %v10836
        %v11042 = vunpack.c.l.b16 %v10837
        %v11043 = vunpack.c.h.b16 %v10837
        %v11044 = vunpack.c.l.b16 %v10838
        %v11045 = vunpack.c.l.b16 %v10839
        %v11046 = vunpack.c.h.b16 %v10839
        %v11047 = vunpack.c.l.b16 %v10840
        %v11048 = vunpack.c.l.b16 %v10841
        %v11049 = vunpack.c.h.b16 %v10841
        %v11050 = vunpack.c.l.b16 %v10842
        %v11051 = vunpack.c.l.b16 %v10843
        %v11052 = vunpack.c.h.b16 %v10843
        %v11053 = vunpack.c.l.b16 %v10844
        %v11054 = vunpack.c.l.b16 %v10845
        %v11055 = vunpack.c.h.b16 %v10845
        %v11056 = vunpack.c.l.b16 %v10846
        %v11057 = vunpack.c.l.b16 %v10847
        %v11058 = vunpack.c.h.b16 %v10847
        %v11059 = vunpack.c.l.b16 %v10848
        %v11060 = vunpack.c.l.b16 %v10849
        %v11061 = vunpack.c.h.b16 %v10849
        %v11062 = vunpack.c.l.b16 %v10850
        %v11063 = vunpack.c.l.b16 %v10851
        %v11064 = vunpack.c.h.b16 %v10851
        %v11065 = vunpack.c.l.b16 %v10852
        %v11066 = vunpack.c.l.b16 %v10853
        %v11067 = vunpack.c.h.b16 %v10853
        %v11068 = vunpack.c.l.b16 %v10854
        %v11069 = vunpack.c.l.b16 %v10855
        %v11070 = vunpack.c.h.b16 %v10855
        %v11071 = vunpack.c.l.b16 %v10856
        %v11072 = vunpack.c.l.b16 %v10857
        %v11073 = vunpack.c.h.b16 %v10857
        %v11074 = vunpack.c.l.b16 %v10858
        %v11075 = vunpack.c.l.b16 %v10859
        %v11076 = vunpack.c.h.b16 %v10859
        %v11077 = vunpack.c.l.b16 %v10860
        %v11078 = vunpack.c.l.b16 %v10861
        %v11079 = vunpack.c.h.b16 %v10861
        %v11080 = vunpack.c.l.b16 %v10862
        %v11081 = vunpack.c.l.b16 %v10863
        %v11082 = vunpack.c.h.b16 %v10863
        %v11083 = vunpack.c.l.b16 %v10864
        %v11084 = vunpack.c.l.b16 %v10865
        %v11085 = vunpack.c.h.b16 %v10865
        %v11086 = vunpack.c.l.b16 %v10866
        %v11087 = vunpack.c.l.b16 %v10867
        %v11088 = vunpack.c.h.b16 %v10867
        %v11089 = vunpack.c.l.b16 %v10868
        %v11090 = vunpack.c.l.b16 %v10869
        %v11091 = vunpack.c.h.b16 %v10869
        %v11092 = vunpack.c.l.b16 %v10870
        %v11093 = vunpack.c.l.b16 %v10871
        %v11094 = vunpack.c.h.b16 %v10871
        %v11095 = vunpack.c.l.b16 %v10872
        %v11096 = vunpack.c.l.b16 %v10873
        %v11097 = vunpack.c.h.b16 %v10873
        %v11098 = vunpack.c.l.b16 %v10874
        %v11099 = vunpack.c.l.b16 %v10875
        %v11100 = vunpack.c.h.b16 %v10875
        %v11101 = vunpack.c.l.b16 %v10876
        %v11102 = vunpack.c.l.b16 %v10877
        %v11103 = vunpack.c.h.b16 %v10877
        %v11104 = vunpack.c.l.b16 %v10878
        %v11105 = vunpack.c.l.b16 %v10879
        %v11106 = vunpack.c.h.b16 %v10879
        %v11107 = vunpack.c.l.b16 %v10880
        %v11108 = vunpack.c.l.b16 %v10881
        %v11109 = vunpack.c.h.b16 %v10881
        %v11110 = vunpack.c.l.b16 %v10882
        %v11111 = vunpack.c.l.b16 %v10883
        %v11112 = vunpack.c.h.b16 %v10883
        %v11113 = vunpack.c.l.b16 %v10884
        %v11114 = vunpack.c.l.b16 %v10885
        %v11115 = vunpack.c.h.b16 %v10885
        %v11116 = vunpack.c.l.b16 %v10886
        %v11117 = vunpack.c.l.b16 %v10887
        %v11118 = vunpack.c.h.b16 %v10887
        %v11119 = vunpack.c.l.b16 %v10888
        %v11120 = vunpack.c.l.b16 %v10889
        %v11121 = vunpack.c.h.b16 %v10889
        %v11122 = vunpack.c.l.b16 %v10890
        %v11123 = vunpack.c.l.b16 %v10891
        %v11124 = vunpack.c.h.b16 %v10891
        %v11125 = vunpack.c.l.b16 %v10892
        %v11126 = vunpack.c.l.b16 %v10893
        %v11127 = vunpack.c.h.b16 %v10893
        %v11128 = vunpack.c.l.b16 %v10894
        %v11129 = vunpack.c.l.b16 %v10895
        %v11130 = vunpack.c.h.b16 %v10895
        %v11131 = vunpack.c.l.b16 %v10896
        %v11132 = vunpack.c.l.b16 %v10897
        %v11133 = vunpack.c.h.b16 %v10897
        %v11134 = vunpack.c.l.b16 %v10898
        %v11135 = vunpack.c.l.b16 %v10899
        %v11136 = vunpack.c.h.b16 %v10899
        %v11137 = vunpack.c.l.b16 %v10900
        %v11138 = vunpack.c.l.b16 %v10901
        %v11139 = vunpack.c.h.b16 %v10901
        %v11140 = vunpack.c.l.b16 %v10902
        %v11141 = vunpack.c.l.b16 %v10903
        %v11142 = vunpack.c.h.b16 %v10903
        %v11143 = vunpack.c.l.b16 %v10904
        %v11144 = vunpack.c.l.b16 %v10905
        %v11145 = vunpack.c.h.b16 %v10905
        %v11146 = vunpack.c.l.b16 %v10906
        %v11147 = vunpack.c.l.b16 %v10907
        %v11148 = vunpack.c.h.b16 %v10907
        %v11149 = vunpack.c.l.b16 %v10908
        %v11150 = vunpack.c.l.b16 %v10909
        %v11151 = vunpack.c.h.b16 %v10909
        %v11152 = vunpack.c.l.b16 %v10910
        %v11153 = vunpack.c.l.b16 %v10911
        %v11154 = vunpack.c.h.b16 %v10911
        %v11155 = vunpack.c.l.b16 %v10912
        %v11156 = vunpack.c.l.b16 %v10913
        %v11157 = vunpack.c.h.b16 %v10913
        %v11158 = vunpack.c.l.b16 %v10914
        %v11159 = vunpack.c.l.b16 %v10915
        %v11160 = vunpack.c.h.b16 %v10915
        %v11161 = vunpack.c.l.b16 %v10916
        %v11162 = vpack.c.b16 %v11042, %v11039
        %v11163 = vpack.c.b16 %v11043, %v11040
        %v11164 = vpack.c.b16 %v11044, %v11041
        %v11165 = vpack.c.b16 %v11048, %v11045
        %v11166 = vpack.c.b16 %v11049, %v11046
        %v11167 = vpack.c.b16 %v11050, %v11047
        %v11168 = vpack.c.b16 %v11054, %v11051
        %v11169 = vpack.c.b16 %v11055, %v11052
        %v11170 = vpack.c.b16 %v11056, %v11053
        %v11171 = vpack.c.b16 %v11060, %v11057
        %v11172 = vpack.c.b16 %v11061, %v11058
        %v11173 = vpack.c.b16 %v11062, %v11059
        %v11174 = vpack.c.b16 %v11066, %v11063
        %v11175 = vpack.c.b16 %v11067, %v11064
        %v11176 = vpack.c.b16 %v11068, %v11065
        %v11177 = vpack.c.b16 %v11072, %v11069
        %v11178 = vpack.c.b16 %v11073, %v11070
        %v11179 = vpack.c.b16 %v11074, %v11071
        %v11180 = vpack.c.b16 %v11078, %v11075
        %v11181 = vpack.c.b16 %v11079, %v11076
        %v11182 = vpack.c.b16 %v11080, %v11077
        %v11183 = vpack.c.b16 %v11084, %v11081
        %v11184 = vpack.c.b16 %v11085, %v11082
        %v11185 = vpack.c.b16 %v11086, %v11083
        %v11186 = vpack.c.b16 %v11090, %v11087
        %v11187 = vpack.c.b16 %v11091, %v11088
        %v11188 = vpack.c.b16 %v11092, %v11089
        %v11189 = vpack.c.b16 %v11096, %v11093
        %v11190 = vpack.c.b16 %v11097, %v11094
        %v11191 = vpack.c.b16 %v11098, %v11095
        %v11192 = vpack.c.b16 %v11102, %v11099
        %v11193 = vpack.c.b16 %v11103, %v11100
        %v11194 = vpack.c.b16 %v11104, %v11101
        %v11195 = vpack.c.b16 %v11108, %v11105
        %v11196 = vpack.c.b16 %v11109, %v11106
        %v11197 = vpack.c.b16 %v11110, %v11107
        %v11198 = vpack.c.b16 %v11114, %v11111
        %v11199 = vpack.c.b16 %v11115, %v11112
        %v11200 = vpack.c.b16 %v11116, %v11113
        %v11201 = vpack.c.b16 %v11120, %v11117
        %v11202 = vpack.c.b16 %v11121, %v11118
        %v11203 = vpack.c.b16 %v11122, %v11119
        %v11204 = vpack.c.b16 %v11126, %v11123
        %v11205 = vpack.c.b16 %v11127, %v11124
        %v11206 = vpack.c.b16 %v11128, %v11125
        %v11207 = vpack.c.b16 %v11132, %v11129
        %v11208 = vpack.c.b16 %v11133, %v11130
        %v11209 = vpack.c.b16 %v11134, %v11131
        %v11210 = vpack.c.b16 %v11138, %v11135
        %v11211 = vpack.c.b16 %v11139, %v11136
        %v11212 = vpack.c.b16 %v11140, %v11137
        %v11213 = vpack.c.b16 %v11144, %v11141
        %v11214 = vpack.c.b16 %v11145, %v11142
        %v11215 = vpack.c.b16 %v11146, %v11143
        %v11216 = vpack.c.b16 %v11150, %v11147
        %v11217 = vpack.c.b16 %v11151, %v11148
        %v11218 = vpack.c.b16 %v11152, %v11149
        %v11219 = vpack.c.b16 %v11156, %v11153
        %v11220 = vpack.c.b16 %v11157, %v11154
        %v11221 = vpack.c.b16 %v11158, %v11155
        %v11222 = vpack.c.b16 %v11159, %v11159
        %v11223 = vpack.c.b16 %v11160, %v11160
        %v11224 = vpack.c.b16 %v11161, %v11161
        %v11303 = vunpack.c.l.b16 %v10917
        %v11304 = vunpack.c.l.b16 %v10918
        %v11305 = vunpack.c.l.b16 %v10919
        %v11306 = vunpack.c.l.b16 %v10920
        %v11307 = vunpack.c.l.b16 %v10921
        %v11308 = vunpack.c.l.b16 %v10922
        %v11309 = vunpack.c.l.b16 %v10923
        %v11310 = vunpack.c.l.b16 %v10924
        %v11311 = vunpack.c.l.b16 %v10925
        %v11312 = vunpack.c.l.b16 %v10926
        %v11313 = vunpack.c.l.b16 %v10927
        %v11314 = vunpack.c.l.b16 %v10928
        %v11315 = vunpack.c.l.b16 %v10929
        %v11316 = vunpack.c.l.b16 %v10930
        %v11317 = vunpack.c.l.b16 %v10931
        %v11318 = vunpack.c.l.b16 %v10932
        %v11319 = vunpack.c.l.b16 %v10933
        %v11320 = vunpack.c.l.b16 %v10934
        %v11321 = vunpack.c.l.b16 %v10935
        %v11322 = vunpack.c.l.b16 %v10936
        %v11323 = vunpack.c.l.b16 %v10937
        %v11324 = vunpack.c.l.b16 %v10938
        %v11325 = vunpack.c.l.b16 %v10939
        %v11326 = vunpack.c.l.b16 %v10940
        %v11327 = vunpack.c.l.b16 %v10941
        %v11328 = vunpack.c.l.b16 %v10942
        %v11329 = vunpack.c.l.b16 %v10943
        %v11330 = vunpack.c.l.b16 %v10944
        %v11331 = vunpack.c.l.b16 %v10945
        %v11332 = vunpack.c.l.b16 %v10946
        %v11333 = vunpack.c.l.b16 %v10947
        %v11334 = vunpack.c.l.b16 %v10948
        %v11335 = vunpack.c.l.b16 %v10949
        %v11336 = vunpack.c.l.b16 %v10950
        %v11337 = vunpack.c.l.b16 %v10951
        %v11338 = vunpack.c.l.b16 %v10952
        %v11339 = vpack.c.b16 %v11304, %v11303
        %v11340 = vpack.c.b16 %v11306, %v11305
        %v11341 = vpack.c.b16 %v11308, %v11307
        %v11342 = vpack.c.b16 %v11310, %v11309
        %v11343 = vpack.c.b16 %v11312, %v11311
        %v11344 = vpack.c.b16 %v11314, %v11313
        %v11345 = vpack.c.b16 %v11316, %v11315
        %v11346 = vpack.c.b16 %v11318, %v11317
        %v11347 = vpack.c.b16 %v11320, %v11319
        %v11348 = vpack.c.b16 %v11322, %v11321
        %v11349 = vpack.c.b16 %v11324, %v11323
        %v11350 = vpack.c.b16 %v11326, %v11325
        %v11351 = vpack.c.b16 %v11328, %v11327
        %v11352 = vpack.c.b16 %v11330, %v11329
        %v11353 = vpack.c.b16 %v11332, %v11331
        %v11354 = vpack.c.b16 %v11334, %v11333
        %v11355 = vpack.c.b16 %v11336, %v11335
        %v11356 = vpack.c.b16 %v11338, %v11337
        %vm11375 = vcmask 261120
        %v11377 = vsel %vm11375, %v11164, 0
        %v11380 = vsel %vm11375, %v11167, 0
        %v11383 = vsel %vm11375, %v11170, 0
        %v11386 = vsel %vm11375, %v11173, 0
        %v11389 = vsel %vm11375, %v11176, 0
        %v11392 = vsel %vm11375, %v11179, 0
        %v11395 = vsel %vm11375, %v11182, 0
        %v11398 = vsel %vm11375, %v11185, 0
        %v11401 = vsel %vm11375, %v11188, 0
        %v11404 = vsel %vm11375, %v11191, 0
        %v11407 = vsel %vm11375, %v11194, 0
        %v11410 = vsel %vm11375, %v11197, 0
        %v11413 = vsel %vm11375, %v11200, 0
        %v11416 = vsel %vm11375, %v11203, 0
        %v11419 = vsel %vm11375, %v11206, 0
        %v11422 = vsel %vm11375, %v11209, 0
        %v11425 = vsel %vm11375, %v11212, 0
        %v11428 = vsel %vm11375, %v11215, 0
        %v11431 = vsel %vm11375, %v11218, 0
        %v11434 = vsel %vm11375, %v11221, 0
        %v11437 = vsel %vm11375, %v11224, 0
        %11439 = vmatpush.bf16.msra.mxu0 %v11346
        %11440 = vmatpush.bf16.msra.mxu0 %v11345
        %11441 = vmatpush.bf16.msra.mxu0 %v11344
        %11442 = vmatpush.bf16.msra.mxu0 %v11343
        %11443 = vmatpush.bf16.msra.mxu0 %v11342
        %11444 = vmatpush.bf16.msra.mxu0 %v11341
        %11445 = vmatpush.bf16.msra.mxu0 %v11340
        %11446 = vmatpush.bf16.msra.mxu0 %v11339
        %11447 = vmatmul.bf16.gmra.mxu0 %v11162
        %v11448 = vpop.f32.mrf.mxu0
        %v11449 = vadd.f32 %v10955, %v11448
        %v11450 = vpop.f32.mrf.mxu0
        %v11451 = vadd.f32 %v10955, %v11450
        %11452 = vmatmul.bf16.gmra.mxu0 %v11165
        %v11453 = vpop.f32.mrf.mxu0
        %v11454 = vadd.f32 %v10955, %v11453
        %v11455 = vpop.f32.mrf.mxu0
        %v11456 = vadd.f32 %v10955, %v11455
        %11457 = vmatmul.bf16.gmra.mxu0 %v11168
        %v11458 = vpop.f32.mrf.mxu0
        %v11459 = vadd.f32 %v10955, %v11458
        %v11460 = vpop.f32.mrf.mxu0
        %v11461 = vadd.f32 %v10955, %v11460
        %11462 = vmatmul.bf16.gmra.mxu0 %v11171
        %v11463 = vpop.f32.mrf.mxu0
        %v11464 = vadd.f32 %v10955, %v11463
        %v11465 = vpop.f32.mrf.mxu0
        %v11466 = vadd.f32 %v10955, %v11465
        %11467 = vmatmul.bf16.gmra.mxu0 %v11174
        %v11468 = vpop.f32.mrf.mxu0
        %v11469 = vadd.f32 %v10955, %v11468
        %v11470 = vpop.f32.mrf.mxu0
        %v11471 = vadd.f32 %v10955, %v11470
        %11472 = vmatmul.bf16.gmra.mxu0 %v11177
        %v11473 = vpop.f32.mrf.mxu0
        %v11474 = vadd.f32 %v10955, %v11473
        %v11475 = vpop.f32.mrf.mxu0
        %v11476 = vadd.f32 %v10955, %v11475
        %11477 = vmatmul.bf16.gmra.mxu0 %v11180
        %v11478 = vpop.f32.mrf.mxu0
        %v11479 = vadd.f32 %v10955, %v11478
        %v11480 = vpop.f32.mrf.mxu0
        %v11481 = vadd.f32 %v10955, %v11480
        %11482 = vmatmul.bf16.gmra.mxu0 %v11183
        %v11483 = vpop.f32.mrf.mxu0
        %v11484 = vadd.f32 %v10955, %v11483
        %v11485 = vpop.f32.mrf.mxu0
        %v11486 = vadd.f32 %v10955, %v11485
        %11487 = vmatmul.bf16.gmra.mxu0 %v11186
        %v11488 = vpop.f32.mrf.mxu0
        %v11489 = vadd.f32 %v10955, %v11488
        %v11490 = vpop.f32.mrf.mxu0
        %v11491 = vadd.f32 %v10955, %v11490
        %11492 = vmatmul.bf16.gmra.mxu0 %v11189
        %v11493 = vpop.f32.mrf.mxu0
        %v11494 = vadd.f32 %v10955, %v11493
        %v11495 = vpop.f32.mrf.mxu0
        %v11496 = vadd.f32 %v10955, %v11495
        %11497 = vmatmul.bf16.gmra.mxu0 %v11192
        %v11498 = vpop.f32.mrf.mxu0
        %v11499 = vadd.f32 %v10955, %v11498
        %v11500 = vpop.f32.mrf.mxu0
        %v11501 = vadd.f32 %v10955, %v11500
        %11502 = vmatmul.bf16.gmra.mxu0 %v11195
        %v11503 = vpop.f32.mrf.mxu0
        %v11504 = vadd.f32 %v10955, %v11503
        %v11505 = vpop.f32.mrf.mxu0
        %v11506 = vadd.f32 %v10955, %v11505
        %11507 = vmatmul.bf16.gmra.mxu0 %v11198
        %v11508 = vpop.f32.mrf.mxu0
        %v11509 = vadd.f32 %v10955, %v11508
        %v11510 = vpop.f32.mrf.mxu0
        %v11511 = vadd.f32 %v10955, %v11510
        %11512 = vmatmul.bf16.gmra.mxu0 %v11201
        %v11513 = vpop.f32.mrf.mxu0
        %v11514 = vadd.f32 %v10955, %v11513
        %v11515 = vpop.f32.mrf.mxu0
        %v11516 = vadd.f32 %v10955, %v11515
        %11517 = vmatmul.bf16.gmra.mxu0 %v11204
        %v11518 = vpop.f32.mrf.mxu0
        %v11519 = vadd.f32 %v10955, %v11518
        %v11520 = vpop.f32.mrf.mxu0
        %v11521 = vadd.f32 %v10955, %v11520
        %11522 = vmatmul.bf16.gmra.mxu0 %v11207
        %v11523 = vpop.f32.mrf.mxu0
        %v11524 = vadd.f32 %v10955, %v11523
        %v11525 = vpop.f32.mrf.mxu0
        %v11526 = vadd.f32 %v10955, %v11525
        %11527 = vmatmul.bf16.gmra.mxu0 %v11210
        %v11528 = vpop.f32.mrf.mxu0
        %v11529 = vadd.f32 %v10955, %v11528
        %v11530 = vpop.f32.mrf.mxu0
        %v11531 = vadd.f32 %v10955, %v11530
        %11532 = vmatmul.bf16.gmra.mxu0 %v11213
        %v11533 = vpop.f32.mrf.mxu0
        %v11534 = vadd.f32 %v10955, %v11533
        %v11535 = vpop.f32.mrf.mxu0
        %v11536 = vadd.f32 %v10955, %v11535
        %11537 = vmatmul.bf16.gmra.mxu0 %v11216
        %v11538 = vpop.f32.mrf.mxu0
        %v11539 = vadd.f32 %v10955, %v11538
        %v11540 = vpop.f32.mrf.mxu0
        %v11541 = vadd.f32 %v10955, %v11540
        %11542 = vmatmul.bf16.gmra.mxu0 %v11219
        %v11543 = vpop.f32.mrf.mxu0
        %v11544 = vadd.f32 %v10955, %v11543
        %v11545 = vpop.f32.mrf.mxu0
        %v11546 = vadd.f32 %v10955, %v11545
        %11547 = vmatmul.bf16.gmra.mxu0 %v11222
        %v11548 = vpop.f32.mrf.mxu0
        %v11549 = vadd.f32 %v10955, %v11548
        %v11550 = vpop.f32.mrf.mxu0
        %11551 = vdwg.mxu0
        %11552 = vmatpush.bf16.msra.mxu0 %v11354
        %11553 = vmatpush.bf16.msra.mxu0 %v11353
        %11554 = vmatpush.bf16.msra.mxu0 %v11352
        %11555 = vmatpush.bf16.msra.mxu0 %v11351
        %11556 = vmatpush.bf16.msra.mxu0 %v11350
        %11557 = vmatpush.bf16.msra.mxu0 %v11349
        %11558 = vmatpush.bf16.msra.mxu0 %v11348
        %11559 = vmatpush.bf16.msra.mxu0 %v11347
        %11560 = vmatmul.bf16.gmra.mxu0 %v11163
        %v11561 = vpop.f32.mrf.mxu0
        %v11562 = vadd.f32 %v11449, %v11561
        %v11563 = vpop.f32.mrf.mxu0
        %v11564 = vadd.f32 %v11451, %v11563
        %11565 = vmatmul.bf16.gmra.mxu0 %v11166
        %v11566 = vpop.f32.mrf.mxu0
        %v11567 = vadd.f32 %v11454, %v11566
        %v11568 = vpop.f32.mrf.mxu0
        %v11569 = vadd.f32 %v11456, %v11568
        %11570 = vmatmul.bf16.gmra.mxu0 %v11169
        %v11571 = vpop.f32.mrf.mxu0
        %v11572 = vadd.f32 %v11459, %v11571
        %v11573 = vpop.f32.mrf.mxu0
        %v11574 = vadd.f32 %v11461, %v11573
        %11575 = vmatmul.bf16.gmra.mxu0 %v11172
        %v11576 = vpop.f32.mrf.mxu0
        %v11577 = vadd.f32 %v11464, %v11576
        %v11578 = vpop.f32.mrf.mxu0
        %v11579 = vadd.f32 %v11466, %v11578
        %11580 = vmatmul.bf16.gmra.mxu0 %v11175
        %v11581 = vpop.f32.mrf.mxu0
        %v11582 = vadd.f32 %v11469, %v11581
        %v11583 = vpop.f32.mrf.mxu0
        %v11584 = vadd.f32 %v11471, %v11583
        %11585 = vmatmul.bf16.gmra.mxu0 %v11178
        %v11586 = vpop.f32.mrf.mxu0
        %v11587 = vadd.f32 %v11474, %v11586
        %v11588 = vpop.f32.mrf.mxu0
        %v11589 = vadd.f32 %v11476, %v11588
        %11590 = vmatmul.bf16.gmra.mxu0 %v11181
        %v11591 = vpop.f32.mrf.mxu0
        %v11592 = vadd.f32 %v11479, %v11591
        %v11593 = vpop.f32.mrf.mxu0
        %v11594 = vadd.f32 %v11481, %v11593
        %11595 = vmatmul.bf16.gmra.mxu0 %v11184
        %v11596 = vpop.f32.mrf.mxu0
        %v11597 = vadd.f32 %v11484, %v11596
        %v11598 = vpop.f32.mrf.mxu0
        %v11599 = vadd.f32 %v11486, %v11598
        %11600 = vmatmul.bf16.gmra.mxu0 %v11187
        %v11601 = vpop.f32.mrf.mxu0
        %v11602 = vadd.f32 %v11489, %v11601
        %v11603 = vpop.f32.mrf.mxu0
        %v11604 = vadd.f32 %v11491, %v11603
        %11605 = vmatmul.bf16.gmra.mxu0 %v11190
        %v11606 = vpop.f32.mrf.mxu0
        %v11607 = vadd.f32 %v11494, %v11606
        %v11608 = vpop.f32.mrf.mxu0
        %v11609 = vadd.f32 %v11496, %v11608
        %11610 = vmatmul.bf16.gmra.mxu0 %v11193
        %v11611 = vpop.f32.mrf.mxu0
        %v11612 = vadd.f32 %v11499, %v11611
        %v11613 = vpop.f32.mrf.mxu0
        %v11614 = vadd.f32 %v11501, %v11613
        %11615 = vmatmul.bf16.gmra.mxu0 %v11196
        %v11616 = vpop.f32.mrf.mxu0
        %v11617 = vadd.f32 %v11504, %v11616
        %v11618 = vpop.f32.mrf.mxu0
        %v11619 = vadd.f32 %v11506, %v11618
        %11620 = vmatmul.bf16.gmra.mxu0 %v11199
        %v11621 = vpop.f32.mrf.mxu0
        %v11622 = vadd.f32 %v11509, %v11621
        %v11623 = vpop.f32.mrf.mxu0
        %v11624 = vadd.f32 %v11511, %v11623
        %11625 = vmatmul.bf16.gmra.mxu0 %v11202
        %v11626 = vpop.f32.mrf.mxu0
        %v11627 = vadd.f32 %v11514, %v11626
        %v11628 = vpop.f32.mrf.mxu0
        %v11629 = vadd.f32 %v11516, %v11628
        %11630 = vmatmul.bf16.gmra.mxu0 %v11205
        %v11631 = vpop.f32.mrf.mxu0
        %v11632 = vadd.f32 %v11519, %v11631
        %v11633 = vpop.f32.mrf.mxu0
        %v11634 = vadd.f32 %v11521, %v11633
        %11635 = vmatmul.bf16.gmra.mxu0 %v11208
        %v11636 = vpop.f32.mrf.mxu0
        %v11637 = vadd.f32 %v11524, %v11636
        %v11638 = vpop.f32.mrf.mxu0
        %v11639 = vadd.f32 %v11526, %v11638
        %11640 = vmatmul.bf16.gmra.mxu0 %v11211
        %v11641 = vpop.f32.mrf.mxu0
        %v11642 = vadd.f32 %v11529, %v11641
        %v11643 = vpop.f32.mrf.mxu0
        %v11644 = vadd.f32 %v11531, %v11643
        %11645 = vmatmul.bf16.gmra.mxu0 %v11214
        %v11646 = vpop.f32.mrf.mxu0
        %v11647 = vadd.f32 %v11534, %v11646
        %v11648 = vpop.f32.mrf.mxu0
        %v11649 = vadd.f32 %v11536, %v11648
        %11650 = vmatmul.bf16.gmra.mxu0 %v11217
        %v11651 = vpop.f32.mrf.mxu0
        %v11652 = vadd.f32 %v11539, %v11651
        %v11653 = vpop.f32.mrf.mxu0
        %v11654 = vadd.f32 %v11541, %v11653
        %11655 = vmatmul.bf16.gmra.mxu0 %v11220
        %v11656 = vpop.f32.mrf.mxu0
        %v11657 = vadd.f32 %v11544, %v11656
        %v11658 = vpop.f32.mrf.mxu0
        %v11659 = vadd.f32 %v11546, %v11658
        %11660 = vmatmul.bf16.gmra.mxu0 %v11223
        %v11661 = vpop.f32.mrf.mxu0
        %v11662 = vadd.f32 %v11549, %v11661
        %v11663 = vpop.f32.mrf.mxu0
        %11664 = vdwg.mxu0
        %11665 = vmatpush.bf16.msra.mxu0 0
        %11666 = vmatpush.bf16.msra.mxu0 0
        %11667 = vmatpush.bf16.msra.mxu0 0
        %11668 = vmatpush.bf16.msra.mxu0 0
        %11669 = vmatpush.bf16.msra.mxu0 0
        %11670 = vmatpush.bf16.msra.mxu0 0
        %11671 = vmatpush.bf16.msra.mxu0 %v11356
        %11672 = vmatpush.bf16.msra.mxu0 %v11355
        %11673 = vmatmul.bf16.gmra.mxu0 %v11377
        %v11674 = vpop.f32.mrf.mxu0
        %v11675 = vadd.f32 %v11562, %v11674
        %v11676 = vpop.f32.mrf.mxu0
        %v11677 = vadd.f32 %v11564, %v11676
        %11678 = vmatmul.bf16.gmra.mxu0 %v11380
        %v11679 = vpop.f32.mrf.mxu0
        %v11680 = vadd.f32 %v11567, %v11679
        %v11681 = vpop.f32.mrf.mxu0
        %v11682 = vadd.f32 %v11569, %v11681
        %11683 = vmatmul.bf16.gmra.mxu0 %v11383
        %v11684 = vpop.f32.mrf.mxu0
        %v11685 = vadd.f32 %v11572, %v11684
        %v11686 = vpop.f32.mrf.mxu0
        %v11687 = vadd.f32 %v11574, %v11686
        %11688 = vmatmul.bf16.gmra.mxu0 %v11386
        %v11689 = vpop.f32.mrf.mxu0
        %v11690 = vadd.f32 %v11577, %v11689
        %v11691 = vpop.f32.mrf.mxu0
        %v11692 = vadd.f32 %v11579, %v11691
        %11693 = vmatmul.bf16.gmra.mxu0 %v11389
        %v11694 = vpop.f32.mrf.mxu0
        %v11695 = vadd.f32 %v11582, %v11694
        %v11696 = vpop.f32.mrf.mxu0
        %v11697 = vadd.f32 %v11584, %v11696
        %11698 = vmatmul.bf16.gmra.mxu0 %v11392
        %v11699 = vpop.f32.mrf.mxu0
        %v11700 = vadd.f32 %v11587, %v11699
        %v11701 = vpop.f32.mrf.mxu0
        %v11702 = vadd.f32 %v11589, %v11701
        %11703 = vmatmul.bf16.gmra.mxu0 %v11395
        %v11704 = vpop.f32.mrf.mxu0
        %v11705 = vadd.f32 %v11592, %v11704
        %v11706 = vpop.f32.mrf.mxu0
        %v11707 = vadd.f32 %v11594, %v11706
        %11708 = vmatmul.bf16.gmra.mxu0 %v11398
        %v11709 = vpop.f32.mrf.mxu0
        %v11710 = vadd.f32 %v11597, %v11709
        %v11711 = vpop.f32.mrf.mxu0
        %v11712 = vadd.f32 %v11599, %v11711
        %11713 = vmatmul.bf16.gmra.mxu0 %v11401
        %v11714 = vpop.f32.mrf.mxu0
        %v11715 = vadd.f32 %v11602, %v11714
        %v11716 = vpop.f32.mrf.mxu0
        %v11717 = vadd.f32 %v11604, %v11716
        %11718 = vmatmul.bf16.gmra.mxu0 %v11404
        %v11719 = vpop.f32.mrf.mxu0
        %v11720 = vadd.f32 %v11607, %v11719
        %v11721 = vpop.f32.mrf.mxu0
        %v11722 = vadd.f32 %v11609, %v11721
        %11723 = vmatmul.bf16.gmra.mxu0 %v11407
        %v11724 = vpop.f32.mrf.mxu0
        %v11725 = vadd.f32 %v11612, %v11724
        %v11726 = vpop.f32.mrf.mxu0
        %v11727 = vadd.f32 %v11614, %v11726
        %11728 = vmatmul.bf16.gmra.mxu0 %v11410
        %v11729 = vpop.f32.mrf.mxu0
        %v11730 = vadd.f32 %v11617, %v11729
        %v11731 = vpop.f32.mrf.mxu0
        %v11732 = vadd.f32 %v11619, %v11731
        %11733 = vmatmul.bf16.gmra.mxu0 %v11413
        %v11734 = vpop.f32.mrf.mxu0
        %v11735 = vadd.f32 %v11622, %v11734
        %v11736 = vpop.f32.mrf.mxu0
        %v11737 = vadd.f32 %v11624, %v11736
        %11738 = vmatmul.bf16.gmra.mxu0 %v11416
        %v11739 = vpop.f32.mrf.mxu0
        %v11740 = vadd.f32 %v11627, %v11739
        %v11741 = vpop.f32.mrf.mxu0
        %v11742 = vadd.f32 %v11629, %v11741
        %11743 = vmatmul.bf16.gmra.mxu0 %v11419
        %v11744 = vpop.f32.mrf.mxu0
        %v11745 = vadd.f32 %v11632, %v11744
        %v11746 = vpop.f32.mrf.mxu0
        %v11747 = vadd.f32 %v11634, %v11746
        %11748 = vmatmul.bf16.gmra.mxu0 %v11422
        %v11749 = vpop.f32.mrf.mxu0
        %v11750 = vadd.f32 %v11637, %v11749
        %v11751 = vpop.f32.mrf.mxu0
        %v11752 = vadd.f32 %v11639, %v11751
        %11753 = vmatmul.bf16.gmra.mxu0 %v11425
        %v11754 = vpop.f32.mrf.mxu0
        %v11755 = vadd.f32 %v11642, %v11754
        %v11756 = vpop.f32.mrf.mxu0
        %v11757 = vadd.f32 %v11644, %v11756
        %11758 = vmatmul.bf16.gmra.mxu0 %v11428
        %v11759 = vpop.f32.mrf.mxu0
        %v11760 = vadd.f32 %v11647, %v11759
        %v11761 = vpop.f32.mrf.mxu0
        %v11762 = vadd.f32 %v11649, %v11761
        %11763 = vmatmul.bf16.gmra.mxu0 %v11431
        %v11764 = vpop.f32.mrf.mxu0
        %v11765 = vadd.f32 %v11652, %v11764
        %v11766 = vpop.f32.mrf.mxu0
        %v11767 = vadd.f32 %v11654, %v11766
        %11768 = vmatmul.bf16.gmra.mxu0 %v11434
        %v11769 = vpop.f32.mrf.mxu0
        %v11770 = vadd.f32 %v11657, %v11769
        %v11771 = vpop.f32.mrf.mxu0
        %v11772 = vadd.f32 %v11659, %v11771
        %11773 = vmatmul.bf16.gmra.mxu0 %v11437
        %v11774 = vpop.f32.mrf.mxu0
        %v11775 = vadd.f32 %v11662, %v11774
        %v11776 = vpop.f32.mrf.mxu0
        %11777 = vdwg.mxu0
        %v11778 = vsel %vm1104, %v11675, -inf
        %v11779 = vsel %vm1105, %v11677, -inf
        %v11780 = vsel %vm1106, %v11680, -inf
        %v11781 = vsel %vm1107, %v11682, -inf
        %v11782 = vsel %vm1108, %v11685, -inf
        %v11783 = vsel %vm1109, %v11687, -inf
        %v11784 = vsel %vm1110, %v11690, -inf
        %v11785 = vsel %vm1111, %v11692, -inf
        %v11786 = vsel %vm1112, %v11695, -inf
        %v11787 = vsel %vm1113, %v11697, -inf
        %v11788 = vsel %vm1114, %v11700, -inf
        %v11789 = vsel %vm1115, %v11702, -inf
        %v11790 = vsel %vm1116, %v11705, -inf
        %v11791 = vsel %vm1117, %v11707, -inf
        %v11792 = vsel %vm1118, %v11710, -inf
        %v11793 = vsel %vm1119, %v11712, -inf
        %v11794 = vsel %vm1120, %v11715, -inf
        %v11795 = vsel %vm1121, %v11717, -inf
        %v11796 = vsel %vm1122, %v11720, -inf
        %v11797 = vsel %vm1123, %v11722, -inf
        %v11798 = vsel %vm1124, %v11725, -inf
        %v11799 = vsel %vm1125, %v11727, -inf
        %v11800 = vsel %vm1126, %v11730, -inf
        %v11801 = vsel %vm1127, %v11732, -inf
        %v11802 = vsel %vm1128, %v11735, -inf
        %v11803 = vsel %vm1129, %v11737, -inf
        %v11804 = vsel %vm1130, %v11740, -inf
        %v11805 = vsel %vm1131, %v11742, -inf
        %v11806 = vsel %vm1132, %v11745, -inf
        %v11807 = vsel %vm1133, %v11747, -inf
        %v11808 = vsel %vm1134, %v11750, -inf
        %v11809 = vsel %vm1135, %v11752, -inf
        %v11810 = vsel %vm1136, %v11755, -inf
        %v11811 = vsel %vm1137, %v11757, -inf
        %v11812 = vsel %vm1138, %v11760, -inf
        %v11813 = vsel %vm1139, %v11762, -inf
        %v11814 = vsel %vm1140, %v11765, -inf
        %v11815 = vsel %vm1141, %v11767, -inf
        %v11816 = vsel %vm1142, %v11770, -inf
        %v11817 = vsel %vm1143, %v11772, -inf
        %v11818 = vsel %vm1144, %v11775, -inf
        %vm11819 = vcmask 523264
        %v11820 = vsel %vm11819, %v11778, -inf
        %v11821 = vsel %vm11819, %v11779, -inf
        %v11822 = vsel %vm11819, %v11780, -inf
        %v11823 = vsel %vm11819, %v11781, -inf
        %v11824 = vsel %vm11819, %v11782, -inf
        %v11825 = vmax.f32 %v11820, %v11824
        %v11826 = vsel %vm11819, %v11783, -inf
        %v11827 = vmax.f32 %v11821, %v11826
        %v11828 = vsel %vm11819, %v11784, -inf
        %v11829 = vmax.f32 %v11822, %v11828
        %v11830 = vsel %vm11819, %v11785, -inf
        %v11831 = vmax.f32 %v11823, %v11830
        %v11832 = vsel %vm11819, %v11786, -inf
        %v11833 = vmax.f32 %v11825, %v11832
        %v11834 = vsel %vm11819, %v11787, -inf
        %v11835 = vmax.f32 %v11827, %v11834
        %v11836 = vsel %vm11819, %v11788, -inf
        %v11837 = vmax.f32 %v11829, %v11836
        %v11838 = vsel %vm11819, %v11789, -inf
        %v11839 = vmax.f32 %v11831, %v11838
        %v11840 = vsel %vm11819, %v11790, -inf
        %v11841 = vmax.f32 %v11833, %v11840
        %v11842 = vsel %vm11819, %v11791, -inf
        %v11843 = vmax.f32 %v11835, %v11842
        %v11844 = vsel %vm11819, %v11792, -inf
        %v11845 = vmax.f32 %v11837, %v11844
        %v11846 = vsel %vm11819, %v11793, -inf
        %v11847 = vmax.f32 %v11839, %v11846
        %v11848 = vsel %vm11819, %v11794, -inf
        %v11849 = vmax.f32 %v11841, %v11848
        %v11850 = vsel %vm11819, %v11795, -inf
        %v11851 = vmax.f32 %v11843, %v11850
        %v11852 = vsel %vm11819, %v11796, -inf
        %v11853 = vmax.f32 %v11845, %v11852
        %v11854 = vsel %vm11819, %v11797, -inf
        %v11855 = vmax.f32 %v11847, %v11854
        %v11856 = vsel %vm11819, %v11798, -inf
        %v11857 = vmax.f32 %v11849, %v11856
        %v11858 = vsel %vm11819, %v11799, -inf
        %v11859 = vmax.f32 %v11851, %v11858
        %v11860 = vsel %vm11819, %v11800, -inf
        %v11861 = vmax.f32 %v11853, %v11860
        %v11862 = vsel %vm11819, %v11801, -inf
        %v11863 = vmax.f32 %v11855, %v11862
        %v11864 = vsel %vm11819, %v11802, -inf
        %v11865 = vmax.f32 %v11857, %v11864
        %v11866 = vsel %vm11819, %v11803, -inf
        %v11867 = vmax.f32 %v11859, %v11866
        %v11868 = vsel %vm11819, %v11804, -inf
        %v11869 = vmax.f32 %v11861, %v11868
        %v11870 = vsel %vm11819, %v11805, -inf
        %v11871 = vmax.f32 %v11863, %v11870
        %v11872 = vsel %vm11819, %v11806, -inf
        %v11873 = vmax.f32 %v11865, %v11872
        %v11874 = vsel %vm11819, %v11807, -inf
        %v11875 = vmax.f32 %v11867, %v11874
        %v11876 = vsel %vm11819, %v11808, -inf
        %v11877 = vmax.f32 %v11869, %v11876
        %v11878 = vsel %vm11819, %v11809, -inf
        %v11879 = vmax.f32 %v11871, %v11878
        %v11880 = vsel %vm11819, %v11810, -inf
        %v11881 = vmax.f32 %v11873, %v11880
        %v11882 = vsel %vm11819, %v11811, -inf
        %v11883 = vmax.f32 %v11875, %v11882
        %v11884 = vsel %vm11819, %v11812, -inf
        %v11885 = vmax.f32 %v11877, %v11884
        %v11886 = vsel %vm11819, %v11813, -inf
        %v11887 = vmax.f32 %v11879, %v11886
        %v11888 = vsel %vm11819, %v11814, -inf
        %v11889 = vmax.f32 %v11881, %v11888
        %v11890 = vsel %vm11819, %v11815, -inf
        %v11891 = vmax.f32 %v11883, %v11890
        %v11892 = vsel %vm11819, %v11816, -inf
        %v11893 = vmax.f32 %v11885, %v11892
        %v11894 = vsel %vm11819, %v11817, -inf
        %v11895 = vmax.f32 %v11887, %v11894
        %v11896 = vsel %vm11819, %v11818, -inf
        %v11897 = vmax.f32 %v11889, %v11896
        %v11898 = vmax.f32 %v11897, %v11891
        %v11899 = vmax.f32 %v11893, %v11895
        %v11900 = vmax.f32 %v11898, %v11899
        %v11901 = vrot.slane %v11900, 4
        %v11902 = vmax.f32 %v11900, %v11901
        %v11903 = vrot.slane %v11902, 2
        %v11904 = vmax.f32 %v11902, %v11903
        %v11905 = vrot.slane %v11904, 1
        %v11906 = vmax.f32 %v11904, %v11905
        %v11907 = vmax.f32 %v11906, 0.0
        %v11908 = vpack.c.bf16 %v11907, %v11907
        %v11909 = vld [vmem:[%s8] sm:$0xf]
        %v11910 = vld [vmem:[%s8 + $0x4] sm:$0xf]
        %v11911 = vld [vmem:[%s8 + $0x8] sm:$0xf]
        %v11912 = vld [vmem:[%s8 + $0xc] sm:$0xf]
        %v11913 = vld [vmem:[%s8 + $0x10] sm:$0xf]
        %v11914 = vld [vmem:[%s8 + $0x14] sm:$0xf]
        %v11915 = vld [vmem:[%s8 + $0x18] sm:$0xf]
        %v11916 = vld [vmem:[%s8 + $0x1c] sm:$0xf]
        %v11917 = vld [vmem:[%s9] sm:$0x1]
        %v11926 = vunpack.c.l.b16 %v11909
        %v11927 = vunpack.c.l.b16 %v11910
        %v11928 = vunpack.c.l.b16 %v11911
        %v11929 = vunpack.c.l.b16 %v11912
        %v11930 = vunpack.c.l.b16 %v11913
        %v11931 = vunpack.c.l.b16 %v11914
        %v11932 = vunpack.c.l.b16 %v11915
        %v11933 = vunpack.c.l.b16 %v11916
        %v11934 = vpack.c.b16 %v11927, %v11926
        %v11935 = vpack.c.b16 %v11929, %v11928
        %v11936 = vpack.c.b16 %v11931, %v11930
        %v11937 = vpack.c.b16 %v11933, %v11932
        %v11943 = vsel %vm11819, %v11908, 0
        %11945 = vmatpush.bf16.msra.mxu0 0
        %11946 = vmatpush.bf16.msra.mxu0 0
        %11947 = vmatpush.bf16.msra.mxu0 0
        %11948 = vmatpush.bf16.msra.mxu0 0
        %11949 = vmatpush.bf16.msra.mxu0 %v11937
        %11950 = vmatpush.bf16.msra.mxu0 %v11936
        %11951 = vmatpush.bf16.msra.mxu0 %v11935
        %11952 = vmatpush.bf16.msra.mxu0 %v11934
        %11953 = vmatmul.bf16.gmra.mxu0 %v11943
        %v11954 = vpop.f32.mrf.mxu0
        %v11955 = vadd.f32 %v11917, %v11954
        %v11956 = vpop.f32.mrf.mxu0
        %11957 = vdwg.mxu0
        %v11958 = vmax.f32 %v11955, 0.0
        %v11959 = vpack.c.bf16 %v11958, %v11958
        %v11960 = vld [vmem:[%s10] sm:$0xff]
        %v11961 = vld [vmem:[%s10 + $0x8] sm:$0xff]
        %v11962 = vld [vmem:[%s10 + $0x10] sm:$0xff]
        %v11963 = vld [vmem:[%s10 + $0x18] sm:$0xff]
        %v11964 = vld [vmem:[%s10 + $0x20] sm:$0xff]
        %v11965 = vld [vmem:[%s10 + $0x28] sm:$0xff]
        %v11966 = vld [vmem:[%s10 + $0x30] sm:$0xff]
        %v11967 = vld [vmem:[%s10 + $0x38] sm:$0xff]
        %v11968 = vld [vmem:[%s10 + $0x40] sm:$0xff]
        %v11969 = vld [vmem:[%s10 + $0x48] sm:$0xff]
        %v11970 = vld [vmem:[%s10 + $0x50] sm:$0xff]
        %v11971 = vld [vmem:[%s10 + $0x58] sm:$0xff]
        %v11972 = vld [vmem:[%s10 + $0x60] sm:$0xff]
        %v11973 = vld [vmem:[%s10 + $0x68] sm:$0xff]
        %v11974 = vld [vmem:[%s10 + $0x70] sm:$0xff]
        %v11975 = vld [vmem:[%s10 + $0x78] sm:$0xff]
        %v11976 = vld [vmem:[%s11] sm:$0x3]
        %v11993 = vunpack.c.l.b16 %v11960
        %v11994 = vunpack.c.h.b16 %v11960
        %v11995 = vunpack.c.l.b16 %v11961
        %v11996 = vunpack.c.h.b16 %v11961
        %v11997 = vunpack.c.l.b16 %v11962
        %v11998 = vunpack.c.h.b16 %v11962
        %v11999 = vunpack.c.l.b16 %v11963
        %v12000 = vunpack.c.h.b16 %v11963
        %v12001 = vunpack.c.l.b16 %v11964
        %v12002 = vunpack.c.h.b16 %v11964
        %v12003 = vunpack.c.l.b16 %v11965
        %v12004 = vunpack.c.h.b16 %v11965
        %v12005 = vunpack.c.l.b16 %v11966
        %v12006 = vunpack.c.h.b16 %v11966
        %v12007 = vunpack.c.l.b16 %v11967
        %v12008 = vunpack.c.h.b16 %v11967
        %v12009 = vunpack.c.l.b16 %v11968
        %v12010 = vunpack.c.h.b16 %v11968
        %v12011 = vunpack.c.l.b16 %v11969
        %v12012 = vunpack.c.h.b16 %v11969
        %v12013 = vunpack.c.l.b16 %v11970
        %v12014 = vunpack.c.h.b16 %v11970
        %v12015 = vunpack.c.l.b16 %v11971
        %v12016 = vunpack.c.h.b16 %v11971
        %v12017 = vunpack.c.l.b16 %v11972
        %v12018 = vunpack.c.h.b16 %v11972
        %v12019 = vunpack.c.l.b16 %v11973
        %v12020 = vunpack.c.h.b16 %v11973
        %v12021 = vunpack.c.l.b16 %v11974
        %v12022 = vunpack.c.h.b16 %v11974
        %v12023 = vunpack.c.l.b16 %v11975
        %v12024 = vunpack.c.h.b16 %v11975
        %v12025 = vpack.c.b16 %v11995, %v11993
        %v12026 = vpack.c.b16 %v11996, %v11994
        %v12027 = vpack.c.b16 %v11999, %v11997
        %v12028 = vpack.c.b16 %v12000, %v11998
        %v12029 = vpack.c.b16 %v12003, %v12001
        %v12030 = vpack.c.b16 %v12004, %v12002
        %v12031 = vpack.c.b16 %v12007, %v12005
        %v12032 = vpack.c.b16 %v12008, %v12006
        %v12033 = vpack.c.b16 %v12011, %v12009
        %v12034 = vpack.c.b16 %v12012, %v12010
        %v12035 = vpack.c.b16 %v12015, %v12013
        %v12036 = vpack.c.b16 %v12016, %v12014
        %v12037 = vpack.c.b16 %v12019, %v12017
        %v12038 = vpack.c.b16 %v12020, %v12018
        %v12039 = vpack.c.b16 %v12023, %v12021
        %v12040 = vpack.c.b16 %v12024, %v12022
        %v12058 = vperm.slane %v11976, 0
        %v12059 = vperm.slane %v11976, 1
        %12062 = vmatpush.bf16.msra.mxu0 %v12039
        %12063 = vmatpush.bf16.msra.mxu0 %v12037
        %12064 = vmatpush.bf16.msra.mxu0 %v12035
        %12065 = vmatpush.bf16.msra.mxu0 %v12033
        %12066 = vmatpush.bf16.msra.mxu0 %v12031
        %12067 = vmatpush.bf16.msra.mxu0 %v12029
        %12068 = vmatpush.bf16.msra.mxu0 %v12027
        %12069 = vmatpush.bf16.msra.mxu0 %v12025
        %12070 = vmatmul.bf16.gmra.mxu0 %v11959
        %v12071 = vpop.f32.mrf.mxu0
        %v12072 = vadd.f32 %v12058, %v12071
        %v12073 = vpop.f32.mrf.mxu0
        %12074 = vdwg.mxu0
        %12075 = vmatpush.bf16.msra.mxu0 %v12040
        %12076 = vmatpush.bf16.msra.mxu0 %v12038
        %12077 = vmatpush.bf16.msra.mxu0 %v12036
        %12078 = vmatpush.bf16.msra.mxu0 %v12034
        %12079 = vmatpush.bf16.msra.mxu0 %v12032
        %12080 = vmatpush.bf16.msra.mxu0 %v12030
        %12081 = vmatpush.bf16.msra.mxu0 %v12028
        %12082 = vmatpush.bf16.msra.mxu0 %v12026
        %12083 = vmatmul.bf16.gmra.mxu0 %v11959
        %v12084 = vpop.f32.mrf.mxu0
        %v12085 = vadd.f32 %v12059, %v12084
        %v12086 = vpop.f32.mrf.mxu0
        %12087 = vdwg.mxu0
        %v12088 = vmax.f32 %v12072, 0.0
        %v12089 = vmax.f32 %v12085, 0.0
        %v12090 = vpack.c.bf16 %v12088, %v12088
        %v12091 = vpack.c.bf16 %v12089, %v12089
        %v12092 = vld [vmem:[%s12] sm:$0xf]
        %v12093 = vld [vmem:[%s12 + $0x4] sm:$0xf]
        %v12094 = vld [vmem:[%s12 + $0x8] sm:$0xf]
        %v12095 = vld [vmem:[%s12 + $0xc] sm:$0xf]
        %v12096 = vld [vmem:[%s12 + $0x10] sm:$0xf]
        %v12097 = vld [vmem:[%s12 + $0x14] sm:$0xf]
        %v12098 = vld [vmem:[%s12 + $0x18] sm:$0xf]
        %v12099 = vld [vmem:[%s12 + $0x1c] sm:$0xf]
        %v12100 = vld [vmem:[%s12 + $0x20] sm:$0xf]
        %v12101 = vld [vmem:[%s12 + $0x24] sm:$0xf]
        %v12102 = vld [vmem:[%s12 + $0x28] sm:$0xf]
        %v12103 = vld [vmem:[%s12 + $0x2c] sm:$0xf]
        %v12104 = vld [vmem:[%s12 + $0x30] sm:$0xf]
        %v12105 = vld [vmem:[%s12 + $0x34] sm:$0xf]
        %v12106 = vld [vmem:[%s12 + $0x38] sm:$0xf]
        %v12107 = vld [vmem:[%s12 + $0x3c] sm:$0xf]
        %v12108 = vld [vmem:[%s12 + $0x40] sm:$0xf]
        %v12109 = vld [vmem:[%s12 + $0x44] sm:$0xf]
        %v12110 = vld [vmem:[%s12 + $0x48] sm:$0xf]
        %v12111 = vld [vmem:[%s12 + $0x4c] sm:$0xf]
        %v12112 = vld [vmem:[%s12 + $0x50] sm:$0xf]
        %v12113 = vld [vmem:[%s12 + $0x54] sm:$0xf]
        %v12114 = vld [vmem:[%s12 + $0x58] sm:$0xf]
        %v12115 = vld [vmem:[%s12 + $0x5c] sm:$0xf]
        %v12116 = vld [vmem:[%s12 + $0x60] sm:$0xf]
        %v12117 = vld [vmem:[%s12 + $0x64] sm:$0xf]
        %v12118 = vld [vmem:[%s12 + $0x68] sm:$0xf]
        %v12119 = vld [vmem:[%s12 + $0x6c] sm:$0xf]
        %v12120 = vld [vmem:[%s12 + $0x70] sm:$0xf]
        %v12121 = vld [vmem:[%s12 + $0x74] sm:$0xf]
        %v12122 = vld [vmem:[%s12 + $0x78] sm:$0xf]
        %v12123 = vld [vmem:[%s12 + $0x7c] sm:$0xf]
        %v12124 = vld [vmem:[%s13] sm:$0x1]
        %v12157 = vunpack.c.l.b16 %v12092
        %v12158 = vunpack.c.l.b16 %v12093
        %v12159 = vunpack.c.l.b16 %v12094
        %v12160 = vunpack.c.l.b16 %v12095
        %v12161 = vunpack.c.l.b16 %v12096
        %v12162 = vunpack.c.l.b16 %v12097
        %v12163 = vunpack.c.l.b16 %v12098
        %v12164 = vunpack.c.l.b16 %v12099
        %v12165 = vunpack.c.l.b16 %v12100
        %v12166 = vunpack.c.l.b16 %v12101
        %v12167 = vunpack.c.l.b16 %v12102
        %v12168 = vunpack.c.l.b16 %v12103
        %v12169 = vunpack.c.l.b16 %v12104
        %v12170 = vunpack.c.l.b16 %v12105
        %v12171 = vunpack.c.l.b16 %v12106
        %v12172 = vunpack.c.l.b16 %v12107
        %v12173 = vunpack.c.l.b16 %v12108
        %v12174 = vunpack.c.l.b16 %v12109
        %v12175 = vunpack.c.l.b16 %v12110
        %v12176 = vunpack.c.l.b16 %v12111
        %v12177 = vunpack.c.l.b16 %v12112
        %v12178 = vunpack.c.l.b16 %v12113
        %v12179 = vunpack.c.l.b16 %v12114
        %v12180 = vunpack.c.l.b16 %v12115
        %v12181 = vunpack.c.l.b16 %v12116
        %v12182 = vunpack.c.l.b16 %v12117
        %v12183 = vunpack.c.l.b16 %v12118
        %v12184 = vunpack.c.l.b16 %v12119
        %v12185 = vunpack.c.l.b16 %v12120
        %v12186 = vunpack.c.l.b16 %v12121
        %v12187 = vunpack.c.l.b16 %v12122
        %v12188 = vunpack.c.l.b16 %v12123
        %v12189 = vpack.c.b16 %v12158, %v12157
        %v12190 = vpack.c.b16 %v12160, %v12159
        %v12191 = vpack.c.b16 %v12162, %v12161
        %v12192 = vpack.c.b16 %v12164, %v12163
        %v12193 = vpack.c.b16 %v12166, %v12165
        %v12194 = vpack.c.b16 %v12168, %v12167
        %v12195 = vpack.c.b16 %v12170, %v12169
        %v12196 = vpack.c.b16 %v12172, %v12171
        %v12197 = vpack.c.b16 %v12174, %v12173
        %v12198 = vpack.c.b16 %v12176, %v12175
        %v12199 = vpack.c.b16 %v12178, %v12177
        %v12200 = vpack.c.b16 %v12180, %v12179
        %v12201 = vpack.c.b16 %v12182, %v12181
        %v12202 = vpack.c.b16 %v12184, %v12183
        %v12203 = vpack.c.b16 %v12186, %v12185
        %v12204 = vpack.c.b16 %v12188, %v12187
        %12221 = vmatpush.bf16.msra.mxu0 %v12196
        %12222 = vmatpush.bf16.msra.mxu0 %v12195
        %12223 = vmatpush.bf16.msra.mxu0 %v12194
        %12224 = vmatpush.bf16.msra.mxu0 %v12193
        %12225 = vmatpush.bf16.msra.mxu0 %v12192
        %12226 = vmatpush.bf16.msra.mxu0 %v12191
        %12227 = vmatpush.bf16.msra.mxu0 %v12190
        %12228 = vmatpush.bf16.msra.mxu0 %v12189
        %12229 = vmatmul.bf16.gmra.mxu0 %v12090
        %v12230 = vpop.f32.mrf.mxu0
        %v12231 = vadd.f32 %v12124, %v12230
        %v12232 = vpop.f32.mrf.mxu0
        %12233 = vdwg.mxu0
        %12234 = vmatpush.bf16.msra.mxu0 %v12204
        %12235 = vmatpush.bf16.msra.mxu0 %v12203
        %12236 = vmatpush.bf16.msra.mxu0 %v12202
        %12237 = vmatpush.bf16.msra.mxu0 %v12201
        %12238 = vmatpush.bf16.msra.mxu0 %v12200
        %12239 = vmatpush.bf16.msra.mxu0 %v12199
        %12240 = vmatpush.bf16.msra.mxu0 %v12198
        %12241 = vmatpush.bf16.msra.mxu0 %v12197
        %12242 = vmatmul.bf16.gmra.mxu0 %v12091
        %v12243 = vpop.f32.mrf.mxu0
        %v12244 = vadd.f32 %v12231, %v12243
        %v12245 = vpop.f32.mrf.mxu0
        %12246 = vdwg.mxu0
        %12248 = vset.pattern.permute.xlu0 5
        %12249 = vperm.xlu0 %12248, %v12244
        %v12250 = vpop.permute.xlu0 %12249
        %v12252 = vadd.f32 %v12250, %v12244
        %vm12253 = vcmask 32768
        %v12254 = vsel %vm12253, %v12244, 0.0
        %12255 = vadd.xlane.f32.xlu0 %v12254
        %v12256 = vpop.xlane.xlu0 %12255
        %v12257 = vrcp.pop 5.0
        %v12258 = vmul.f32 5.0, %v12257
        %v12259 = vsub.f32 1.0, %v12258
        %v12260 = vmul.f32 %v12257, %v12259
        %v12261 = vadd.f32 %v12257, %v12260
        %vm12262 = vweird.f32 %v12257
        %v12263 = vsel %vm12262, %v12257, %v12261
        %v12264 = vmul.f32 %v12256, %v12263
        %v12265 = vsub.f32 %v12252, %v12264
        %12266 = vst.msk [vmem:[%s460] sm:$0x1] %vm12253, %v12265
        %s12267 = sand.u32 %s335, 1
        %s12268 = scalar_lea.sflag [#allocation5], %s12267
        %s12269 = sand.u32 %s335, 1
        %s12270 = scalar_lea.vmem [#allocation4], %s12269
        // Predicated region
        $region77: #{qnet_forward.1} parent=75 // pred_check
          %p12271 = pneg %p345
        $region78: #{qnet_forward.1} parent=75 // pred_check_branch
          %12273 = sbr.rel (%p12271) target = $region80
        $region79: #{qnet_forward.1} parent=75 // pred_region
          %12275 = vsyncadd %s12268, 0
          %s12276 = scalar_lea.hbm %s14, %s28
          %s12278 = sshll.u32 %s12270, 4
          %s12279 = int_to_ptr.vmem [resolvable:$true] %s12278
          %s12280 = sshll.u32 %s12276, 4
          %s12281 = int_to_ptr.hbm [resolvable:$true] %s12280
          %12283 = dma.vmem_to_hbm [thread:$0]  %s12279, 16, %s12281, %s12268
        $region80: #{qnet_forward.1} parent=75 // pred_fallthru
          _
      $region76: #{qnet_forward.1} parent=5 // pred_fallthru
        _
      %p12284 = scmp.le.s32.totalorder 2, %s23
      // Predicated region
      $region81: #{qnet_forward.1} parent=5 // pred_check
        %p12285 = pneg %p12284
      $region82: #{qnet_forward.1} parent=5 // pred_check_branch
        %12287 = sbr.rel (%p12285) target = $region84
      $region83: #{qnet_forward.1} parent=5 // pred_region
        %s12288 = ssub.s32 %s23, 2
        // Predicated region
        $region85: #{qnet_forward.1} parent=83 // pred_check
          %p12289 = pneg %p351
        $region86: #{qnet_forward.1} parent=83 // pred_check_branch
          %12291 = sbr.rel (%p12289) target = $region88
        $region87: #{qnet_forward.1} parent=83 // pred_region
          %s12292 = sand.u32 %s336, 1
          %s12293 = scalar_lea.sflag [#allocation5], %s12292
          %s12294 = sand.u32 %s336, 1
          %s12295 = scalar_lea.vmem [#allocation4], %s12294
          %12297 = dma.done %s12293, 16
        $region88: #{qnet_forward.1} parent=83 // pred_fallthru
          _
      $region84: #{qnet_forward.1} parent=5 // pred_fallthru
        _
    $region6: #{qnet_forward.1} parent=1 // loop_footer
      %s27 = sadd.s32 1, %s23
    $region7: #{qnet_forward.1} parent=1 // loop_footer_branch
      %22 = sbr.rel target = $region3
    $region8: #{qnet_forward.1} parent=1 // loop_exit
      _
    %12298 = vsyncpa [#allocation5], 1
    %s12299 = scalar_lea.sflag [#allocation5], 1
    %12300 = vsyncpa %s12299, 1

</llo_original>
